<compile_context>
chip_gen: v7x
topology: tpu7x:2x2x1
jax: 0.10.0
libtpu: 0.0.40
codegen_flags: <defaults>
</compile_context>

<pallas_src>
import jax
import jax.numpy as jnp
from jax.experimental import pallas as pl
from jax.experimental.pallas import tpu as pltpu

C_FEAT = 64  # "feature3" in the PyTorch module (hidden conv channel count)


def dyprox_kernel(x_ref, w1_ref, w2_ref, w3_ref, w4_ref, w5_ref, eb_ref,
                  o_ref, bufa_ref, bufb_ref, col_ref):
    # Layouts:
    #   x_ref / o_ref : (H, W, 1)  HWC feature maps, channels on TPU lanes
    #   w1_ref        : (9, C)     layer-1 taps, [tap, cout]          (cin = 1)
    #   w2..w4_ref    : (9*C, C)   hidden-layer weights, row = tap*C + cin (im2col order)
    #   w5_ref        : (9, C)     layer-5 taps, [tap, cin]           (cout = 1)
    #   eb_ref        : (8, C)     [eta1..eta4, beta1..beta4]
    #   bufa/bufb_ref : (H+2, W+2, C) zero-bordered ping-pong feature buffers (scratch)
    #   col_ref       : (H, W, 9*C)   im2col scratch
    H, W, _ = x_ref.shape
    C = w1_ref.shape[-1]
    eps = 1e-5
    inv_n = 1.0 / (H * W)

    # Zero ONLY the 1-pixel borders, once.  Safe because every layer fully overwrites
    # the interior channels it later reads: layer 1 reads only channel 0 (written
    # below), layers 2-5 read all C channels, which the previous layer's store fully
    # overwrites.  Do not change a layer's cin without revisiting this invariant.
    def zero_border(buf):
        buf[0:1, :, :] = jnp.zeros((1, W + 2, C), jnp.float32)
        buf[H + 1:H + 2, :, :] = jnp.zeros((1, W + 2, C), jnp.float32)
        buf[:, 0:1, :] = jnp.zeros((H + 2, 1, C), jnp.float32)
        buf[:, W + 1:W + 2, :] = jnp.zeros((H + 2, 1, C), jnp.float32)

    zero_border(bufa_ref)
    zero_border(bufb_ref)

    eb = eb_ref[...]                                             # (8, C)

    def adain_relu(y, idx):
        # TODO(synk): `adain` is not defined in the reference file; implemented as the
        # standard AdaIN (per-channel instance norm over HxW, biased variance, eps=1e-5,
        # then scale by eta and shift by beta).  Stats are single-pass sum / sum-of-sq;
        # eta/beta are folded into a fused per-channel scale/shift so the (H,W,C)
        # modulation costs one multiply and one add per element.
        s = jnp.sum(y, axis=(0, 1), keepdims=True)               # (1, 1, C)
        ss = jnp.sum(y * y, axis=(0, 1), keepdims=True)          # (1, 1, C)
        mean = s * inv_n
        var = ss * inv_n - mean * mean
        rstd = jax.lax.rsqrt(var + eps)                          # EUP
        eta = eb[idx:idx + 1].reshape(1, 1, C)
        beta = eb[4 + idx:5 + idx].reshape(1, 1, C)
        scale = eta * rstd                                       # (1, 1, C)
        shift = beta - mean * scale                              # (1, 1, C)
        return jnp.maximum(y * scale + shift, 0.0)

    def conv_hidden(src_ref, w_ref):
        # 3x3 "same" conv, C -> C, as ONE im2col matmul with K = 9*C = 576.
        for k in range(9):
            dh, dw = k // 3, k % 3
            col_ref[:, :, k * C:(k + 1) * C] = src_ref[dh:dh + H, dw:dw + W, :]
        y = jnp.dot(col_ref[...].reshape(H * W, 9 * C), w_ref[...],
                    preferred_element_type=jnp.float32)          # (H*W, C)
        return y.reshape(H, W, C)

    # ---- layer 1: 1 -> C.  Only channel 0 of bufa is touched (9 broadcast MACs). ----
    bufa_ref[1:H + 1, 1:W + 1, 0:1] = x_ref[...]
    w1 = w1_ref[...]
    acc1 = jnp.zeros((H, W, C), jnp.float32)
    for k in range(9):
        dh, dw = k // 3, k % 3
        acc1 = acc1 + bufa_ref[dh:dh + H, dw:dw + W, 0:1] * w1[k:k + 1].reshape(1, 1, C)
    bufb_ref[1:H + 1, 1:W + 1, :] = adain_relu(acc1, 0)

    # ---- layers 2-4: C -> C, ping-pong between the two padded buffers ----
    bufa_ref[1:H + 1, 1:W + 1, :] = adain_relu(conv_hidden(bufb_ref, w2_ref), 1)
    bufb_ref[1:H + 1, 1:W + 1, :] = adain_relu(conv_hidden(bufa_ref, w3_ref), 2)
    bufa_ref[1:H + 1, 1:W + 1, :] = adain_relu(conv_hidden(bufb_ref, w4_ref), 3)

    # ---- layer 5: C -> 1.  Accumulate 9 broadcast multiplies, one lane reduce,
    # ---- residual add fused into the output store.  (No AdaIN / ReLU on this layer.)
    w5 = w5_ref[...]
    acc5 = jnp.zeros((H, W, C), jnp.float32)
    for k in range(9):
        dh, dw = k // 3, k % 3
        acc5 = acc5 + bufa_ref[dh:dh + H, dw:dw + W, :] * w5[k:k + 1].reshape(1, 1, C)
    o_ref[...] = jnp.sum(acc5, axis=-1, keepdims=True) + x_ref[...]


@jax.jit
def dyproxnet_forward(params, x_param, x_img):
    """x_param: (1, 1) f32;  x_img: (1, 1, H, W) f32 NCHW  ->  (1, 1, H, W) f32."""

    def lin(name, x):
        w, b = params[name]
        return x @ w.T + b

    relu = jax.nn.relu

    # Hyper-network: scalar -> conv kernels (plain-JAX glue), laid out for the kernel.
    def taps(name, cout, cin):
        w = lin(name, x_param).reshape(cout, cin, 3, 3)               # PyTorch (Cout,Cin,3,3)
        return jnp.transpose(w, (2, 3, 1, 0)).reshape(9, cin, cout)   # (tap, cin, cout)

    w1 = taps("fc1", 64, 1).reshape(9, 64)            # [tap, cout]
    w2 = taps("fc2", 64, 64).reshape(9 * 64, 64)      # [tap*cin, cout] -> im2col rows
    w3 = taps("fc3", 64, 64).reshape(9 * 64, 64)
    w4 = taps("fc4", 64, 64).reshape(9 * 64, 64)
    w5 = taps("fc5", 1, 64).reshape(9, 64)            # [tap, cin]

    # Hyper-network: scalar -> AdaIN modulation vectors.
    mods = []
    for a, b in [("eta1", "eta11"), ("eta2", "eta21"), ("eta3", "eta31"),
                 ("eta4", "eta41"), ("beta1", "beta11"), ("beta2", "beta21"),
                 ("beta3", "beta31"), ("beta4", "beta41")]:
        mods.append(lin(b, relu(lin(a, x_param)))[0])                 # (64,)
    eb = jnp.stack(mods, axis=0)                                      # (8, 64)

    H, W = x_img.shape[2], x_img.shape[3]
    x_hwc = jnp.transpose(x_img[0], (1, 2, 0)).astype(jnp.float32)    # (H, W, 1)

    vmem = pl.BlockSpec(memory_space=pltpu.MemorySpace.VMEM)
    out_hwc = pl.pallas_call(
        dyprox_kernel,
        out_shape=jax.ShapeDtypeStruct((H, W, 1), jnp.float32),
        in_specs=[vmem] * 7,
        out_specs=vmem,
        scratch_shapes=[
            pltpu.VMEM((H + 2, W + 2, C_FEAT), jnp.float32),          # ping padded buffer
            pltpu.VMEM((H + 2, W + 2, C_FEAT), jnp.float32),          # pong padded buffer
            pltpu.VMEM((H, W, 9 * C_FEAT), jnp.float32),              # im2col scratch
        ],
        # Explicit VMEM budget. Scratch is ~0.9 MiB at 16x16; for large images this
        # kernel should be spatially tiled with a 1-row halo and a ("parallel",) grid
        # axis (2 TCs on v7x) — a single invocation is right at toy size.
        compiler_params=pltpu.CompilerParams(vmem_limit_bytes=32 * 1024 * 1024),
    )(x_hwc, w1, w2, w3, w4, w5, eb)

    return jnp.transpose(out_hwc, (2, 0, 1))[None]                    # NCHW (1, 1, H, W)


def init_params(key):
    """Deterministic parameter init matching the PyTorch module's layer shapes."""
    def xavier_normal(k, out_f, in_f):
        std = (2.0 / (in_f + out_f)) ** 0.5
        return std * jax.random.normal(k, (out_f, in_f), jnp.float32)

    def default_linear(k, out_f, in_f):
        kw, kb = jax.random.split(k)
        bound = 1.0 / (in_f ** 0.5)
        w = jax.random.uniform(kw, (out_f, in_f), jnp.float32, -bound, bound)
        b = jax.random.uniform(kb, (out_f,), jnp.float32, -bound, bound)
        return w, b

    layers = {
        "fc1": (576, 1, "xavier"), "fc2": (36864, 1, "xavier"),
        "fc3": (36864, 1, "xavier"), "fc4": (36864, 1, "xavier"),
        "fc5": (576, 1, "xavier"),
        "eta1": (64, 1, "default"), "eta2": (64, 1, "default"),
        "eta3": (64, 1, "default"), "eta4": (64, 1, "default"),
        "beta1": (64, 1, "default"), "beta2": (64, 1, "default"),
        "beta3": (64, 1, "default"), "beta4": (64, 1, "default"),
        "eta11": (64, 64, "default"), "eta21": (64, 64, "default"),
        "eta31": (64, 64, "default"), "eta41": (64, 64, "default"),
        "beta11": (64, 64, "default"), "beta21": (64, 64, "default"),
        "beta31": (64, 64, "default"), "beta41": (64, 64, "default"),
    }
    params = {}
    keys = jax.random.split(key, len(layers))
    for k, (name, (out_f, in_f, kind)) in zip(keys, layers.items()):
        if kind == "xavier":
            w = xavier_normal(k, out_f, in_f)
            b = jnp.zeros((out_f,), jnp.float32)
        else:
            w, b = default_linear(k, out_f, in_f)
        params[name] = (w, b)
    return params


if __name__ == "__main__":
    root = jax.random.PRNGKey(0)
    kp, kparam, kimg = jax.random.split(root, 3)

    params = init_params(kp)
    x_param = jax.random.uniform(kparam, (1, 1), jnp.float32, 0.1, 1.0)
    x_img = jax.random.normal(kimg, (1, 1, 16, 16), jnp.float32)

    out = dyproxnet_forward(params, x_param, x_img)
    out = jax.block_until_ready(out)
    assert out.shape == (1, 1, 16, 16) and out.dtype == jnp.float32
    print("KERNEL_OK")
</pallas_src>

<mosaic_0001>
module attributes {stable_mosaic.version = 11 : i64} {
  func.func @dyprox_kernel(%arg0: memref<16x16x1xf32, #tpu.memory_space<vmem>>, %arg1: memref<9x64xf32, #tpu.memory_space<vmem>>, %arg2: memref<576x64xf32, #tpu.memory_space<vmem>>, %arg3: memref<576x64xf32, #tpu.memory_space<vmem>>, %arg4: memref<576x64xf32, #tpu.memory_space<vmem>>, %arg5: memref<9x64xf32, #tpu.memory_space<vmem>>, %arg6: memref<8x64xf32, #tpu.memory_space<vmem>>, %arg7: memref<16x16x1xf32, #tpu.memory_space<vmem>>, %arg8: memref<18x18x64xf32, #tpu.memory_space<vmem>>, %arg9: memref<18x18x64xf32, #tpu.memory_space<vmem>>, %arg10: memref<16x16x576xf32, #tpu.memory_space<vmem>>) attributes {dimension_semantics = [], scalar_prefetch = 0 : i64, scratch_operands = 3 : i64, tpu.core_type = #tpu.core_type<tc>} {
    %cst = arith.constant 0.000000e+00 : f32
    %0 = vector.broadcast %cst : f32 to vector<1x18x64xf32>
    %c0 = arith.constant 0 : index
    %c0_0 = arith.constant 0 : index
    %c0_1 = arith.constant 0 : index
    %1 = vector.load %arg8[%c0, %c0_0, %c0_1] : memref<18x18x64xf32, #tpu.memory_space<vmem>>, vector<1x18x64xf32>
    tpu.vector_store %arg8[%c0, %c0_0, %c0_1], %0 {strides = array<i32>} : memref<18x18x64xf32, #tpu.memory_space<vmem>>, vector<1x18x64xf32>,
    %cst_2 = arith.constant 0.000000e+00 : f32
    %2 = vector.broadcast %cst_2 : f32 to vector<1x18x64xf32>
    %c17 = arith.constant 17 : index
    %c0_3 = arith.constant 0 : index
    %c0_4 = arith.constant 0 : index
    %3 = vector.load %arg8[%c17, %c0_3, %c0_4] : memref<18x18x64xf32, #tpu.memory_space<vmem>>, vector<1x18x64xf32>
    tpu.vector_store %arg8[%c17, %c0_3, %c0_4], %2 {strides = array<i32>} : memref<18x18x64xf32, #tpu.memory_space<vmem>>, vector<1x18x64xf32>,
    %cst_5 = arith.constant 0.000000e+00 : f32
    %4 = vector.broadcast %cst_5 : f32 to vector<18x1x64xf32>
    %c0_6 = arith.constant 0 : index
    %c0_7 = arith.constant 0 : index
    %c0_8 = arith.constant 0 : index
    %5 = vector.load %arg8[%c0_6, %c0_7, %c0_8] : memref<18x18x64xf32, #tpu.memory_space<vmem>>, vector<18x1x64xf32>
    tpu.vector_store %arg8[%c0_6, %c0_7, %c0_8], %4 {strides = array<i32>} : memref<18x18x64xf32, #tpu.memory_space<vmem>>, vector<18x1x64xf32>,
    %cst_9 = arith.constant 0.000000e+00 : f32
    %6 = vector.broadcast %cst_9 : f32 to vector<18x1x64xf32>
    %c0_10 = arith.constant 0 : index
    %c17_11 = arith.constant 17 : index
    %c0_12 = arith.constant 0 : index
    %7 = vector.load %arg8[%c0_10, %c17_11, %c0_12] : memref<18x18x64xf32, #tpu.memory_space<vmem>>, vector<18x1x64xf32>
    tpu.vector_store %arg8[%c0_10, %c17_11, %c0_12], %6 {strides = array<i32>} : memref<18x18x64xf32, #tpu.memory_space<vmem>>, vector<18x1x64xf32>,
    %cst_13 = arith.constant 0.000000e+00 : f32
    %8 = vector.broadcast %cst_13 : f32 to vector<1x18x64xf32>
    %c0_14 = arith.constant 0 : index
    %c0_15 = arith.constant 0 : index
    %c0_16 = arith.constant 0 : index
    %9 = vector.load %arg9[%c0_14, %c0_15, %c0_16] : memref<18x18x64xf32, #tpu.memory_space<vmem>>, vector<1x18x64xf32>
    tpu.vector_store %arg9[%c0_14, %c0_15, %c0_16], %8 {strides = array<i32>} : memref<18x18x64xf32, #tpu.memory_space<vmem>>, vector<1x18x64xf32>,
    %cst_17 = arith.constant 0.000000e+00 : f32
    %10 = vector.broadcast %cst_17 : f32 to vector<1x18x64xf32>
    %c17_18 = arith.constant 17 : index
    %c0_19 = arith.constant 0 : index
    %c0_20 = arith.constant 0 : index
    %11 = vector.load %arg9[%c17_18, %c0_19, %c0_20] : memref<18x18x64xf32, #tpu.memory_space<vmem>>, vector<1x18x64xf32>
    tpu.vector_store %arg9[%c17_18, %c0_19, %c0_20], %10 {strides = array<i32>} : memref<18x18x64xf32, #tpu.memory_space<vmem>>, vector<1x18x64xf32>,
    %cst_21 = arith.constant 0.000000e+00 : f32
    %12 = vector.broadcast %cst_21 : f32 to vector<18x1x64xf32>
    %c0_22 = arith.constant 0 : index
    %c0_23 = arith.constant 0 : index
    %c0_24 = arith.constant 0 : index
    %13 = vector.load %arg9[%c0_22, %c0_23, %c0_24] : memref<18x18x64xf32, #tpu.memory_space<vmem>>, vector<18x1x64xf32>
    tpu.vector_store %arg9[%c0_22, %c0_23, %c0_24], %12 {strides = array<i32>} : memref<18x18x64xf32, #tpu.memory_space<vmem>>, vector<18x1x64xf32>,
    %cst_25 = arith.constant 0.000000e+00 : f32
    %14 = vector.broadcast %cst_25 : f32 to vector<18x1x64xf32>
    %c0_26 = arith.constant 0 : index
    %c17_27 = arith.constant 17 : index
    %c0_28 = arith.constant 0 : index
    %15 = vector.load %arg9[%c0_26, %c17_27, %c0_28] : memref<18x18x64xf32, #tpu.memory_space<vmem>>, vector<18x1x64xf32>
    tpu.vector_store %arg9[%c0_26, %c17_27, %c0_28], %14 {strides = array<i32>} : memref<18x18x64xf32, #tpu.memory_space<vmem>>, vector<18x1x64xf32>,
    %c0_29 = arith.constant 0 : index
    %c0_30 = arith.constant 0 : index
    %16 = vector.load %arg6[%c0_29, %c0_30] : memref<8x64xf32, #tpu.memory_space<vmem>>, vector<8x64xf32>
    %c0_31 = arith.constant 0 : index
    %c0_32 = arith.constant 0 : index
    %c0_33 = arith.constant 0 : index
    %17 = vector.load %arg0[%c0_31, %c0_32, %c0_33] : memref<16x16x1xf32, #tpu.memory_space<vmem>>, vector<16x16x1xf32>
    %c1 = arith.constant 1 : index
    %c1_34 = arith.constant 1 : index
    %c0_35 = arith.constant 0 : index
    %18 = vector.load %arg8[%c1, %c1_34, %c0_35] : memref<18x18x64xf32, #tpu.memory_space<vmem>>, vector<16x16x1xf32>
    tpu.vector_store %arg8[%c1, %c1_34, %c0_35], %17 {strides = array<i32>} : memref<18x18x64xf32, #tpu.memory_space<vmem>>, vector<16x16x1xf32>,
    %c0_36 = arith.constant 0 : index
    %c0_37 = arith.constant 0 : index
    %19 = vector.load %arg1[%c0_36, %c0_37] : memref<9x64xf32, #tpu.memory_space<vmem>>, vector<9x64xf32>
    %cst_38 = arith.constant 0.000000e+00 : f32
    %20 = vector.broadcast %cst_38 : f32 to vector<16x16x64xf32>
    %c0_39 = arith.constant 0 : index
    %c0_40 = arith.constant 0 : index
    %c0_41 = arith.constant 0 : index
    %21 = vector.load %arg8[%c0_39, %c0_40, %c0_41] : memref<18x18x64xf32, #tpu.memory_space<vmem>>, vector<16x16x1xf32>
    %22 = vector.extract_strided_slice %19 {offsets = [0, 0], sizes = [1, 64], strides = [1, 1]} : vector<9x64xf32> to vector<1x64xf32>
    %23 = vector.shape_cast %22 : vector<1x64xf32> to vector<1x1x64xf32>
    %24 = vector.broadcast %21 : vector<16x16x1xf32> to vector<16x16x64xf32>
    %25 = vector.broadcast %23 : vector<1x1x64xf32> to vector<16x16x64xf32>
    %26 = arith.mulf %24, %25 : vector<16x16x64xf32>
    %27 = arith.addf %20, %26 : vector<16x16x64xf32>
    %c0_42 = arith.constant 0 : index
    %c1_43 = arith.constant 1 : index
    %c0_44 = arith.constant 0 : index
    %28 = vector.load %arg8[%c0_42, %c1_43, %c0_44] : memref<18x18x64xf32, #tpu.memory_space<vmem>>, vector<16x16x1xf32>
    %29 = vector.extract_strided_slice %19 {offsets = [1, 0], sizes = [1, 64], strides = [1, 1]} : vector<9x64xf32> to vector<1x64xf32>
    %30 = vector.shape_cast %29 : vector<1x64xf32> to vector<1x1x64xf32>
    %31 = vector.broadcast %28 : vector<16x16x1xf32> to vector<16x16x64xf32>
    %32 = vector.broadcast %30 : vector<1x1x64xf32> to vector<16x16x64xf32>
    %33 = arith.mulf %31, %32 : vector<16x16x64xf32>
    %34 = arith.addf %27, %33 : vector<16x16x64xf32>
    %c0_45 = arith.constant 0 : index
    %c2 = arith.constant 2 : index
    %c0_46 = arith.constant 0 : index
    %35 = vector.load %arg8[%c0_45, %c2, %c0_46] : memref<18x18x64xf32, #tpu.memory_space<vmem>>, vector<16x16x1xf32>
    %36 = vector.extract_strided_slice %19 {offsets = [2, 0], sizes = [1, 64], strides = [1, 1]} : vector<9x64xf32> to vector<1x64xf32>
    %37 = vector.shape_cast %36 : vector<1x64xf32> to vector<1x1x64xf32>
    %38 = vector.broadcast %35 : vector<16x16x1xf32> to vector<16x16x64xf32>
    %39 = vector.broadcast %37 : vector<1x1x64xf32> to vector<16x16x64xf32>
    %40 = arith.mulf %38, %39 : vector<16x16x64xf32>
    %41 = arith.addf %34, %40 : vector<16x16x64xf32>
    %c1_47 = arith.constant 1 : index
    %c0_48 = arith.constant 0 : index
    %c0_49 = arith.constant 0 : index
    %42 = vector.load %arg8[%c1_47, %c0_48, %c0_49] : memref<18x18x64xf32, #tpu.memory_space<vmem>>, vector<16x16x1xf32>
    %43 = vector.extract_strided_slice %19 {offsets = [3, 0], sizes = [1, 64], strides = [1, 1]} : vector<9x64xf32> to vector<1x64xf32>
    %44 = vector.shape_cast %43 : vector<1x64xf32> to vector<1x1x64xf32>
    %45 = vector.broadcast %42 : vector<16x16x1xf32> to vector<16x16x64xf32>
    %46 = vector.broadcast %44 : vector<1x1x64xf32> to vector<16x16x64xf32>
    %47 = arith.mulf %45, %46 : vector<16x16x64xf32>
    %48 = arith.addf %41, %47 : vector<16x16x64xf32>
    %c1_50 = arith.constant 1 : index
    %c1_51 = arith.constant 1 : index
    %c0_52 = arith.constant 0 : index
    %49 = vector.load %arg8[%c1_50, %c1_51, %c0_52] : memref<18x18x64xf32, #tpu.memory_space<vmem>>, vector<16x16x1xf32>
    %50 = vector.extract_strided_slice %19 {offsets = [4, 0], sizes = [1, 64], strides = [1, 1]} : vector<9x64xf32> to vector<1x64xf32>
    %51 = vector.shape_cast %50 : vector<1x64xf32> to vector<1x1x64xf32>
    %52 = vector.broadcast %49 : vector<16x16x1xf32> to vector<16x16x64xf32>
    %53 = vector.broadcast %51 : vector<1x1x64xf32> to vector<16x16x64xf32>
    %54 = arith.mulf %52, %53 : vector<16x16x64xf32>
    %55 = arith.addf %48, %54 : vector<16x16x64xf32>
    %c1_53 = arith.constant 1 : index
    %c2_54 = arith.constant 2 : index
    %c0_55 = arith.constant 0 : index
    %56 = vector.load %arg8[%c1_53, %c2_54, %c0_55] : memref<18x18x64xf32, #tpu.memory_space<vmem>>, vector<16x16x1xf32>
    %57 = vector.extract_strided_slice %19 {offsets = [5, 0], sizes = [1, 64], strides = [1, 1]} : vector<9x64xf32> to vector<1x64xf32>
    %58 = vector.shape_cast %57 : vector<1x64xf32> to vector<1x1x64xf32>
    %59 = vector.broadcast %56 : vector<16x16x1xf32> to vector<16x16x64xf32>
    %60 = vector.broadcast %58 : vector<1x1x64xf32> to vector<16x16x64xf32>
    %61 = arith.mulf %59, %60 : vector<16x16x64xf32>
    %62 = arith.addf %55, %61 : vector<16x16x64xf32>
    %c2_56 = arith.constant 2 : index
    %c0_57 = arith.constant 0 : index
    %c0_58 = arith.constant 0 : index
    %63 = vector.load %arg8[%c2_56, %c0_57, %c0_58] : memref<18x18x64xf32, #tpu.memory_space<vmem>>, vector<16x16x1xf32>
    %64 = vector.extract_strided_slice %19 {offsets = [6, 0], sizes = [1, 64], strides = [1, 1]} : vector<9x64xf32> to vector<1x64xf32>
    %65 = vector.shape_cast %64 : vector<1x64xf32> to vector<1x1x64xf32>
    %66 = vector.broadcast %63 : vector<16x16x1xf32> to vector<16x16x64xf32>
    %67 = vector.broadcast %65 : vector<1x1x64xf32> to vector<16x16x64xf32>
    %68 = arith.mulf %66, %67 : vector<16x16x64xf32>
    %69 = arith.addf %62, %68 : vector<16x16x64xf32>
    %c2_59 = arith.constant 2 : index
    %c1_60 = arith.constant 1 : index
    %c0_61 = arith.constant 0 : index
    %70 = vector.load %arg8[%c2_59, %c1_60, %c0_61] : memref<18x18x64xf32, #tpu.memory_space<vmem>>, vector<16x16x1xf32>
    %71 = vector.extract_strided_slice %19 {offsets = [7, 0], sizes = [1, 64], strides = [1, 1]} : vector<9x64xf32> to vector<1x64xf32>
    %72 = vector.shape_cast %71 : vector<1x64xf32> to vector<1x1x64xf32>
    %73 = vector.broadcast %70 : vector<16x16x1xf32> to vector<16x16x64xf32>
    %74 = vector.broadcast %72 : vector<1x1x64xf32> to vector<16x16x64xf32>
    %75 = arith.mulf %73, %74 : vector<16x16x64xf32>
    %76 = arith.addf %69, %75 : vector<16x16x64xf32>
    %c2_62 = arith.constant 2 : index
    %c2_63 = arith.constant 2 : index
    %c0_64 = arith.constant 0 : index
    %77 = vector.load %arg8[%c2_62, %c2_63, %c0_64] : memref<18x18x64xf32, #tpu.memory_space<vmem>>, vector<16x16x1xf32>
    %78 = vector.extract_strided_slice %19 {offsets = [8, 0], sizes = [1, 64], strides = [1, 1]} : vector<9x64xf32> to vector<1x64xf32>
    %79 = vector.shape_cast %78 : vector<1x64xf32> to vector<1x1x64xf32>
    %80 = vector.broadcast %77 : vector<16x16x1xf32> to vector<16x16x64xf32>
    %81 = vector.broadcast %79 : vector<1x1x64xf32> to vector<16x16x64xf32>
    %82 = arith.mulf %80, %81 : vector<16x16x64xf32>
    %83 = arith.addf %76, %82 : vector<16x16x64xf32>
    %cst_65 = arith.constant dense<0.000000e+00> : vector<64xf32>
    %84 = vector.multi_reduction <add>, %83, %cst_65 [0, 1] : vector<16x16x64xf32> to vector<64xf32>
    %85 = vector.shape_cast %84 : vector<64xf32> to vector<1x1x64xf32>
    %86 = arith.mulf %83, %83 : vector<16x16x64xf32>
    %cst_66 = arith.constant dense<0.000000e+00> : vector<64xf32>
    %87 = vector.multi_reduction <add>, %86, %cst_66 [0, 1] : vector<16x16x64xf32> to vector<64xf32>
    %88 = vector.shape_cast %87 : vector<64xf32> to vector<1x1x64xf32>
    %cst_67 = arith.constant 3.906250e-03 : f32
    %89 = vector.broadcast %cst_67 : f32 to vector<1x1x64xf32>
    %90 = arith.mulf %85, %89 : vector<1x1x64xf32>
    %cst_68 = arith.constant 3.906250e-03 : f32
    %91 = vector.broadcast %cst_68 : f32 to vector<1x1x64xf32>
    %92 = arith.mulf %88, %91 : vector<1x1x64xf32>
    %93 = arith.mulf %90, %90 : vector<1x1x64xf32>
    %94 = arith.subf %92, %93 : vector<1x1x64xf32>
    %cst_69 = arith.constant 9.99999974E-6 : f32
    %95 = vector.broadcast %cst_69 : f32 to vector<1x1x64xf32>
    %96 = arith.addf %94, %95 : vector<1x1x64xf32>
    %97 = math.rsqrt %96 : vector<1x1x64xf32>
    %98 = vector.extract_strided_slice %16 {offsets = [0, 0], sizes = [1, 64], strides = [1, 1]} : vector<8x64xf32> to vector<1x64xf32>
    %99 = vector.shape_cast %98 : vector<1x64xf32> to vector<1x1x64xf32>
    %100 = vector.extract_strided_slice %16 {offsets = [4, 0], sizes = [1, 64], strides = [1, 1]} : vector<8x64xf32> to vector<1x64xf32>
    %101 = vector.shape_cast %100 : vector<1x64xf32> to vector<1x1x64xf32>
    %102 = arith.mulf %99, %97 : vector<1x1x64xf32>
    %103 = arith.mulf %90, %102 : vector<1x1x64xf32>
    %104 = arith.subf %101, %103 : vector<1x1x64xf32>
    %105 = vector.broadcast %102 : vector<1x1x64xf32> to vector<16x16x64xf32>
    %106 = arith.mulf %83, %105 : vector<16x16x64xf32>
    %107 = vector.broadcast %104 : vector<1x1x64xf32> to vector<16x16x64xf32>
    %108 = arith.addf %106, %107 : vector<16x16x64xf32>
    %cst_70 = arith.constant 0.000000e+00 : f32
    %109 = vector.broadcast %cst_70 : f32 to vector<16x16x64xf32>
    %110 = arith.maximumf %108, %109 : vector<16x16x64xf32>
    %c1_71 = arith.constant 1 : index
    %c1_72 = arith.constant 1 : index
    %c0_73 = arith.constant 0 : index
    %111 = vector.load %arg9[%c1_71, %c1_72, %c0_73] : memref<18x18x64xf32, #tpu.memory_space<vmem>>, vector<16x16x64xf32>
    tpu.vector_store %arg9[%c1_71, %c1_72, %c0_73], %110 {strides = array<i32>} : memref<18x18x64xf32, #tpu.memory_space<vmem>>, vector<16x16x64xf32>,
    %c0_74 = arith.constant 0 : index
    %c0_75 = arith.constant 0 : index
    %c0_76 = arith.constant 0 : index
    %112 = vector.load %arg9[%c0_74, %c0_75, %c0_76] : memref<18x18x64xf32, #tpu.memory_space<vmem>>, vector<16x16x64xf32>
    %c0_77 = arith.constant 0 : index
    %c0_78 = arith.constant 0 : index
    %c0_79 = arith.constant 0 : index
    %113 = vector.load %arg10[%c0_77, %c0_78, %c0_79] : memref<16x16x576xf32, #tpu.memory_space<vmem>>, vector<16x16x64xf32>
    tpu.vector_store %arg10[%c0_77, %c0_78, %c0_79], %112 {strides = array<i32>} : memref<16x16x576xf32, #tpu.memory_space<vmem>>, vector<16x16x64xf32>,
    %c0_80 = arith.constant 0 : index
    %c1_81 = arith.constant 1 : index
    %c0_82 = arith.constant 0 : index
    %114 = vector.load %arg9[%c0_80, %c1_81, %c0_82] : memref<18x18x64xf32, #tpu.memory_space<vmem>>, vector<16x16x64xf32>
    %c0_83 = arith.constant 0 : index
    %c0_84 = arith.constant 0 : index
    %c64 = arith.constant 64 : index
    %115 = vector.load %arg10[%c0_83, %c0_84, %c64] : memref<16x16x576xf32, #tpu.memory_space<vmem>>, vector<16x16x64xf32>
    tpu.vector_store %arg10[%c0_83, %c0_84, %c64], %114 {strides = array<i32>} : memref<16x16x576xf32, #tpu.memory_space<vmem>>, vector<16x16x64xf32>,
    %c0_85 = arith.constant 0 : index
    %c2_86 = arith.constant 2 : index
    %c0_87 = arith.constant 0 : index
    %116 = vector.load %arg9[%c0_85, %c2_86, %c0_87] : memref<18x18x64xf32, #tpu.memory_space<vmem>>, vector<16x16x64xf32>
    %c0_88 = arith.constant 0 : index
    %c0_89 = arith.constant 0 : index
    %c128 = arith.constant 128 : index
    %117 = vector.load %arg10[%c0_88, %c0_89, %c128] : memref<16x16x576xf32, #tpu.memory_space<vmem>>, vector<16x16x64xf32>
    tpu.vector_store %arg10[%c0_88, %c0_89, %c128], %116 {strides = array<i32>} : memref<16x16x576xf32, #tpu.memory_space<vmem>>, vector<16x16x64xf32>,
    %c1_90 = arith.constant 1 : index
    %c0_91 = arith.constant 0 : index
    %c0_92 = arith.constant 0 : index
    %118 = vector.load %arg9[%c1_90, %c0_91, %c0_92] : memref<18x18x64xf32, #tpu.memory_space<vmem>>, vector<16x16x64xf32>
    %c0_93 = arith.constant 0 : index
    %c0_94 = arith.constant 0 : index
    %c192 = arith.constant 192 : index
    %119 = vector.load %arg10[%c0_93, %c0_94, %c192] : memref<16x16x576xf32, #tpu.memory_space<vmem>>, vector<16x16x64xf32>
    tpu.vector_store %arg10[%c0_93, %c0_94, %c192], %118 {strides = array<i32>} : memref<16x16x576xf32, #tpu.memory_space<vmem>>, vector<16x16x64xf32>,
    %c1_95 = arith.constant 1 : index
    %c1_96 = arith.constant 1 : index
    %c0_97 = arith.constant 0 : index
    %120 = vector.load %arg9[%c1_95, %c1_96, %c0_97] : memref<18x18x64xf32, #tpu.memory_space<vmem>>, vector<16x16x64xf32>
    %c0_98 = arith.constant 0 : index
    %c0_99 = arith.constant 0 : index
    %c256 = arith.constant 256 : index
    %121 = vector.load %arg10[%c0_98, %c0_99, %c256] : memref<16x16x576xf32, #tpu.memory_space<vmem>>, vector<16x16x64xf32>
    tpu.vector_store %arg10[%c0_98, %c0_99, %c256], %120 {strides = array<i32>} : memref<16x16x576xf32, #tpu.memory_space<vmem>>, vector<16x16x64xf32>,
    %c1_100 = arith.constant 1 : index
    %c2_101 = arith.constant 2 : index
    %c0_102 = arith.constant 0 : index
    %122 = vector.load %arg9[%c1_100, %c2_101, %c0_102] : memref<18x18x64xf32, #tpu.memory_space<vmem>>, vector<16x16x64xf32>
    %c0_103 = arith.constant 0 : index
    %c0_104 = arith.constant 0 : index
    %c320 = arith.constant 320 : index
    %123 = vector.load %arg10[%c0_103, %c0_104, %c320] : memref<16x16x576xf32, #tpu.memory_space<vmem>>, vector<16x16x64xf32>
    tpu.vector_store %arg10[%c0_103, %c0_104, %c320], %122 {strides = array<i32>} : memref<16x16x576xf32, #tpu.memory_space<vmem>>, vector<16x16x64xf32>,
    %c2_105 = arith.constant 2 : index
    %c0_106 = arith.constant 0 : index
    %c0_107 = arith.constant 0 : index
    %124 = vector.load %arg9[%c2_105, %c0_106, %c0_107] : memref<18x18x64xf32, #tpu.memory_space<vmem>>, vector<16x16x64xf32>
    %c0_108 = arith.constant 0 : index
    %c0_109 = arith.constant 0 : index
    %c384 = arith.constant 384 : index
    %125 = vector.load %arg10[%c0_108, %c0_109, %c384] : memref<16x16x576xf32, #tpu.memory_space<vmem>>, vector<16x16x64xf32>
    tpu.vector_store %arg10[%c0_108, %c0_109, %c384], %124 {strides = array<i32>} : memref<16x16x576xf32, #tpu.memory_space<vmem>>, vector<16x16x64xf32>,
    %c2_110 = arith.constant 2 : index
    %c1_111 = arith.constant 1 : index
    %c0_112 = arith.constant 0 : index
    %126 = vector.load %arg9[%c2_110, %c1_111, %c0_112] : memref<18x18x64xf32, #tpu.memory_space<vmem>>, vector<16x16x64xf32>
    %c0_113 = arith.constant 0 : index
    %c0_114 = arith.constant 0 : index
    %c448 = arith.constant 448 : index
    %127 = vector.load %arg10[%c0_113, %c0_114, %c448] : memref<16x16x576xf32, #tpu.memory_space<vmem>>, vector<16x16x64xf32>
    tpu.vector_store %arg10[%c0_113, %c0_114, %c448], %126 {strides = array<i32>} : memref<16x16x576xf32, #tpu.memory_space<vmem>>, vector<16x16x64xf32>,
    %c2_115 = arith.constant 2 : index
    %c2_116 = arith.constant 2 : index
    %c0_117 = arith.constant 0 : index
    %128 = vector.load %arg9[%c2_115, %c2_116, %c0_117] : memref<18x18x64xf32, #tpu.memory_space<vmem>>, vector<16x16x64xf32>
    %c0_118 = arith.constant 0 : index
    %c0_119 = arith.constant 0 : index
    %c512 = arith.constant 512 : index
    %129 = vector.load %arg10[%c0_118, %c0_119, %c512] : memref<16x16x576xf32, #tpu.memory_space<vmem>>, vector<16x16x64xf32>
    tpu.vector_store %arg10[%c0_118, %c0_119, %c512], %128 {strides = array<i32>} : memref<16x16x576xf32, #tpu.memory_space<vmem>>, vector<16x16x64xf32>,
    %c0_120 = arith.constant 0 : index
    %c0_121 = arith.constant 0 : index
    %c0_122 = arith.constant 0 : index
    %130 = vector.load %arg10[%c0_120, %c0_121, %c0_122] : memref<16x16x576xf32, #tpu.memory_space<vmem>>, vector<16x16x576xf32>
    %131 = vector.shape_cast %130 : vector<16x16x576xf32> to vector<256x576xf32>
    %c0_123 = arith.constant 0 : index
    %c0_124 = arith.constant 0 : index
    %132 = vector.load %arg2[%c0_123, %c0_124] : memref<576x64xf32, #tpu.memory_space<vmem>>, vector<576x64xf32>
    %cst_125 = arith.constant dense<0.000000e+00> : vector<256x64xf32>
    %133 = tpu.matmul %131, %132, %cst_125 {dimension_numbers = #tpu.dot_dimension_numbers<[1], [0], [0], [1], [0, 0, 1, 1], [], []>} : vector<256x576xf32>, vector<576x64xf32>, vector<256x64xf32> -> vector<256x64xf32>
    %134 = vector.shape_cast %133 : vector<256x64xf32> to vector<16x16x64xf32>
    %cst_126 = arith.constant dense<0.000000e+00> : vector<64xf32>
    %135 = vector.multi_reduction <add>, %134, %cst_126 [0, 1] : vector<16x16x64xf32> to vector<64xf32>
    %136 = vector.shape_cast %135 : vector<64xf32> to vector<1x1x64xf32>
    %137 = arith.mulf %134, %134 : vector<16x16x64xf32>
    %cst_127 = arith.constant dense<0.000000e+00> : vector<64xf32>
    %138 = vector.multi_reduction <add>, %137, %cst_127 [0, 1] : vector<16x16x64xf32> to vector<64xf32>
    %139 = vector.shape_cast %138 : vector<64xf32> to vector<1x1x64xf32>
    %cst_128 = arith.constant 3.906250e-03 : f32
    %140 = vector.broadcast %cst_128 : f32 to vector<1x1x64xf32>
    %141 = arith.mulf %136, %140 : vector<1x1x64xf32>
    %cst_129 = arith.constant 3.906250e-03 : f32
    %142 = vector.broadcast %cst_129 : f32 to vector<1x1x64xf32>
    %143 = arith.mulf %139, %142 : vector<1x1x64xf32>
    %144 = arith.mulf %141, %141 : vector<1x1x64xf32>
    %145 = arith.subf %143, %144 : vector<1x1x64xf32>
    %cst_130 = arith.constant 9.99999974E-6 : f32
    %146 = vector.broadcast %cst_130 : f32 to vector<1x1x64xf32>
    %147 = arith.addf %145, %146 : vector<1x1x64xf32>
    %148 = math.rsqrt %147 : vector<1x1x64xf32>
    %149 = vector.extract_strided_slice %16 {offsets = [1, 0], sizes = [1, 64], strides = [1, 1]} : vector<8x64xf32> to vector<1x64xf32>
    %150 = vector.shape_cast %149 : vector<1x64xf32> to vector<1x1x64xf32>
    %151 = vector.extract_strided_slice %16 {offsets = [5, 0], sizes = [1, 64], strides = [1, 1]} : vector<8x64xf32> to vector<1x64xf32>
    %152 = vector.shape_cast %151 : vector<1x64xf32> to vector<1x1x64xf32>
    %153 = arith.mulf %150, %148 : vector<1x1x64xf32>
    %154 = arith.mulf %141, %153 : vector<1x1x64xf32>
    %155 = arith.subf %152, %154 : vector<1x1x64xf32>
    %156 = vector.broadcast %153 : vector<1x1x64xf32> to vector<16x16x64xf32>
    %157 = arith.mulf %134, %156 : vector<16x16x64xf32>
    %158 = vector.broadcast %155 : vector<1x1x64xf32> to vector<16x16x64xf32>
    %159 = arith.addf %157, %158 : vector<16x16x64xf32>
    %cst_131 = arith.constant 0.000000e+00 : f32
    %160 = vector.broadcast %cst_131 : f32 to vector<16x16x64xf32>
    %161 = arith.maximumf %159, %160 : vector<16x16x64xf32>
    %c1_132 = arith.constant 1 : index
    %c1_133 = arith.constant 1 : index
    %c0_134 = arith.constant 0 : index
    %162 = vector.load %arg8[%c1_132, %c1_133, %c0_134] : memref<18x18x64xf32, #tpu.memory_space<vmem>>, vector<16x16x64xf32>
    tpu.vector_store %arg8[%c1_132, %c1_133, %c0_134], %161 {strides = array<i32>} : memref<18x18x64xf32, #tpu.memory_space<vmem>>, vector<16x16x64xf32>,
    %c0_135 = arith.constant 0 : index
    %c0_136 = arith.constant 0 : index
    %c0_137 = arith.constant 0 : index
    %163 = vector.load %arg8[%c0_135, %c0_136, %c0_137] : memref<18x18x64xf32, #tpu.memory_space<vmem>>, vector<16x16x64xf32>
    %c0_138 = arith.constant 0 : index
    %c0_139 = arith.constant 0 : index
    %c0_140 = arith.constant 0 : index
    %164 = vector.load %arg10[%c0_138, %c0_139, %c0_140] : memref<16x16x576xf32, #tpu.memory_space<vmem>>, vector<16x16x64xf32>
    tpu.vector_store %arg10[%c0_138, %c0_139, %c0_140], %163 {strides = array<i32>} : memref<16x16x576xf32, #tpu.memory_space<vmem>>, vector<16x16x64xf32>,
    %c0_141 = arith.constant 0 : index
    %c1_142 = arith.constant 1 : index
    %c0_143 = arith.constant 0 : index
    %165 = vector.load %arg8[%c0_141, %c1_142, %c0_143] : memref<18x18x64xf32, #tpu.memory_space<vmem>>, vector<16x16x64xf32>
    %c0_144 = arith.constant 0 : index
    %c0_145 = arith.constant 0 : index
    %c64_146 = arith.constant 64 : index
    %166 = vector.load %arg10[%c0_144, %c0_145, %c64_146] : memref<16x16x576xf32, #tpu.memory_space<vmem>>, vector<16x16x64xf32>
    tpu.vector_store %arg10[%c0_144, %c0_145, %c64_146], %165 {strides = array<i32>} : memref<16x16x576xf32, #tpu.memory_space<vmem>>, vector<16x16x64xf32>,
    %c0_147 = arith.constant 0 : index
    %c2_148 = arith.constant 2 : index
    %c0_149 = arith.constant 0 : index
    %167 = vector.load %arg8[%c0_147, %c2_148, %c0_149] : memref<18x18x64xf32, #tpu.memory_space<vmem>>, vector<16x16x64xf32>
    %c0_150 = arith.constant 0 : index
    %c0_151 = arith.constant 0 : index
    %c128_152 = arith.constant 128 : index
    %168 = vector.load %arg10[%c0_150, %c0_151, %c128_152] : memref<16x16x576xf32, #tpu.memory_space<vmem>>, vector<16x16x64xf32>
    tpu.vector_store %arg10[%c0_150, %c0_151, %c128_152], %167 {strides = array<i32>} : memref<16x16x576xf32, #tpu.memory_space<vmem>>, vector<16x16x64xf32>,
    %c1_153 = arith.constant 1 : index
    %c0_154 = arith.constant 0 : index
    %c0_155 = arith.constant 0 : index
    %169 = vector.load %arg8[%c1_153, %c0_154, %c0_155] : memref<18x18x64xf32, #tpu.memory_space<vmem>>, vector<16x16x64xf32>
    %c0_156 = arith.constant 0 : index
    %c0_157 = arith.constant 0 : index
    %c192_158 = arith.constant 192 : index
    %170 = vector.load %arg10[%c0_156, %c0_157, %c192_158] : memref<16x16x576xf32, #tpu.memory_space<vmem>>, vector<16x16x64xf32>
    tpu.vector_store %arg10[%c0_156, %c0_157, %c192_158], %169 {strides = array<i32>} : memref<16x16x576xf32, #tpu.memory_space<vmem>>, vector<16x16x64xf32>,
    %c1_159 = arith.constant 1 : index
    %c1_160 = arith.constant 1 : index
    %c0_161 = arith.constant 0 : index
    %171 = vector.load %arg8[%c1_159, %c1_160, %c0_161] : memref<18x18x64xf32, #tpu.memory_space<vmem>>, vector<16x16x64xf32>
    %c0_162 = arith.constant 0 : index
    %c0_163 = arith.constant 0 : index
    %c256_164 = arith.constant 256 : index
    %172 = vector.load %arg10[%c0_162, %c0_163, %c256_164] : memref<16x16x576xf32, #tpu.memory_space<vmem>>, vector<16x16x64xf32>
    tpu.vector_store %arg10[%c0_162, %c0_163, %c256_164], %171 {strides = array<i32>} : memref<16x16x576xf32, #tpu.memory_space<vmem>>, vector<16x16x64xf32>,
    %c1_165 = arith.constant 1 : index
    %c2_166 = arith.constant 2 : index
    %c0_167 = arith.constant 0 : index
    %173 = vector.load %arg8[%c1_165, %c2_166, %c0_167] : memref<18x18x64xf32, #tpu.memory_space<vmem>>, vector<16x16x64xf32>
    %c0_168 = arith.constant 0 : index
    %c0_169 = arith.constant 0 : index
    %c320_170 = arith.constant 320 : index
    %174 = vector.load %arg10[%c0_168, %c0_169, %c320_170] : memref<16x16x576xf32, #tpu.memory_space<vmem>>, vector<16x16x64xf32>
    tpu.vector_store %arg10[%c0_168, %c0_169, %c320_170], %173 {strides = array<i32>} : memref<16x16x576xf32, #tpu.memory_space<vmem>>, vector<16x16x64xf32>,
    %c2_171 = arith.constant 2 : index
    %c0_172 = arith.constant 0 : index
    %c0_173 = arith.constant 0 : index
    %175 = vector.load %arg8[%c2_171, %c0_172, %c0_173] : memref<18x18x64xf32, #tpu.memory_space<vmem>>, vector<16x16x64xf32>
    %c0_174 = arith.constant 0 : index
    %c0_175 = arith.constant 0 : index
    %c384_176 = arith.constant 384 : index
    %176 = vector.load %arg10[%c0_174, %c0_175, %c384_176] : memref<16x16x576xf32, #tpu.memory_space<vmem>>, vector<16x16x64xf32>
    tpu.vector_store %arg10[%c0_174, %c0_175, %c384_176], %175 {strides = array<i32>} : memref<16x16x576xf32, #tpu.memory_space<vmem>>, vector<16x16x64xf32>,
    %c2_177 = arith.constant 2 : index
    %c1_178 = arith.constant 1 : index
    %c0_179 = arith.constant 0 : index
    %177 = vector.load %arg8[%c2_177, %c1_178, %c0_179] : memref<18x18x64xf32, #tpu.memory_space<vmem>>, vector<16x16x64xf32>
    %c0_180 = arith.constant 0 : index
    %c0_181 = arith.constant 0 : index
    %c448_182 = arith.constant 448 : index
    %178 = vector.load %arg10[%c0_180, %c0_181, %c448_182] : memref<16x16x576xf32, #tpu.memory_space<vmem>>, vector<16x16x64xf32>
    tpu.vector_store %arg10[%c0_180, %c0_181, %c448_182], %177 {strides = array<i32>} : memref<16x16x576xf32, #tpu.memory_space<vmem>>, vector<16x16x64xf32>,
    %c2_183 = arith.constant 2 : index
    %c2_184 = arith.constant 2 : index
    %c0_185 = arith.constant 0 : index
    %179 = vector.load %arg8[%c2_183, %c2_184, %c0_185] : memref<18x18x64xf32, #tpu.memory_space<vmem>>, vector<16x16x64xf32>
    %c0_186 = arith.constant 0 : index
    %c0_187 = arith.constant 0 : index
    %c512_188 = arith.constant 512 : index
    %180 = vector.load %arg10[%c0_186, %c0_187, %c512_188] : memref<16x16x576xf32, #tpu.memory_space<vmem>>, vector<16x16x64xf32>
    tpu.vector_store %arg10[%c0_186, %c0_187, %c512_188], %179 {strides = array<i32>} : memref<16x16x576xf32, #tpu.memory_space<vmem>>, vector<16x16x64xf32>,
    %c0_189 = arith.constant 0 : index
    %c0_190 = arith.constant 0 : index
    %c0_191 = arith.constant 0 : index
    %181 = vector.load %arg10[%c0_189, %c0_190, %c0_191] : memref<16x16x576xf32, #tpu.memory_space<vmem>>, vector<16x16x576xf32>
    %182 = vector.shape_cast %181 : vector<16x16x576xf32> to vector<256x576xf32>
    %c0_192 = arith.constant 0 : index
    %c0_193 = arith.constant 0 : index
    %183 = vector.load %arg3[%c0_192, %c0_193] : memref<576x64xf32, #tpu.memory_space<vmem>>, vector<576x64xf32>
    %cst_194 = arith.constant dense<0.000000e+00> : vector<256x64xf32>
    %184 = tpu.matmul %182, %183, %cst_194 {dimension_numbers = #tpu.dot_dimension_numbers<[1], [0], [0], [1], [0, 0, 1, 1], [], []>} : vector<256x576xf32>, vector<576x64xf32>, vector<256x64xf32> -> vector<256x64xf32>
    %185 = vector.shape_cast %184 : vector<256x64xf32> to vector<16x16x64xf32>
    %cst_195 = arith.constant dense<0.000000e+00> : vector<64xf32>
    %186 = vector.multi_reduction <add>, %185, %cst_195 [0, 1] : vector<16x16x64xf32> to vector<64xf32>
    %187 = vector.shape_cast %186 : vector<64xf32> to vector<1x1x64xf32>
    %188 = arith.mulf %185, %185 : vector<16x16x64xf32>
    %cst_196 = arith.constant dense<0.000000e+00> : vector<64xf32>
    %189 = vector.multi_reduction <add>, %188, %cst_196 [0, 1] : vector<16x16x64xf32> to vector<64xf32>
    %190 = vector.shape_cast %189 : vector<64xf32> to vector<1x1x64xf32>
    %cst_197 = arith.constant 3.906250e-03 : f32
    %191 = vector.broadcast %cst_197 : f32 to vector<1x1x64xf32>
    %192 = arith.mulf %187, %191 : vector<1x1x64xf32>
    %cst_198 = arith.constant 3.906250e-03 : f32
    %193 = vector.broadcast %cst_198 : f32 to vector<1x1x64xf32>
    %194 = arith.mulf %190, %193 : vector<1x1x64xf32>
    %195 = arith.mulf %192, %192 : vector<1x1x64xf32>
    %196 = arith.subf %194, %195 : vector<1x1x64xf32>
    %cst_199 = arith.constant 9.99999974E-6 : f32
    %197 = vector.broadcast %cst_199 : f32 to vector<1x1x64xf32>
    %198 = arith.addf %196, %197 : vector<1x1x64xf32>
    %199 = math.rsqrt %198 : vector<1x1x64xf32>
    %200 = vector.extract_strided_slice %16 {offsets = [2, 0], sizes = [1, 64], strides = [1, 1]} : vector<8x64xf32> to vector<1x64xf32>
    %201 = vector.shape_cast %200 : vector<1x64xf32> to vector<1x1x64xf32>
    %202 = vector.extract_strided_slice %16 {offsets = [6, 0], sizes = [1, 64], strides = [1, 1]} : vector<8x64xf32> to vector<1x64xf32>
    %203 = vector.shape_cast %202 : vector<1x64xf32> to vector<1x1x64xf32>
    %204 = arith.mulf %201, %199 : vector<1x1x64xf32>
    %205 = arith.mulf %192, %204 : vector<1x1x64xf32>
    %206 = arith.subf %203, %205 : vector<1x1x64xf32>
    %207 = vector.broadcast %204 : vector<1x1x64xf32> to vector<16x16x64xf32>
    %208 = arith.mulf %185, %207 : vector<16x16x64xf32>
    %209 = vector.broadcast %206 : vector<1x1x64xf32> to vector<16x16x64xf32>
    %210 = arith.addf %208, %209 : vector<16x16x64xf32>
    %cst_200 = arith.constant 0.000000e+00 : f32
    %211 = vector.broadcast %cst_200 : f32 to vector<16x16x64xf32>
    %212 = arith.maximumf %210, %211 : vector<16x16x64xf32>
    %c1_201 = arith.constant 1 : index
    %c1_202 = arith.constant 1 : index
    %c0_203 = arith.constant 0 : index
    %213 = vector.load %arg9[%c1_201, %c1_202, %c0_203] : memref<18x18x64xf32, #tpu.memory_space<vmem>>, vector<16x16x64xf32>
    tpu.vector_store %arg9[%c1_201, %c1_202, %c0_203], %212 {strides = array<i32>} : memref<18x18x64xf32, #tpu.memory_space<vmem>>, vector<16x16x64xf32>,
    %c0_204 = arith.constant 0 : index
    %c0_205 = arith.constant 0 : index
    %c0_206 = arith.constant 0 : index
    %214 = vector.load %arg9[%c0_204, %c0_205, %c0_206] : memref<18x18x64xf32, #tpu.memory_space<vmem>>, vector<16x16x64xf32>
    %c0_207 = arith.constant 0 : index
    %c0_208 = arith.constant 0 : index
    %c0_209 = arith.constant 0 : index
    %215 = vector.load %arg10[%c0_207, %c0_208, %c0_209] : memref<16x16x576xf32, #tpu.memory_space<vmem>>, vector<16x16x64xf32>
    tpu.vector_store %arg10[%c0_207, %c0_208, %c0_209], %214 {strides = array<i32>} : memref<16x16x576xf32, #tpu.memory_space<vmem>>, vector<16x16x64xf32>,
    %c0_210 = arith.constant 0 : index
    %c1_211 = arith.constant 1 : index
    %c0_212 = arith.constant 0 : index
    %216 = vector.load %arg9[%c0_210, %c1_211, %c0_212] : memref<18x18x64xf32, #tpu.memory_space<vmem>>, vector<16x16x64xf32>
    %c0_213 = arith.constant 0 : index
    %c0_214 = arith.constant 0 : index
    %c64_215 = arith.constant 64 : index
    %217 = vector.load %arg10[%c0_213, %c0_214, %c64_215] : memref<16x16x576xf32, #tpu.memory_space<vmem>>, vector<16x16x64xf32>
    tpu.vector_store %arg10[%c0_213, %c0_214, %c64_215], %216 {strides = array<i32>} : memref<16x16x576xf32, #tpu.memory_space<vmem>>, vector<16x16x64xf32>,
    %c0_216 = arith.constant 0 : index
    %c2_217 = arith.constant 2 : index
    %c0_218 = arith.constant 0 : index
    %218 = vector.load %arg9[%c0_216, %c2_217, %c0_218] : memref<18x18x64xf32, #tpu.memory_space<vmem>>, vector<16x16x64xf32>
    %c0_219 = arith.constant 0 : index
    %c0_220 = arith.constant 0 : index
    %c128_221 = arith.constant 128 : index
    %219 = vector.load %arg10[%c0_219, %c0_220, %c128_221] : memref<16x16x576xf32, #tpu.memory_space<vmem>>, vector<16x16x64xf32>
    tpu.vector_store %arg10[%c0_219, %c0_220, %c128_221], %218 {strides = array<i32>} : memref<16x16x576xf32, #tpu.memory_space<vmem>>, vector<16x16x64xf32>,
    %c1_222 = arith.constant 1 : index
    %c0_223 = arith.constant 0 : index
    %c0_224 = arith.constant 0 : index
    %220 = vector.load %arg9[%c1_222, %c0_223, %c0_224] : memref<18x18x64xf32, #tpu.memory_space<vmem>>, vector<16x16x64xf32>
    %c0_225 = arith.constant 0 : index
    %c0_226 = arith.constant 0 : index
    %c192_227 = arith.constant 192 : index
    %221 = vector.load %arg10[%c0_225, %c0_226, %c192_227] : memref<16x16x576xf32, #tpu.memory_space<vmem>>, vector<16x16x64xf32>
    tpu.vector_store %arg10[%c0_225, %c0_226, %c192_227], %220 {strides = array<i32>} : memref<16x16x576xf32, #tpu.memory_space<vmem>>, vector<16x16x64xf32>,
    %c1_228 = arith.constant 1 : index
    %c1_229 = arith.constant 1 : index
    %c0_230 = arith.constant 0 : index
    %222 = vector.load %arg9[%c1_228, %c1_229, %c0_230] : memref<18x18x64xf32, #tpu.memory_space<vmem>>, vector<16x16x64xf32>
    %c0_231 = arith.constant 0 : index
    %c0_232 = arith.constant 0 : index
    %c256_233 = arith.constant 256 : index
    %223 = vector.load %arg10[%c0_231, %c0_232, %c256_233] : memref<16x16x576xf32, #tpu.memory_space<vmem>>, vector<16x16x64xf32>
    tpu.vector_store %arg10[%c0_231, %c0_232, %c256_233], %222 {strides = array<i32>} : memref<16x16x576xf32, #tpu.memory_space<vmem>>, vector<16x16x64xf32>,
    %c1_234 = arith.constant 1 : index
    %c2_235 = arith.constant 2 : index
    %c0_236 = arith.constant 0 : index
    %224 = vector.load %arg9[%c1_234, %c2_235, %c0_236] : memref<18x18x64xf32, #tpu.memory_space<vmem>>, vector<16x16x64xf32>
    %c0_237 = arith.constant 0 : index
    %c0_238 = arith.constant 0 : index
    %c320_239 = arith.constant 320 : index
    %225 = vector.load %arg10[%c0_237, %c0_238, %c320_239] : memref<16x16x576xf32, #tpu.memory_space<vmem>>, vector<16x16x64xf32>
    tpu.vector_store %arg10[%c0_237, %c0_238, %c320_239], %224 {strides = array<i32>} : memref<16x16x576xf32, #tpu.memory_space<vmem>>, vector<16x16x64xf32>,
    %c2_240 = arith.constant 2 : index
    %c0_241 = arith.constant 0 : index
    %c0_242 = arith.constant 0 : index
    %226 = vector.load %arg9[%c2_240, %c0_241, %c0_242] : memref<18x18x64xf32, #tpu.memory_space<vmem>>, vector<16x16x64xf32>
    %c0_243 = arith.constant 0 : index
    %c0_244 = arith.constant 0 : index
    %c384_245 = arith.constant 384 : index
    %227 = vector.load %arg10[%c0_243, %c0_244, %c384_245] : memref<16x16x576xf32, #tpu.memory_space<vmem>>, vector<16x16x64xf32>
    tpu.vector_store %arg10[%c0_243, %c0_244, %c384_245], %226 {strides = array<i32>} : memref<16x16x576xf32, #tpu.memory_space<vmem>>, vector<16x16x64xf32>,
    %c2_246 = arith.constant 2 : index
    %c1_247 = arith.constant 1 : index
    %c0_248 = arith.constant 0 : index
    %228 = vector.load %arg9[%c2_246, %c1_247, %c0_248] : memref<18x18x64xf32, #tpu.memory_space<vmem>>, vector<16x16x64xf32>
    %c0_249 = arith.constant 0 : index
    %c0_250 = arith.constant 0 : index
    %c448_251 = arith.constant 448 : index
    %229 = vector.load %arg10[%c0_249, %c0_250, %c448_251] : memref<16x16x576xf32, #tpu.memory_space<vmem>>, vector<16x16x64xf32>
    tpu.vector_store %arg10[%c0_249, %c0_250, %c448_251], %228 {strides = array<i32>} : memref<16x16x576xf32, #tpu.memory_space<vmem>>, vector<16x16x64xf32>,
    %c2_252 = arith.constant 2 : index
    %c2_253 = arith.constant 2 : index
    %c0_254 = arith.constant 0 : index
    %230 = vector.load %arg9[%c2_252, %c2_253, %c0_254] : memref<18x18x64xf32, #tpu.memory_space<vmem>>, vector<16x16x64xf32>
    %c0_255 = arith.constant 0 : index
    %c0_256 = arith.constant 0 : index
    %c512_257 = arith.constant 512 : index
    %231 = vector.load %arg10[%c0_255, %c0_256, %c512_257] : memref<16x16x576xf32, #tpu.memory_space<vmem>>, vector<16x16x64xf32>
    tpu.vector_store %arg10[%c0_255, %c0_256, %c512_257], %230 {strides = array<i32>} : memref<16x16x576xf32, #tpu.memory_space<vmem>>, vector<16x16x64xf32>,
    %c0_258 = arith.constant 0 : index
    %c0_259 = arith.constant 0 : index
    %c0_260 = arith.constant 0 : index
    %232 = vector.load %arg10[%c0_258, %c0_259, %c0_260] : memref<16x16x576xf32, #tpu.memory_space<vmem>>, vector<16x16x576xf32>
    %233 = vector.shape_cast %232 : vector<16x16x576xf32> to vector<256x576xf32>
    %c0_261 = arith.constant 0 : index
    %c0_262 = arith.constant 0 : index
    %234 = vector.load %arg4[%c0_261, %c0_262] : memref<576x64xf32, #tpu.memory_space<vmem>>, vector<576x64xf32>
    %cst_263 = arith.constant dense<0.000000e+00> : vector<256x64xf32>
    %235 = tpu.matmul %233, %234, %cst_263 {dimension_numbers = #tpu.dot_dimension_numbers<[1], [0], [0], [1], [0, 0, 1, 1], [], []>} : vector<256x576xf32>, vector<576x64xf32>, vector<256x64xf32> -> vector<256x64xf32>
    %236 = vector.shape_cast %235 : vector<256x64xf32> to vector<16x16x64xf32>
    %cst_264 = arith.constant dense<0.000000e+00> : vector<64xf32>
    %237 = vector.multi_reduction <add>, %236, %cst_264 [0, 1] : vector<16x16x64xf32> to vector<64xf32>
    %238 = vector.shape_cast %237 : vector<64xf32> to vector<1x1x64xf32>
    %239 = arith.mulf %236, %236 : vector<16x16x64xf32>
    %cst_265 = arith.constant dense<0.000000e+00> : vector<64xf32>
    %240 = vector.multi_reduction <add>, %239, %cst_265 [0, 1] : vector<16x16x64xf32> to vector<64xf32>
    %241 = vector.shape_cast %240 : vector<64xf32> to vector<1x1x64xf32>
    %cst_266 = arith.constant 3.906250e-03 : f32
    %242 = vector.broadcast %cst_266 : f32 to vector<1x1x64xf32>
    %243 = arith.mulf %238, %242 : vector<1x1x64xf32>
    %cst_267 = arith.constant 3.906250e-03 : f32
    %244 = vector.broadcast %cst_267 : f32 to vector<1x1x64xf32>
    %245 = arith.mulf %241, %244 : vector<1x1x64xf32>
    %246 = arith.mulf %243, %243 : vector<1x1x64xf32>
    %247 = arith.subf %245, %246 : vector<1x1x64xf32>
    %cst_268 = arith.constant 9.99999974E-6 : f32
    %248 = vector.broadcast %cst_268 : f32 to vector<1x1x64xf32>
    %249 = arith.addf %247, %248 : vector<1x1x64xf32>
    %250 = math.rsqrt %249 : vector<1x1x64xf32>
    %251 = vector.extract_strided_slice %16 {offsets = [3, 0], sizes = [1, 64], strides = [1, 1]} : vector<8x64xf32> to vector<1x64xf32>
    %252 = vector.shape_cast %251 : vector<1x64xf32> to vector<1x1x64xf32>
    %253 = vector.extract_strided_slice %16 {offsets = [7, 0], sizes = [1, 64], strides = [1, 1]} : vector<8x64xf32> to vector<1x64xf32>
    %254 = vector.shape_cast %253 : vector<1x64xf32> to vector<1x1x64xf32>
    %255 = arith.mulf %252, %250 : vector<1x1x64xf32>
    %256 = arith.mulf %243, %255 : vector<1x1x64xf32>
    %257 = arith.subf %254, %256 : vector<1x1x64xf32>
    %258 = vector.broadcast %255 : vector<1x1x64xf32> to vector<16x16x64xf32>
    %259 = arith.mulf %236, %258 : vector<16x16x64xf32>
    %260 = vector.broadcast %257 : vector<1x1x64xf32> to vector<16x16x64xf32>
    %261 = arith.addf %259, %260 : vector<16x16x64xf32>
    %cst_269 = arith.constant 0.000000e+00 : f32
    %262 = vector.broadcast %cst_269 : f32 to vector<16x16x64xf32>
    %263 = arith.maximumf %261, %262 : vector<16x16x64xf32>
    %c1_270 = arith.constant 1 : index
    %c1_271 = arith.constant 1 : index
    %c0_272 = arith.constant 0 : index
    %264 = vector.load %arg8[%c1_270, %c1_271, %c0_272] : memref<18x18x64xf32, #tpu.memory_space<vmem>>, vector<16x16x64xf32>
    tpu.vector_store %arg8[%c1_270, %c1_271, %c0_272], %263 {strides = array<i32>} : memref<18x18x64xf32, #tpu.memory_space<vmem>>, vector<16x16x64xf32>,
    %c0_273 = arith.constant 0 : index
    %c0_274 = arith.constant 0 : index
    %265 = vector.load %arg5[%c0_273, %c0_274] : memref<9x64xf32, #tpu.memory_space<vmem>>, vector<9x64xf32>
    %cst_275 = arith.constant 0.000000e+00 : f32
    %266 = vector.broadcast %cst_275 : f32 to vector<16x16x64xf32>
    %c0_276 = arith.constant 0 : index
    %c0_277 = arith.constant 0 : index
    %c0_278 = arith.constant 0 : index
    %267 = vector.load %arg8[%c0_276, %c0_277, %c0_278] : memref<18x18x64xf32, #tpu.memory_space<vmem>>, vector<16x16x64xf32>
    %268 = vector.extract_strided_slice %265 {offsets = [0, 0], sizes = [1, 64], strides = [1, 1]} : vector<9x64xf32> to vector<1x64xf32>
    %269 = vector.shape_cast %268 : vector<1x64xf32> to vector<1x1x64xf32>
    %270 = vector.broadcast %269 : vector<1x1x64xf32> to vector<16x16x64xf32>
    %271 = arith.mulf %267, %270 : vector<16x16x64xf32>
    %272 = arith.addf %266, %271 : vector<16x16x64xf32>
    %c0_279 = arith.constant 0 : index
    %c1_280 = arith.constant 1 : index
    %c0_281 = arith.constant 0 : index
    %273 = vector.load %arg8[%c0_279, %c1_280, %c0_281] : memref<18x18x64xf32, #tpu.memory_space<vmem>>, vector<16x16x64xf32>
    %274 = vector.extract_strided_slice %265 {offsets = [1, 0], sizes = [1, 64], strides = [1, 1]} : vector<9x64xf32> to vector<1x64xf32>
    %275 = vector.shape_cast %274 : vector<1x64xf32> to vector<1x1x64xf32>
    %276 = vector.broadcast %275 : vector<1x1x64xf32> to vector<16x16x64xf32>
    %277 = arith.mulf %273, %276 : vector<16x16x64xf32>
    %278 = arith.addf %272, %277 : vector<16x16x64xf32>
    %c0_282 = arith.constant 0 : index
    %c2_283 = arith.constant 2 : index
    %c0_284 = arith.constant 0 : index
    %279 = vector.load %arg8[%c0_282, %c2_283, %c0_284] : memref<18x18x64xf32, #tpu.memory_space<vmem>>, vector<16x16x64xf32>
    %280 = vector.extract_strided_slice %265 {offsets = [2, 0], sizes = [1, 64], strides = [1, 1]} : vector<9x64xf32> to vector<1x64xf32>
    %281 = vector.shape_cast %280 : vector<1x64xf32> to vector<1x1x64xf32>
    %282 = vector.broadcast %281 : vector<1x1x64xf32> to vector<16x16x64xf32>
    %283 = arith.mulf %279, %282 : vector<16x16x64xf32>
    %284 = arith.addf %278, %283 : vector<16x16x64xf32>
    %c1_285 = arith.constant 1 : index
    %c0_286 = arith.constant 0 : index
    %c0_287 = arith.constant 0 : index
    %285 = vector.load %arg8[%c1_285, %c0_286, %c0_287] : memref<18x18x64xf32, #tpu.memory_space<vmem>>, vector<16x16x64xf32>
    %286 = vector.extract_strided_slice %265 {offsets = [3, 0], sizes = [1, 64], strides = [1, 1]} : vector<9x64xf32> to vector<1x64xf32>
    %287 = vector.shape_cast %286 : vector<1x64xf32> to vector<1x1x64xf32>
    %288 = vector.broadcast %287 : vector<1x1x64xf32> to vector<16x16x64xf32>
    %289 = arith.mulf %285, %288 : vector<16x16x64xf32>
    %290 = arith.addf %284, %289 : vector<16x16x64xf32>
    %c1_288 = arith.constant 1 : index
    %c1_289 = arith.constant 1 : index
    %c0_290 = arith.constant 0 : index
    %291 = vector.load %arg8[%c1_288, %c1_289, %c0_290] : memref<18x18x64xf32, #tpu.memory_space<vmem>>, vector<16x16x64xf32>
    %292 = vector.extract_strided_slice %265 {offsets = [4, 0], sizes = [1, 64], strides = [1, 1]} : vector<9x64xf32> to vector<1x64xf32>
    %293 = vector.shape_cast %292 : vector<1x64xf32> to vector<1x1x64xf32>
    %294 = vector.broadcast %293 : vector<1x1x64xf32> to vector<16x16x64xf32>
    %295 = arith.mulf %291, %294 : vector<16x16x64xf32>
    %296 = arith.addf %290, %295 : vector<16x16x64xf32>
    %c1_291 = arith.constant 1 : index
    %c2_292 = arith.constant 2 : index
    %c0_293 = arith.constant 0 : index
    %297 = vector.load %arg8[%c1_291, %c2_292, %c0_293] : memref<18x18x64xf32, #tpu.memory_space<vmem>>, vector<16x16x64xf32>
    %298 = vector.extract_strided_slice %265 {offsets = [5, 0], sizes = [1, 64], strides = [1, 1]} : vector<9x64xf32> to vector<1x64xf32>
    %299 = vector.shape_cast %298 : vector<1x64xf32> to vector<1x1x64xf32>
    %300 = vector.broadcast %299 : vector<1x1x64xf32> to vector<16x16x64xf32>
    %301 = arith.mulf %297, %300 : vector<16x16x64xf32>
    %302 = arith.addf %296, %301 : vector<16x16x64xf32>
    %c2_294 = arith.constant 2 : index
    %c0_295 = arith.constant 0 : index
    %c0_296 = arith.constant 0 : index
    %303 = vector.load %arg8[%c2_294, %c0_295, %c0_296] : memref<18x18x64xf32, #tpu.memory_space<vmem>>, vector<16x16x64xf32>
    %304 = vector.extract_strided_slice %265 {offsets = [6, 0], sizes = [1, 64], strides = [1, 1]} : vector<9x64xf32> to vector<1x64xf32>
    %305 = vector.shape_cast %304 : vector<1x64xf32> to vector<1x1x64xf32>
    %306 = vector.broadcast %305 : vector<1x1x64xf32> to vector<16x16x64xf32>
    %307 = arith.mulf %303, %306 : vector<16x16x64xf32>
    %308 = arith.addf %302, %307 : vector<16x16x64xf32>
    %c2_297 = arith.constant 2 : index
    %c1_298 = arith.constant 1 : index
    %c0_299 = arith.constant 0 : index
    %309 = vector.load %arg8[%c2_297, %c1_298, %c0_299] : memref<18x18x64xf32, #tpu.memory_space<vmem>>, vector<16x16x64xf32>
    %310 = vector.extract_strided_slice %265 {offsets = [7, 0], sizes = [1, 64], strides = [1, 1]} : vector<9x64xf32> to vector<1x64xf32>
    %311 = vector.shape_cast %310 : vector<1x64xf32> to vector<1x1x64xf32>
    %312 = vector.broadcast %311 : vector<1x1x64xf32> to vector<16x16x64xf32>
    %313 = arith.mulf %309, %312 : vector<16x16x64xf32>
    %314 = arith.addf %308, %313 : vector<16x16x64xf32>
    %c2_300 = arith.constant 2 : index
    %c2_301 = arith.constant 2 : index
    %c0_302 = arith.constant 0 : index
    %315 = vector.load %arg8[%c2_300, %c2_301, %c0_302] : memref<18x18x64xf32, #tpu.memory_space<vmem>>, vector<16x16x64xf32>
    %316 = vector.extract_strided_slice %265 {offsets = [8, 0], sizes = [1, 64], strides = [1, 1]} : vector<9x64xf32> to vector<1x64xf32>
    %317 = vector.shape_cast %316 : vector<1x64xf32> to vector<1x1x64xf32>
    %318 = vector.broadcast %317 : vector<1x1x64xf32> to vector<16x16x64xf32>
    %319 = arith.mulf %315, %318 : vector<16x16x64xf32>
    %320 = arith.addf %314, %319 : vector<16x16x64xf32>
    %cst_303 = arith.constant dense<0.000000e+00> : vector<16x16xf32>
    %321 = vector.multi_reduction <add>, %320, %cst_303 [2] : vector<16x16x64xf32> to vector<16x16xf32>
    %322 = vector.shape_cast %321 : vector<16x16xf32> to vector<16x16x1xf32>
    %c0_304 = arith.constant 0 : index
    %c0_305 = arith.constant 0 : index
    %c0_306 = arith.constant 0 : index
    %323 = vector.load %arg0[%c0_304, %c0_305, %c0_306] : memref<16x16x1xf32, #tpu.memory_space<vmem>>, vector<16x16x1xf32>
    %324 = arith.addf %322, %323 : vector<16x16x1xf32>
    %c0_307 = arith.constant 0 : index
    %c0_308 = arith.constant 0 : index
    %c0_309 = arith.constant 0 : index
    %325 = vector.load %arg7[%c0_307, %c0_308, %c0_309] : memref<16x16x1xf32, #tpu.memory_space<vmem>>, vector<16x16x1xf32>
    tpu.vector_store %arg7[%c0_307, %c0_308, %c0_309], %324 {strides = array<i32>} : memref<16x16x1xf32, #tpu.memory_space<vmem>>, vector<16x16x1xf32>,
    return
  }
}

</mosaic_0001>

<llo_original>
// kernel: dyproxnet_forward.1
$region0: #{dyproxnet_forward.1}
  #allocation0 [shape = 'u32[]', space=smem, size = 0x4, offset = 0x4, fixed_abs, tag = 'smem constant byte address 0x4 - core index']
  #allocation1 [shape = 'u32[144,128]{1,0:T(1,128)}', space=vmem, size = 0x12000, scoped, tag = 'internal scratch']
  #allocation2 [shape = 'f32[18,18,64]{2,1,0:T(8,128)}', space=vmem, size = 0x36000, scoped, tag = 'scratch operand']
  #allocation3 [shape = 'f32[18,18,64]{2,1,0:T(8,128)}', space=vmem, size = 0x36000, scoped, tag = 'scratch operand']
  #allocation4 [shape = 'f32[16,16,576]{2,1,0:T(8,128)}', space=vmem, size = 0xa0000, scoped, tag = 'scratch operand']
  %s0 = inlined_call_operand.vmem [shape: f32[16,16,1], index: 0, kind: input, shape index: {}]
  %s1 = inlined_call_operand.vmem [shape: f32[9,64], index: 1, kind: input, shape index: {}]
  %s2 = inlined_call_operand.vmem [shape: f32[576,64], index: 2, kind: input, shape index: {}]
  %s3 = inlined_call_operand.vmem [shape: f32[576,64], index: 3, kind: input, shape index: {}]
  %s4 = inlined_call_operand.vmem [shape: f32[576,64], index: 4, kind: input, shape index: {}]
  %s5 = inlined_call_operand.vmem [shape: f32[9,64], index: 5, kind: input, shape index: {}]
  %s6 = inlined_call_operand.vmem [shape: f32[8,64], index: 6, kind: input, shape index: {}]
  %s7 = inlined_call_operand.vmem [shape: f32[16,16,1], index: 7, kind: output, shape index: {}]
  %s8 = sld [smem:[#allocation0]]
  $region38: #{dyproxnet_forward.1} parent=0
    _
  %s10 = ssub.s32 1, %s8
  %s11 = scalar_select 0, %s10, %s8
  // Predicated region
  $region2: #{dyproxnet_forward.1} parent=0 // pred_check
    _
  $region3: #{dyproxnet_forward.1} parent=0 // pred_check_branch
    %13 = sbr.rel (0) target = $region5
  $region4: #{dyproxnet_forward.1} parent=0 // pred_region
    _
  $region5: #{dyproxnet_forward.1} parent=0 // pred_fallthru
    _
  // Predicated region
  $region6: #{dyproxnet_forward.1} parent=0 // pred_check
    _
  $region7: #{dyproxnet_forward.1} parent=0 // pred_check_branch
    %15 = sbr.rel (0) target = $region9
  $region8: #{dyproxnet_forward.1} parent=0 // pred_region
    _
  $region9: #{dyproxnet_forward.1} parent=0 // pred_fallthru
    _
  // Predicated region
  $region10: #{dyproxnet_forward.1} parent=0 // pred_check
    _
  $region11: #{dyproxnet_forward.1} parent=0 // pred_check_branch
    %17 = sbr.rel (0) target = $region13
  $region12: #{dyproxnet_forward.1} parent=0 // pred_region
    _
  $region13: #{dyproxnet_forward.1} parent=0 // pred_fallthru
    _
  // Predicated region
  $region14: #{dyproxnet_forward.1} parent=0 // pred_check
    _
  $region15: #{dyproxnet_forward.1} parent=0 // pred_check_branch
    %19 = sbr.rel (0) target = $region17
  $region16: #{dyproxnet_forward.1} parent=0 // pred_region
    _
  $region17: #{dyproxnet_forward.1} parent=0 // pred_fallthru
    _
  // Predicated region
  $region18: #{dyproxnet_forward.1} parent=0 // pred_check
    _
  $region19: #{dyproxnet_forward.1} parent=0 // pred_check_branch
    %21 = sbr.rel (0) target = $region21
  $region20: #{dyproxnet_forward.1} parent=0 // pred_region
    _
  $region21: #{dyproxnet_forward.1} parent=0 // pred_fallthru
    _
  // Predicated region
  $region22: #{dyproxnet_forward.1} parent=0 // pred_check
    _
  $region23: #{dyproxnet_forward.1} parent=0 // pred_check_branch
    %23 = sbr.rel (0) target = $region25
  $region24: #{dyproxnet_forward.1} parent=0 // pred_region
    _
  $region25: #{dyproxnet_forward.1} parent=0 // pred_fallthru
    _
  // Predicated region
  $region26: #{dyproxnet_forward.1} parent=0 // pred_check
    _
  $region27: #{dyproxnet_forward.1} parent=0 // pred_check_branch
    %25 = sbr.rel (0) target = $region29
  $region28: #{dyproxnet_forward.1} parent=0 // pred_region
    _
  $region29: #{dyproxnet_forward.1} parent=0 // pred_fallthru
    _
  %vm26 = vcmask 523264
  %27 = vst.msk [vmem:[#allocation2] sm:$0xff] %vm26, 0.0
  %28 = vst.msk [vmem:[#allocation2 + $0x8] sm:$0xff] %vm26, 0.0
  %vm29 = vcmask 517120
  %30 = vst.msk [vmem:[#allocation2 + $0x10] sm:$0x3] %vm29, 0.0
  %s31 = scalar_lea.vmem [#allocation2], 408
  %32 = vst.msk [vmem:[%s31] sm:$0xff] %vm26, 0.0
  %33 = vst.msk [vmem:[%s31 + $0x8] sm:$0xff] %vm26, 0.0
  %34 = vst.msk [vmem:[%s31 + $0x10] sm:$0x3] %vm29, 0.0
  %vm35 = vcmask 516096
  %36 = vst.msk [vmem:[#allocation2] sm:$0x1] %vm35, 0.0
  %37 = vst.msk [vmem:[#allocation2 + $0x18] sm:$0x1] %vm35, 0.0
  %38 = vst.msk [vmem:[#allocation2 + $0x30] sm:$0x1] %vm35, 0.0
  %39 = vst.msk [vmem:[#allocation2 + $0x48] sm:$0x1] %vm35, 0.0
  %40 = vst.msk [vmem:[#allocation2 + $0x60] sm:$0x1] %vm35, 0.0
  %41 = vst.msk [vmem:[#allocation2 + $0x78] sm:$0x1] %vm35, 0.0
  %42 = vst.msk [vmem:[#allocation2 + $0x90] sm:$0x1] %vm35, 0.0
  %43 = vst.msk [vmem:[#allocation2 + $0xa8] sm:$0x1] %vm35, 0.0
  %44 = vst.msk [vmem:[#allocation2 + $0xc0] sm:$0x1] %vm35, 0.0
  %45 = vst.msk [vmem:[#allocation2 + $0xd8] sm:$0x1] %vm35, 0.0
  %46 = vst.msk [vmem:[#allocation2 + $0xf0] sm:$0x1] %vm35, 0.0
  %47 = vst.msk [vmem:[#allocation2 + $0x108] sm:$0x1] %vm35, 0.0
  %48 = vst.msk [vmem:[#allocation2 + $0x120] sm:$0x1] %vm35, 0.0
  %49 = vst.msk [vmem:[#allocation2 + $0x138] sm:$0x1] %vm35, 0.0
  %50 = vst.msk [vmem:[#allocation2 + $0x150] sm:$0x1] %vm35, 0.0
  %51 = vst.msk [vmem:[#allocation2 + $0x168] sm:$0x1] %vm35, 0.0
  %52 = vst.msk [vmem:[#allocation2 + $0x180] sm:$0x1] %vm35, 0.0
  %53 = vst.msk [vmem:[#allocation2 + $0x198] sm:$0x1] %vm35, 0.0
  %54 = vst.msk [vmem:[#allocation2 + $0x11] sm:$0x1] %vm35, 0.0
  %55 = vst.msk [vmem:[#allocation2 + $0x29] sm:$0x1] %vm35, 0.0
  %56 = vst.msk [vmem:[#allocation2 + $0x41] sm:$0x1] %vm35, 0.0
  %57 = vst.msk [vmem:[#allocation2 + $0x59] sm:$0x1] %vm35, 0.0
  %58 = vst.msk [vmem:[#allocation2 + $0x71] sm:$0x1] %vm35, 0.0
  %59 = vst.msk [vmem:[#allocation2 + $0x89] sm:$0x1] %vm35, 0.0
  %60 = vst.msk [vmem:[#allocation2 + $0xa1] sm:$0x1] %vm35, 0.0
  %61 = vst.msk [vmem:[#allocation2 + $0xb9] sm:$0x1] %vm35, 0.0
  %62 = vst.msk [vmem:[#allocation2 + $0xd1] sm:$0x1] %vm35, 0.0
  %63 = vst.msk [vmem:[#allocation2 + $0xe9] sm:$0x1] %vm35, 0.0
  %64 = vst.msk [vmem:[#allocation2 + $0x101] sm:$0x1] %vm35, 0.0
  %65 = vst.msk [vmem:[#allocation2 + $0x119] sm:$0x1] %vm35, 0.0
  %66 = vst.msk [vmem:[#allocation2 + $0x131] sm:$0x1] %vm35, 0.0
  %67 = vst.msk [vmem:[#allocation2 + $0x149] sm:$0x1] %vm35, 0.0
  %68 = vst.msk [vmem:[#allocation2 + $0x161] sm:$0x1] %vm35, 0.0
  %69 = vst.msk [vmem:[#allocation2 + $0x179] sm:$0x1] %vm35, 0.0
  %70 = vst.msk [vmem:[#allocation2 + $0x191] sm:$0x1] %vm35, 0.0
  %71 = vst.msk [vmem:[#allocation2 + $0x1a9] sm:$0x1] %vm35, 0.0
  %72 = vst.msk [vmem:[#allocation3] sm:$0xff] %vm26, 0.0
  %73 = vst.msk [vmem:[#allocation3 + $0x8] sm:$0xff] %vm26, 0.0
  %74 = vst.msk [vmem:[#allocation3 + $0x10] sm:$0x3] %vm29, 0.0
  %s75 = scalar_lea.vmem [#allocation3], 408
  %76 = vst.msk [vmem:[%s75] sm:$0xff] %vm26, 0.0
  %77 = vst.msk [vmem:[%s75 + $0x8] sm:$0xff] %vm26, 0.0
  %78 = vst.msk [vmem:[%s75 + $0x10] sm:$0x3] %vm29, 0.0
  %79 = vst.msk [vmem:[#allocation3] sm:$0x1] %vm35, 0.0
  %80 = vst.msk [vmem:[#allocation3 + $0x18] sm:$0x1] %vm35, 0.0
  %81 = vst.msk [vmem:[#allocation3 + $0x30] sm:$0x1] %vm35, 0.0
  %82 = vst.msk [vmem:[#allocation3 + $0x48] sm:$0x1] %vm35, 0.0
  %83 = vst.msk [vmem:[#allocation3 + $0x60] sm:$0x1] %vm35, 0.0
  %84 = vst.msk [vmem:[#allocation3 + $0x78] sm:$0x1] %vm35, 0.0
  %85 = vst.msk [vmem:[#allocation3 + $0x90] sm:$0x1] %vm35, 0.0
  %86 = vst.msk [vmem:[#allocation3 + $0xa8] sm:$0x1] %vm35, 0.0
  %87 = vst.msk [vmem:[#allocation3 + $0xc0] sm:$0x1] %vm35, 0.0
  %88 = vst.msk [vmem:[#allocation3 + $0xd8] sm:$0x1] %vm35, 0.0
  %89 = vst.msk [vmem:[#allocation3 + $0xf0] sm:$0x1] %vm35, 0.0
  %90 = vst.msk [vmem:[#allocation3 + $0x108] sm:$0x1] %vm35, 0.0
  %91 = vst.msk [vmem:[#allocation3 + $0x120] sm:$0x1] %vm35, 0.0
  %92 = vst.msk [vmem:[#allocation3 + $0x138] sm:$0x1] %vm35, 0.0
  %93 = vst.msk [vmem:[#allocation3 + $0x150] sm:$0x1] %vm35, 0.0
  %94 = vst.msk [vmem:[#allocation3 + $0x168] sm:$0x1] %vm35, 0.0
  %95 = vst.msk [vmem:[#allocation3 + $0x180] sm:$0x1] %vm35, 0.0
  %96 = vst.msk [vmem:[#allocation3 + $0x198] sm:$0x1] %vm35, 0.0
  %97 = vst.msk [vmem:[#allocation3 + $0x11] sm:$0x1] %vm35, 0.0
  %98 = vst.msk [vmem:[#allocation3 + $0x29] sm:$0x1] %vm35, 0.0
  %99 = vst.msk [vmem:[#allocation3 + $0x41] sm:$0x1] %vm35, 0.0
  %100 = vst.msk [vmem:[#allocation3 + $0x59] sm:$0x1] %vm35, 0.0
  %101 = vst.msk [vmem:[#allocation3 + $0x71] sm:$0x1] %vm35, 0.0
  %102 = vst.msk [vmem:[#allocation3 + $0x89] sm:$0x1] %vm35, 0.0
  %103 = vst.msk [vmem:[#allocation3 + $0xa1] sm:$0x1] %vm35, 0.0
  %104 = vst.msk [vmem:[#allocation3 + $0xb9] sm:$0x1] %vm35, 0.0
  %105 = vst.msk [vmem:[#allocation3 + $0xd1] sm:$0x1] %vm35, 0.0
  %106 = vst.msk [vmem:[#allocation3 + $0xe9] sm:$0x1] %vm35, 0.0
  %107 = vst.msk [vmem:[#allocation3 + $0x101] sm:$0x1] %vm35, 0.0
  %108 = vst.msk [vmem:[#allocation3 + $0x119] sm:$0x1] %vm35, 0.0
  %109 = vst.msk [vmem:[#allocation3 + $0x131] sm:$0x1] %vm35, 0.0
  %110 = vst.msk [vmem:[#allocation3 + $0x149] sm:$0x1] %vm35, 0.0
  %111 = vst.msk [vmem:[#allocation3 + $0x161] sm:$0x1] %vm35, 0.0
  %112 = vst.msk [vmem:[#allocation3 + $0x179] sm:$0x1] %vm35, 0.0
  %113 = vst.msk [vmem:[#allocation3 + $0x191] sm:$0x1] %vm35, 0.0
  %114 = vst.msk [vmem:[#allocation3 + $0x1a9] sm:$0x1] %vm35, 0.0
  %v115 = vld [vmem:[%s6] sm:$0xff]
  %v116 = vld [vmem:[%s0] sm:$0xff]
  %v117 = vld [vmem:[%s0 + $0x8] sm:$0xff]
  %v118 = vld [vmem:[%s0 + $0x10] sm:$0xff]
  %v119 = vld [vmem:[%s0 + $0x18] sm:$0xff]
  %v120 = vld [vmem:[%s0 + $0x20] sm:$0xff]
  %v121 = vld [vmem:[%s0 + $0x28] sm:$0xff]
  %v122 = vld [vmem:[%s0 + $0x30] sm:$0xff]
  %v123 = vld [vmem:[%s0 + $0x38] sm:$0xff]
  %v124 = vld [vmem:[%s0 + $0x40] sm:$0xff]
  %v125 = vld [vmem:[%s0 + $0x48] sm:$0xff]
  %v126 = vld [vmem:[%s0 + $0x50] sm:$0xff]
  %v127 = vld [vmem:[%s0 + $0x58] sm:$0xff]
  %v128 = vld [vmem:[%s0 + $0x60] sm:$0xff]
  %v129 = vld [vmem:[%s0 + $0x68] sm:$0xff]
  %v130 = vld [vmem:[%s0 + $0x70] sm:$0xff]
  %v131 = vld [vmem:[%s0 + $0x78] sm:$0xff]
  %v132 = vld [vmem:[%s0 + $0x80] sm:$0xff]
  %v133 = vld [vmem:[%s0 + $0x88] sm:$0xff]
  %v134 = vld [vmem:[%s0 + $0x90] sm:$0xff]
  %v135 = vld [vmem:[%s0 + $0x98] sm:$0xff]
  %v136 = vld [vmem:[%s0 + $0xa0] sm:$0xff]
  %v137 = vld [vmem:[%s0 + $0xa8] sm:$0xff]
  %v138 = vld [vmem:[%s0 + $0xb0] sm:$0xff]
  %v139 = vld [vmem:[%s0 + $0xb8] sm:$0xff]
  %v140 = vld [vmem:[%s0 + $0xc0] sm:$0xff]
  %v141 = vld [vmem:[%s0 + $0xc8] sm:$0xff]
  %v142 = vld [vmem:[%s0 + $0xd0] sm:$0xff]
  %v143 = vld [vmem:[%s0 + $0xd8] sm:$0xff]
  %v144 = vld [vmem:[%s0 + $0xe0] sm:$0xff]
  %v145 = vld [vmem:[%s0 + $0xe8] sm:$0xff]
  %v146 = vld [vmem:[%s0 + $0xf0] sm:$0xff]
  %v147 = vld [vmem:[%s0 + $0xf8] sm:$0xff]
  %s148 = scalar_lea.vmem [#allocation2], 24
  %vm149 = vcmask 7168
  %150 = vst.msk [vmem:[%s148 + $0x1] sm:$0xff] %vm149, %v116
  %151 = vst.msk [vmem:[%s148 + $0x9] sm:$0xff] %vm149, %v117
  %152 = vst.msk [vmem:[%s148 + $0x19] sm:$0xff] %vm149, %v118
  %153 = vst.msk [vmem:[%s148 + $0x21] sm:$0xff] %vm149, %v119
  %154 = vst.msk [vmem:[%s148 + $0x31] sm:$0xff] %vm149, %v120
  %155 = vst.msk [vmem:[%s148 + $0x39] sm:$0xff] %vm149, %v121
  %156 = vst.msk [vmem:[%s148 + $0x49] sm:$0xff] %vm149, %v122
  %157 = vst.msk [vmem:[%s148 + $0x51] sm:$0xff] %vm149, %v123
  %158 = vst.msk [vmem:[%s148 + $0x61] sm:$0xff] %vm149, %v124
  %159 = vst.msk [vmem:[%s148 + $0x69] sm:$0xff] %vm149, %v125
  %160 = vst.msk [vmem:[%s148 + $0x79] sm:$0xff] %vm149, %v126
  %161 = vst.msk [vmem:[%s148 + $0x81] sm:$0xff] %vm149, %v127
  %162 = vst.msk [vmem:[%s148 + $0x91] sm:$0xff] %vm149, %v128
  %163 = vst.msk [vmem:[%s148 + $0x99] sm:$0xff] %vm149, %v129
  %164 = vst.msk [vmem:[%s148 + $0xa9] sm:$0xff] %vm149, %v130
  %165 = vst.msk [vmem:[%s148 + $0xb1] sm:$0xff] %vm149, %v131
  %166 = vst.msk [vmem:[%s148 + $0xc1] sm:$0xff] %vm149, %v132
  %167 = vst.msk [vmem:[%s148 + $0xc9] sm:$0xff] %vm149, %v133
  %168 = vst.msk [vmem:[%s148 + $0xd9] sm:$0xff] %vm149, %v134
  %169 = vst.msk [vmem:[%s148 + $0xe1] sm:$0xff] %vm149, %v135
  %170 = vst.msk [vmem:[%s148 + $0xf1] sm:$0xff] %vm149, %v136
  %171 = vst.msk [vmem:[%s148 + $0xf9] sm:$0xff] %vm149, %v137
  %172 = vst.msk [vmem:[%s148 + $0x109] sm:$0xff] %vm149, %v138
  %173 = vst.msk [vmem:[%s148 + $0x111] sm:$0xff] %vm149, %v139
  %174 = vst.msk [vmem:[%s148 + $0x121] sm:$0xff] %vm149, %v140
  %175 = vst.msk [vmem:[%s148 + $0x129] sm:$0xff] %vm149, %v141
  %176 = vst.msk [vmem:[%s148 + $0x139] sm:$0xff] %vm149, %v142
  %177 = vst.msk [vmem:[%s148 + $0x141] sm:$0xff] %vm149, %v143
  %178 = vst.msk [vmem:[%s148 + $0x151] sm:$0xff] %vm149, %v144
  %179 = vst.msk [vmem:[%s148 + $0x159] sm:$0xff] %vm149, %v145
  %180 = vst.msk [vmem:[%s148 + $0x169] sm:$0xff] %vm149, %v146
  %181 = vst.msk [vmem:[%s148 + $0x171] sm:$0xff] %vm149, %v147
  %v182 = vld [vmem:[%s1] sm:$0xff]
  %v183 = vld [vmem:[%s1 + $0x8] sm:$0x1]
  %v184 = vld [vmem:[#allocation2] sm:$0xff]
  %v185 = vld [vmem:[#allocation2 + $0x8] sm:$0xff]
  %v186 = vld [vmem:[#allocation2 + $0x18] sm:$0xff]
  %v187 = vld [vmem:[#allocation2 + $0x20] sm:$0xff]
  %v188 = vld [vmem:[#allocation2 + $0x30] sm:$0xff]
  %v189 = vld [vmem:[#allocation2 + $0x38] sm:$0xff]
  %v190 = vld [vmem:[#allocation2 + $0x48] sm:$0xff]
  %v191 = vld [vmem:[#allocation2 + $0x50] sm:$0xff]
  %v192 = vld [vmem:[#allocation2 + $0x60] sm:$0xff]
  %v193 = vld [vmem:[#allocation2 + $0x68] sm:$0xff]
  %v194 = vld [vmem:[#allocation2 + $0x78] sm:$0xff]
  %v195 = vld [vmem:[#allocation2 + $0x80] sm:$0xff]
  %v196 = vld [vmem:[#allocation2 + $0x90] sm:$0xff]
  %v197 = vld [vmem:[#allocation2 + $0x98] sm:$0xff]
  %v198 = vld [vmem:[#allocation2 + $0xa8] sm:$0xff]
  %v199 = vld [vmem:[#allocation2 + $0xb0] sm:$0xff]
  %v200 = vld [vmem:[#allocation2 + $0xc0] sm:$0xff]
  %v201 = vld [vmem:[#allocation2 + $0xc8] sm:$0xff]
  %v202 = vld [vmem:[#allocation2 + $0xd8] sm:$0xff]
  %v203 = vld [vmem:[#allocation2 + $0xe0] sm:$0xff]
  %v204 = vld [vmem:[#allocation2 + $0xf0] sm:$0xff]
  %v205 = vld [vmem:[#allocation2 + $0xf8] sm:$0xff]
  %v206 = vld [vmem:[#allocation2 + $0x108] sm:$0xff]
  %v207 = vld [vmem:[#allocation2 + $0x110] sm:$0xff]
  %v208 = vld [vmem:[#allocation2 + $0x120] sm:$0xff]
  %v209 = vld [vmem:[#allocation2 + $0x128] sm:$0xff]
  %v210 = vld [vmem:[#allocation2 + $0x138] sm:$0xff]
  %v211 = vld [vmem:[#allocation2 + $0x140] sm:$0xff]
  %v212 = vld [vmem:[#allocation2 + $0x150] sm:$0xff]
  %v213 = vld [vmem:[#allocation2 + $0x158] sm:$0xff]
  %v214 = vld [vmem:[#allocation2 + $0x168] sm:$0xff]
  %v215 = vld [vmem:[#allocation2 + $0x170] sm:$0xff]
  %217 = vset.pattern.permute.xlu0 0
  %218 = vperm.xlu0 %217, %v184
  %v219 = vpop.permute.xlu0 %218
  %222 = vset.pattern.permute.xlu0 0
  %223 = vperm.xlu0 %222, %v185
  %v224 = vpop.permute.xlu0 %223
  %227 = vset.pattern.permute.xlu0 0
  %228 = vperm.xlu0 %227, %v186
  %v229 = vpop.permute.xlu0 %228
  %232 = vset.pattern.permute.xlu0 0
  %233 = vperm.xlu0 %232, %v187
  %v234 = vpop.permute.xlu0 %233
  %237 = vset.pattern.permute.xlu0 0
  %238 = vperm.xlu0 %237, %v188
  %v239 = vpop.permute.xlu0 %238
  %242 = vset.pattern.permute.xlu0 0
  %243 = vperm.xlu0 %242, %v189
  %v244 = vpop.permute.xlu0 %243
  %247 = vset.pattern.permute.xlu0 0
  %248 = vperm.xlu0 %247, %v190
  %v249 = vpop.permute.xlu0 %248
  %252 = vset.pattern.permute.xlu0 0
  %253 = vperm.xlu0 %252, %v191
  %v254 = vpop.permute.xlu0 %253
  %257 = vset.pattern.permute.xlu0 0
  %258 = vperm.xlu0 %257, %v192
  %v259 = vpop.permute.xlu0 %258
  %262 = vset.pattern.permute.xlu0 0
  %263 = vperm.xlu0 %262, %v193
  %v264 = vpop.permute.xlu0 %263
  %267 = vset.pattern.permute.xlu0 0
  %268 = vperm.xlu0 %267, %v194
  %v269 = vpop.permute.xlu0 %268
  %272 = vset.pattern.permute.xlu0 0
  %273 = vperm.xlu0 %272, %v195
  %v274 = vpop.permute.xlu0 %273
  %277 = vset.pattern.permute.xlu0 0
  %278 = vperm.xlu0 %277, %v196
  %v279 = vpop.permute.xlu0 %278
  %282 = vset.pattern.permute.xlu0 0
  %283 = vperm.xlu0 %282, %v197
  %v284 = vpop.permute.xlu0 %283
  %287 = vset.pattern.permute.xlu0 0
  %288 = vperm.xlu0 %287, %v198
  %v289 = vpop.permute.xlu0 %288
  %292 = vset.pattern.permute.xlu0 0
  %293 = vperm.xlu0 %292, %v199
  %v294 = vpop.permute.xlu0 %293
  %297 = vset.pattern.permute.xlu0 0
  %298 = vperm.xlu0 %297, %v200
  %v299 = vpop.permute.xlu0 %298
  %302 = vset.pattern.permute.xlu0 0
  %303 = vperm.xlu0 %302, %v201
  %v304 = vpop.permute.xlu0 %303
  %307 = vset.pattern.permute.xlu0 0
  %308 = vperm.xlu0 %307, %v202
  %v309 = vpop.permute.xlu0 %308
  %312 = vset.pattern.permute.xlu0 0
  %313 = vperm.xlu0 %312, %v203
  %v314 = vpop.permute.xlu0 %313
  %317 = vset.pattern.permute.xlu0 0
  %318 = vperm.xlu0 %317, %v204
  %v319 = vpop.permute.xlu0 %318
  %322 = vset.pattern.permute.xlu0 0
  %323 = vperm.xlu0 %322, %v205
  %v324 = vpop.permute.xlu0 %323
  %327 = vset.pattern.permute.xlu0 0
  %328 = vperm.xlu0 %327, %v206
  %v329 = vpop.permute.xlu0 %328
  %332 = vset.pattern.permute.xlu0 0
  %333 = vperm.xlu0 %332, %v207
  %v334 = vpop.permute.xlu0 %333
  %337 = vset.pattern.permute.xlu0 0
  %338 = vperm.xlu0 %337, %v208
  %v339 = vpop.permute.xlu0 %338
  %342 = vset.pattern.permute.xlu0 0
  %343 = vperm.xlu0 %342, %v209
  %v344 = vpop.permute.xlu0 %343
  %347 = vset.pattern.permute.xlu0 0
  %348 = vperm.xlu0 %347, %v210
  %v349 = vpop.permute.xlu0 %348
  %352 = vset.pattern.permute.xlu0 0
  %353 = vperm.xlu0 %352, %v211
  %v354 = vpop.permute.xlu0 %353
  %357 = vset.pattern.permute.xlu0 0
  %358 = vperm.xlu0 %357, %v212
  %v359 = vpop.permute.xlu0 %358
  %362 = vset.pattern.permute.xlu0 0
  %363 = vperm.xlu0 %362, %v213
  %v364 = vpop.permute.xlu0 %363
  %367 = vset.pattern.permute.xlu0 0
  %368 = vperm.xlu0 %367, %v214
  %v369 = vpop.permute.xlu0 %368
  %372 = vset.pattern.permute.xlu0 0
  %373 = vperm.xlu0 %372, %v215
  %v374 = vpop.permute.xlu0 %373
  %v376 = vlaneseq
  %v377 = vshrl.u32 %v376, 7
  %v378 = vsub.s32 0, %v377
  %v379 = vrot.slane %v182, %v378
  %v380 = vmul.f32 %v219, %v379
  %v381 = vmul.f32 %v224, %v379
  %v382 = vmul.f32 %v229, %v379
  %v383 = vmul.f32 %v234, %v379
  %v384 = vmul.f32 %v239, %v379
  %v385 = vmul.f32 %v244, %v379
  %v386 = vmul.f32 %v249, %v379
  %v387 = vmul.f32 %v254, %v379
  %v388 = vmul.f32 %v259, %v379
  %v389 = vmul.f32 %v264, %v379
  %v390 = vmul.f32 %v269, %v379
  %v391 = vmul.f32 %v274, %v379
  %v392 = vmul.f32 %v279, %v379
  %v393 = vmul.f32 %v284, %v379
  %v394 = vmul.f32 %v289, %v379
  %v395 = vmul.f32 %v294, %v379
  %v396 = vmul.f32 %v299, %v379
  %v397 = vmul.f32 %v304, %v379
  %v398 = vmul.f32 %v309, %v379
  %v399 = vmul.f32 %v314, %v379
  %v400 = vmul.f32 %v319, %v379
  %v401 = vmul.f32 %v324, %v379
  %v402 = vmul.f32 %v329, %v379
  %v403 = vmul.f32 %v334, %v379
  %v404 = vmul.f32 %v339, %v379
  %v405 = vmul.f32 %v344, %v379
  %v406 = vmul.f32 %v349, %v379
  %v407 = vmul.f32 %v354, %v379
  %v408 = vmul.f32 %v359, %v379
  %v409 = vmul.f32 %v364, %v379
  %v410 = vmul.f32 %v369, %v379
  %v411 = vmul.f32 %v374, %v379
  %v412 = vadd.f32 %v380, 0.0
  %v413 = vadd.f32 %v381, 0.0
  %v414 = vadd.f32 %v382, 0.0
  %v415 = vadd.f32 %v383, 0.0
  %v416 = vadd.f32 %v384, 0.0
  %v417 = vadd.f32 %v385, 0.0
  %v418 = vadd.f32 %v386, 0.0
  %v419 = vadd.f32 %v387, 0.0
  %v420 = vadd.f32 %v388, 0.0
  %v421 = vadd.f32 %v389, 0.0
  %v422 = vadd.f32 %v390, 0.0
  %v423 = vadd.f32 %v391, 0.0
  %v424 = vadd.f32 %v392, 0.0
  %v425 = vadd.f32 %v393, 0.0
  %v426 = vadd.f32 %v394, 0.0
  %v427 = vadd.f32 %v395, 0.0
  %v428 = vadd.f32 %v396, 0.0
  %v429 = vadd.f32 %v397, 0.0
  %v430 = vadd.f32 %v398, 0.0
  %v431 = vadd.f32 %v399, 0.0
  %v432 = vadd.f32 %v400, 0.0
  %v433 = vadd.f32 %v401, 0.0
  %v434 = vadd.f32 %v402, 0.0
  %v435 = vadd.f32 %v403, 0.0
  %v436 = vadd.f32 %v404, 0.0
  %v437 = vadd.f32 %v405, 0.0
  %v438 = vadd.f32 %v406, 0.0
  %v439 = vadd.f32 %v407, 0.0
  %v440 = vadd.f32 %v408, 0.0
  %v441 = vadd.f32 %v409, 0.0
  %v442 = vadd.f32 %v410, 0.0
  %v443 = vadd.f32 %v411, 0.0
  %v444 = vld [vmem:[#allocation2 + $0x1] sm:$0xff]
  %v445 = vld [vmem:[#allocation2 + $0x9] sm:$0xff]
  %v446 = vld [vmem:[#allocation2 + $0x19] sm:$0xff]
  %v447 = vld [vmem:[#allocation2 + $0x21] sm:$0xff]
  %v448 = vld [vmem:[#allocation2 + $0x31] sm:$0xff]
  %v449 = vld [vmem:[#allocation2 + $0x39] sm:$0xff]
  %v450 = vld [vmem:[#allocation2 + $0x49] sm:$0xff]
  %v451 = vld [vmem:[#allocation2 + $0x51] sm:$0xff]
  %v452 = vld [vmem:[#allocation2 + $0x61] sm:$0xff]
  %v453 = vld [vmem:[#allocation2 + $0x69] sm:$0xff]
  %v454 = vld [vmem:[#allocation2 + $0x79] sm:$0xff]
  %v455 = vld [vmem:[#allocation2 + $0x81] sm:$0xff]
  %v456 = vld [vmem:[#allocation2 + $0x91] sm:$0xff]
  %v457 = vld [vmem:[#allocation2 + $0x99] sm:$0xff]
  %v458 = vld [vmem:[#allocation2 + $0xa9] sm:$0xff]
  %v459 = vld [vmem:[#allocation2 + $0xb1] sm:$0xff]
  %v460 = vld [vmem:[#allocation2 + $0xc1] sm:$0xff]
  %v461 = vld [vmem:[#allocation2 + $0xc9] sm:$0xff]
  %v462 = vld [vmem:[#allocation2 + $0xd9] sm:$0xff]
  %v463 = vld [vmem:[#allocation2 + $0xe1] sm:$0xff]
  %v464 = vld [vmem:[#allocation2 + $0xf1] sm:$0xff]
  %v465 = vld [vmem:[#allocation2 + $0xf9] sm:$0xff]
  %v466 = vld [vmem:[#allocation2 + $0x109] sm:$0xff]
  %v467 = vld [vmem:[#allocation2 + $0x111] sm:$0xff]
  %v468 = vld [vmem:[#allocation2 + $0x121] sm:$0xff]
  %v469 = vld [vmem:[#allocation2 + $0x129] sm:$0xff]
  %v470 = vld [vmem:[#allocation2 + $0x139] sm:$0xff]
  %v471 = vld [vmem:[#allocation2 + $0x141] sm:$0xff]
  %v472 = vld [vmem:[#allocation2 + $0x151] sm:$0xff]
  %v473 = vld [vmem:[#allocation2 + $0x159] sm:$0xff]
  %v474 = vld [vmem:[#allocation2 + $0x169] sm:$0xff]
  %v475 = vld [vmem:[#allocation2 + $0x171] sm:$0xff]
  %477 = vset.pattern.permute.xlu0 0
  %478 = vperm.xlu0 %477, %v444
  %v479 = vpop.permute.xlu0 %478
  %482 = vset.pattern.permute.xlu0 0
  %483 = vperm.xlu0 %482, %v445
  %v484 = vpop.permute.xlu0 %483
  %487 = vset.pattern.permute.xlu0 0
  %488 = vperm.xlu0 %487, %v446
  %v489 = vpop.permute.xlu0 %488
  %492 = vset.pattern.permute.xlu0 0
  %493 = vperm.xlu0 %492, %v447
  %v494 = vpop.permute.xlu0 %493
  %497 = vset.pattern.permute.xlu0 0
  %498 = vperm.xlu0 %497, %v448
  %v499 = vpop.permute.xlu0 %498
  %502 = vset.pattern.permute.xlu0 0
  %503 = vperm.xlu0 %502, %v449
  %v504 = vpop.permute.xlu0 %503
  %507 = vset.pattern.permute.xlu0 0
  %508 = vperm.xlu0 %507, %v450
  %v509 = vpop.permute.xlu0 %508
  %512 = vset.pattern.permute.xlu0 0
  %513 = vperm.xlu0 %512, %v451
  %v514 = vpop.permute.xlu0 %513
  %517 = vset.pattern.permute.xlu0 0
  %518 = vperm.xlu0 %517, %v452
  %v519 = vpop.permute.xlu0 %518
  %522 = vset.pattern.permute.xlu0 0
  %523 = vperm.xlu0 %522, %v453
  %v524 = vpop.permute.xlu0 %523
  %527 = vset.pattern.permute.xlu0 0
  %528 = vperm.xlu0 %527, %v454
  %v529 = vpop.permute.xlu0 %528
  %532 = vset.pattern.permute.xlu0 0
  %533 = vperm.xlu0 %532, %v455
  %v534 = vpop.permute.xlu0 %533
  %537 = vset.pattern.permute.xlu0 0
  %538 = vperm.xlu0 %537, %v456
  %v539 = vpop.permute.xlu0 %538
  %542 = vset.pattern.permute.xlu0 0
  %543 = vperm.xlu0 %542, %v457
  %v544 = vpop.permute.xlu0 %543
  %547 = vset.pattern.permute.xlu0 0
  %548 = vperm.xlu0 %547, %v458
  %v549 = vpop.permute.xlu0 %548
  %552 = vset.pattern.permute.xlu0 0
  %553 = vperm.xlu0 %552, %v459
  %v554 = vpop.permute.xlu0 %553
  %557 = vset.pattern.permute.xlu0 0
  %558 = vperm.xlu0 %557, %v460
  %v559 = vpop.permute.xlu0 %558
  %562 = vset.pattern.permute.xlu0 0
  %563 = vperm.xlu0 %562, %v461
  %v564 = vpop.permute.xlu0 %563
  %567 = vset.pattern.permute.xlu0 0
  %568 = vperm.xlu0 %567, %v462
  %v569 = vpop.permute.xlu0 %568
  %572 = vset.pattern.permute.xlu0 0
  %573 = vperm.xlu0 %572, %v463
  %v574 = vpop.permute.xlu0 %573
  %577 = vset.pattern.permute.xlu0 0
  %578 = vperm.xlu0 %577, %v464
  %v579 = vpop.permute.xlu0 %578
  %582 = vset.pattern.permute.xlu0 0
  %583 = vperm.xlu0 %582, %v465
  %v584 = vpop.permute.xlu0 %583
  %587 = vset.pattern.permute.xlu0 0
  %588 = vperm.xlu0 %587, %v466
  %v589 = vpop.permute.xlu0 %588
  %592 = vset.pattern.permute.xlu0 0
  %593 = vperm.xlu0 %592, %v467
  %v594 = vpop.permute.xlu0 %593
  %597 = vset.pattern.permute.xlu0 0
  %598 = vperm.xlu0 %597, %v468
  %v599 = vpop.permute.xlu0 %598
  %602 = vset.pattern.permute.xlu0 0
  %603 = vperm.xlu0 %602, %v469
  %v604 = vpop.permute.xlu0 %603
  %607 = vset.pattern.permute.xlu0 0
  %608 = vperm.xlu0 %607, %v470
  %v609 = vpop.permute.xlu0 %608
  %612 = vset.pattern.permute.xlu0 0
  %613 = vperm.xlu0 %612, %v471
  %v614 = vpop.permute.xlu0 %613
  %617 = vset.pattern.permute.xlu0 0
  %618 = vperm.xlu0 %617, %v472
  %v619 = vpop.permute.xlu0 %618
  %622 = vset.pattern.permute.xlu0 0
  %623 = vperm.xlu0 %622, %v473
  %v624 = vpop.permute.xlu0 %623
  %627 = vset.pattern.permute.xlu0 0
  %628 = vperm.xlu0 %627, %v474
  %v629 = vpop.permute.xlu0 %628
  %632 = vset.pattern.permute.xlu0 0
  %633 = vperm.xlu0 %632, %v475
  %v634 = vpop.permute.xlu0 %633
  %v636 = vlaneseq
  %v637 = vshrl.u32 %v636, 7
  %v638 = vsub.s32 1, %v637
  %v639 = vrot.slane %v182, %v638
  %v640 = vmul.f32 %v479, %v639
  %v641 = vmul.f32 %v484, %v639
  %v642 = vmul.f32 %v489, %v639
  %v643 = vmul.f32 %v494, %v639
  %v644 = vmul.f32 %v499, %v639
  %v645 = vmul.f32 %v504, %v639
  %v646 = vmul.f32 %v509, %v639
  %v647 = vmul.f32 %v514, %v639
  %v648 = vmul.f32 %v519, %v639
  %v649 = vmul.f32 %v524, %v639
  %v650 = vmul.f32 %v529, %v639
  %v651 = vmul.f32 %v534, %v639
  %v652 = vmul.f32 %v539, %v639
  %v653 = vmul.f32 %v544, %v639
  %v654 = vmul.f32 %v549, %v639
  %v655 = vmul.f32 %v554, %v639
  %v656 = vmul.f32 %v559, %v639
  %v657 = vmul.f32 %v564, %v639
  %v658 = vmul.f32 %v569, %v639
  %v659 = vmul.f32 %v574, %v639
  %v660 = vmul.f32 %v579, %v639
  %v661 = vmul.f32 %v584, %v639
  %v662 = vmul.f32 %v589, %v639
  %v663 = vmul.f32 %v594, %v639
  %v664 = vmul.f32 %v599, %v639
  %v665 = vmul.f32 %v604, %v639
  %v666 = vmul.f32 %v609, %v639
  %v667 = vmul.f32 %v614, %v639
  %v668 = vmul.f32 %v619, %v639
  %v669 = vmul.f32 %v624, %v639
  %v670 = vmul.f32 %v629, %v639
  %v671 = vmul.f32 %v634, %v639
  %v672 = vadd.f32 %v412, %v640
  %v673 = vadd.f32 %v413, %v641
  %v674 = vadd.f32 %v414, %v642
  %v675 = vadd.f32 %v415, %v643
  %v676 = vadd.f32 %v416, %v644
  %v677 = vadd.f32 %v417, %v645
  %v678 = vadd.f32 %v418, %v646
  %v679 = vadd.f32 %v419, %v647
  %v680 = vadd.f32 %v420, %v648
  %v681 = vadd.f32 %v421, %v649
  %v682 = vadd.f32 %v422, %v650
  %v683 = vadd.f32 %v423, %v651
  %v684 = vadd.f32 %v424, %v652
  %v685 = vadd.f32 %v425, %v653
  %v686 = vadd.f32 %v426, %v654
  %v687 = vadd.f32 %v427, %v655
  %v688 = vadd.f32 %v428, %v656
  %v689 = vadd.f32 %v429, %v657
  %v690 = vadd.f32 %v430, %v658
  %v691 = vadd.f32 %v431, %v659
  %v692 = vadd.f32 %v432, %v660
  %v693 = vadd.f32 %v433, %v661
  %v694 = vadd.f32 %v434, %v662
  %v695 = vadd.f32 %v435, %v663
  %v696 = vadd.f32 %v436, %v664
  %v697 = vadd.f32 %v437, %v665
  %v698 = vadd.f32 %v438, %v666
  %v699 = vadd.f32 %v439, %v667
  %v700 = vadd.f32 %v440, %v668
  %v701 = vadd.f32 %v441, %v669
  %v702 = vadd.f32 %v442, %v670
  %v703 = vadd.f32 %v443, %v671
  %v704 = vld [vmem:[#allocation2 + $0x2] sm:$0xff]
  %v705 = vld [vmem:[#allocation2 + $0xa] sm:$0xff]
  %v706 = vld [vmem:[#allocation2 + $0x1a] sm:$0xff]
  %v707 = vld [vmem:[#allocation2 + $0x22] sm:$0xff]
  %v708 = vld [vmem:[#allocation2 + $0x32] sm:$0xff]
  %v709 = vld [vmem:[#allocation2 + $0x3a] sm:$0xff]
  %v710 = vld [vmem:[#allocation2 + $0x4a] sm:$0xff]
  %v711 = vld [vmem:[#allocation2 + $0x52] sm:$0xff]
  %v712 = vld [vmem:[#allocation2 + $0x62] sm:$0xff]
  %v713 = vld [vmem:[#allocation2 + $0x6a] sm:$0xff]
  %v714 = vld [vmem:[#allocation2 + $0x7a] sm:$0xff]
  %v715 = vld [vmem:[#allocation2 + $0x82] sm:$0xff]
  %v716 = vld [vmem:[#allocation2 + $0x92] sm:$0xff]
  %v717 = vld [vmem:[#allocation2 + $0x9a] sm:$0xff]
  %v718 = vld [vmem:[#allocation2 + $0xaa] sm:$0xff]
  %v719 = vld [vmem:[#allocation2 + $0xb2] sm:$0xff]
  %v720 = vld [vmem:[#allocation2 + $0xc2] sm:$0xff]
  %v721 = vld [vmem:[#allocation2 + $0xca] sm:$0xff]
  %v722 = vld [vmem:[#allocation2 + $0xda] sm:$0xff]
  %v723 = vld [vmem:[#allocation2 + $0xe2] sm:$0xff]
  %v724 = vld [vmem:[#allocation2 + $0xf2] sm:$0xff]
  %v725 = vld [vmem:[#allocation2 + $0xfa] sm:$0xff]
  %v726 = vld [vmem:[#allocation2 + $0x10a] sm:$0xff]
  %v727 = vld [vmem:[#allocation2 + $0x112] sm:$0xff]
  %v728 = vld [vmem:[#allocation2 + $0x122] sm:$0xff]
  %v729 = vld [vmem:[#allocation2 + $0x12a] sm:$0xff]
  %v730 = vld [vmem:[#allocation2 + $0x13a] sm:$0xff]
  %v731 = vld [vmem:[#allocation2 + $0x142] sm:$0xff]
  %v732 = vld [vmem:[#allocation2 + $0x152] sm:$0xff]
  %v733 = vld [vmem:[#allocation2 + $0x15a] sm:$0xff]
  %v734 = vld [vmem:[#allocation2 + $0x16a] sm:$0xff]
  %v735 = vld [vmem:[#allocation2 + $0x172] sm:$0xff]
  %737 = vset.pattern.permute.xlu0 0
  %738 = vperm.xlu0 %737, %v704
  %v739 = vpop.permute.xlu0 %738
  %742 = vset.pattern.permute.xlu0 0
  %743 = vperm.xlu0 %742, %v705
  %v744 = vpop.permute.xlu0 %743
  %747 = vset.pattern.permute.xlu0 0
  %748 = vperm.xlu0 %747, %v706
  %v749 = vpop.permute.xlu0 %748
  %752 = vset.pattern.permute.xlu0 0
  %753 = vperm.xlu0 %752, %v707
  %v754 = vpop.permute.xlu0 %753
  %757 = vset.pattern.permute.xlu0 0
  %758 = vperm.xlu0 %757, %v708
  %v759 = vpop.permute.xlu0 %758
  %762 = vset.pattern.permute.xlu0 0
  %763 = vperm.xlu0 %762, %v709
  %v764 = vpop.permute.xlu0 %763
  %767 = vset.pattern.permute.xlu0 0
  %768 = vperm.xlu0 %767, %v710
  %v769 = vpop.permute.xlu0 %768
  %772 = vset.pattern.permute.xlu0 0
  %773 = vperm.xlu0 %772, %v711
  %v774 = vpop.permute.xlu0 %773
  %777 = vset.pattern.permute.xlu0 0
  %778 = vperm.xlu0 %777, %v712
  %v779 = vpop.permute.xlu0 %778
  %782 = vset.pattern.permute.xlu0 0
  %783 = vperm.xlu0 %782, %v713
  %v784 = vpop.permute.xlu0 %783
  %787 = vset.pattern.permute.xlu0 0
  %788 = vperm.xlu0 %787, %v714
  %v789 = vpop.permute.xlu0 %788
  %792 = vset.pattern.permute.xlu0 0
  %793 = vperm.xlu0 %792, %v715
  %v794 = vpop.permute.xlu0 %793
  %797 = vset.pattern.permute.xlu0 0
  %798 = vperm.xlu0 %797, %v716
  %v799 = vpop.permute.xlu0 %798
  %802 = vset.pattern.permute.xlu0 0
  %803 = vperm.xlu0 %802, %v717
  %v804 = vpop.permute.xlu0 %803
  %807 = vset.pattern.permute.xlu0 0
  %808 = vperm.xlu0 %807, %v718
  %v809 = vpop.permute.xlu0 %808
  %812 = vset.pattern.permute.xlu0 0
  %813 = vperm.xlu0 %812, %v719
  %v814 = vpop.permute.xlu0 %813
  %817 = vset.pattern.permute.xlu0 0
  %818 = vperm.xlu0 %817, %v720
  %v819 = vpop.permute.xlu0 %818
  %822 = vset.pattern.permute.xlu0 0
  %823 = vperm.xlu0 %822, %v721
  %v824 = vpop.permute.xlu0 %823
  %827 = vset.pattern.permute.xlu0 0
  %828 = vperm.xlu0 %827, %v722
  %v829 = vpop.permute.xlu0 %828
  %832 = vset.pattern.permute.xlu0 0
  %833 = vperm.xlu0 %832, %v723
  %v834 = vpop.permute.xlu0 %833
  %837 = vset.pattern.permute.xlu0 0
  %838 = vperm.xlu0 %837, %v724
  %v839 = vpop.permute.xlu0 %838
  %842 = vset.pattern.permute.xlu0 0
  %843 = vperm.xlu0 %842, %v725
  %v844 = vpop.permute.xlu0 %843
  %847 = vset.pattern.permute.xlu0 0
  %848 = vperm.xlu0 %847, %v726
  %v849 = vpop.permute.xlu0 %848
  %852 = vset.pattern.permute.xlu0 0
  %853 = vperm.xlu0 %852, %v727
  %v854 = vpop.permute.xlu0 %853
  %857 = vset.pattern.permute.xlu0 0
  %858 = vperm.xlu0 %857, %v728
  %v859 = vpop.permute.xlu0 %858
  %862 = vset.pattern.permute.xlu0 0
  %863 = vperm.xlu0 %862, %v729
  %v864 = vpop.permute.xlu0 %863
  %867 = vset.pattern.permute.xlu0 0
  %868 = vperm.xlu0 %867, %v730
  %v869 = vpop.permute.xlu0 %868
  %872 = vset.pattern.permute.xlu0 0
  %873 = vperm.xlu0 %872, %v731
  %v874 = vpop.permute.xlu0 %873
  %877 = vset.pattern.permute.xlu0 0
  %878 = vperm.xlu0 %877, %v732
  %v879 = vpop.permute.xlu0 %878
  %882 = vset.pattern.permute.xlu0 0
  %883 = vperm.xlu0 %882, %v733
  %v884 = vpop.permute.xlu0 %883
  %887 = vset.pattern.permute.xlu0 0
  %888 = vperm.xlu0 %887, %v734
  %v889 = vpop.permute.xlu0 %888
  %892 = vset.pattern.permute.xlu0 0
  %893 = vperm.xlu0 %892, %v735
  %v894 = vpop.permute.xlu0 %893
  %v896 = vlaneseq
  %v897 = vshrl.u32 %v896, 7
  %v898 = vsub.s32 2, %v897
  %v899 = vrot.slane %v182, %v898
  %v900 = vmul.f32 %v739, %v899
  %v901 = vmul.f32 %v744, %v899
  %v902 = vmul.f32 %v749, %v899
  %v903 = vmul.f32 %v754, %v899
  %v904 = vmul.f32 %v759, %v899
  %v905 = vmul.f32 %v764, %v899
  %v906 = vmul.f32 %v769, %v899
  %v907 = vmul.f32 %v774, %v899
  %v908 = vmul.f32 %v779, %v899
  %v909 = vmul.f32 %v784, %v899
  %v910 = vmul.f32 %v789, %v899
  %v911 = vmul.f32 %v794, %v899
  %v912 = vmul.f32 %v799, %v899
  %v913 = vmul.f32 %v804, %v899
  %v914 = vmul.f32 %v809, %v899
  %v915 = vmul.f32 %v814, %v899
  %v916 = vmul.f32 %v819, %v899
  %v917 = vmul.f32 %v824, %v899
  %v918 = vmul.f32 %v829, %v899
  %v919 = vmul.f32 %v834, %v899
  %v920 = vmul.f32 %v839, %v899
  %v921 = vmul.f32 %v844, %v899
  %v922 = vmul.f32 %v849, %v899
  %v923 = vmul.f32 %v854, %v899
  %v924 = vmul.f32 %v859, %v899
  %v925 = vmul.f32 %v864, %v899
  %v926 = vmul.f32 %v869, %v899
  %v927 = vmul.f32 %v874, %v899
  %v928 = vmul.f32 %v879, %v899
  %v929 = vmul.f32 %v884, %v899
  %v930 = vmul.f32 %v889, %v899
  %v931 = vmul.f32 %v894, %v899
  %v932 = vadd.f32 %v672, %v900
  %v933 = vadd.f32 %v673, %v901
  %v934 = vadd.f32 %v674, %v902
  %v935 = vadd.f32 %v675, %v903
  %v936 = vadd.f32 %v676, %v904
  %v937 = vadd.f32 %v677, %v905
  %v938 = vadd.f32 %v678, %v906
  %v939 = vadd.f32 %v679, %v907
  %v940 = vadd.f32 %v680, %v908
  %v941 = vadd.f32 %v681, %v909
  %v942 = vadd.f32 %v682, %v910
  %v943 = vadd.f32 %v683, %v911
  %v944 = vadd.f32 %v684, %v912
  %v945 = vadd.f32 %v685, %v913
  %v946 = vadd.f32 %v686, %v914
  %v947 = vadd.f32 %v687, %v915
  %v948 = vadd.f32 %v688, %v916
  %v949 = vadd.f32 %v689, %v917
  %v950 = vadd.f32 %v690, %v918
  %v951 = vadd.f32 %v691, %v919
  %v952 = vadd.f32 %v692, %v920
  %v953 = vadd.f32 %v693, %v921
  %v954 = vadd.f32 %v694, %v922
  %v955 = vadd.f32 %v695, %v923
  %v956 = vadd.f32 %v696, %v924
  %v957 = vadd.f32 %v697, %v925
  %v958 = vadd.f32 %v698, %v926
  %v959 = vadd.f32 %v699, %v927
  %v960 = vadd.f32 %v700, %v928
  %v961 = vadd.f32 %v701, %v929
  %v962 = vadd.f32 %v702, %v930
  %v963 = vadd.f32 %v703, %v931
  %v964 = vld [vmem:[%s148] sm:$0xff]
  %v965 = vld [vmem:[%s148 + $0x8] sm:$0xff]
  %v966 = vld [vmem:[%s148 + $0x18] sm:$0xff]
  %v967 = vld [vmem:[%s148 + $0x20] sm:$0xff]
  %v968 = vld [vmem:[%s148 + $0x30] sm:$0xff]
  %v969 = vld [vmem:[%s148 + $0x38] sm:$0xff]
  %v970 = vld [vmem:[%s148 + $0x48] sm:$0xff]
  %v971 = vld [vmem:[%s148 + $0x50] sm:$0xff]
  %v972 = vld [vmem:[%s148 + $0x60] sm:$0xff]
  %v973 = vld [vmem:[%s148 + $0x68] sm:$0xff]
  %v974 = vld [vmem:[%s148 + $0x78] sm:$0xff]
  %v975 = vld [vmem:[%s148 + $0x80] sm:$0xff]
  %v976 = vld [vmem:[%s148 + $0x90] sm:$0xff]
  %v977 = vld [vmem:[%s148 + $0x98] sm:$0xff]
  %v978 = vld [vmem:[%s148 + $0xa8] sm:$0xff]
  %v979 = vld [vmem:[%s148 + $0xb0] sm:$0xff]
  %v980 = vld [vmem:[%s148 + $0xc0] sm:$0xff]
  %v981 = vld [vmem:[%s148 + $0xc8] sm:$0xff]
  %v982 = vld [vmem:[%s148 + $0xd8] sm:$0xff]
  %v983 = vld [vmem:[%s148 + $0xe0] sm:$0xff]
  %v984 = vld [vmem:[%s148 + $0xf0] sm:$0xff]
  %v985 = vld [vmem:[%s148 + $0xf8] sm:$0xff]
  %v986 = vld [vmem:[%s148 + $0x108] sm:$0xff]
  %v987 = vld [vmem:[%s148 + $0x110] sm:$0xff]
  %v988 = vld [vmem:[%s148 + $0x120] sm:$0xff]
  %v989 = vld [vmem:[%s148 + $0x128] sm:$0xff]
  %v990 = vld [vmem:[%s148 + $0x138] sm:$0xff]
  %v991 = vld [vmem:[%s148 + $0x140] sm:$0xff]
  %v992 = vld [vmem:[%s148 + $0x150] sm:$0xff]
  %v993 = vld [vmem:[%s148 + $0x158] sm:$0xff]
  %v994 = vld [vmem:[%s148 + $0x168] sm:$0xff]
  %v995 = vld [vmem:[%s148 + $0x170] sm:$0xff]
  %997 = vset.pattern.permute.xlu0 0
  %998 = vperm.xlu0 %997, %v964
  %v999 = vpop.permute.xlu0 %998
  %1002 = vset.pattern.permute.xlu0 0
  %1003 = vperm.xlu0 %1002, %v965
  %v1004 = vpop.permute.xlu0 %1003
  %1007 = vset.pattern.permute.xlu0 0
  %1008 = vperm.xlu0 %1007, %v966
  %v1009 = vpop.permute.xlu0 %1008
  %1012 = vset.pattern.permute.xlu0 0
  %1013 = vperm.xlu0 %1012, %v967
  %v1014 = vpop.permute.xlu0 %1013
  %1017 = vset.pattern.permute.xlu0 0
  %1018 = vperm.xlu0 %1017, %v968
  %v1019 = vpop.permute.xlu0 %1018
  %1022 = vset.pattern.permute.xlu0 0
  %1023 = vperm.xlu0 %1022, %v969
  %v1024 = vpop.permute.xlu0 %1023
  %1027 = vset.pattern.permute.xlu0 0
  %1028 = vperm.xlu0 %1027, %v970
  %v1029 = vpop.permute.xlu0 %1028
  %1032 = vset.pattern.permute.xlu0 0
  %1033 = vperm.xlu0 %1032, %v971
  %v1034 = vpop.permute.xlu0 %1033
  %1037 = vset.pattern.permute.xlu0 0
  %1038 = vperm.xlu0 %1037, %v972
  %v1039 = vpop.permute.xlu0 %1038
  %1042 = vset.pattern.permute.xlu0 0
  %1043 = vperm.xlu0 %1042, %v973
  %v1044 = vpop.permute.xlu0 %1043
  %1047 = vset.pattern.permute.xlu0 0
  %1048 = vperm.xlu0 %1047, %v974
  %v1049 = vpop.permute.xlu0 %1048
  %1052 = vset.pattern.permute.xlu0 0
  %1053 = vperm.xlu0 %1052, %v975
  %v1054 = vpop.permute.xlu0 %1053
  %1057 = vset.pattern.permute.xlu0 0
  %1058 = vperm.xlu0 %1057, %v976
  %v1059 = vpop.permute.xlu0 %1058
  %1062 = vset.pattern.permute.xlu0 0
  %1063 = vperm.xlu0 %1062, %v977
  %v1064 = vpop.permute.xlu0 %1063
  %1067 = vset.pattern.permute.xlu0 0
  %1068 = vperm.xlu0 %1067, %v978
  %v1069 = vpop.permute.xlu0 %1068
  %1072 = vset.pattern.permute.xlu0 0
  %1073 = vperm.xlu0 %1072, %v979
  %v1074 = vpop.permute.xlu0 %1073
  %1077 = vset.pattern.permute.xlu0 0
  %1078 = vperm.xlu0 %1077, %v980
  %v1079 = vpop.permute.xlu0 %1078
  %1082 = vset.pattern.permute.xlu0 0
  %1083 = vperm.xlu0 %1082, %v981
  %v1084 = vpop.permute.xlu0 %1083
  %1087 = vset.pattern.permute.xlu0 0
  %1088 = vperm.xlu0 %1087, %v982
  %v1089 = vpop.permute.xlu0 %1088
  %1092 = vset.pattern.permute.xlu0 0
  %1093 = vperm.xlu0 %1092, %v983
  %v1094 = vpop.permute.xlu0 %1093
  %1097 = vset.pattern.permute.xlu0 0
  %1098 = vperm.xlu0 %1097, %v984
  %v1099 = vpop.permute.xlu0 %1098
  %1102 = vset.pattern.permute.xlu0 0
  %1103 = vperm.xlu0 %1102, %v985
  %v1104 = vpop.permute.xlu0 %1103
  %1107 = vset.pattern.permute.xlu0 0
  %1108 = vperm.xlu0 %1107, %v986
  %v1109 = vpop.permute.xlu0 %1108
  %1112 = vset.pattern.permute.xlu0 0
  %1113 = vperm.xlu0 %1112, %v987
  %v1114 = vpop.permute.xlu0 %1113
  %1117 = vset.pattern.permute.xlu0 0
  %1118 = vperm.xlu0 %1117, %v988
  %v1119 = vpop.permute.xlu0 %1118
  %1122 = vset.pattern.permute.xlu0 0
  %1123 = vperm.xlu0 %1122, %v989
  %v1124 = vpop.permute.xlu0 %1123
  %1127 = vset.pattern.permute.xlu0 0
  %1128 = vperm.xlu0 %1127, %v990
  %v1129 = vpop.permute.xlu0 %1128
  %1132 = vset.pattern.permute.xlu0 0
  %1133 = vperm.xlu0 %1132, %v991
  %v1134 = vpop.permute.xlu0 %1133
  %1137 = vset.pattern.permute.xlu0 0
  %1138 = vperm.xlu0 %1137, %v992
  %v1139 = vpop.permute.xlu0 %1138
  %1142 = vset.pattern.permute.xlu0 0
  %1143 = vperm.xlu0 %1142, %v993
  %v1144 = vpop.permute.xlu0 %1143
  %1147 = vset.pattern.permute.xlu0 0
  %1148 = vperm.xlu0 %1147, %v994
  %v1149 = vpop.permute.xlu0 %1148
  %1152 = vset.pattern.permute.xlu0 0
  %1153 = vperm.xlu0 %1152, %v995
  %v1154 = vpop.permute.xlu0 %1153
  %v1156 = vlaneseq
  %v1157 = vshrl.u32 %v1156, 7
  %v1158 = vsub.s32 3, %v1157
  %v1159 = vrot.slane %v182, %v1158
  %v1160 = vmul.f32 %v999, %v1159
  %v1161 = vmul.f32 %v1004, %v1159
  %v1162 = vmul.f32 %v1009, %v1159
  %v1163 = vmul.f32 %v1014, %v1159
  %v1164 = vmul.f32 %v1019, %v1159
  %v1165 = vmul.f32 %v1024, %v1159
  %v1166 = vmul.f32 %v1029, %v1159
  %v1167 = vmul.f32 %v1034, %v1159
  %v1168 = vmul.f32 %v1039, %v1159
  %v1169 = vmul.f32 %v1044, %v1159
  %v1170 = vmul.f32 %v1049, %v1159
  %v1171 = vmul.f32 %v1054, %v1159
  %v1172 = vmul.f32 %v1059, %v1159
  %v1173 = vmul.f32 %v1064, %v1159
  %v1174 = vmul.f32 %v1069, %v1159
  %v1175 = vmul.f32 %v1074, %v1159
  %v1176 = vmul.f32 %v1079, %v1159
  %v1177 = vmul.f32 %v1084, %v1159
  %v1178 = vmul.f32 %v1089, %v1159
  %v1179 = vmul.f32 %v1094, %v1159
  %v1180 = vmul.f32 %v1099, %v1159
  %v1181 = vmul.f32 %v1104, %v1159
  %v1182 = vmul.f32 %v1109, %v1159
  %v1183 = vmul.f32 %v1114, %v1159
  %v1184 = vmul.f32 %v1119, %v1159
  %v1185 = vmul.f32 %v1124, %v1159
  %v1186 = vmul.f32 %v1129, %v1159
  %v1187 = vmul.f32 %v1134, %v1159
  %v1188 = vmul.f32 %v1139, %v1159
  %v1189 = vmul.f32 %v1144, %v1159
  %v1190 = vmul.f32 %v1149, %v1159
  %v1191 = vmul.f32 %v1154, %v1159
  %v1192 = vadd.f32 %v932, %v1160
  %v1193 = vadd.f32 %v933, %v1161
  %v1194 = vadd.f32 %v934, %v1162
  %v1195 = vadd.f32 %v935, %v1163
  %v1196 = vadd.f32 %v936, %v1164
  %v1197 = vadd.f32 %v937, %v1165
  %v1198 = vadd.f32 %v938, %v1166
  %v1199 = vadd.f32 %v939, %v1167
  %v1200 = vadd.f32 %v940, %v1168
  %v1201 = vadd.f32 %v941, %v1169
  %v1202 = vadd.f32 %v942, %v1170
  %v1203 = vadd.f32 %v943, %v1171
  %v1204 = vadd.f32 %v944, %v1172
  %v1205 = vadd.f32 %v945, %v1173
  %v1206 = vadd.f32 %v946, %v1174
  %v1207 = vadd.f32 %v947, %v1175
  %v1208 = vadd.f32 %v948, %v1176
  %v1209 = vadd.f32 %v949, %v1177
  %v1210 = vadd.f32 %v950, %v1178
  %v1211 = vadd.f32 %v951, %v1179
  %v1212 = vadd.f32 %v952, %v1180
  %v1213 = vadd.f32 %v953, %v1181
  %v1214 = vadd.f32 %v954, %v1182
  %v1215 = vadd.f32 %v955, %v1183
  %v1216 = vadd.f32 %v956, %v1184
  %v1217 = vadd.f32 %v957, %v1185
  %v1218 = vadd.f32 %v958, %v1186
  %v1219 = vadd.f32 %v959, %v1187
  %v1220 = vadd.f32 %v960, %v1188
  %v1221 = vadd.f32 %v961, %v1189
  %v1222 = vadd.f32 %v962, %v1190
  %v1223 = vadd.f32 %v963, %v1191
  %v1224 = vld [vmem:[%s148 + $0x1] sm:$0xff]
  %v1225 = vld [vmem:[%s148 + $0x9] sm:$0xff]
  %v1226 = vld [vmem:[%s148 + $0x19] sm:$0xff]
  %v1227 = vld [vmem:[%s148 + $0x21] sm:$0xff]
  %v1228 = vld [vmem:[%s148 + $0x31] sm:$0xff]
  %v1229 = vld [vmem:[%s148 + $0x39] sm:$0xff]
  %v1230 = vld [vmem:[%s148 + $0x49] sm:$0xff]
  %v1231 = vld [vmem:[%s148 + $0x51] sm:$0xff]
  %v1232 = vld [vmem:[%s148 + $0x61] sm:$0xff]
  %v1233 = vld [vmem:[%s148 + $0x69] sm:$0xff]
  %v1234 = vld [vmem:[%s148 + $0x79] sm:$0xff]
  %v1235 = vld [vmem:[%s148 + $0x81] sm:$0xff]
  %v1236 = vld [vmem:[%s148 + $0x91] sm:$0xff]
  %v1237 = vld [vmem:[%s148 + $0x99] sm:$0xff]
  %v1238 = vld [vmem:[%s148 + $0xa9] sm:$0xff]
  %v1239 = vld [vmem:[%s148 + $0xb1] sm:$0xff]
  %v1240 = vld [vmem:[%s148 + $0xc1] sm:$0xff]
  %v1241 = vld [vmem:[%s148 + $0xc9] sm:$0xff]
  %v1242 = vld [vmem:[%s148 + $0xd9] sm:$0xff]
  %v1243 = vld [vmem:[%s148 + $0xe1] sm:$0xff]
  %v1244 = vld [vmem:[%s148 + $0xf1] sm:$0xff]
  %v1245 = vld [vmem:[%s148 + $0xf9] sm:$0xff]
  %v1246 = vld [vmem:[%s148 + $0x109] sm:$0xff]
  %v1247 = vld [vmem:[%s148 + $0x111] sm:$0xff]
  %v1248 = vld [vmem:[%s148 + $0x121] sm:$0xff]
  %v1249 = vld [vmem:[%s148 + $0x129] sm:$0xff]
  %v1250 = vld [vmem:[%s148 + $0x139] sm:$0xff]
  %v1251 = vld [vmem:[%s148 + $0x141] sm:$0xff]
  %v1252 = vld [vmem:[%s148 + $0x151] sm:$0xff]
  %v1253 = vld [vmem:[%s148 + $0x159] sm:$0xff]
  %v1254 = vld [vmem:[%s148 + $0x169] sm:$0xff]
  %v1255 = vld [vmem:[%s148 + $0x171] sm:$0xff]
  %1257 = vset.pattern.permute.xlu0 0
  %1258 = vperm.xlu0 %1257, %v1224
  %v1259 = vpop.permute.xlu0 %1258
  %1262 = vset.pattern.permute.xlu0 0
  %1263 = vperm.xlu0 %1262, %v1225
  %v1264 = vpop.permute.xlu0 %1263
  %1267 = vset.pattern.permute.xlu0 0
  %1268 = vperm.xlu0 %1267, %v1226
  %v1269 = vpop.permute.xlu0 %1268
  %1272 = vset.pattern.permute.xlu0 0
  %1273 = vperm.xlu0 %1272, %v1227
  %v1274 = vpop.permute.xlu0 %1273
  %1277 = vset.pattern.permute.xlu0 0
  %1278 = vperm.xlu0 %1277, %v1228
  %v1279 = vpop.permute.xlu0 %1278
  %1282 = vset.pattern.permute.xlu0 0
  %1283 = vperm.xlu0 %1282, %v1229
  %v1284 = vpop.permute.xlu0 %1283
  %1287 = vset.pattern.permute.xlu0 0
  %1288 = vperm.xlu0 %1287, %v1230
  %v1289 = vpop.permute.xlu0 %1288
  %1292 = vset.pattern.permute.xlu0 0
  %1293 = vperm.xlu0 %1292, %v1231
  %v1294 = vpop.permute.xlu0 %1293
  %1297 = vset.pattern.permute.xlu0 0
  %1298 = vperm.xlu0 %1297, %v1232
  %v1299 = vpop.permute.xlu0 %1298
  %1302 = vset.pattern.permute.xlu0 0
  %1303 = vperm.xlu0 %1302, %v1233
  %v1304 = vpop.permute.xlu0 %1303
  %1307 = vset.pattern.permute.xlu0 0
  %1308 = vperm.xlu0 %1307, %v1234
  %v1309 = vpop.permute.xlu0 %1308
  %1312 = vset.pattern.permute.xlu0 0
  %1313 = vperm.xlu0 %1312, %v1235
  %v1314 = vpop.permute.xlu0 %1313
  %1317 = vset.pattern.permute.xlu0 0
  %1318 = vperm.xlu0 %1317, %v1236
  %v1319 = vpop.permute.xlu0 %1318
  %1322 = vset.pattern.permute.xlu0 0
  %1323 = vperm.xlu0 %1322, %v1237
  %v1324 = vpop.permute.xlu0 %1323
  %1327 = vset.pattern.permute.xlu0 0
  %1328 = vperm.xlu0 %1327, %v1238
  %v1329 = vpop.permute.xlu0 %1328
  %1332 = vset.pattern.permute.xlu0 0
  %1333 = vperm.xlu0 %1332, %v1239
  %v1334 = vpop.permute.xlu0 %1333
  %1337 = vset.pattern.permute.xlu0 0
  %1338 = vperm.xlu0 %1337, %v1240
  %v1339 = vpop.permute.xlu0 %1338
  %1342 = vset.pattern.permute.xlu0 0
  %1343 = vperm.xlu0 %1342, %v1241
  %v1344 = vpop.permute.xlu0 %1343
  %1347 = vset.pattern.permute.xlu0 0
  %1348 = vperm.xlu0 %1347, %v1242
  %v1349 = vpop.permute.xlu0 %1348
  %1352 = vset.pattern.permute.xlu0 0
  %1353 = vperm.xlu0 %1352, %v1243
  %v1354 = vpop.permute.xlu0 %1353
  %1357 = vset.pattern.permute.xlu0 0
  %1358 = vperm.xlu0 %1357, %v1244
  %v1359 = vpop.permute.xlu0 %1358
  %1362 = vset.pattern.permute.xlu0 0
  %1363 = vperm.xlu0 %1362, %v1245
  %v1364 = vpop.permute.xlu0 %1363
  %1367 = vset.pattern.permute.xlu0 0
  %1368 = vperm.xlu0 %1367, %v1246
  %v1369 = vpop.permute.xlu0 %1368
  %1372 = vset.pattern.permute.xlu0 0
  %1373 = vperm.xlu0 %1372, %v1247
  %v1374 = vpop.permute.xlu0 %1373
  %1377 = vset.pattern.permute.xlu0 0
  %1378 = vperm.xlu0 %1377, %v1248
  %v1379 = vpop.permute.xlu0 %1378
  %1382 = vset.pattern.permute.xlu0 0
  %1383 = vperm.xlu0 %1382, %v1249
  %v1384 = vpop.permute.xlu0 %1383
  %1387 = vset.pattern.permute.xlu0 0
  %1388 = vperm.xlu0 %1387, %v1250
  %v1389 = vpop.permute.xlu0 %1388
  %1392 = vset.pattern.permute.xlu0 0
  %1393 = vperm.xlu0 %1392, %v1251
  %v1394 = vpop.permute.xlu0 %1393
  %1397 = vset.pattern.permute.xlu0 0
  %1398 = vperm.xlu0 %1397, %v1252
  %v1399 = vpop.permute.xlu0 %1398
  %1402 = vset.pattern.permute.xlu0 0
  %1403 = vperm.xlu0 %1402, %v1253
  %v1404 = vpop.permute.xlu0 %1403
  %1407 = vset.pattern.permute.xlu0 0
  %1408 = vperm.xlu0 %1407, %v1254
  %v1409 = vpop.permute.xlu0 %1408
  %1412 = vset.pattern.permute.xlu0 0
  %1413 = vperm.xlu0 %1412, %v1255
  %v1414 = vpop.permute.xlu0 %1413
  %v1416 = vlaneseq
  %v1417 = vshrl.u32 %v1416, 7
  %v1418 = vsub.s32 4, %v1417
  %v1419 = vrot.slane %v182, %v1418
  %v1420 = vmul.f32 %v1259, %v1419
  %v1421 = vmul.f32 %v1264, %v1419
  %v1422 = vmul.f32 %v1269, %v1419
  %v1423 = vmul.f32 %v1274, %v1419
  %v1424 = vmul.f32 %v1279, %v1419
  %v1425 = vmul.f32 %v1284, %v1419
  %v1426 = vmul.f32 %v1289, %v1419
  %v1427 = vmul.f32 %v1294, %v1419
  %v1428 = vmul.f32 %v1299, %v1419
  %v1429 = vmul.f32 %v1304, %v1419
  %v1430 = vmul.f32 %v1309, %v1419
  %v1431 = vmul.f32 %v1314, %v1419
  %v1432 = vmul.f32 %v1319, %v1419
  %v1433 = vmul.f32 %v1324, %v1419
  %v1434 = vmul.f32 %v1329, %v1419
  %v1435 = vmul.f32 %v1334, %v1419
  %v1436 = vmul.f32 %v1339, %v1419
  %v1437 = vmul.f32 %v1344, %v1419
  %v1438 = vmul.f32 %v1349, %v1419
  %v1439 = vmul.f32 %v1354, %v1419
  %v1440 = vmul.f32 %v1359, %v1419
  %v1441 = vmul.f32 %v1364, %v1419
  %v1442 = vmul.f32 %v1369, %v1419
  %v1443 = vmul.f32 %v1374, %v1419
  %v1444 = vmul.f32 %v1379, %v1419
  %v1445 = vmul.f32 %v1384, %v1419
  %v1446 = vmul.f32 %v1389, %v1419
  %v1447 = vmul.f32 %v1394, %v1419
  %v1448 = vmul.f32 %v1399, %v1419
  %v1449 = vmul.f32 %v1404, %v1419
  %v1450 = vmul.f32 %v1409, %v1419
  %v1451 = vmul.f32 %v1414, %v1419
  %v1452 = vadd.f32 %v1192, %v1420
  %v1453 = vadd.f32 %v1193, %v1421
  %v1454 = vadd.f32 %v1194, %v1422
  %v1455 = vadd.f32 %v1195, %v1423
  %v1456 = vadd.f32 %v1196, %v1424
  %v1457 = vadd.f32 %v1197, %v1425
  %v1458 = vadd.f32 %v1198, %v1426
  %v1459 = vadd.f32 %v1199, %v1427
  %v1460 = vadd.f32 %v1200, %v1428
  %v1461 = vadd.f32 %v1201, %v1429
  %v1462 = vadd.f32 %v1202, %v1430
  %v1463 = vadd.f32 %v1203, %v1431
  %v1464 = vadd.f32 %v1204, %v1432
  %v1465 = vadd.f32 %v1205, %v1433
  %v1466 = vadd.f32 %v1206, %v1434
  %v1467 = vadd.f32 %v1207, %v1435
  %v1468 = vadd.f32 %v1208, %v1436
  %v1469 = vadd.f32 %v1209, %v1437
  %v1470 = vadd.f32 %v1210, %v1438
  %v1471 = vadd.f32 %v1211, %v1439
  %v1472 = vadd.f32 %v1212, %v1440
  %v1473 = vadd.f32 %v1213, %v1441
  %v1474 = vadd.f32 %v1214, %v1442
  %v1475 = vadd.f32 %v1215, %v1443
  %v1476 = vadd.f32 %v1216, %v1444
  %v1477 = vadd.f32 %v1217, %v1445
  %v1478 = vadd.f32 %v1218, %v1446
  %v1479 = vadd.f32 %v1219, %v1447
  %v1480 = vadd.f32 %v1220, %v1448
  %v1481 = vadd.f32 %v1221, %v1449
  %v1482 = vadd.f32 %v1222, %v1450
  %v1483 = vadd.f32 %v1223, %v1451
  %v1484 = vld [vmem:[%s148 + $0x2] sm:$0xff]
  %v1485 = vld [vmem:[%s148 + $0xa] sm:$0xff]
  %v1486 = vld [vmem:[%s148 + $0x1a] sm:$0xff]
  %v1487 = vld [vmem:[%s148 + $0x22] sm:$0xff]
  %v1488 = vld [vmem:[%s148 + $0x32] sm:$0xff]
  %v1489 = vld [vmem:[%s148 + $0x3a] sm:$0xff]
  %v1490 = vld [vmem:[%s148 + $0x4a] sm:$0xff]
  %v1491 = vld [vmem:[%s148 + $0x52] sm:$0xff]
  %v1492 = vld [vmem:[%s148 + $0x62] sm:$0xff]
  %v1493 = vld [vmem:[%s148 + $0x6a] sm:$0xff]
  %v1494 = vld [vmem:[%s148 + $0x7a] sm:$0xff]
  %v1495 = vld [vmem:[%s148 + $0x82] sm:$0xff]
  %v1496 = vld [vmem:[%s148 + $0x92] sm:$0xff]
  %v1497 = vld [vmem:[%s148 + $0x9a] sm:$0xff]
  %v1498 = vld [vmem:[%s148 + $0xaa] sm:$0xff]
  %v1499 = vld [vmem:[%s148 + $0xb2] sm:$0xff]
  %v1500 = vld [vmem:[%s148 + $0xc2] sm:$0xff]
  %v1501 = vld [vmem:[%s148 + $0xca] sm:$0xff]
  %v1502 = vld [vmem:[%s148 + $0xda] sm:$0xff]
  %v1503 = vld [vmem:[%s148 + $0xe2] sm:$0xff]
  %v1504 = vld [vmem:[%s148 + $0xf2] sm:$0xff]
  %v1505 = vld [vmem:[%s148 + $0xfa] sm:$0xff]
  %v1506 = vld [vmem:[%s148 + $0x10a] sm:$0xff]
  %v1507 = vld [vmem:[%s148 + $0x112] sm:$0xff]
  %v1508 = vld [vmem:[%s148 + $0x122] sm:$0xff]
  %v1509 = vld [vmem:[%s148 + $0x12a] sm:$0xff]
  %v1510 = vld [vmem:[%s148 + $0x13a] sm:$0xff]
  %v1511 = vld [vmem:[%s148 + $0x142] sm:$0xff]
  %v1512 = vld [vmem:[%s148 + $0x152] sm:$0xff]
  %v1513 = vld [vmem:[%s148 + $0x15a] sm:$0xff]
  %v1514 = vld [vmem:[%s148 + $0x16a] sm:$0xff]
  %v1515 = vld [vmem:[%s148 + $0x172] sm:$0xff]
  %1517 = vset.pattern.permute.xlu0 0
  %1518 = vperm.xlu0 %1517, %v1484
  %v1519 = vpop.permute.xlu0 %1518
  %1522 = vset.pattern.permute.xlu0 0
  %1523 = vperm.xlu0 %1522, %v1485
  %v1524 = vpop.permute.xlu0 %1523
  %1527 = vset.pattern.permute.xlu0 0
  %1528 = vperm.xlu0 %1527, %v1486
  %v1529 = vpop.permute.xlu0 %1528
  %1532 = vset.pattern.permute.xlu0 0
  %1533 = vperm.xlu0 %1532, %v1487
  %v1534 = vpop.permute.xlu0 %1533
  %1537 = vset.pattern.permute.xlu0 0
  %1538 = vperm.xlu0 %1537, %v1488
  %v1539 = vpop.permute.xlu0 %1538
  %1542 = vset.pattern.permute.xlu0 0
  %1543 = vperm.xlu0 %1542, %v1489
  %v1544 = vpop.permute.xlu0 %1543
  %1547 = vset.pattern.permute.xlu0 0
  %1548 = vperm.xlu0 %1547, %v1490
  %v1549 = vpop.permute.xlu0 %1548
  %1552 = vset.pattern.permute.xlu0 0
  %1553 = vperm.xlu0 %1552, %v1491
  %v1554 = vpop.permute.xlu0 %1553
  %1557 = vset.pattern.permute.xlu0 0
  %1558 = vperm.xlu0 %1557, %v1492
  %v1559 = vpop.permute.xlu0 %1558
  %1562 = vset.pattern.permute.xlu0 0
  %1563 = vperm.xlu0 %1562, %v1493
  %v1564 = vpop.permute.xlu0 %1563
  %1567 = vset.pattern.permute.xlu0 0
  %1568 = vperm.xlu0 %1567, %v1494
  %v1569 = vpop.permute.xlu0 %1568
  %1572 = vset.pattern.permute.xlu0 0
  %1573 = vperm.xlu0 %1572, %v1495
  %v1574 = vpop.permute.xlu0 %1573
  %1577 = vset.pattern.permute.xlu0 0
  %1578 = vperm.xlu0 %1577, %v1496
  %v1579 = vpop.permute.xlu0 %1578
  %1582 = vset.pattern.permute.xlu0 0
  %1583 = vperm.xlu0 %1582, %v1497
  %v1584 = vpop.permute.xlu0 %1583
  %1587 = vset.pattern.permute.xlu0 0
  %1588 = vperm.xlu0 %1587, %v1498
  %v1589 = vpop.permute.xlu0 %1588
  %1592 = vset.pattern.permute.xlu0 0
  %1593 = vperm.xlu0 %1592, %v1499
  %v1594 = vpop.permute.xlu0 %1593
  %1597 = vset.pattern.permute.xlu0 0
  %1598 = vperm.xlu0 %1597, %v1500
  %v1599 = vpop.permute.xlu0 %1598
  %1602 = vset.pattern.permute.xlu0 0
  %1603 = vperm.xlu0 %1602, %v1501
  %v1604 = vpop.permute.xlu0 %1603
  %1607 = vset.pattern.permute.xlu0 0
  %1608 = vperm.xlu0 %1607, %v1502
  %v1609 = vpop.permute.xlu0 %1608
  %1612 = vset.pattern.permute.xlu0 0
  %1613 = vperm.xlu0 %1612, %v1503
  %v1614 = vpop.permute.xlu0 %1613
  %1617 = vset.pattern.permute.xlu0 0
  %1618 = vperm.xlu0 %1617, %v1504
  %v1619 = vpop.permute.xlu0 %1618
  %1622 = vset.pattern.permute.xlu0 0
  %1623 = vperm.xlu0 %1622, %v1505
  %v1624 = vpop.permute.xlu0 %1623
  %1627 = vset.pattern.permute.xlu0 0
  %1628 = vperm.xlu0 %1627, %v1506
  %v1629 = vpop.permute.xlu0 %1628
  %1632 = vset.pattern.permute.xlu0 0
  %1633 = vperm.xlu0 %1632, %v1507
  %v1634 = vpop.permute.xlu0 %1633
  %1637 = vset.pattern.permute.xlu0 0
  %1638 = vperm.xlu0 %1637, %v1508
  %v1639 = vpop.permute.xlu0 %1638
  %1642 = vset.pattern.permute.xlu0 0
  %1643 = vperm.xlu0 %1642, %v1509
  %v1644 = vpop.permute.xlu0 %1643
  %1647 = vset.pattern.permute.xlu0 0
  %1648 = vperm.xlu0 %1647, %v1510
  %v1649 = vpop.permute.xlu0 %1648
  %1652 = vset.pattern.permute.xlu0 0
  %1653 = vperm.xlu0 %1652, %v1511
  %v1654 = vpop.permute.xlu0 %1653
  %1657 = vset.pattern.permute.xlu0 0
  %1658 = vperm.xlu0 %1657, %v1512
  %v1659 = vpop.permute.xlu0 %1658
  %1662 = vset.pattern.permute.xlu0 0
  %1663 = vperm.xlu0 %1662, %v1513
  %v1664 = vpop.permute.xlu0 %1663
  %1667 = vset.pattern.permute.xlu0 0
  %1668 = vperm.xlu0 %1667, %v1514
  %v1669 = vpop.permute.xlu0 %1668
  %1672 = vset.pattern.permute.xlu0 0
  %1673 = vperm.xlu0 %1672, %v1515
  %v1674 = vpop.permute.xlu0 %1673
  %v1676 = vlaneseq
  %v1677 = vshrl.u32 %v1676, 7
  %v1678 = vsub.s32 5, %v1677
  %v1679 = vrot.slane %v182, %v1678
  %v1680 = vmul.f32 %v1519, %v1679
  %v1681 = vmul.f32 %v1524, %v1679
  %v1682 = vmul.f32 %v1529, %v1679
  %v1683 = vmul.f32 %v1534, %v1679
  %v1684 = vmul.f32 %v1539, %v1679
  %v1685 = vmul.f32 %v1544, %v1679
  %v1686 = vmul.f32 %v1549, %v1679
  %v1687 = vmul.f32 %v1554, %v1679
  %v1688 = vmul.f32 %v1559, %v1679
  %v1689 = vmul.f32 %v1564, %v1679
  %v1690 = vmul.f32 %v1569, %v1679
  %v1691 = vmul.f32 %v1574, %v1679
  %v1692 = vmul.f32 %v1579, %v1679
  %v1693 = vmul.f32 %v1584, %v1679
  %v1694 = vmul.f32 %v1589, %v1679
  %v1695 = vmul.f32 %v1594, %v1679
  %v1696 = vmul.f32 %v1599, %v1679
  %v1697 = vmul.f32 %v1604, %v1679
  %v1698 = vmul.f32 %v1609, %v1679
  %v1699 = vmul.f32 %v1614, %v1679
  %v1700 = vmul.f32 %v1619, %v1679
  %v1701 = vmul.f32 %v1624, %v1679
  %v1702 = vmul.f32 %v1629, %v1679
  %v1703 = vmul.f32 %v1634, %v1679
  %v1704 = vmul.f32 %v1639, %v1679
  %v1705 = vmul.f32 %v1644, %v1679
  %v1706 = vmul.f32 %v1649, %v1679
  %v1707 = vmul.f32 %v1654, %v1679
  %v1708 = vmul.f32 %v1659, %v1679
  %v1709 = vmul.f32 %v1664, %v1679
  %v1710 = vmul.f32 %v1669, %v1679
  %v1711 = vmul.f32 %v1674, %v1679
  %v1712 = vadd.f32 %v1452, %v1680
  %v1713 = vadd.f32 %v1453, %v1681
  %v1714 = vadd.f32 %v1454, %v1682
  %v1715 = vadd.f32 %v1455, %v1683
  %v1716 = vadd.f32 %v1456, %v1684
  %v1717 = vadd.f32 %v1457, %v1685
  %v1718 = vadd.f32 %v1458, %v1686
  %v1719 = vadd.f32 %v1459, %v1687
  %v1720 = vadd.f32 %v1460, %v1688
  %v1721 = vadd.f32 %v1461, %v1689
  %v1722 = vadd.f32 %v1462, %v1690
  %v1723 = vadd.f32 %v1463, %v1691
  %v1724 = vadd.f32 %v1464, %v1692
  %v1725 = vadd.f32 %v1465, %v1693
  %v1726 = vadd.f32 %v1466, %v1694
  %v1727 = vadd.f32 %v1467, %v1695
  %v1728 = vadd.f32 %v1468, %v1696
  %v1729 = vadd.f32 %v1469, %v1697
  %v1730 = vadd.f32 %v1470, %v1698
  %v1731 = vadd.f32 %v1471, %v1699
  %v1732 = vadd.f32 %v1472, %v1700
  %v1733 = vadd.f32 %v1473, %v1701
  %v1734 = vadd.f32 %v1474, %v1702
  %v1735 = vadd.f32 %v1475, %v1703
  %v1736 = vadd.f32 %v1476, %v1704
  %v1737 = vadd.f32 %v1477, %v1705
  %v1738 = vadd.f32 %v1478, %v1706
  %v1739 = vadd.f32 %v1479, %v1707
  %v1740 = vadd.f32 %v1480, %v1708
  %v1741 = vadd.f32 %v1481, %v1709
  %v1742 = vadd.f32 %v1482, %v1710
  %v1743 = vadd.f32 %v1483, %v1711
  %s1744 = scalar_lea.vmem [#allocation2], 48
  %v1745 = vld [vmem:[%s1744] sm:$0xff]
  %v1746 = vld [vmem:[%s1744 + $0x8] sm:$0xff]
  %v1747 = vld [vmem:[%s1744 + $0x18] sm:$0xff]
  %v1748 = vld [vmem:[%s1744 + $0x20] sm:$0xff]
  %v1749 = vld [vmem:[%s1744 + $0x30] sm:$0xff]
  %v1750 = vld [vmem:[%s1744 + $0x38] sm:$0xff]
  %v1751 = vld [vmem:[%s1744 + $0x48] sm:$0xff]
  %v1752 = vld [vmem:[%s1744 + $0x50] sm:$0xff]
  %v1753 = vld [vmem:[%s1744 + $0x60] sm:$0xff]
  %v1754 = vld [vmem:[%s1744 + $0x68] sm:$0xff]
  %v1755 = vld [vmem:[%s1744 + $0x78] sm:$0xff]
  %v1756 = vld [vmem:[%s1744 + $0x80] sm:$0xff]
  %v1757 = vld [vmem:[%s1744 + $0x90] sm:$0xff]
  %v1758 = vld [vmem:[%s1744 + $0x98] sm:$0xff]
  %v1759 = vld [vmem:[%s1744 + $0xa8] sm:$0xff]
  %v1760 = vld [vmem:[%s1744 + $0xb0] sm:$0xff]
  %v1761 = vld [vmem:[%s1744 + $0xc0] sm:$0xff]
  %v1762 = vld [vmem:[%s1744 + $0xc8] sm:$0xff]
  %v1763 = vld [vmem:[%s1744 + $0xd8] sm:$0xff]
  %v1764 = vld [vmem:[%s1744 + $0xe0] sm:$0xff]
  %v1765 = vld [vmem:[%s1744 + $0xf0] sm:$0xff]
  %v1766 = vld [vmem:[%s1744 + $0xf8] sm:$0xff]
  %v1767 = vld [vmem:[%s1744 + $0x108] sm:$0xff]
  %v1768 = vld [vmem:[%s1744 + $0x110] sm:$0xff]
  %v1769 = vld [vmem:[%s1744 + $0x120] sm:$0xff]
  %v1770 = vld [vmem:[%s1744 + $0x128] sm:$0xff]
  %v1771 = vld [vmem:[%s1744 + $0x138] sm:$0xff]
  %v1772 = vld [vmem:[%s1744 + $0x140] sm:$0xff]
  %v1773 = vld [vmem:[%s1744 + $0x150] sm:$0xff]
  %v1774 = vld [vmem:[%s1744 + $0x158] sm:$0xff]
  %v1775 = vld [vmem:[%s1744 + $0x168] sm:$0xff]
  %v1776 = vld [vmem:[%s1744 + $0x170] sm:$0xff]
  %1778 = vset.pattern.permute.xlu0 0
  %1779 = vperm.xlu0 %1778, %v1745
  %v1780 = vpop.permute.xlu0 %1779
  %1783 = vset.pattern.permute.xlu0 0
  %1784 = vperm.xlu0 %1783, %v1746
  %v1785 = vpop.permute.xlu0 %1784
  %1788 = vset.pattern.permute.xlu0 0
  %1789 = vperm.xlu0 %1788, %v1747
  %v1790 = vpop.permute.xlu0 %1789
  %1793 = vset.pattern.permute.xlu0 0
  %1794 = vperm.xlu0 %1793, %v1748
  %v1795 = vpop.permute.xlu0 %1794
  %1798 = vset.pattern.permute.xlu0 0
  %1799 = vperm.xlu0 %1798, %v1749
  %v1800 = vpop.permute.xlu0 %1799
  %1803 = vset.pattern.permute.xlu0 0
  %1804 = vperm.xlu0 %1803, %v1750
  %v1805 = vpop.permute.xlu0 %1804
  %1808 = vset.pattern.permute.xlu0 0
  %1809 = vperm.xlu0 %1808, %v1751
  %v1810 = vpop.permute.xlu0 %1809
  %1813 = vset.pattern.permute.xlu0 0
  %1814 = vperm.xlu0 %1813, %v1752
  %v1815 = vpop.permute.xlu0 %1814
  %1818 = vset.pattern.permute.xlu0 0
  %1819 = vperm.xlu0 %1818, %v1753
  %v1820 = vpop.permute.xlu0 %1819
  %1823 = vset.pattern.permute.xlu0 0
  %1824 = vperm.xlu0 %1823, %v1754
  %v1825 = vpop.permute.xlu0 %1824
  %1828 = vset.pattern.permute.xlu0 0
  %1829 = vperm.xlu0 %1828, %v1755
  %v1830 = vpop.permute.xlu0 %1829
  %1833 = vset.pattern.permute.xlu0 0
  %1834 = vperm.xlu0 %1833, %v1756
  %v1835 = vpop.permute.xlu0 %1834
  %1838 = vset.pattern.permute.xlu0 0
  %1839 = vperm.xlu0 %1838, %v1757
  %v1840 = vpop.permute.xlu0 %1839
  %1843 = vset.pattern.permute.xlu0 0
  %1844 = vperm.xlu0 %1843, %v1758
  %v1845 = vpop.permute.xlu0 %1844
  %1848 = vset.pattern.permute.xlu0 0
  %1849 = vperm.xlu0 %1848, %v1759
  %v1850 = vpop.permute.xlu0 %1849
  %1853 = vset.pattern.permute.xlu0 0
  %1854 = vperm.xlu0 %1853, %v1760
  %v1855 = vpop.permute.xlu0 %1854
  %1858 = vset.pattern.permute.xlu0 0
  %1859 = vperm.xlu0 %1858, %v1761
  %v1860 = vpop.permute.xlu0 %1859
  %1863 = vset.pattern.permute.xlu0 0
  %1864 = vperm.xlu0 %1863, %v1762
  %v1865 = vpop.permute.xlu0 %1864
  %1868 = vset.pattern.permute.xlu0 0
  %1869 = vperm.xlu0 %1868, %v1763
  %v1870 = vpop.permute.xlu0 %1869
  %1873 = vset.pattern.permute.xlu0 0
  %1874 = vperm.xlu0 %1873, %v1764
  %v1875 = vpop.permute.xlu0 %1874
  %1878 = vset.pattern.permute.xlu0 0
  %1879 = vperm.xlu0 %1878, %v1765
  %v1880 = vpop.permute.xlu0 %1879
  %1883 = vset.pattern.permute.xlu0 0
  %1884 = vperm.xlu0 %1883, %v1766
  %v1885 = vpop.permute.xlu0 %1884
  %1888 = vset.pattern.permute.xlu0 0
  %1889 = vperm.xlu0 %1888, %v1767
  %v1890 = vpop.permute.xlu0 %1889
  %1893 = vset.pattern.permute.xlu0 0
  %1894 = vperm.xlu0 %1893, %v1768
  %v1895 = vpop.permute.xlu0 %1894
  %1898 = vset.pattern.permute.xlu0 0
  %1899 = vperm.xlu0 %1898, %v1769
  %v1900 = vpop.permute.xlu0 %1899
  %1903 = vset.pattern.permute.xlu0 0
  %1904 = vperm.xlu0 %1903, %v1770
  %v1905 = vpop.permute.xlu0 %1904
  %1908 = vset.pattern.permute.xlu0 0
  %1909 = vperm.xlu0 %1908, %v1771
  %v1910 = vpop.permute.xlu0 %1909
  %1913 = vset.pattern.permute.xlu0 0
  %1914 = vperm.xlu0 %1913, %v1772
  %v1915 = vpop.permute.xlu0 %1914
  %1918 = vset.pattern.permute.xlu0 0
  %1919 = vperm.xlu0 %1918, %v1773
  %v1920 = vpop.permute.xlu0 %1919
  %1923 = vset.pattern.permute.xlu0 0
  %1924 = vperm.xlu0 %1923, %v1774
  %v1925 = vpop.permute.xlu0 %1924
  %1928 = vset.pattern.permute.xlu0 0
  %1929 = vperm.xlu0 %1928, %v1775
  %v1930 = vpop.permute.xlu0 %1929
  %1933 = vset.pattern.permute.xlu0 0
  %1934 = vperm.xlu0 %1933, %v1776
  %v1935 = vpop.permute.xlu0 %1934
  %v1937 = vlaneseq
  %v1938 = vshrl.u32 %v1937, 7
  %v1939 = vsub.s32 6, %v1938
  %v1940 = vrot.slane %v182, %v1939
  %v1941 = vmul.f32 %v1780, %v1940
  %v1942 = vmul.f32 %v1785, %v1940
  %v1943 = vmul.f32 %v1790, %v1940
  %v1944 = vmul.f32 %v1795, %v1940
  %v1945 = vmul.f32 %v1800, %v1940
  %v1946 = vmul.f32 %v1805, %v1940
  %v1947 = vmul.f32 %v1810, %v1940
  %v1948 = vmul.f32 %v1815, %v1940
  %v1949 = vmul.f32 %v1820, %v1940
  %v1950 = vmul.f32 %v1825, %v1940
  %v1951 = vmul.f32 %v1830, %v1940
  %v1952 = vmul.f32 %v1835, %v1940
  %v1953 = vmul.f32 %v1840, %v1940
  %v1954 = vmul.f32 %v1845, %v1940
  %v1955 = vmul.f32 %v1850, %v1940
  %v1956 = vmul.f32 %v1855, %v1940
  %v1957 = vmul.f32 %v1860, %v1940
  %v1958 = vmul.f32 %v1865, %v1940
  %v1959 = vmul.f32 %v1870, %v1940
  %v1960 = vmul.f32 %v1875, %v1940
  %v1961 = vmul.f32 %v1880, %v1940
  %v1962 = vmul.f32 %v1885, %v1940
  %v1963 = vmul.f32 %v1890, %v1940
  %v1964 = vmul.f32 %v1895, %v1940
  %v1965 = vmul.f32 %v1900, %v1940
  %v1966 = vmul.f32 %v1905, %v1940
  %v1967 = vmul.f32 %v1910, %v1940
  %v1968 = vmul.f32 %v1915, %v1940
  %v1969 = vmul.f32 %v1920, %v1940
  %v1970 = vmul.f32 %v1925, %v1940
  %v1971 = vmul.f32 %v1930, %v1940
  %v1972 = vmul.f32 %v1935, %v1940
  %v1973 = vadd.f32 %v1712, %v1941
  %v1974 = vadd.f32 %v1713, %v1942
  %v1975 = vadd.f32 %v1714, %v1943
  %v1976 = vadd.f32 %v1715, %v1944
  %v1977 = vadd.f32 %v1716, %v1945
  %v1978 = vadd.f32 %v1717, %v1946
  %v1979 = vadd.f32 %v1718, %v1947
  %v1980 = vadd.f32 %v1719, %v1948
  %v1981 = vadd.f32 %v1720, %v1949
  %v1982 = vadd.f32 %v1721, %v1950
  %v1983 = vadd.f32 %v1722, %v1951
  %v1984 = vadd.f32 %v1723, %v1952
  %v1985 = vadd.f32 %v1724, %v1953
  %v1986 = vadd.f32 %v1725, %v1954
  %v1987 = vadd.f32 %v1726, %v1955
  %v1988 = vadd.f32 %v1727, %v1956
  %v1989 = vadd.f32 %v1728, %v1957
  %v1990 = vadd.f32 %v1729, %v1958
  %v1991 = vadd.f32 %v1730, %v1959
  %v1992 = vadd.f32 %v1731, %v1960
  %v1993 = vadd.f32 %v1732, %v1961
  %v1994 = vadd.f32 %v1733, %v1962
  %v1995 = vadd.f32 %v1734, %v1963
  %v1996 = vadd.f32 %v1735, %v1964
  %v1997 = vadd.f32 %v1736, %v1965
  %v1998 = vadd.f32 %v1737, %v1966
  %v1999 = vadd.f32 %v1738, %v1967
  %v2000 = vadd.f32 %v1739, %v1968
  %v2001 = vadd.f32 %v1740, %v1969
  %v2002 = vadd.f32 %v1741, %v1970
  %v2003 = vadd.f32 %v1742, %v1971
  %v2004 = vadd.f32 %v1743, %v1972
  %v2005 = vld [vmem:[%s1744 + $0x1] sm:$0xff]
  %v2006 = vld [vmem:[%s1744 + $0x9] sm:$0xff]
  %v2007 = vld [vmem:[%s1744 + $0x19] sm:$0xff]
  %v2008 = vld [vmem:[%s1744 + $0x21] sm:$0xff]
  %v2009 = vld [vmem:[%s1744 + $0x31] sm:$0xff]
  %v2010 = vld [vmem:[%s1744 + $0x39] sm:$0xff]
  %v2011 = vld [vmem:[%s1744 + $0x49] sm:$0xff]
  %v2012 = vld [vmem:[%s1744 + $0x51] sm:$0xff]
  %v2013 = vld [vmem:[%s1744 + $0x61] sm:$0xff]
  %v2014 = vld [vmem:[%s1744 + $0x69] sm:$0xff]
  %v2015 = vld [vmem:[%s1744 + $0x79] sm:$0xff]
  %v2016 = vld [vmem:[%s1744 + $0x81] sm:$0xff]
  %v2017 = vld [vmem:[%s1744 + $0x91] sm:$0xff]
  %v2018 = vld [vmem:[%s1744 + $0x99] sm:$0xff]
  %v2019 = vld [vmem:[%s1744 + $0xa9] sm:$0xff]
  %v2020 = vld [vmem:[%s1744 + $0xb1] sm:$0xff]
  %v2021 = vld [vmem:[%s1744 + $0xc1] sm:$0xff]
  %v2022 = vld [vmem:[%s1744 + $0xc9] sm:$0xff]
  %v2023 = vld [vmem:[%s1744 + $0xd9] sm:$0xff]
  %v2024 = vld [vmem:[%s1744 + $0xe1] sm:$0xff]
  %v2025 = vld [vmem:[%s1744 + $0xf1] sm:$0xff]
  %v2026 = vld [vmem:[%s1744 + $0xf9] sm:$0xff]
  %v2027 = vld [vmem:[%s1744 + $0x109] sm:$0xff]
  %v2028 = vld [vmem:[%s1744 + $0x111] sm:$0xff]
  %v2029 = vld [vmem:[%s1744 + $0x121] sm:$0xff]
  %v2030 = vld [vmem:[%s1744 + $0x129] sm:$0xff]
  %v2031 = vld [vmem:[%s1744 + $0x139] sm:$0xff]
  %v2032 = vld [vmem:[%s1744 + $0x141] sm:$0xff]
  %v2033 = vld [vmem:[%s1744 + $0x151] sm:$0xff]
  %v2034 = vld [vmem:[%s1744 + $0x159] sm:$0xff]
  %v2035 = vld [vmem:[%s1744 + $0x169] sm:$0xff]
  %v2036 = vld [vmem:[%s1744 + $0x171] sm:$0xff]
  %2038 = vset.pattern.permute.xlu0 0
  %2039 = vperm.xlu0 %2038, %v2005
  %v2040 = vpop.permute.xlu0 %2039
  %2043 = vset.pattern.permute.xlu0 0
  %2044 = vperm.xlu0 %2043, %v2006
  %v2045 = vpop.permute.xlu0 %2044
  %2048 = vset.pattern.permute.xlu0 0
  %2049 = vperm.xlu0 %2048, %v2007
  %v2050 = vpop.permute.xlu0 %2049
  %2053 = vset.pattern.permute.xlu0 0
  %2054 = vperm.xlu0 %2053, %v2008
  %v2055 = vpop.permute.xlu0 %2054
  %2058 = vset.pattern.permute.xlu0 0
  %2059 = vperm.xlu0 %2058, %v2009
  %v2060 = vpop.permute.xlu0 %2059
  %2063 = vset.pattern.permute.xlu0 0
  %2064 = vperm.xlu0 %2063, %v2010
  %v2065 = vpop.permute.xlu0 %2064
  %2068 = vset.pattern.permute.xlu0 0
  %2069 = vperm.xlu0 %2068, %v2011
  %v2070 = vpop.permute.xlu0 %2069
  %2073 = vset.pattern.permute.xlu0 0
  %2074 = vperm.xlu0 %2073, %v2012
  %v2075 = vpop.permute.xlu0 %2074
  %2078 = vset.pattern.permute.xlu0 0
  %2079 = vperm.xlu0 %2078, %v2013
  %v2080 = vpop.permute.xlu0 %2079
  %2083 = vset.pattern.permute.xlu0 0
  %2084 = vperm.xlu0 %2083, %v2014
  %v2085 = vpop.permute.xlu0 %2084
  %2088 = vset.pattern.permute.xlu0 0
  %2089 = vperm.xlu0 %2088, %v2015
  %v2090 = vpop.permute.xlu0 %2089
  %2093 = vset.pattern.permute.xlu0 0
  %2094 = vperm.xlu0 %2093, %v2016
  %v2095 = vpop.permute.xlu0 %2094
  %2098 = vset.pattern.permute.xlu0 0
  %2099 = vperm.xlu0 %2098, %v2017
  %v2100 = vpop.permute.xlu0 %2099
  %2103 = vset.pattern.permute.xlu0 0
  %2104 = vperm.xlu0 %2103, %v2018
  %v2105 = vpop.permute.xlu0 %2104
  %2108 = vset.pattern.permute.xlu0 0
  %2109 = vperm.xlu0 %2108, %v2019
  %v2110 = vpop.permute.xlu0 %2109
  %2113 = vset.pattern.permute.xlu0 0
  %2114 = vperm.xlu0 %2113, %v2020
  %v2115 = vpop.permute.xlu0 %2114
  %2118 = vset.pattern.permute.xlu0 0
  %2119 = vperm.xlu0 %2118, %v2021
  %v2120 = vpop.permute.xlu0 %2119
  %2123 = vset.pattern.permute.xlu0 0
  %2124 = vperm.xlu0 %2123, %v2022
  %v2125 = vpop.permute.xlu0 %2124
  %2128 = vset.pattern.permute.xlu0 0
  %2129 = vperm.xlu0 %2128, %v2023
  %v2130 = vpop.permute.xlu0 %2129
  %2133 = vset.pattern.permute.xlu0 0
  %2134 = vperm.xlu0 %2133, %v2024
  %v2135 = vpop.permute.xlu0 %2134
  %2138 = vset.pattern.permute.xlu0 0
  %2139 = vperm.xlu0 %2138, %v2025
  %v2140 = vpop.permute.xlu0 %2139
  %2143 = vset.pattern.permute.xlu0 0
  %2144 = vperm.xlu0 %2143, %v2026
  %v2145 = vpop.permute.xlu0 %2144
  %2148 = vset.pattern.permute.xlu0 0
  %2149 = vperm.xlu0 %2148, %v2027
  %v2150 = vpop.permute.xlu0 %2149
  %2153 = vset.pattern.permute.xlu0 0
  %2154 = vperm.xlu0 %2153, %v2028
  %v2155 = vpop.permute.xlu0 %2154
  %2158 = vset.pattern.permute.xlu0 0
  %2159 = vperm.xlu0 %2158, %v2029
  %v2160 = vpop.permute.xlu0 %2159
  %2163 = vset.pattern.permute.xlu0 0
  %2164 = vperm.xlu0 %2163, %v2030
  %v2165 = vpop.permute.xlu0 %2164
  %2168 = vset.pattern.permute.xlu0 0
  %2169 = vperm.xlu0 %2168, %v2031
  %v2170 = vpop.permute.xlu0 %2169
  %2173 = vset.pattern.permute.xlu0 0
  %2174 = vperm.xlu0 %2173, %v2032
  %v2175 = vpop.permute.xlu0 %2174
  %2178 = vset.pattern.permute.xlu0 0
  %2179 = vperm.xlu0 %2178, %v2033
  %v2180 = vpop.permute.xlu0 %2179
  %2183 = vset.pattern.permute.xlu0 0
  %2184 = vperm.xlu0 %2183, %v2034
  %v2185 = vpop.permute.xlu0 %2184
  %2188 = vset.pattern.permute.xlu0 0
  %2189 = vperm.xlu0 %2188, %v2035
  %v2190 = vpop.permute.xlu0 %2189
  %2193 = vset.pattern.permute.xlu0 0
  %2194 = vperm.xlu0 %2193, %v2036
  %v2195 = vpop.permute.xlu0 %2194
  %v2197 = vlaneseq
  %v2198 = vshrl.u32 %v2197, 7
  %v2199 = vsub.s32 7, %v2198
  %v2200 = vrot.slane %v182, %v2199
  %v2201 = vmul.f32 %v2040, %v2200
  %v2202 = vmul.f32 %v2045, %v2200
  %v2203 = vmul.f32 %v2050, %v2200
  %v2204 = vmul.f32 %v2055, %v2200
  %v2205 = vmul.f32 %v2060, %v2200
  %v2206 = vmul.f32 %v2065, %v2200
  %v2207 = vmul.f32 %v2070, %v2200
  %v2208 = vmul.f32 %v2075, %v2200
  %v2209 = vmul.f32 %v2080, %v2200
  %v2210 = vmul.f32 %v2085, %v2200
  %v2211 = vmul.f32 %v2090, %v2200
  %v2212 = vmul.f32 %v2095, %v2200
  %v2213 = vmul.f32 %v2100, %v2200
  %v2214 = vmul.f32 %v2105, %v2200
  %v2215 = vmul.f32 %v2110, %v2200
  %v2216 = vmul.f32 %v2115, %v2200
  %v2217 = vmul.f32 %v2120, %v2200
  %v2218 = vmul.f32 %v2125, %v2200
  %v2219 = vmul.f32 %v2130, %v2200
  %v2220 = vmul.f32 %v2135, %v2200
  %v2221 = vmul.f32 %v2140, %v2200
  %v2222 = vmul.f32 %v2145, %v2200
  %v2223 = vmul.f32 %v2150, %v2200
  %v2224 = vmul.f32 %v2155, %v2200
  %v2225 = vmul.f32 %v2160, %v2200
  %v2226 = vmul.f32 %v2165, %v2200
  %v2227 = vmul.f32 %v2170, %v2200
  %v2228 = vmul.f32 %v2175, %v2200
  %v2229 = vmul.f32 %v2180, %v2200
  %v2230 = vmul.f32 %v2185, %v2200
  %v2231 = vmul.f32 %v2190, %v2200
  %v2232 = vmul.f32 %v2195, %v2200
  %v2233 = vadd.f32 %v1973, %v2201
  %v2234 = vadd.f32 %v1974, %v2202
  %v2235 = vadd.f32 %v1975, %v2203
  %v2236 = vadd.f32 %v1976, %v2204
  %v2237 = vadd.f32 %v1977, %v2205
  %v2238 = vadd.f32 %v1978, %v2206
  %v2239 = vadd.f32 %v1979, %v2207
  %v2240 = vadd.f32 %v1980, %v2208
  %v2241 = vadd.f32 %v1981, %v2209
  %v2242 = vadd.f32 %v1982, %v2210
  %v2243 = vadd.f32 %v1983, %v2211
  %v2244 = vadd.f32 %v1984, %v2212
  %v2245 = vadd.f32 %v1985, %v2213
  %v2246 = vadd.f32 %v1986, %v2214
  %v2247 = vadd.f32 %v1987, %v2215
  %v2248 = vadd.f32 %v1988, %v2216
  %v2249 = vadd.f32 %v1989, %v2217
  %v2250 = vadd.f32 %v1990, %v2218
  %v2251 = vadd.f32 %v1991, %v2219
  %v2252 = vadd.f32 %v1992, %v2220
  %v2253 = vadd.f32 %v1993, %v2221
  %v2254 = vadd.f32 %v1994, %v2222
  %v2255 = vadd.f32 %v1995, %v2223
  %v2256 = vadd.f32 %v1996, %v2224
  %v2257 = vadd.f32 %v1997, %v2225
  %v2258 = vadd.f32 %v1998, %v2226
  %v2259 = vadd.f32 %v1999, %v2227
  %v2260 = vadd.f32 %v2000, %v2228
  %v2261 = vadd.f32 %v2001, %v2229
  %v2262 = vadd.f32 %v2002, %v2230
  %v2263 = vadd.f32 %v2003, %v2231
  %v2264 = vadd.f32 %v2004, %v2232
  %v2265 = vld [vmem:[%s1744 + $0x2] sm:$0xff]
  %v2266 = vld [vmem:[%s1744 + $0xa] sm:$0xff]
  %v2267 = vld [vmem:[%s1744 + $0x1a] sm:$0xff]
  %v2268 = vld [vmem:[%s1744 + $0x22] sm:$0xff]
  %v2269 = vld [vmem:[%s1744 + $0x32] sm:$0xff]
  %v2270 = vld [vmem:[%s1744 + $0x3a] sm:$0xff]
  %v2271 = vld [vmem:[%s1744 + $0x4a] sm:$0xff]
  %v2272 = vld [vmem:[%s1744 + $0x52] sm:$0xff]
  %v2273 = vld [vmem:[%s1744 + $0x62] sm:$0xff]
  %v2274 = vld [vmem:[%s1744 + $0x6a] sm:$0xff]
  %v2275 = vld [vmem:[%s1744 + $0x7a] sm:$0xff]
  %v2276 = vld [vmem:[%s1744 + $0x82] sm:$0xff]
  %v2277 = vld [vmem:[%s1744 + $0x92] sm:$0xff]
  %v2278 = vld [vmem:[%s1744 + $0x9a] sm:$0xff]
  %v2279 = vld [vmem:[%s1744 + $0xaa] sm:$0xff]
  %v2280 = vld [vmem:[%s1744 + $0xb2] sm:$0xff]
  %v2281 = vld [vmem:[%s1744 + $0xc2] sm:$0xff]
  %v2282 = vld [vmem:[%s1744 + $0xca] sm:$0xff]
  %v2283 = vld [vmem:[%s1744 + $0xda] sm:$0xff]
  %v2284 = vld [vmem:[%s1744 + $0xe2] sm:$0xff]
  %v2285 = vld [vmem:[%s1744 + $0xf2] sm:$0xff]
  %v2286 = vld [vmem:[%s1744 + $0xfa] sm:$0xff]
  %v2287 = vld [vmem:[%s1744 + $0x10a] sm:$0xff]
  %v2288 = vld [vmem:[%s1744 + $0x112] sm:$0xff]
  %v2289 = vld [vmem:[%s1744 + $0x122] sm:$0xff]
  %v2290 = vld [vmem:[%s1744 + $0x12a] sm:$0xff]
  %v2291 = vld [vmem:[%s1744 + $0x13a] sm:$0xff]
  %v2292 = vld [vmem:[%s1744 + $0x142] sm:$0xff]
  %v2293 = vld [vmem:[%s1744 + $0x152] sm:$0xff]
  %v2294 = vld [vmem:[%s1744 + $0x15a] sm:$0xff]
  %v2295 = vld [vmem:[%s1744 + $0x16a] sm:$0xff]
  %v2296 = vld [vmem:[%s1744 + $0x172] sm:$0xff]
  %2298 = vset.pattern.permute.xlu0 0
  %2299 = vperm.xlu0 %2298, %v2265
  %v2300 = vpop.permute.xlu0 %2299
  %2303 = vset.pattern.permute.xlu0 0
  %2304 = vperm.xlu0 %2303, %v2266
  %v2305 = vpop.permute.xlu0 %2304
  %2308 = vset.pattern.permute.xlu0 0
  %2309 = vperm.xlu0 %2308, %v2267
  %v2310 = vpop.permute.xlu0 %2309
  %2313 = vset.pattern.permute.xlu0 0
  %2314 = vperm.xlu0 %2313, %v2268
  %v2315 = vpop.permute.xlu0 %2314
  %2318 = vset.pattern.permute.xlu0 0
  %2319 = vperm.xlu0 %2318, %v2269
  %v2320 = vpop.permute.xlu0 %2319
  %2323 = vset.pattern.permute.xlu0 0
  %2324 = vperm.xlu0 %2323, %v2270
  %v2325 = vpop.permute.xlu0 %2324
  %2328 = vset.pattern.permute.xlu0 0
  %2329 = vperm.xlu0 %2328, %v2271
  %v2330 = vpop.permute.xlu0 %2329
  %2333 = vset.pattern.permute.xlu0 0
  %2334 = vperm.xlu0 %2333, %v2272
  %v2335 = vpop.permute.xlu0 %2334
  %2338 = vset.pattern.permute.xlu0 0
  %2339 = vperm.xlu0 %2338, %v2273
  %v2340 = vpop.permute.xlu0 %2339
  %2343 = vset.pattern.permute.xlu0 0
  %2344 = vperm.xlu0 %2343, %v2274
  %v2345 = vpop.permute.xlu0 %2344
  %2348 = vset.pattern.permute.xlu0 0
  %2349 = vperm.xlu0 %2348, %v2275
  %v2350 = vpop.permute.xlu0 %2349
  %2353 = vset.pattern.permute.xlu0 0
  %2354 = vperm.xlu0 %2353, %v2276
  %v2355 = vpop.permute.xlu0 %2354
  %2358 = vset.pattern.permute.xlu0 0
  %2359 = vperm.xlu0 %2358, %v2277
  %v2360 = vpop.permute.xlu0 %2359
  %2363 = vset.pattern.permute.xlu0 0
  %2364 = vperm.xlu0 %2363, %v2278
  %v2365 = vpop.permute.xlu0 %2364
  %2368 = vset.pattern.permute.xlu0 0
  %2369 = vperm.xlu0 %2368, %v2279
  %v2370 = vpop.permute.xlu0 %2369
  %2373 = vset.pattern.permute.xlu0 0
  %2374 = vperm.xlu0 %2373, %v2280
  %v2375 = vpop.permute.xlu0 %2374
  %2378 = vset.pattern.permute.xlu0 0
  %2379 = vperm.xlu0 %2378, %v2281
  %v2380 = vpop.permute.xlu0 %2379
  %2383 = vset.pattern.permute.xlu0 0
  %2384 = vperm.xlu0 %2383, %v2282
  %v2385 = vpop.permute.xlu0 %2384
  %2388 = vset.pattern.permute.xlu0 0
  %2389 = vperm.xlu0 %2388, %v2283
  %v2390 = vpop.permute.xlu0 %2389
  %2393 = vset.pattern.permute.xlu0 0
  %2394 = vperm.xlu0 %2393, %v2284
  %v2395 = vpop.permute.xlu0 %2394
  %2398 = vset.pattern.permute.xlu0 0
  %2399 = vperm.xlu0 %2398, %v2285
  %v2400 = vpop.permute.xlu0 %2399
  %2403 = vset.pattern.permute.xlu0 0
  %2404 = vperm.xlu0 %2403, %v2286
  %v2405 = vpop.permute.xlu0 %2404
  %2408 = vset.pattern.permute.xlu0 0
  %2409 = vperm.xlu0 %2408, %v2287
  %v2410 = vpop.permute.xlu0 %2409
  %2413 = vset.pattern.permute.xlu0 0
  %2414 = vperm.xlu0 %2413, %v2288
  %v2415 = vpop.permute.xlu0 %2414
  %2418 = vset.pattern.permute.xlu0 0
  %2419 = vperm.xlu0 %2418, %v2289
  %v2420 = vpop.permute.xlu0 %2419
  %2423 = vset.pattern.permute.xlu0 0
  %2424 = vperm.xlu0 %2423, %v2290
  %v2425 = vpop.permute.xlu0 %2424
  %2428 = vset.pattern.permute.xlu0 0
  %2429 = vperm.xlu0 %2428, %v2291
  %v2430 = vpop.permute.xlu0 %2429
  %2433 = vset.pattern.permute.xlu0 0
  %2434 = vperm.xlu0 %2433, %v2292
  %v2435 = vpop.permute.xlu0 %2434
  %2438 = vset.pattern.permute.xlu0 0
  %2439 = vperm.xlu0 %2438, %v2293
  %v2440 = vpop.permute.xlu0 %2439
  %2443 = vset.pattern.permute.xlu0 0
  %2444 = vperm.xlu0 %2443, %v2294
  %v2445 = vpop.permute.xlu0 %2444
  %2448 = vset.pattern.permute.xlu0 0
  %2449 = vperm.xlu0 %2448, %v2295
  %v2450 = vpop.permute.xlu0 %2449
  %2453 = vset.pattern.permute.xlu0 0
  %2454 = vperm.xlu0 %2453, %v2296
  %v2455 = vpop.permute.xlu0 %2454
  %v2457 = vlaneseq
  %v2458 = vshrl.u32 %v2457, 7
  %v2459 = vsub.s32 0, %v2458
  %v2460 = vrot.slane %v183, %v2459
  %v2461 = vmul.f32 %v2300, %v2460
  %v2462 = vmul.f32 %v2305, %v2460
  %v2463 = vmul.f32 %v2310, %v2460
  %v2464 = vmul.f32 %v2315, %v2460
  %v2465 = vmul.f32 %v2320, %v2460
  %v2466 = vmul.f32 %v2325, %v2460
  %v2467 = vmul.f32 %v2330, %v2460
  %v2468 = vmul.f32 %v2335, %v2460
  %v2469 = vmul.f32 %v2340, %v2460
  %v2470 = vmul.f32 %v2345, %v2460
  %v2471 = vmul.f32 %v2350, %v2460
  %v2472 = vmul.f32 %v2355, %v2460
  %v2473 = vmul.f32 %v2360, %v2460
  %v2474 = vmul.f32 %v2365, %v2460
  %v2475 = vmul.f32 %v2370, %v2460
  %v2476 = vmul.f32 %v2375, %v2460
  %v2477 = vmul.f32 %v2380, %v2460
  %v2478 = vmul.f32 %v2385, %v2460
  %v2479 = vmul.f32 %v2390, %v2460
  %v2480 = vmul.f32 %v2395, %v2460
  %v2481 = vmul.f32 %v2400, %v2460
  %v2482 = vmul.f32 %v2405, %v2460
  %v2483 = vmul.f32 %v2410, %v2460
  %v2484 = vmul.f32 %v2415, %v2460
  %v2485 = vmul.f32 %v2420, %v2460
  %v2486 = vmul.f32 %v2425, %v2460
  %v2487 = vmul.f32 %v2430, %v2460
  %v2488 = vmul.f32 %v2435, %v2460
  %v2489 = vmul.f32 %v2440, %v2460
  %v2490 = vmul.f32 %v2445, %v2460
  %v2491 = vmul.f32 %v2450, %v2460
  %v2492 = vmul.f32 %v2455, %v2460
  %v2493 = vadd.f32 %v2233, %v2461
  %v2494 = vadd.f32 %v2234, %v2462
  %v2495 = vadd.f32 %v2235, %v2463
  %v2496 = vadd.f32 %v2236, %v2464
  %v2497 = vadd.f32 %v2237, %v2465
  %v2498 = vadd.f32 %v2238, %v2466
  %v2499 = vadd.f32 %v2239, %v2467
  %v2500 = vadd.f32 %v2240, %v2468
  %v2501 = vadd.f32 %v2241, %v2469
  %v2502 = vadd.f32 %v2242, %v2470
  %v2503 = vadd.f32 %v2243, %v2471
  %v2504 = vadd.f32 %v2244, %v2472
  %v2505 = vadd.f32 %v2245, %v2473
  %v2506 = vadd.f32 %v2246, %v2474
  %v2507 = vadd.f32 %v2247, %v2475
  %v2508 = vadd.f32 %v2248, %v2476
  %v2509 = vadd.f32 %v2249, %v2477
  %v2510 = vadd.f32 %v2250, %v2478
  %v2511 = vadd.f32 %v2251, %v2479
  %v2512 = vadd.f32 %v2252, %v2480
  %v2513 = vadd.f32 %v2253, %v2481
  %v2514 = vadd.f32 %v2254, %v2482
  %v2515 = vadd.f32 %v2255, %v2483
  %v2516 = vadd.f32 %v2256, %v2484
  %v2517 = vadd.f32 %v2257, %v2485
  %v2518 = vadd.f32 %v2258, %v2486
  %v2519 = vadd.f32 %v2259, %v2487
  %v2520 = vadd.f32 %v2260, %v2488
  %v2521 = vadd.f32 %v2261, %v2489
  %v2522 = vadd.f32 %v2262, %v2490
  %v2523 = vadd.f32 %v2263, %v2491
  %v2524 = vadd.f32 %v2264, %v2492
  %v2525 = vsel %vm26, %v2493, 0.0
  %v2526 = vsel %vm26, %v2494, 0.0
  %v2527 = vadd.f32 %v2525, %v2526
  %v2528 = vsel %vm26, %v2495, 0.0
  %v2529 = vadd.f32 %v2527, %v2528
  %v2530 = vsel %vm26, %v2496, 0.0
  %v2531 = vadd.f32 %v2529, %v2530
  %v2532 = vsel %vm26, %v2497, 0.0
  %v2533 = vadd.f32 %v2531, %v2532
  %v2534 = vsel %vm26, %v2498, 0.0
  %v2535 = vadd.f32 %v2533, %v2534
  %v2536 = vsel %vm26, %v2499, 0.0
  %v2537 = vadd.f32 %v2535, %v2536
  %v2538 = vsel %vm26, %v2500, 0.0
  %v2539 = vadd.f32 %v2537, %v2538
  %v2540 = vsel %vm26, %v2501, 0.0
  %v2541 = vadd.f32 %v2539, %v2540
  %v2542 = vsel %vm26, %v2502, 0.0
  %v2543 = vadd.f32 %v2541, %v2542
  %v2544 = vsel %vm26, %v2503, 0.0
  %v2545 = vadd.f32 %v2543, %v2544
  %v2546 = vsel %vm26, %v2504, 0.0
  %v2547 = vadd.f32 %v2545, %v2546
  %v2548 = vsel %vm26, %v2505, 0.0
  %v2549 = vadd.f32 %v2547, %v2548
  %v2550 = vsel %vm26, %v2506, 0.0
  %v2551 = vadd.f32 %v2549, %v2550
  %v2552 = vsel %vm26, %v2507, 0.0
  %v2553 = vadd.f32 %v2551, %v2552
  %v2554 = vsel %vm26, %v2508, 0.0
  %v2555 = vadd.f32 %v2553, %v2554
  %v2556 = vsel %vm26, %v2509, 0.0
  %v2557 = vadd.f32 %v2555, %v2556
  %v2558 = vsel %vm26, %v2510, 0.0
  %v2559 = vadd.f32 %v2557, %v2558
  %v2560 = vsel %vm26, %v2511, 0.0
  %v2561 = vadd.f32 %v2559, %v2560
  %v2562 = vsel %vm26, %v2512, 0.0
  %v2563 = vadd.f32 %v2561, %v2562
  %v2564 = vsel %vm26, %v2513, 0.0
  %v2565 = vadd.f32 %v2563, %v2564
  %v2566 = vsel %vm26, %v2514, 0.0
  %v2567 = vadd.f32 %v2565, %v2566
  %v2568 = vsel %vm26, %v2515, 0.0
  %v2569 = vadd.f32 %v2567, %v2568
  %v2570 = vsel %vm26, %v2516, 0.0
  %v2571 = vadd.f32 %v2569, %v2570
  %v2572 = vsel %vm26, %v2517, 0.0
  %v2573 = vadd.f32 %v2571, %v2572
  %v2574 = vsel %vm26, %v2518, 0.0
  %v2575 = vadd.f32 %v2573, %v2574
  %v2576 = vsel %vm26, %v2519, 0.0
  %v2577 = vadd.f32 %v2575, %v2576
  %v2578 = vsel %vm26, %v2520, 0.0
  %v2579 = vadd.f32 %v2577, %v2578
  %v2580 = vsel %vm26, %v2521, 0.0
  %v2581 = vadd.f32 %v2579, %v2580
  %v2582 = vsel %vm26, %v2522, 0.0
  %v2583 = vadd.f32 %v2581, %v2582
  %v2584 = vsel %vm26, %v2523, 0.0
  %v2585 = vadd.f32 %v2583, %v2584
  %v2586 = vsel %vm26, %v2524, 0.0
  %v2587 = vadd.f32 %v2585, %v2586
  %v2588 = vrot.slane %v2587, 4
  %v2589 = vadd.f32 %v2587, %v2588
  %v2590 = vrot.slane %v2589, 2
  %v2591 = vadd.f32 %v2589, %v2590
  %v2592 = vrot.slane %v2591, 1
  %v2593 = vadd.f32 %v2591, %v2592
  %v2594 = vmul.f32 %v2493, %v2493
  %v2595 = vmul.f32 %v2494, %v2494
  %v2596 = vmul.f32 %v2495, %v2495
  %v2597 = vmul.f32 %v2496, %v2496
  %v2598 = vmul.f32 %v2497, %v2497
  %v2599 = vmul.f32 %v2498, %v2498
  %v2600 = vmul.f32 %v2499, %v2499
  %v2601 = vmul.f32 %v2500, %v2500
  %v2602 = vmul.f32 %v2501, %v2501
  %v2603 = vmul.f32 %v2502, %v2502
  %v2604 = vmul.f32 %v2503, %v2503
  %v2605 = vmul.f32 %v2504, %v2504
  %v2606 = vmul.f32 %v2505, %v2505
  %v2607 = vmul.f32 %v2506, %v2506
  %v2608 = vmul.f32 %v2507, %v2507
  %v2609 = vmul.f32 %v2508, %v2508
  %v2610 = vmul.f32 %v2509, %v2509
  %v2611 = vmul.f32 %v2510, %v2510
  %v2612 = vmul.f32 %v2511, %v2511
  %v2613 = vmul.f32 %v2512, %v2512
  %v2614 = vmul.f32 %v2513, %v2513
  %v2615 = vmul.f32 %v2514, %v2514
  %v2616 = vmul.f32 %v2515, %v2515
  %v2617 = vmul.f32 %v2516, %v2516
  %v2618 = vmul.f32 %v2517, %v2517
  %v2619 = vmul.f32 %v2518, %v2518
  %v2620 = vmul.f32 %v2519, %v2519
  %v2621 = vmul.f32 %v2520, %v2520
  %v2622 = vmul.f32 %v2521, %v2521
  %v2623 = vmul.f32 %v2522, %v2522
  %v2624 = vmul.f32 %v2523, %v2523
  %v2625 = vmul.f32 %v2524, %v2524
  %v2626 = vsel %vm26, %v2594, 0.0
  %v2627 = vsel %vm26, %v2595, 0.0
  %v2628 = vadd.f32 %v2626, %v2627
  %v2629 = vsel %vm26, %v2596, 0.0
  %v2630 = vadd.f32 %v2628, %v2629
  %v2631 = vsel %vm26, %v2597, 0.0
  %v2632 = vadd.f32 %v2630, %v2631
  %v2633 = vsel %vm26, %v2598, 0.0
  %v2634 = vadd.f32 %v2632, %v2633
  %v2635 = vsel %vm26, %v2599, 0.0
  %v2636 = vadd.f32 %v2634, %v2635
  %v2637 = vsel %vm26, %v2600, 0.0
  %v2638 = vadd.f32 %v2636, %v2637
  %v2639 = vsel %vm26, %v2601, 0.0
  %v2640 = vadd.f32 %v2638, %v2639
  %v2641 = vsel %vm26, %v2602, 0.0
  %v2642 = vadd.f32 %v2640, %v2641
  %v2643 = vsel %vm26, %v2603, 0.0
  %v2644 = vadd.f32 %v2642, %v2643
  %v2645 = vsel %vm26, %v2604, 0.0
  %v2646 = vadd.f32 %v2644, %v2645
  %v2647 = vsel %vm26, %v2605, 0.0
  %v2648 = vadd.f32 %v2646, %v2647
  %v2649 = vsel %vm26, %v2606, 0.0
  %v2650 = vadd.f32 %v2648, %v2649
  %v2651 = vsel %vm26, %v2607, 0.0
  %v2652 = vadd.f32 %v2650, %v2651
  %v2653 = vsel %vm26, %v2608, 0.0
  %v2654 = vadd.f32 %v2652, %v2653
  %v2655 = vsel %vm26, %v2609, 0.0
  %v2656 = vadd.f32 %v2654, %v2655
  %v2657 = vsel %vm26, %v2610, 0.0
  %v2658 = vadd.f32 %v2656, %v2657
  %v2659 = vsel %vm26, %v2611, 0.0
  %v2660 = vadd.f32 %v2658, %v2659
  %v2661 = vsel %vm26, %v2612, 0.0
  %v2662 = vadd.f32 %v2660, %v2661
  %v2663 = vsel %vm26, %v2613, 0.0
  %v2664 = vadd.f32 %v2662, %v2663
  %v2665 = vsel %vm26, %v2614, 0.0
  %v2666 = vadd.f32 %v2664, %v2665
  %v2667 = vsel %vm26, %v2615, 0.0
  %v2668 = vadd.f32 %v2666, %v2667
  %v2669 = vsel %vm26, %v2616, 0.0
  %v2670 = vadd.f32 %v2668, %v2669
  %v2671 = vsel %vm26, %v2617, 0.0
  %v2672 = vadd.f32 %v2670, %v2671
  %v2673 = vsel %vm26, %v2618, 0.0
  %v2674 = vadd.f32 %v2672, %v2673
  %v2675 = vsel %vm26, %v2619, 0.0
  %v2676 = vadd.f32 %v2674, %v2675
  %v2677 = vsel %vm26, %v2620, 0.0
  %v2678 = vadd.f32 %v2676, %v2677
  %v2679 = vsel %vm26, %v2621, 0.0
  %v2680 = vadd.f32 %v2678, %v2679
  %v2681 = vsel %vm26, %v2622, 0.0
  %v2682 = vadd.f32 %v2680, %v2681
  %v2683 = vsel %vm26, %v2623, 0.0
  %v2684 = vadd.f32 %v2682, %v2683
  %v2685 = vsel %vm26, %v2624, 0.0
  %v2686 = vadd.f32 %v2684, %v2685
  %v2687 = vsel %vm26, %v2625, 0.0
  %v2688 = vadd.f32 %v2686, %v2687
  %v2689 = vrot.slane %v2688, 4
  %v2690 = vadd.f32 %v2688, %v2689
  %v2691 = vrot.slane %v2690, 2
  %v2692 = vadd.f32 %v2690, %v2691
  %v2693 = vrot.slane %v2692, 1
  %v2694 = vadd.f32 %v2692, %v2693
  %v2695 = vmul.f32 %v2593, 0.00390625
  %v2696 = vmul.f32 %v2694, 0.00390625
  %v2697 = vmul.f32 %v2695, %v2695
  %v2698 = vsub.f32 %v2696, %v2697
  %v2699 = vadd.f32 %v2698, 1e-05
  %v2700 = vrsqrt.pop %v2699
  %v2701 = vmul.f32 %v115, %v2700
  %v2702 = vmul.f32 %v2695, %v2701
  %v2704 = vrot.slane %v2702, 4
  %v2706 = vsub.f32 %v115, %v2704
  %v2707 = vlaneseq
  %v2708 = vshrl.u32 %v2707, 7
  %v2709 = vsub.s32 0, %v2708
  %v2710 = vrot.slane %v2701, %v2709
  %v2711 = vmul.f32 %v2493, %v2710
  %v2712 = vmul.f32 %v2494, %v2710
  %v2713 = vmul.f32 %v2495, %v2710
  %v2714 = vmul.f32 %v2496, %v2710
  %v2715 = vmul.f32 %v2497, %v2710
  %v2716 = vmul.f32 %v2498, %v2710
  %v2717 = vmul.f32 %v2499, %v2710
  %v2718 = vmul.f32 %v2500, %v2710
  %v2719 = vmul.f32 %v2501, %v2710
  %v2720 = vmul.f32 %v2502, %v2710
  %v2721 = vmul.f32 %v2503, %v2710
  %v2722 = vmul.f32 %v2504, %v2710
  %v2723 = vmul.f32 %v2505, %v2710
  %v2724 = vmul.f32 %v2506, %v2710
  %v2725 = vmul.f32 %v2507, %v2710
  %v2726 = vmul.f32 %v2508, %v2710
  %v2727 = vmul.f32 %v2509, %v2710
  %v2728 = vmul.f32 %v2510, %v2710
  %v2729 = vmul.f32 %v2511, %v2710
  %v2730 = vmul.f32 %v2512, %v2710
  %v2731 = vmul.f32 %v2513, %v2710
  %v2732 = vmul.f32 %v2514, %v2710
  %v2733 = vmul.f32 %v2515, %v2710
  %v2734 = vmul.f32 %v2516, %v2710
  %v2735 = vmul.f32 %v2517, %v2710
  %v2736 = vmul.f32 %v2518, %v2710
  %v2737 = vmul.f32 %v2519, %v2710
  %v2738 = vmul.f32 %v2520, %v2710
  %v2739 = vmul.f32 %v2521, %v2710
  %v2740 = vmul.f32 %v2522, %v2710
  %v2741 = vmul.f32 %v2523, %v2710
  %v2742 = vmul.f32 %v2524, %v2710
  %v2743 = vlaneseq
  %v2744 = vshrl.u32 %v2743, 7
  %v2745 = vsub.s32 4, %v2744
  %v2746 = vrot.slane %v2706, %v2745
  %v2747 = vadd.f32 %v2711, %v2746
  %v2748 = vadd.f32 %v2712, %v2746
  %v2749 = vadd.f32 %v2713, %v2746
  %v2750 = vadd.f32 %v2714, %v2746
  %v2751 = vadd.f32 %v2715, %v2746
  %v2752 = vadd.f32 %v2716, %v2746
  %v2753 = vadd.f32 %v2717, %v2746
  %v2754 = vadd.f32 %v2718, %v2746
  %v2755 = vadd.f32 %v2719, %v2746
  %v2756 = vadd.f32 %v2720, %v2746
  %v2757 = vadd.f32 %v2721, %v2746
  %v2758 = vadd.f32 %v2722, %v2746
  %v2759 = vadd.f32 %v2723, %v2746
  %v2760 = vadd.f32 %v2724, %v2746
  %v2761 = vadd.f32 %v2725, %v2746
  %v2762 = vadd.f32 %v2726, %v2746
  %v2763 = vadd.f32 %v2727, %v2746
  %v2764 = vadd.f32 %v2728, %v2746
  %v2765 = vadd.f32 %v2729, %v2746
  %v2766 = vadd.f32 %v2730, %v2746
  %v2767 = vadd.f32 %v2731, %v2746
  %v2768 = vadd.f32 %v2732, %v2746
  %v2769 = vadd.f32 %v2733, %v2746
  %v2770 = vadd.f32 %v2734, %v2746
  %v2771 = vadd.f32 %v2735, %v2746
  %v2772 = vadd.f32 %v2736, %v2746
  %v2773 = vadd.f32 %v2737, %v2746
  %v2774 = vadd.f32 %v2738, %v2746
  %v2775 = vadd.f32 %v2739, %v2746
  %v2776 = vadd.f32 %v2740, %v2746
  %v2777 = vadd.f32 %v2741, %v2746
  %v2778 = vadd.f32 %v2742, %v2746
  %v2779 = vmax.f32 %v2747, 0.0
  %v2780 = vmax.f32 %v2748, 0.0
  %v2781 = vmax.f32 %v2749, 0.0
  %v2782 = vmax.f32 %v2750, 0.0
  %v2783 = vmax.f32 %v2751, 0.0
  %v2784 = vmax.f32 %v2752, 0.0
  %v2785 = vmax.f32 %v2753, 0.0
  %v2786 = vmax.f32 %v2754, 0.0
  %v2787 = vmax.f32 %v2755, 0.0
  %v2788 = vmax.f32 %v2756, 0.0
  %v2789 = vmax.f32 %v2757, 0.0
  %v2790 = vmax.f32 %v2758, 0.0
  %v2791 = vmax.f32 %v2759, 0.0
  %v2792 = vmax.f32 %v2760, 0.0
  %v2793 = vmax.f32 %v2761, 0.0
  %v2794 = vmax.f32 %v2762, 0.0
  %v2795 = vmax.f32 %v2763, 0.0
  %v2796 = vmax.f32 %v2764, 0.0
  %v2797 = vmax.f32 %v2765, 0.0
  %v2798 = vmax.f32 %v2766, 0.0
  %v2799 = vmax.f32 %v2767, 0.0
  %v2800 = vmax.f32 %v2768, 0.0
  %v2801 = vmax.f32 %v2769, 0.0
  %v2802 = vmax.f32 %v2770, 0.0
  %v2803 = vmax.f32 %v2771, 0.0
  %v2804 = vmax.f32 %v2772, 0.0
  %v2805 = vmax.f32 %v2773, 0.0
  %v2806 = vmax.f32 %v2774, 0.0
  %v2807 = vmax.f32 %v2775, 0.0
  %v2808 = vmax.f32 %v2776, 0.0
  %v2809 = vmax.f32 %v2777, 0.0
  %v2810 = vmax.f32 %v2778, 0.0
  %s2811 = scalar_lea.vmem [#allocation3], 24
  %2812 = vst.msk [vmem:[%s2811 + $0x1] sm:$0xff] %vm26, %v2779
  %2813 = vst.msk [vmem:[%s2811 + $0x9] sm:$0xff] %vm26, %v2780
  %2814 = vst.msk [vmem:[%s2811 + $0x19] sm:$0xff] %vm26, %v2781
  %2815 = vst.msk [vmem:[%s2811 + $0x21] sm:$0xff] %vm26, %v2782
  %2816 = vst.msk [vmem:[%s2811 + $0x31] sm:$0xff] %vm26, %v2783
  %2817 = vst.msk [vmem:[%s2811 + $0x39] sm:$0xff] %vm26, %v2784
  %2818 = vst.msk [vmem:[%s2811 + $0x49] sm:$0xff] %vm26, %v2785
  %2819 = vst.msk [vmem:[%s2811 + $0x51] sm:$0xff] %vm26, %v2786
  %2820 = vst.msk [vmem:[%s2811 + $0x61] sm:$0xff] %vm26, %v2787
  %2821 = vst.msk [vmem:[%s2811 + $0x69] sm:$0xff] %vm26, %v2788
  %2822 = vst.msk [vmem:[%s2811 + $0x79] sm:$0xff] %vm26, %v2789
  %2823 = vst.msk [vmem:[%s2811 + $0x81] sm:$0xff] %vm26, %v2790
  %2824 = vst.msk [vmem:[%s2811 + $0x91] sm:$0xff] %vm26, %v2791
  %2825 = vst.msk [vmem:[%s2811 + $0x99] sm:$0xff] %vm26, %v2792
  %2826 = vst.msk [vmem:[%s2811 + $0xa9] sm:$0xff] %vm26, %v2793
  %2827 = vst.msk [vmem:[%s2811 + $0xb1] sm:$0xff] %vm26, %v2794
  %2828 = vst.msk [vmem:[%s2811 + $0xc1] sm:$0xff] %vm26, %v2795
  %2829 = vst.msk [vmem:[%s2811 + $0xc9] sm:$0xff] %vm26, %v2796
  %2830 = vst.msk [vmem:[%s2811 + $0xd9] sm:$0xff] %vm26, %v2797
  %2831 = vst.msk [vmem:[%s2811 + $0xe1] sm:$0xff] %vm26, %v2798
  %2832 = vst.msk [vmem:[%s2811 + $0xf1] sm:$0xff] %vm26, %v2799
  %2833 = vst.msk [vmem:[%s2811 + $0xf9] sm:$0xff] %vm26, %v2800
  %2834 = vst.msk [vmem:[%s2811 + $0x109] sm:$0xff] %vm26, %v2801
  %2835 = vst.msk [vmem:[%s2811 + $0x111] sm:$0xff] %vm26, %v2802
  %2836 = vst.msk [vmem:[%s2811 + $0x121] sm:$0xff] %vm26, %v2803
  %2837 = vst.msk [vmem:[%s2811 + $0x129] sm:$0xff] %vm26, %v2804
  %2838 = vst.msk [vmem:[%s2811 + $0x139] sm:$0xff] %vm26, %v2805
  %2839 = vst.msk [vmem:[%s2811 + $0x141] sm:$0xff] %vm26, %v2806
  %2840 = vst.msk [vmem:[%s2811 + $0x151] sm:$0xff] %vm26, %v2807
  %2841 = vst.msk [vmem:[%s2811 + $0x159] sm:$0xff] %vm26, %v2808
  %2842 = vst.msk [vmem:[%s2811 + $0x169] sm:$0xff] %vm26, %v2809
  %2843 = vst.msk [vmem:[%s2811 + $0x171] sm:$0xff] %vm26, %v2810
  %v2844 = vld [vmem:[#allocation3] sm:$0xff]
  %v2845 = vld [vmem:[#allocation3 + $0x8] sm:$0xff]
  %v2846 = vld [vmem:[#allocation3 + $0x18] sm:$0xff]
  %v2847 = vld [vmem:[#allocation3 + $0x20] sm:$0xff]
  %v2848 = vld [vmem:[#allocation3 + $0x30] sm:$0xff]
  %v2849 = vld [vmem:[#allocation3 + $0x38] sm:$0xff]
  %v2850 = vld [vmem:[#allocation3 + $0x48] sm:$0xff]
  %v2851 = vld [vmem:[#allocation3 + $0x50] sm:$0xff]
  %v2852 = vld [vmem:[#allocation3 + $0x60] sm:$0xff]
  %v2853 = vld [vmem:[#allocation3 + $0x68] sm:$0xff]
  %v2854 = vld [vmem:[#allocation3 + $0x78] sm:$0xff]
  %v2855 = vld [vmem:[#allocation3 + $0x80] sm:$0xff]
  %v2856 = vld [vmem:[#allocation3 + $0x90] sm:$0xff]
  %v2857 = vld [vmem:[#allocation3 + $0x98] sm:$0xff]
  %v2858 = vld [vmem:[#allocation3 + $0xa8] sm:$0xff]
  %v2859 = vld [vmem:[#allocation3 + $0xb0] sm:$0xff]
  %v2860 = vld [vmem:[#allocation3 + $0xc0] sm:$0xff]
  %v2861 = vld [vmem:[#allocation3 + $0xc8] sm:$0xff]
  %v2862 = vld [vmem:[#allocation3 + $0xd8] sm:$0xff]
  %v2863 = vld [vmem:[#allocation3 + $0xe0] sm:$0xff]
  %v2864 = vld [vmem:[#allocation3 + $0xf0] sm:$0xff]
  %v2865 = vld [vmem:[#allocation3 + $0xf8] sm:$0xff]
  %v2866 = vld [vmem:[#allocation3 + $0x108] sm:$0xff]
  %v2867 = vld [vmem:[#allocation3 + $0x110] sm:$0xff]
  %v2868 = vld [vmem:[#allocation3 + $0x120] sm:$0xff]
  %v2869 = vld [vmem:[#allocation3 + $0x128] sm:$0xff]
  %v2870 = vld [vmem:[#allocation3 + $0x138] sm:$0xff]
  %v2871 = vld [vmem:[#allocation3 + $0x140] sm:$0xff]
  %v2872 = vld [vmem:[#allocation3 + $0x150] sm:$0xff]
  %v2873 = vld [vmem:[#allocation3 + $0x158] sm:$0xff]
  %v2874 = vld [vmem:[#allocation3 + $0x168] sm:$0xff]
  %v2875 = vld [vmem:[#allocation3 + $0x170] sm:$0xff]
  %2876 = vst.msk [vmem:[#allocation4] sm:$0xff] %vm26, %v2844
  %2877 = vst.msk [vmem:[#allocation4 + $0x28] sm:$0xff] %vm26, %v2845
  %2878 = vst.msk [vmem:[#allocation4 + $0x50] sm:$0xff] %vm26, %v2846
  %2879 = vst.msk [vmem:[#allocation4 + $0x78] sm:$0xff] %vm26, %v2847
  %2880 = vst.msk [vmem:[#allocation4 + $0xa0] sm:$0xff] %vm26, %v2848
  %2881 = vst.msk [vmem:[#allocation4 + $0xc8] sm:$0xff] %vm26, %v2849
  %2882 = vst.msk [vmem:[#allocation4 + $0xf0] sm:$0xff] %vm26, %v2850
  %2883 = vst.msk [vmem:[#allocation4 + $0x118] sm:$0xff] %vm26, %v2851
  %2884 = vst.msk [vmem:[#allocation4 + $0x140] sm:$0xff] %vm26, %v2852
  %2885 = vst.msk [vmem:[#allocation4 + $0x168] sm:$0xff] %vm26, %v2853
  %2886 = vst.msk [vmem:[#allocation4 + $0x190] sm:$0xff] %vm26, %v2854
  %2887 = vst.msk [vmem:[#allocation4 + $0x1b8] sm:$0xff] %vm26, %v2855
  %2888 = vst.msk [vmem:[#allocation4 + $0x1e0] sm:$0xff] %vm26, %v2856
  %2889 = vst.msk [vmem:[#allocation4 + $0x208] sm:$0xff] %vm26, %v2857
  %2890 = vst.msk [vmem:[#allocation4 + $0x230] sm:$0xff] %vm26, %v2858
  %2891 = vst.msk [vmem:[#allocation4 + $0x258] sm:$0xff] %vm26, %v2859
  %2892 = vst.msk [vmem:[#allocation4 + $0x280] sm:$0xff] %vm26, %v2860
  %2893 = vst.msk [vmem:[#allocation4 + $0x2a8] sm:$0xff] %vm26, %v2861
  %2894 = vst.msk [vmem:[#allocation4 + $0x2d0] sm:$0xff] %vm26, %v2862
  %2895 = vst.msk [vmem:[#allocation4 + $0x2f8] sm:$0xff] %vm26, %v2863
  %2896 = vst.msk [vmem:[#allocation4 + $0x320] sm:$0xff] %vm26, %v2864
  %2897 = vst.msk [vmem:[#allocation4 + $0x348] sm:$0xff] %vm26, %v2865
  %2898 = vst.msk [vmem:[#allocation4 + $0x370] sm:$0xff] %vm26, %v2866
  %2899 = vst.msk [vmem:[#allocation4 + $0x398] sm:$0xff] %vm26, %v2867
  %2900 = vst.msk [vmem:[#allocation4 + $0x3c0] sm:$0xff] %vm26, %v2868
  %2901 = vst.msk [vmem:[#allocation4 + $0x3e8] sm:$0xff] %vm26, %v2869
  %2902 = vst.msk [vmem:[#allocation4 + $0x410] sm:$0xff] %vm26, %v2870
  %2903 = vst.msk [vmem:[#allocation4 + $0x438] sm:$0xff] %vm26, %v2871
  %2904 = vst.msk [vmem:[#allocation4 + $0x460] sm:$0xff] %vm26, %v2872
  %2905 = vst.msk [vmem:[#allocation4 + $0x488] sm:$0xff] %vm26, %v2873
  %2906 = vst.msk [vmem:[#allocation4 + $0x4b0] sm:$0xff] %vm26, %v2874
  %2907 = vst.msk [vmem:[#allocation4 + $0x4d8] sm:$0xff] %vm26, %v2875
  %v2908 = vld [vmem:[#allocation3 + $0x1] sm:$0xff]
  %v2909 = vld [vmem:[#allocation3 + $0x9] sm:$0xff]
  %v2910 = vld [vmem:[#allocation3 + $0x19] sm:$0xff]
  %v2911 = vld [vmem:[#allocation3 + $0x21] sm:$0xff]
  %v2912 = vld [vmem:[#allocation3 + $0x31] sm:$0xff]
  %v2913 = vld [vmem:[#allocation3 + $0x39] sm:$0xff]
  %v2914 = vld [vmem:[#allocation3 + $0x49] sm:$0xff]
  %v2915 = vld [vmem:[#allocation3 + $0x51] sm:$0xff]
  %v2916 = vld [vmem:[#allocation3 + $0x61] sm:$0xff]
  %v2917 = vld [vmem:[#allocation3 + $0x69] sm:$0xff]
  %v2918 = vld [vmem:[#allocation3 + $0x79] sm:$0xff]
  %v2919 = vld [vmem:[#allocation3 + $0x81] sm:$0xff]
  %v2920 = vld [vmem:[#allocation3 + $0x91] sm:$0xff]
  %v2921 = vld [vmem:[#allocation3 + $0x99] sm:$0xff]
  %v2922 = vld [vmem:[#allocation3 + $0xa9] sm:$0xff]
  %v2923 = vld [vmem:[#allocation3 + $0xb1] sm:$0xff]
  %v2924 = vld [vmem:[#allocation3 + $0xc1] sm:$0xff]
  %v2925 = vld [vmem:[#allocation3 + $0xc9] sm:$0xff]
  %v2926 = vld [vmem:[#allocation3 + $0xd9] sm:$0xff]
  %v2927 = vld [vmem:[#allocation3 + $0xe1] sm:$0xff]
  %v2928 = vld [vmem:[#allocation3 + $0xf1] sm:$0xff]
  %v2929 = vld [vmem:[#allocation3 + $0xf9] sm:$0xff]
  %v2930 = vld [vmem:[#allocation3 + $0x109] sm:$0xff]
  %v2931 = vld [vmem:[#allocation3 + $0x111] sm:$0xff]
  %v2932 = vld [vmem:[#allocation3 + $0x121] sm:$0xff]
  %v2933 = vld [vmem:[#allocation3 + $0x129] sm:$0xff]
  %v2934 = vld [vmem:[#allocation3 + $0x139] sm:$0xff]
  %v2935 = vld [vmem:[#allocation3 + $0x141] sm:$0xff]
  %v2936 = vld [vmem:[#allocation3 + $0x151] sm:$0xff]
  %v2937 = vld [vmem:[#allocation3 + $0x159] sm:$0xff]
  %v2938 = vld [vmem:[#allocation3 + $0x169] sm:$0xff]
  %v2939 = vld [vmem:[#allocation3 + $0x171] sm:$0xff]
  %2972 = vrot.lane.b32.xlu0 %v2908, 64
  %v2973 = vpop.permute.xlu0 %2972
  %2974 = vrot.lane.b32.xlu0 %v2909, 64
  %v2975 = vpop.permute.xlu0 %2974
  %2976 = vrot.lane.b32.xlu0 %v2910, 64
  %v2977 = vpop.permute.xlu0 %2976
  %2978 = vrot.lane.b32.xlu0 %v2911, 64
  %v2979 = vpop.permute.xlu0 %2978
  %2980 = vrot.lane.b32.xlu0 %v2912, 64
  %v2981 = vpop.permute.xlu0 %2980
  %2982 = vrot.lane.b32.xlu0 %v2913, 64
  %v2983 = vpop.permute.xlu0 %2982
  %2984 = vrot.lane.b32.xlu0 %v2914, 64
  %v2985 = vpop.permute.xlu0 %2984
  %2986 = vrot.lane.b32.xlu0 %v2915, 64
  %v2987 = vpop.permute.xlu0 %2986
  %2988 = vrot.lane.b32.xlu0 %v2916, 64
  %v2989 = vpop.permute.xlu0 %2988
  %2990 = vrot.lane.b32.xlu0 %v2917, 64
  %v2991 = vpop.permute.xlu0 %2990
  %2992 = vrot.lane.b32.xlu0 %v2918, 64
  %v2993 = vpop.permute.xlu0 %2992
  %2994 = vrot.lane.b32.xlu0 %v2919, 64
  %v2995 = vpop.permute.xlu0 %2994
  %2996 = vrot.lane.b32.xlu0 %v2920, 64
  %v2997 = vpop.permute.xlu0 %2996
  %2998 = vrot.lane.b32.xlu0 %v2921, 64
  %v2999 = vpop.permute.xlu0 %2998
  %3000 = vrot.lane.b32.xlu0 %v2922, 64
  %v3001 = vpop.permute.xlu0 %3000
  %3002 = vrot.lane.b32.xlu0 %v2923, 64
  %v3003 = vpop.permute.xlu0 %3002
  %3004 = vrot.lane.b32.xlu0 %v2924, 64
  %v3005 = vpop.permute.xlu0 %3004
  %3006 = vrot.lane.b32.xlu0 %v2925, 64
  %v3007 = vpop.permute.xlu0 %3006
  %3008 = vrot.lane.b32.xlu0 %v2926, 64
  %v3009 = vpop.permute.xlu0 %3008
  %3010 = vrot.lane.b32.xlu0 %v2927, 64
  %v3011 = vpop.permute.xlu0 %3010
  %3012 = vrot.lane.b32.xlu0 %v2928, 64
  %v3013 = vpop.permute.xlu0 %3012
  %3014 = vrot.lane.b32.xlu0 %v2929, 64
  %v3015 = vpop.permute.xlu0 %3014
  %3016 = vrot.lane.b32.xlu0 %v2930, 64
  %v3017 = vpop.permute.xlu0 %3016
  %3018 = vrot.lane.b32.xlu0 %v2931, 64
  %v3019 = vpop.permute.xlu0 %3018
  %3020 = vrot.lane.b32.xlu0 %v2932, 64
  %v3021 = vpop.permute.xlu0 %3020
  %3022 = vrot.lane.b32.xlu0 %v2933, 64
  %v3023 = vpop.permute.xlu0 %3022
  %3024 = vrot.lane.b32.xlu0 %v2934, 64
  %v3025 = vpop.permute.xlu0 %3024
  %3026 = vrot.lane.b32.xlu0 %v2935, 64
  %v3027 = vpop.permute.xlu0 %3026
  %3028 = vrot.lane.b32.xlu0 %v2936, 64
  %v3029 = vpop.permute.xlu0 %3028
  %3030 = vrot.lane.b32.xlu0 %v2937, 64
  %v3031 = vpop.permute.xlu0 %3030
  %3032 = vrot.lane.b32.xlu0 %v2938, 64
  %v3033 = vpop.permute.xlu0 %3032
  %3034 = vrot.lane.b32.xlu0 %v2939, 64
  %v3035 = vpop.permute.xlu0 %3034
  %vm3068 = vcmask 1048064
  %3069 = vst.msk [vmem:[#allocation4] sm:$0xff] %vm3068, %v2973
  %3070 = vst.msk [vmem:[#allocation4 + $0x28] sm:$0xff] %vm3068, %v2975
  %3071 = vst.msk [vmem:[#allocation4 + $0x50] sm:$0xff] %vm3068, %v2977
  %3072 = vst.msk [vmem:[#allocation4 + $0x78] sm:$0xff] %vm3068, %v2979
  %3073 = vst.msk [vmem:[#allocation4 + $0xa0] sm:$0xff] %vm3068, %v2981
  %3074 = vst.msk [vmem:[#allocation4 + $0xc8] sm:$0xff] %vm3068, %v2983
  %3075 = vst.msk [vmem:[#allocation4 + $0xf0] sm:$0xff] %vm3068, %v2985
  %3076 = vst.msk [vmem:[#allocation4 + $0x118] sm:$0xff] %vm3068, %v2987
  %3077 = vst.msk [vmem:[#allocation4 + $0x140] sm:$0xff] %vm3068, %v2989
  %3078 = vst.msk [vmem:[#allocation4 + $0x168] sm:$0xff] %vm3068, %v2991
  %3079 = vst.msk [vmem:[#allocation4 + $0x190] sm:$0xff] %vm3068, %v2993
  %3080 = vst.msk [vmem:[#allocation4 + $0x1b8] sm:$0xff] %vm3068, %v2995
  %3081 = vst.msk [vmem:[#allocation4 + $0x1e0] sm:$0xff] %vm3068, %v2997
  %3082 = vst.msk [vmem:[#allocation4 + $0x208] sm:$0xff] %vm3068, %v2999
  %3083 = vst.msk [vmem:[#allocation4 + $0x230] sm:$0xff] %vm3068, %v3001
  %3084 = vst.msk [vmem:[#allocation4 + $0x258] sm:$0xff] %vm3068, %v3003
  %3085 = vst.msk [vmem:[#allocation4 + $0x280] sm:$0xff] %vm3068, %v3005
  %3086 = vst.msk [vmem:[#allocation4 + $0x2a8] sm:$0xff] %vm3068, %v3007
  %3087 = vst.msk [vmem:[#allocation4 + $0x2d0] sm:$0xff] %vm3068, %v3009
  %3088 = vst.msk [vmem:[#allocation4 + $0x2f8] sm:$0xff] %vm3068, %v3011
  %3089 = vst.msk [vmem:[#allocation4 + $0x320] sm:$0xff] %vm3068, %v3013
  %3090 = vst.msk [vmem:[#allocation4 + $0x348] sm:$0xff] %vm3068, %v3015
  %3091 = vst.msk [vmem:[#allocation4 + $0x370] sm:$0xff] %vm3068, %v3017
  %3092 = vst.msk [vmem:[#allocation4 + $0x398] sm:$0xff] %vm3068, %v3019
  %3093 = vst.msk [vmem:[#allocation4 + $0x3c0] sm:$0xff] %vm3068, %v3021
  %3094 = vst.msk [vmem:[#allocation4 + $0x3e8] sm:$0xff] %vm3068, %v3023
  %3095 = vst.msk [vmem:[#allocation4 + $0x410] sm:$0xff] %vm3068, %v3025
  %3096 = vst.msk [vmem:[#allocation4 + $0x438] sm:$0xff] %vm3068, %v3027
  %3097 = vst.msk [vmem:[#allocation4 + $0x460] sm:$0xff] %vm3068, %v3029
  %3098 = vst.msk [vmem:[#allocation4 + $0x488] sm:$0xff] %vm3068, %v3031
  %3099 = vst.msk [vmem:[#allocation4 + $0x4b0] sm:$0xff] %vm3068, %v3033
  %3100 = vst.msk [vmem:[#allocation4 + $0x4d8] sm:$0xff] %vm3068, %v3035
  %v3101 = vld [vmem:[#allocation3 + $0x2] sm:$0xff]
  %v3102 = vld [vmem:[#allocation3 + $0xa] sm:$0xff]
  %v3103 = vld [vmem:[#allocation3 + $0x1a] sm:$0xff]
  %v3104 = vld [vmem:[#allocation3 + $0x22] sm:$0xff]
  %v3105 = vld [vmem:[#allocation3 + $0x32] sm:$0xff]
  %v3106 = vld [vmem:[#allocation3 + $0x3a] sm:$0xff]
  %v3107 = vld [vmem:[#allocation3 + $0x4a] sm:$0xff]
  %v3108 = vld [vmem:[#allocation3 + $0x52] sm:$0xff]
  %v3109 = vld [vmem:[#allocation3 + $0x62] sm:$0xff]
  %v3110 = vld [vmem:[#allocation3 + $0x6a] sm:$0xff]
  %v3111 = vld [vmem:[#allocation3 + $0x7a] sm:$0xff]
  %v3112 = vld [vmem:[#allocation3 + $0x82] sm:$0xff]
  %v3113 = vld [vmem:[#allocation3 + $0x92] sm:$0xff]
  %v3114 = vld [vmem:[#allocation3 + $0x9a] sm:$0xff]
  %v3115 = vld [vmem:[#allocation3 + $0xaa] sm:$0xff]
  %v3116 = vld [vmem:[#allocation3 + $0xb2] sm:$0xff]
  %v3117 = vld [vmem:[#allocation3 + $0xc2] sm:$0xff]
  %v3118 = vld [vmem:[#allocation3 + $0xca] sm:$0xff]
  %v3119 = vld [vmem:[#allocation3 + $0xda] sm:$0xff]
  %v3120 = vld [vmem:[#allocation3 + $0xe2] sm:$0xff]
  %v3121 = vld [vmem:[#allocation3 + $0xf2] sm:$0xff]
  %v3122 = vld [vmem:[#allocation3 + $0xfa] sm:$0xff]
  %v3123 = vld [vmem:[#allocation3 + $0x10a] sm:$0xff]
  %v3124 = vld [vmem:[#allocation3 + $0x112] sm:$0xff]
  %v3125 = vld [vmem:[#allocation3 + $0x122] sm:$0xff]
  %v3126 = vld [vmem:[#allocation3 + $0x12a] sm:$0xff]
  %v3127 = vld [vmem:[#allocation3 + $0x13a] sm:$0xff]
  %v3128 = vld [vmem:[#allocation3 + $0x142] sm:$0xff]
  %v3129 = vld [vmem:[#allocation3 + $0x152] sm:$0xff]
  %v3130 = vld [vmem:[#allocation3 + $0x15a] sm:$0xff]
  %v3131 = vld [vmem:[#allocation3 + $0x16a] sm:$0xff]
  %v3132 = vld [vmem:[#allocation3 + $0x172] sm:$0xff]
  %3133 = vst.msk [vmem:[#allocation4 + $0x8] sm:$0xff] %vm26, %v3101
  %3134 = vst.msk [vmem:[#allocation4 + $0x30] sm:$0xff] %vm26, %v3102
  %3135 = vst.msk [vmem:[#allocation4 + $0x58] sm:$0xff] %vm26, %v3103
  %3136 = vst.msk [vmem:[#allocation4 + $0x80] sm:$0xff] %vm26, %v3104
  %3137 = vst.msk [vmem:[#allocation4 + $0xa8] sm:$0xff] %vm26, %v3105
  %3138 = vst.msk [vmem:[#allocation4 + $0xd0] sm:$0xff] %vm26, %v3106
  %3139 = vst.msk [vmem:[#allocation4 + $0xf8] sm:$0xff] %vm26, %v3107
  %3140 = vst.msk [vmem:[#allocation4 + $0x120] sm:$0xff] %vm26, %v3108
  %3141 = vst.msk [vmem:[#allocation4 + $0x148] sm:$0xff] %vm26, %v3109
  %3142 = vst.msk [vmem:[#allocation4 + $0x170] sm:$0xff] %vm26, %v3110
  %3143 = vst.msk [vmem:[#allocation4 + $0x198] sm:$0xff] %vm26, %v3111
  %3144 = vst.msk [vmem:[#allocation4 + $0x1c0] sm:$0xff] %vm26, %v3112
  %3145 = vst.msk [vmem:[#allocation4 + $0x1e8] sm:$0xff] %vm26, %v3113
  %3146 = vst.msk [vmem:[#allocation4 + $0x210] sm:$0xff] %vm26, %v3114
  %3147 = vst.msk [vmem:[#allocation4 + $0x238] sm:$0xff] %vm26, %v3115
  %3148 = vst.msk [vmem:[#allocation4 + $0x260] sm:$0xff] %vm26, %v3116
  %3149 = vst.msk [vmem:[#allocation4 + $0x288] sm:$0xff] %vm26, %v3117
  %3150 = vst.msk [vmem:[#allocation4 + $0x2b0] sm:$0xff] %vm26, %v3118
  %3151 = vst.msk [vmem:[#allocation4 + $0x2d8] sm:$0xff] %vm26, %v3119
  %3152 = vst.msk [vmem:[#allocation4 + $0x300] sm:$0xff] %vm26, %v3120
  %3153 = vst.msk [vmem:[#allocation4 + $0x328] sm:$0xff] %vm26, %v3121
  %3154 = vst.msk [vmem:[#allocation4 + $0x350] sm:$0xff] %vm26, %v3122
  %3155 = vst.msk [vmem:[#allocation4 + $0x378] sm:$0xff] %vm26, %v3123
  %3156 = vst.msk [vmem:[#allocation4 + $0x3a0] sm:$0xff] %vm26, %v3124
  %3157 = vst.msk [vmem:[#allocation4 + $0x3c8] sm:$0xff] %vm26, %v3125
  %3158 = vst.msk [vmem:[#allocation4 + $0x3f0] sm:$0xff] %vm26, %v3126
  %3159 = vst.msk [vmem:[#allocation4 + $0x418] sm:$0xff] %vm26, %v3127
  %3160 = vst.msk [vmem:[#allocation4 + $0x440] sm:$0xff] %vm26, %v3128
  %3161 = vst.msk [vmem:[#allocation4 + $0x468] sm:$0xff] %vm26, %v3129
  %3162 = vst.msk [vmem:[#allocation4 + $0x490] sm:$0xff] %vm26, %v3130
  %3163 = vst.msk [vmem:[#allocation4 + $0x4b8] sm:$0xff] %vm26, %v3131
  %3164 = vst.msk [vmem:[#allocation4 + $0x4e0] sm:$0xff] %vm26, %v3132
  %v3165 = vld [vmem:[%s2811] sm:$0xff]
  %v3166 = vld [vmem:[%s2811 + $0x8] sm:$0xff]
  %v3167 = vld [vmem:[%s2811 + $0x18] sm:$0xff]
  %v3168 = vld [vmem:[%s2811 + $0x20] sm:$0xff]
  %v3169 = vld [vmem:[%s2811 + $0x30] sm:$0xff]
  %v3170 = vld [vmem:[%s2811 + $0x38] sm:$0xff]
  %v3171 = vld [vmem:[%s2811 + $0x48] sm:$0xff]
  %v3172 = vld [vmem:[%s2811 + $0x50] sm:$0xff]
  %v3173 = vld [vmem:[%s2811 + $0x60] sm:$0xff]
  %v3174 = vld [vmem:[%s2811 + $0x68] sm:$0xff]
  %v3175 = vld [vmem:[%s2811 + $0x78] sm:$0xff]
  %v3176 = vld [vmem:[%s2811 + $0x80] sm:$0xff]
  %v3177 = vld [vmem:[%s2811 + $0x90] sm:$0xff]
  %v3178 = vld [vmem:[%s2811 + $0x98] sm:$0xff]
  %v3179 = vld [vmem:[%s2811 + $0xa8] sm:$0xff]
  %v3180 = vld [vmem:[%s2811 + $0xb0] sm:$0xff]
  %v3181 = vld [vmem:[%s2811 + $0xc0] sm:$0xff]
  %v3182 = vld [vmem:[%s2811 + $0xc8] sm:$0xff]
  %v3183 = vld [vmem:[%s2811 + $0xd8] sm:$0xff]
  %v3184 = vld [vmem:[%s2811 + $0xe0] sm:$0xff]
  %v3185 = vld [vmem:[%s2811 + $0xf0] sm:$0xff]
  %v3186 = vld [vmem:[%s2811 + $0xf8] sm:$0xff]
  %v3187 = vld [vmem:[%s2811 + $0x108] sm:$0xff]
  %v3188 = vld [vmem:[%s2811 + $0x110] sm:$0xff]
  %v3189 = vld [vmem:[%s2811 + $0x120] sm:$0xff]
  %v3190 = vld [vmem:[%s2811 + $0x128] sm:$0xff]
  %v3191 = vld [vmem:[%s2811 + $0x138] sm:$0xff]
  %v3192 = vld [vmem:[%s2811 + $0x140] sm:$0xff]
  %v3193 = vld [vmem:[%s2811 + $0x150] sm:$0xff]
  %v3194 = vld [vmem:[%s2811 + $0x158] sm:$0xff]
  %v3195 = vld [vmem:[%s2811 + $0x168] sm:$0xff]
  %v3196 = vld [vmem:[%s2811 + $0x170] sm:$0xff]
  %3229 = vrot.lane.b32.xlu0 %v3165, 64
  %v3230 = vpop.permute.xlu0 %3229
  %3231 = vrot.lane.b32.xlu0 %v3166, 64
  %v3232 = vpop.permute.xlu0 %3231
  %3233 = vrot.lane.b32.xlu0 %v3167, 64
  %v3234 = vpop.permute.xlu0 %3233
  %3235 = vrot.lane.b32.xlu0 %v3168, 64
  %v3236 = vpop.permute.xlu0 %3235
  %3237 = vrot.lane.b32.xlu0 %v3169, 64
  %v3238 = vpop.permute.xlu0 %3237
  %3239 = vrot.lane.b32.xlu0 %v3170, 64
  %v3240 = vpop.permute.xlu0 %3239
  %3241 = vrot.lane.b32.xlu0 %v3171, 64
  %v3242 = vpop.permute.xlu0 %3241
  %3243 = vrot.lane.b32.xlu0 %v3172, 64
  %v3244 = vpop.permute.xlu0 %3243
  %3245 = vrot.lane.b32.xlu0 %v3173, 64
  %v3246 = vpop.permute.xlu0 %3245
  %3247 = vrot.lane.b32.xlu0 %v3174, 64
  %v3248 = vpop.permute.xlu0 %3247
  %3249 = vrot.lane.b32.xlu0 %v3175, 64
  %v3250 = vpop.permute.xlu0 %3249
  %3251 = vrot.lane.b32.xlu0 %v3176, 64
  %v3252 = vpop.permute.xlu0 %3251
  %3253 = vrot.lane.b32.xlu0 %v3177, 64
  %v3254 = vpop.permute.xlu0 %3253
  %3255 = vrot.lane.b32.xlu0 %v3178, 64
  %v3256 = vpop.permute.xlu0 %3255
  %3257 = vrot.lane.b32.xlu0 %v3179, 64
  %v3258 = vpop.permute.xlu0 %3257
  %3259 = vrot.lane.b32.xlu0 %v3180, 64
  %v3260 = vpop.permute.xlu0 %3259
  %3261 = vrot.lane.b32.xlu0 %v3181, 64
  %v3262 = vpop.permute.xlu0 %3261
  %3263 = vrot.lane.b32.xlu0 %v3182, 64
  %v3264 = vpop.permute.xlu0 %3263
  %3265 = vrot.lane.b32.xlu0 %v3183, 64
  %v3266 = vpop.permute.xlu0 %3265
  %3267 = vrot.lane.b32.xlu0 %v3184, 64
  %v3268 = vpop.permute.xlu0 %3267
  %3269 = vrot.lane.b32.xlu0 %v3185, 64
  %v3270 = vpop.permute.xlu0 %3269
  %3271 = vrot.lane.b32.xlu0 %v3186, 64
  %v3272 = vpop.permute.xlu0 %3271
  %3273 = vrot.lane.b32.xlu0 %v3187, 64
  %v3274 = vpop.permute.xlu0 %3273
  %3275 = vrot.lane.b32.xlu0 %v3188, 64
  %v3276 = vpop.permute.xlu0 %3275
  %3277 = vrot.lane.b32.xlu0 %v3189, 64
  %v3278 = vpop.permute.xlu0 %3277
  %3279 = vrot.lane.b32.xlu0 %v3190, 64
  %v3280 = vpop.permute.xlu0 %3279
  %3281 = vrot.lane.b32.xlu0 %v3191, 64
  %v3282 = vpop.permute.xlu0 %3281
  %3283 = vrot.lane.b32.xlu0 %v3192, 64
  %v3284 = vpop.permute.xlu0 %3283
  %3285 = vrot.lane.b32.xlu0 %v3193, 64
  %v3286 = vpop.permute.xlu0 %3285
  %3287 = vrot.lane.b32.xlu0 %v3194, 64
  %v3288 = vpop.permute.xlu0 %3287
  %3289 = vrot.lane.b32.xlu0 %v3195, 64
  %v3290 = vpop.permute.xlu0 %3289
  %3291 = vrot.lane.b32.xlu0 %v3196, 64
  %v3292 = vpop.permute.xlu0 %3291
  %3325 = vst.msk [vmem:[#allocation4 + $0x8] sm:$0xff] %vm3068, %v3230
  %3326 = vst.msk [vmem:[#allocation4 + $0x30] sm:$0xff] %vm3068, %v3232
  %3327 = vst.msk [vmem:[#allocation4 + $0x58] sm:$0xff] %vm3068, %v3234
  %3328 = vst.msk [vmem:[#allocation4 + $0x80] sm:$0xff] %vm3068, %v3236
  %3329 = vst.msk [vmem:[#allocation4 + $0xa8] sm:$0xff] %vm3068, %v3238
  %3330 = vst.msk [vmem:[#allocation4 + $0xd0] sm:$0xff] %vm3068, %v3240
  %3331 = vst.msk [vmem:[#allocation4 + $0xf8] sm:$0xff] %vm3068, %v3242
  %3332 = vst.msk [vmem:[#allocation4 + $0x120] sm:$0xff] %vm3068, %v3244
  %3333 = vst.msk [vmem:[#allocation4 + $0x148] sm:$0xff] %vm3068, %v3246
  %3334 = vst.msk [vmem:[#allocation4 + $0x170] sm:$0xff] %vm3068, %v3248
  %3335 = vst.msk [vmem:[#allocation4 + $0x198] sm:$0xff] %vm3068, %v3250
  %3336 = vst.msk [vmem:[#allocation4 + $0x1c0] sm:$0xff] %vm3068, %v3252
  %3337 = vst.msk [vmem:[#allocation4 + $0x1e8] sm:$0xff] %vm3068, %v3254
  %3338 = vst.msk [vmem:[#allocation4 + $0x210] sm:$0xff] %vm3068, %v3256
  %3339 = vst.msk [vmem:[#allocation4 + $0x238] sm:$0xff] %vm3068, %v3258
  %3340 = vst.msk [vmem:[#allocation4 + $0x260] sm:$0xff] %vm3068, %v3260
  %3341 = vst.msk [vmem:[#allocation4 + $0x288] sm:$0xff] %vm3068, %v3262
  %3342 = vst.msk [vmem:[#allocation4 + $0x2b0] sm:$0xff] %vm3068, %v3264
  %3343 = vst.msk [vmem:[#allocation4 + $0x2d8] sm:$0xff] %vm3068, %v3266
  %3344 = vst.msk [vmem:[#allocation4 + $0x300] sm:$0xff] %vm3068, %v3268
  %3345 = vst.msk [vmem:[#allocation4 + $0x328] sm:$0xff] %vm3068, %v3270
  %3346 = vst.msk [vmem:[#allocation4 + $0x350] sm:$0xff] %vm3068, %v3272
  %3347 = vst.msk [vmem:[#allocation4 + $0x378] sm:$0xff] %vm3068, %v3274
  %3348 = vst.msk [vmem:[#allocation4 + $0x3a0] sm:$0xff] %vm3068, %v3276
  %3349 = vst.msk [vmem:[#allocation4 + $0x3c8] sm:$0xff] %vm3068, %v3278
  %3350 = vst.msk [vmem:[#allocation4 + $0x3f0] sm:$0xff] %vm3068, %v3280
  %3351 = vst.msk [vmem:[#allocation4 + $0x418] sm:$0xff] %vm3068, %v3282
  %3352 = vst.msk [vmem:[#allocation4 + $0x440] sm:$0xff] %vm3068, %v3284
  %3353 = vst.msk [vmem:[#allocation4 + $0x468] sm:$0xff] %vm3068, %v3286
  %3354 = vst.msk [vmem:[#allocation4 + $0x490] sm:$0xff] %vm3068, %v3288
  %3355 = vst.msk [vmem:[#allocation4 + $0x4b8] sm:$0xff] %vm3068, %v3290
  %3356 = vst.msk [vmem:[#allocation4 + $0x4e0] sm:$0xff] %vm3068, %v3292
  %v3357 = vld [vmem:[%s2811 + $0x1] sm:$0xff]
  %v3358 = vld [vmem:[%s2811 + $0x9] sm:$0xff]
  %v3359 = vld [vmem:[%s2811 + $0x19] sm:$0xff]
  %v3360 = vld [vmem:[%s2811 + $0x21] sm:$0xff]
  %v3361 = vld [vmem:[%s2811 + $0x31] sm:$0xff]
  %v3362 = vld [vmem:[%s2811 + $0x39] sm:$0xff]
  %v3363 = vld [vmem:[%s2811 + $0x49] sm:$0xff]
  %v3364 = vld [vmem:[%s2811 + $0x51] sm:$0xff]
  %v3365 = vld [vmem:[%s2811 + $0x61] sm:$0xff]
  %v3366 = vld [vmem:[%s2811 + $0x69] sm:$0xff]
  %v3367 = vld [vmem:[%s2811 + $0x79] sm:$0xff]
  %v3368 = vld [vmem:[%s2811 + $0x81] sm:$0xff]
  %v3369 = vld [vmem:[%s2811 + $0x91] sm:$0xff]
  %v3370 = vld [vmem:[%s2811 + $0x99] sm:$0xff]
  %v3371 = vld [vmem:[%s2811 + $0xa9] sm:$0xff]
  %v3372 = vld [vmem:[%s2811 + $0xb1] sm:$0xff]
  %v3373 = vld [vmem:[%s2811 + $0xc1] sm:$0xff]
  %v3374 = vld [vmem:[%s2811 + $0xc9] sm:$0xff]
  %v3375 = vld [vmem:[%s2811 + $0xd9] sm:$0xff]
  %v3376 = vld [vmem:[%s2811 + $0xe1] sm:$0xff]
  %v3377 = vld [vmem:[%s2811 + $0xf1] sm:$0xff]
  %v3378 = vld [vmem:[%s2811 + $0xf9] sm:$0xff]
  %v3379 = vld [vmem:[%s2811 + $0x109] sm:$0xff]
  %v3380 = vld [vmem:[%s2811 + $0x111] sm:$0xff]
  %v3381 = vld [vmem:[%s2811 + $0x121] sm:$0xff]
  %v3382 = vld [vmem:[%s2811 + $0x129] sm:$0xff]
  %v3383 = vld [vmem:[%s2811 + $0x139] sm:$0xff]
  %v3384 = vld [vmem:[%s2811 + $0x141] sm:$0xff]
  %v3385 = vld [vmem:[%s2811 + $0x151] sm:$0xff]
  %v3386 = vld [vmem:[%s2811 + $0x159] sm:$0xff]
  %v3387 = vld [vmem:[%s2811 + $0x169] sm:$0xff]
  %v3388 = vld [vmem:[%s2811 + $0x171] sm:$0xff]
  %3389 = vst.msk [vmem:[#allocation4 + $0x10] sm:$0xff] %vm26, %v3357
  %3390 = vst.msk [vmem:[#allocation4 + $0x38] sm:$0xff] %vm26, %v3358
  %3391 = vst.msk [vmem:[#allocation4 + $0x60] sm:$0xff] %vm26, %v3359
  %3392 = vst.msk [vmem:[#allocation4 + $0x88] sm:$0xff] %vm26, %v3360
  %3393 = vst.msk [vmem:[#allocation4 + $0xb0] sm:$0xff] %vm26, %v3361
  %3394 = vst.msk [vmem:[#allocation4 + $0xd8] sm:$0xff] %vm26, %v3362
  %3395 = vst.msk [vmem:[#allocation4 + $0x100] sm:$0xff] %vm26, %v3363
  %3396 = vst.msk [vmem:[#allocation4 + $0x128] sm:$0xff] %vm26, %v3364
  %3397 = vst.msk [vmem:[#allocation4 + $0x150] sm:$0xff] %vm26, %v3365
  %3398 = vst.msk [vmem:[#allocation4 + $0x178] sm:$0xff] %vm26, %v3366
  %3399 = vst.msk [vmem:[#allocation4 + $0x1a0] sm:$0xff] %vm26, %v3367
  %3400 = vst.msk [vmem:[#allocation4 + $0x1c8] sm:$0xff] %vm26, %v3368
  %3401 = vst.msk [vmem:[#allocation4 + $0x1f0] sm:$0xff] %vm26, %v3369
  %3402 = vst.msk [vmem:[#allocation4 + $0x218] sm:$0xff] %vm26, %v3370
  %3403 = vst.msk [vmem:[#allocation4 + $0x240] sm:$0xff] %vm26, %v3371
  %3404 = vst.msk [vmem:[#allocation4 + $0x268] sm:$0xff] %vm26, %v3372
  %3405 = vst.msk [vmem:[#allocation4 + $0x290] sm:$0xff] %vm26, %v3373
  %3406 = vst.msk [vmem:[#allocation4 + $0x2b8] sm:$0xff] %vm26, %v3374
  %3407 = vst.msk [vmem:[#allocation4 + $0x2e0] sm:$0xff] %vm26, %v3375
  %3408 = vst.msk [vmem:[#allocation4 + $0x308] sm:$0xff] %vm26, %v3376
  %3409 = vst.msk [vmem:[#allocation4 + $0x330] sm:$0xff] %vm26, %v3377
  %3410 = vst.msk [vmem:[#allocation4 + $0x358] sm:$0xff] %vm26, %v3378
  %3411 = vst.msk [vmem:[#allocation4 + $0x380] sm:$0xff] %vm26, %v3379
  %3412 = vst.msk [vmem:[#allocation4 + $0x3a8] sm:$0xff] %vm26, %v3380
  %3413 = vst.msk [vmem:[#allocation4 + $0x3d0] sm:$0xff] %vm26, %v3381
  %3414 = vst.msk [vmem:[#allocation4 + $0x3f8] sm:$0xff] %vm26, %v3382
  %3415 = vst.msk [vmem:[#allocation4 + $0x420] sm:$0xff] %vm26, %v3383
  %3416 = vst.msk [vmem:[#allocation4 + $0x448] sm:$0xff] %vm26, %v3384
  %3417 = vst.msk [vmem:[#allocation4 + $0x470] sm:$0xff] %vm26, %v3385
  %3418 = vst.msk [vmem:[#allocation4 + $0x498] sm:$0xff] %vm26, %v3386
  %3419 = vst.msk [vmem:[#allocation4 + $0x4c0] sm:$0xff] %vm26, %v3387
  %3420 = vst.msk [vmem:[#allocation4 + $0x4e8] sm:$0xff] %vm26, %v3388
  %v3421 = vld [vmem:[%s2811 + $0x2] sm:$0xff]
  %v3422 = vld [vmem:[%s2811 + $0xa] sm:$0xff]
  %v3423 = vld [vmem:[%s2811 + $0x1a] sm:$0xff]
  %v3424 = vld [vmem:[%s2811 + $0x22] sm:$0xff]
  %v3425 = vld [vmem:[%s2811 + $0x32] sm:$0xff]
  %v3426 = vld [vmem:[%s2811 + $0x3a] sm:$0xff]
  %v3427 = vld [vmem:[%s2811 + $0x4a] sm:$0xff]
  %v3428 = vld [vmem:[%s2811 + $0x52] sm:$0xff]
  %v3429 = vld [vmem:[%s2811 + $0x62] sm:$0xff]
  %v3430 = vld [vmem:[%s2811 + $0x6a] sm:$0xff]
  %v3431 = vld [vmem:[%s2811 + $0x7a] sm:$0xff]
  %v3432 = vld [vmem:[%s2811 + $0x82] sm:$0xff]
  %v3433 = vld [vmem:[%s2811 + $0x92] sm:$0xff]
  %v3434 = vld [vmem:[%s2811 + $0x9a] sm:$0xff]
  %v3435 = vld [vmem:[%s2811 + $0xaa] sm:$0xff]
  %v3436 = vld [vmem:[%s2811 + $0xb2] sm:$0xff]
  %v3437 = vld [vmem:[%s2811 + $0xc2] sm:$0xff]
  %v3438 = vld [vmem:[%s2811 + $0xca] sm:$0xff]
  %v3439 = vld [vmem:[%s2811 + $0xda] sm:$0xff]
  %v3440 = vld [vmem:[%s2811 + $0xe2] sm:$0xff]
  %v3441 = vld [vmem:[%s2811 + $0xf2] sm:$0xff]
  %v3442 = vld [vmem:[%s2811 + $0xfa] sm:$0xff]
  %v3443 = vld [vmem:[%s2811 + $0x10a] sm:$0xff]
  %v3444 = vld [vmem:[%s2811 + $0x112] sm:$0xff]
  %v3445 = vld [vmem:[%s2811 + $0x122] sm:$0xff]
  %v3446 = vld [vmem:[%s2811 + $0x12a] sm:$0xff]
  %v3447 = vld [vmem:[%s2811 + $0x13a] sm:$0xff]
  %v3448 = vld [vmem:[%s2811 + $0x142] sm:$0xff]
  %v3449 = vld [vmem:[%s2811 + $0x152] sm:$0xff]
  %v3450 = vld [vmem:[%s2811 + $0x15a] sm:$0xff]
  %v3451 = vld [vmem:[%s2811 + $0x16a] sm:$0xff]
  %v3452 = vld [vmem:[%s2811 + $0x172] sm:$0xff]
  %3485 = vrot.lane.b32.xlu0 %v3421, 64
  %v3486 = vpop.permute.xlu0 %3485
  %3487 = vrot.lane.b32.xlu0 %v3422, 64
  %v3488 = vpop.permute.xlu0 %3487
  %3489 = vrot.lane.b32.xlu0 %v3423, 64
  %v3490 = vpop.permute.xlu0 %3489
  %3491 = vrot.lane.b32.xlu0 %v3424, 64
  %v3492 = vpop.permute.xlu0 %3491
  %3493 = vrot.lane.b32.xlu0 %v3425, 64
  %v3494 = vpop.permute.xlu0 %3493
  %3495 = vrot.lane.b32.xlu0 %v3426, 64
  %v3496 = vpop.permute.xlu0 %3495
  %3497 = vrot.lane.b32.xlu0 %v3427, 64
  %v3498 = vpop.permute.xlu0 %3497
  %3499 = vrot.lane.b32.xlu0 %v3428, 64
  %v3500 = vpop.permute.xlu0 %3499
  %3501 = vrot.lane.b32.xlu0 %v3429, 64
  %v3502 = vpop.permute.xlu0 %3501
  %3503 = vrot.lane.b32.xlu0 %v3430, 64
  %v3504 = vpop.permute.xlu0 %3503
  %3505 = vrot.lane.b32.xlu0 %v3431, 64
  %v3506 = vpop.permute.xlu0 %3505
  %3507 = vrot.lane.b32.xlu0 %v3432, 64
  %v3508 = vpop.permute.xlu0 %3507
  %3509 = vrot.lane.b32.xlu0 %v3433, 64
  %v3510 = vpop.permute.xlu0 %3509
  %3511 = vrot.lane.b32.xlu0 %v3434, 64
  %v3512 = vpop.permute.xlu0 %3511
  %3513 = vrot.lane.b32.xlu0 %v3435, 64
  %v3514 = vpop.permute.xlu0 %3513
  %3515 = vrot.lane.b32.xlu0 %v3436, 64
  %v3516 = vpop.permute.xlu0 %3515
  %3517 = vrot.lane.b32.xlu0 %v3437, 64
  %v3518 = vpop.permute.xlu0 %3517
  %3519 = vrot.lane.b32.xlu0 %v3438, 64
  %v3520 = vpop.permute.xlu0 %3519
  %3521 = vrot.lane.b32.xlu0 %v3439, 64
  %v3522 = vpop.permute.xlu0 %3521
  %3523 = vrot.lane.b32.xlu0 %v3440, 64
  %v3524 = vpop.permute.xlu0 %3523
  %3525 = vrot.lane.b32.xlu0 %v3441, 64
  %v3526 = vpop.permute.xlu0 %3525
  %3527 = vrot.lane.b32.xlu0 %v3442, 64
  %v3528 = vpop.permute.xlu0 %3527
  %3529 = vrot.lane.b32.xlu0 %v3443, 64
  %v3530 = vpop.permute.xlu0 %3529
  %3531 = vrot.lane.b32.xlu0 %v3444, 64
  %v3532 = vpop.permute.xlu0 %3531
  %3533 = vrot.lane.b32.xlu0 %v3445, 64
  %v3534 = vpop.permute.xlu0 %3533
  %3535 = vrot.lane.b32.xlu0 %v3446, 64
  %v3536 = vpop.permute.xlu0 %3535
  %3537 = vrot.lane.b32.xlu0 %v3447, 64
  %v3538 = vpop.permute.xlu0 %3537
  %3539 = vrot.lane.b32.xlu0 %v3448, 64
  %v3540 = vpop.permute.xlu0 %3539
  %3541 = vrot.lane.b32.xlu0 %v3449, 64
  %v3542 = vpop.permute.xlu0 %3541
  %3543 = vrot.lane.b32.xlu0 %v3450, 64
  %v3544 = vpop.permute.xlu0 %3543
  %3545 = vrot.lane.b32.xlu0 %v3451, 64
  %v3546 = vpop.permute.xlu0 %3545
  %3547 = vrot.lane.b32.xlu0 %v3452, 64
  %v3548 = vpop.permute.xlu0 %3547
  %3581 = vst.msk [vmem:[#allocation4 + $0x10] sm:$0xff] %vm3068, %v3486
  %3582 = vst.msk [vmem:[#allocation4 + $0x38] sm:$0xff] %vm3068, %v3488
  %3583 = vst.msk [vmem:[#allocation4 + $0x60] sm:$0xff] %vm3068, %v3490
  %3584 = vst.msk [vmem:[#allocation4 + $0x88] sm:$0xff] %vm3068, %v3492
  %3585 = vst.msk [vmem:[#allocation4 + $0xb0] sm:$0xff] %vm3068, %v3494
  %3586 = vst.msk [vmem:[#allocation4 + $0xd8] sm:$0xff] %vm3068, %v3496
  %3587 = vst.msk [vmem:[#allocation4 + $0x100] sm:$0xff] %vm3068, %v3498
  %3588 = vst.msk [vmem:[#allocation4 + $0x128] sm:$0xff] %vm3068, %v3500
  %3589 = vst.msk [vmem:[#allocation4 + $0x150] sm:$0xff] %vm3068, %v3502
  %3590 = vst.msk [vmem:[#allocation4 + $0x178] sm:$0xff] %vm3068, %v3504
  %3591 = vst.msk [vmem:[#allocation4 + $0x1a0] sm:$0xff] %vm3068, %v3506
  %3592 = vst.msk [vmem:[#allocation4 + $0x1c8] sm:$0xff] %vm3068, %v3508
  %3593 = vst.msk [vmem:[#allocation4 + $0x1f0] sm:$0xff] %vm3068, %v3510
  %3594 = vst.msk [vmem:[#allocation4 + $0x218] sm:$0xff] %vm3068, %v3512
  %3595 = vst.msk [vmem:[#allocation4 + $0x240] sm:$0xff] %vm3068, %v3514
  %3596 = vst.msk [vmem:[#allocation4 + $0x268] sm:$0xff] %vm3068, %v3516
  %3597 = vst.msk [vmem:[#allocation4 + $0x290] sm:$0xff] %vm3068, %v3518
  %3598 = vst.msk [vmem:[#allocation4 + $0x2b8] sm:$0xff] %vm3068, %v3520
  %3599 = vst.msk [vmem:[#allocation4 + $0x2e0] sm:$0xff] %vm3068, %v3522
  %3600 = vst.msk [vmem:[#allocation4 + $0x308] sm:$0xff] %vm3068, %v3524
  %3601 = vst.msk [vmem:[#allocation4 + $0x330] sm:$0xff] %vm3068, %v3526
  %3602 = vst.msk [vmem:[#allocation4 + $0x358] sm:$0xff] %vm3068, %v3528
  %3603 = vst.msk [vmem:[#allocation4 + $0x380] sm:$0xff] %vm3068, %v3530
  %3604 = vst.msk [vmem:[#allocation4 + $0x3a8] sm:$0xff] %vm3068, %v3532
  %3605 = vst.msk [vmem:[#allocation4 + $0x3d0] sm:$0xff] %vm3068, %v3534
  %3606 = vst.msk [vmem:[#allocation4 + $0x3f8] sm:$0xff] %vm3068, %v3536
  %3607 = vst.msk [vmem:[#allocation4 + $0x420] sm:$0xff] %vm3068, %v3538
  %3608 = vst.msk [vmem:[#allocation4 + $0x448] sm:$0xff] %vm3068, %v3540
  %3609 = vst.msk [vmem:[#allocation4 + $0x470] sm:$0xff] %vm3068, %v3542
  %3610 = vst.msk [vmem:[#allocation4 + $0x498] sm:$0xff] %vm3068, %v3544
  %3611 = vst.msk [vmem:[#allocation4 + $0x4c0] sm:$0xff] %vm3068, %v3546
  %3612 = vst.msk [vmem:[#allocation4 + $0x4e8] sm:$0xff] %vm3068, %v3548
  %s3613 = scalar_lea.vmem [#allocation3], 48
  %v3614 = vld [vmem:[%s3613] sm:$0xff]
  %v3615 = vld [vmem:[%s3613 + $0x8] sm:$0xff]
  %v3616 = vld [vmem:[%s3613 + $0x18] sm:$0xff]
  %v3617 = vld [vmem:[%s3613 + $0x20] sm:$0xff]
  %v3618 = vld [vmem:[%s3613 + $0x30] sm:$0xff]
  %v3619 = vld [vmem:[%s3613 + $0x38] sm:$0xff]
  %v3620 = vld [vmem:[%s3613 + $0x48] sm:$0xff]
  %v3621 = vld [vmem:[%s3613 + $0x50] sm:$0xff]
  %v3622 = vld [vmem:[%s3613 + $0x60] sm:$0xff]
  %v3623 = vld [vmem:[%s3613 + $0x68] sm:$0xff]
  %v3624 = vld [vmem:[%s3613 + $0x78] sm:$0xff]
  %v3625 = vld [vmem:[%s3613 + $0x80] sm:$0xff]
  %v3626 = vld [vmem:[%s3613 + $0x90] sm:$0xff]
  %v3627 = vld [vmem:[%s3613 + $0x98] sm:$0xff]
  %v3628 = vld [vmem:[%s3613 + $0xa8] sm:$0xff]
  %v3629 = vld [vmem:[%s3613 + $0xb0] sm:$0xff]
  %v3630 = vld [vmem:[%s3613 + $0xc0] sm:$0xff]
  %v3631 = vld [vmem:[%s3613 + $0xc8] sm:$0xff]
  %v3632 = vld [vmem:[%s3613 + $0xd8] sm:$0xff]
  %v3633 = vld [vmem:[%s3613 + $0xe0] sm:$0xff]
  %v3634 = vld [vmem:[%s3613 + $0xf0] sm:$0xff]
  %v3635 = vld [vmem:[%s3613 + $0xf8] sm:$0xff]
  %v3636 = vld [vmem:[%s3613 + $0x108] sm:$0xff]
  %v3637 = vld [vmem:[%s3613 + $0x110] sm:$0xff]
  %v3638 = vld [vmem:[%s3613 + $0x120] sm:$0xff]
  %v3639 = vld [vmem:[%s3613 + $0x128] sm:$0xff]
  %v3640 = vld [vmem:[%s3613 + $0x138] sm:$0xff]
  %v3641 = vld [vmem:[%s3613 + $0x140] sm:$0xff]
  %v3642 = vld [vmem:[%s3613 + $0x150] sm:$0xff]
  %v3643 = vld [vmem:[%s3613 + $0x158] sm:$0xff]
  %v3644 = vld [vmem:[%s3613 + $0x168] sm:$0xff]
  %v3645 = vld [vmem:[%s3613 + $0x170] sm:$0xff]
  %3646 = vst.msk [vmem:[#allocation4 + $0x18] sm:$0xff] %vm26, %v3614
  %3647 = vst.msk [vmem:[#allocation4 + $0x40] sm:$0xff] %vm26, %v3615
  %3648 = vst.msk [vmem:[#allocation4 + $0x68] sm:$0xff] %vm26, %v3616
  %3649 = vst.msk [vmem:[#allocation4 + $0x90] sm:$0xff] %vm26, %v3617
  %3650 = vst.msk [vmem:[#allocation4 + $0xb8] sm:$0xff] %vm26, %v3618
  %3651 = vst.msk [vmem:[#allocation4 + $0xe0] sm:$0xff] %vm26, %v3619
  %3652 = vst.msk [vmem:[#allocation4 + $0x108] sm:$0xff] %vm26, %v3620
  %3653 = vst.msk [vmem:[#allocation4 + $0x130] sm:$0xff] %vm26, %v3621
  %3654 = vst.msk [vmem:[#allocation4 + $0x158] sm:$0xff] %vm26, %v3622
  %3655 = vst.msk [vmem:[#allocation4 + $0x180] sm:$0xff] %vm26, %v3623
  %3656 = vst.msk [vmem:[#allocation4 + $0x1a8] sm:$0xff] %vm26, %v3624
  %3657 = vst.msk [vmem:[#allocation4 + $0x1d0] sm:$0xff] %vm26, %v3625
  %3658 = vst.msk [vmem:[#allocation4 + $0x1f8] sm:$0xff] %vm26, %v3626
  %3659 = vst.msk [vmem:[#allocation4 + $0x220] sm:$0xff] %vm26, %v3627
  %3660 = vst.msk [vmem:[#allocation4 + $0x248] sm:$0xff] %vm26, %v3628
  %3661 = vst.msk [vmem:[#allocation4 + $0x270] sm:$0xff] %vm26, %v3629
  %3662 = vst.msk [vmem:[#allocation4 + $0x298] sm:$0xff] %vm26, %v3630
  %3663 = vst.msk [vmem:[#allocation4 + $0x2c0] sm:$0xff] %vm26, %v3631
  %3664 = vst.msk [vmem:[#allocation4 + $0x2e8] sm:$0xff] %vm26, %v3632
  %3665 = vst.msk [vmem:[#allocation4 + $0x310] sm:$0xff] %vm26, %v3633
  %3666 = vst.msk [vmem:[#allocation4 + $0x338] sm:$0xff] %vm26, %v3634
  %3667 = vst.msk [vmem:[#allocation4 + $0x360] sm:$0xff] %vm26, %v3635
  %3668 = vst.msk [vmem:[#allocation4 + $0x388] sm:$0xff] %vm26, %v3636
  %3669 = vst.msk [vmem:[#allocation4 + $0x3b0] sm:$0xff] %vm26, %v3637
  %3670 = vst.msk [vmem:[#allocation4 + $0x3d8] sm:$0xff] %vm26, %v3638
  %3671 = vst.msk [vmem:[#allocation4 + $0x400] sm:$0xff] %vm26, %v3639
  %3672 = vst.msk [vmem:[#allocation4 + $0x428] sm:$0xff] %vm26, %v3640
  %3673 = vst.msk [vmem:[#allocation4 + $0x450] sm:$0xff] %vm26, %v3641
  %3674 = vst.msk [vmem:[#allocation4 + $0x478] sm:$0xff] %vm26, %v3642
  %3675 = vst.msk [vmem:[#allocation4 + $0x4a0] sm:$0xff] %vm26, %v3643
  %3676 = vst.msk [vmem:[#allocation4 + $0x4c8] sm:$0xff] %vm26, %v3644
  %3677 = vst.msk [vmem:[#allocation4 + $0x4f0] sm:$0xff] %vm26, %v3645
  %v3678 = vld [vmem:[%s3613 + $0x1] sm:$0xff]
  %v3679 = vld [vmem:[%s3613 + $0x9] sm:$0xff]
  %v3680 = vld [vmem:[%s3613 + $0x19] sm:$0xff]
  %v3681 = vld [vmem:[%s3613 + $0x21] sm:$0xff]
  %v3682 = vld [vmem:[%s3613 + $0x31] sm:$0xff]
  %v3683 = vld [vmem:[%s3613 + $0x39] sm:$0xff]
  %v3684 = vld [vmem:[%s3613 + $0x49] sm:$0xff]
  %v3685 = vld [vmem:[%s3613 + $0x51] sm:$0xff]
  %v3686 = vld [vmem:[%s3613 + $0x61] sm:$0xff]
  %v3687 = vld [vmem:[%s3613 + $0x69] sm:$0xff]
  %v3688 = vld [vmem:[%s3613 + $0x79] sm:$0xff]
  %v3689 = vld [vmem:[%s3613 + $0x81] sm:$0xff]
  %v3690 = vld [vmem:[%s3613 + $0x91] sm:$0xff]
  %v3691 = vld [vmem:[%s3613 + $0x99] sm:$0xff]
  %v3692 = vld [vmem:[%s3613 + $0xa9] sm:$0xff]
  %v3693 = vld [vmem:[%s3613 + $0xb1] sm:$0xff]
  %v3694 = vld [vmem:[%s3613 + $0xc1] sm:$0xff]
  %v3695 = vld [vmem:[%s3613 + $0xc9] sm:$0xff]
  %v3696 = vld [vmem:[%s3613 + $0xd9] sm:$0xff]
  %v3697 = vld [vmem:[%s3613 + $0xe1] sm:$0xff]
  %v3698 = vld [vmem:[%s3613 + $0xf1] sm:$0xff]
  %v3699 = vld [vmem:[%s3613 + $0xf9] sm:$0xff]
  %v3700 = vld [vmem:[%s3613 + $0x109] sm:$0xff]
  %v3701 = vld [vmem:[%s3613 + $0x111] sm:$0xff]
  %v3702 = vld [vmem:[%s3613 + $0x121] sm:$0xff]
  %v3703 = vld [vmem:[%s3613 + $0x129] sm:$0xff]
  %v3704 = vld [vmem:[%s3613 + $0x139] sm:$0xff]
  %v3705 = vld [vmem:[%s3613 + $0x141] sm:$0xff]
  %v3706 = vld [vmem:[%s3613 + $0x151] sm:$0xff]
  %v3707 = vld [vmem:[%s3613 + $0x159] sm:$0xff]
  %v3708 = vld [vmem:[%s3613 + $0x169] sm:$0xff]
  %v3709 = vld [vmem:[%s3613 + $0x171] sm:$0xff]
  %3742 = vrot.lane.b32.xlu0 %v3678, 64
  %v3743 = vpop.permute.xlu0 %3742
  %3744 = vrot.lane.b32.xlu0 %v3679, 64
  %v3745 = vpop.permute.xlu0 %3744
  %3746 = vrot.lane.b32.xlu0 %v3680, 64
  %v3747 = vpop.permute.xlu0 %3746
  %3748 = vrot.lane.b32.xlu0 %v3681, 64
  %v3749 = vpop.permute.xlu0 %3748
  %3750 = vrot.lane.b32.xlu0 %v3682, 64
  %v3751 = vpop.permute.xlu0 %3750
  %3752 = vrot.lane.b32.xlu0 %v3683, 64
  %v3753 = vpop.permute.xlu0 %3752
  %3754 = vrot.lane.b32.xlu0 %v3684, 64
  %v3755 = vpop.permute.xlu0 %3754
  %3756 = vrot.lane.b32.xlu0 %v3685, 64
  %v3757 = vpop.permute.xlu0 %3756
  %3758 = vrot.lane.b32.xlu0 %v3686, 64
  %v3759 = vpop.permute.xlu0 %3758
  %3760 = vrot.lane.b32.xlu0 %v3687, 64
  %v3761 = vpop.permute.xlu0 %3760
  %3762 = vrot.lane.b32.xlu0 %v3688, 64
  %v3763 = vpop.permute.xlu0 %3762
  %3764 = vrot.lane.b32.xlu0 %v3689, 64
  %v3765 = vpop.permute.xlu0 %3764
  %3766 = vrot.lane.b32.xlu0 %v3690, 64
  %v3767 = vpop.permute.xlu0 %3766
  %3768 = vrot.lane.b32.xlu0 %v3691, 64
  %v3769 = vpop.permute.xlu0 %3768
  %3770 = vrot.lane.b32.xlu0 %v3692, 64
  %v3771 = vpop.permute.xlu0 %3770
  %3772 = vrot.lane.b32.xlu0 %v3693, 64
  %v3773 = vpop.permute.xlu0 %3772
  %3774 = vrot.lane.b32.xlu0 %v3694, 64
  %v3775 = vpop.permute.xlu0 %3774
  %3776 = vrot.lane.b32.xlu0 %v3695, 64
  %v3777 = vpop.permute.xlu0 %3776
  %3778 = vrot.lane.b32.xlu0 %v3696, 64
  %v3779 = vpop.permute.xlu0 %3778
  %3780 = vrot.lane.b32.xlu0 %v3697, 64
  %v3781 = vpop.permute.xlu0 %3780
  %3782 = vrot.lane.b32.xlu0 %v3698, 64
  %v3783 = vpop.permute.xlu0 %3782
  %3784 = vrot.lane.b32.xlu0 %v3699, 64
  %v3785 = vpop.permute.xlu0 %3784
  %3786 = vrot.lane.b32.xlu0 %v3700, 64
  %v3787 = vpop.permute.xlu0 %3786
  %3788 = vrot.lane.b32.xlu0 %v3701, 64
  %v3789 = vpop.permute.xlu0 %3788
  %3790 = vrot.lane.b32.xlu0 %v3702, 64
  %v3791 = vpop.permute.xlu0 %3790
  %3792 = vrot.lane.b32.xlu0 %v3703, 64
  %v3793 = vpop.permute.xlu0 %3792
  %3794 = vrot.lane.b32.xlu0 %v3704, 64
  %v3795 = vpop.permute.xlu0 %3794
  %3796 = vrot.lane.b32.xlu0 %v3705, 64
  %v3797 = vpop.permute.xlu0 %3796
  %3798 = vrot.lane.b32.xlu0 %v3706, 64
  %v3799 = vpop.permute.xlu0 %3798
  %3800 = vrot.lane.b32.xlu0 %v3707, 64
  %v3801 = vpop.permute.xlu0 %3800
  %3802 = vrot.lane.b32.xlu0 %v3708, 64
  %v3803 = vpop.permute.xlu0 %3802
  %3804 = vrot.lane.b32.xlu0 %v3709, 64
  %v3805 = vpop.permute.xlu0 %3804
  %3838 = vst.msk [vmem:[#allocation4 + $0x18] sm:$0xff] %vm3068, %v3743
  %3839 = vst.msk [vmem:[#allocation4 + $0x40] sm:$0xff] %vm3068, %v3745
  %3840 = vst.msk [vmem:[#allocation4 + $0x68] sm:$0xff] %vm3068, %v3747
  %3841 = vst.msk [vmem:[#allocation4 + $0x90] sm:$0xff] %vm3068, %v3749
  %3842 = vst.msk [vmem:[#allocation4 + $0xb8] sm:$0xff] %vm3068, %v3751
  %3843 = vst.msk [vmem:[#allocation4 + $0xe0] sm:$0xff] %vm3068, %v3753
  %3844 = vst.msk [vmem:[#allocation4 + $0x108] sm:$0xff] %vm3068, %v3755
  %3845 = vst.msk [vmem:[#allocation4 + $0x130] sm:$0xff] %vm3068, %v3757
  %3846 = vst.msk [vmem:[#allocation4 + $0x158] sm:$0xff] %vm3068, %v3759
  %3847 = vst.msk [vmem:[#allocation4 + $0x180] sm:$0xff] %vm3068, %v3761
  %3848 = vst.msk [vmem:[#allocation4 + $0x1a8] sm:$0xff] %vm3068, %v3763
  %3849 = vst.msk [vmem:[#allocation4 + $0x1d0] sm:$0xff] %vm3068, %v3765
  %3850 = vst.msk [vmem:[#allocation4 + $0x1f8] sm:$0xff] %vm3068, %v3767
  %3851 = vst.msk [vmem:[#allocation4 + $0x220] sm:$0xff] %vm3068, %v3769
  %3852 = vst.msk [vmem:[#allocation4 + $0x248] sm:$0xff] %vm3068, %v3771
  %3853 = vst.msk [vmem:[#allocation4 + $0x270] sm:$0xff] %vm3068, %v3773
  %3854 = vst.msk [vmem:[#allocation4 + $0x298] sm:$0xff] %vm3068, %v3775
  %3855 = vst.msk [vmem:[#allocation4 + $0x2c0] sm:$0xff] %vm3068, %v3777
  %3856 = vst.msk [vmem:[#allocation4 + $0x2e8] sm:$0xff] %vm3068, %v3779
  %3857 = vst.msk [vmem:[#allocation4 + $0x310] sm:$0xff] %vm3068, %v3781
  %3858 = vst.msk [vmem:[#allocation4 + $0x338] sm:$0xff] %vm3068, %v3783
  %3859 = vst.msk [vmem:[#allocation4 + $0x360] sm:$0xff] %vm3068, %v3785
  %3860 = vst.msk [vmem:[#allocation4 + $0x388] sm:$0xff] %vm3068, %v3787
  %3861 = vst.msk [vmem:[#allocation4 + $0x3b0] sm:$0xff] %vm3068, %v3789
  %3862 = vst.msk [vmem:[#allocation4 + $0x3d8] sm:$0xff] %vm3068, %v3791
  %3863 = vst.msk [vmem:[#allocation4 + $0x400] sm:$0xff] %vm3068, %v3793
  %3864 = vst.msk [vmem:[#allocation4 + $0x428] sm:$0xff] %vm3068, %v3795
  %3865 = vst.msk [vmem:[#allocation4 + $0x450] sm:$0xff] %vm3068, %v3797
  %3866 = vst.msk [vmem:[#allocation4 + $0x478] sm:$0xff] %vm3068, %v3799
  %3867 = vst.msk [vmem:[#allocation4 + $0x4a0] sm:$0xff] %vm3068, %v3801
  %3868 = vst.msk [vmem:[#allocation4 + $0x4c8] sm:$0xff] %vm3068, %v3803
  %3869 = vst.msk [vmem:[#allocation4 + $0x4f0] sm:$0xff] %vm3068, %v3805
  %v3870 = vld [vmem:[%s3613 + $0x2] sm:$0xff]
  %v3871 = vld [vmem:[%s3613 + $0xa] sm:$0xff]
  %v3872 = vld [vmem:[%s3613 + $0x1a] sm:$0xff]
  %v3873 = vld [vmem:[%s3613 + $0x22] sm:$0xff]
  %v3874 = vld [vmem:[%s3613 + $0x32] sm:$0xff]
  %v3875 = vld [vmem:[%s3613 + $0x3a] sm:$0xff]
  %v3876 = vld [vmem:[%s3613 + $0x4a] sm:$0xff]
  %v3877 = vld [vmem:[%s3613 + $0x52] sm:$0xff]
  %v3878 = vld [vmem:[%s3613 + $0x62] sm:$0xff]
  %v3879 = vld [vmem:[%s3613 + $0x6a] sm:$0xff]
  %v3880 = vld [vmem:[%s3613 + $0x7a] sm:$0xff]
  %v3881 = vld [vmem:[%s3613 + $0x82] sm:$0xff]
  %v3882 = vld [vmem:[%s3613 + $0x92] sm:$0xff]
  %v3883 = vld [vmem:[%s3613 + $0x9a] sm:$0xff]
  %v3884 = vld [vmem:[%s3613 + $0xaa] sm:$0xff]
  %v3885 = vld [vmem:[%s3613 + $0xb2] sm:$0xff]
  %v3886 = vld [vmem:[%s3613 + $0xc2] sm:$0xff]
  %v3887 = vld [vmem:[%s3613 + $0xca] sm:$0xff]
  %v3888 = vld [vmem:[%s3613 + $0xda] sm:$0xff]
  %v3889 = vld [vmem:[%s3613 + $0xe2] sm:$0xff]
  %v3890 = vld [vmem:[%s3613 + $0xf2] sm:$0xff]
  %v3891 = vld [vmem:[%s3613 + $0xfa] sm:$0xff]
  %v3892 = vld [vmem:[%s3613 + $0x10a] sm:$0xff]
  %v3893 = vld [vmem:[%s3613 + $0x112] sm:$0xff]
  %v3894 = vld [vmem:[%s3613 + $0x122] sm:$0xff]
  %v3895 = vld [vmem:[%s3613 + $0x12a] sm:$0xff]
  %v3896 = vld [vmem:[%s3613 + $0x13a] sm:$0xff]
  %v3897 = vld [vmem:[%s3613 + $0x142] sm:$0xff]
  %v3898 = vld [vmem:[%s3613 + $0x152] sm:$0xff]
  %v3899 = vld [vmem:[%s3613 + $0x15a] sm:$0xff]
  %v3900 = vld [vmem:[%s3613 + $0x16a] sm:$0xff]
  %v3901 = vld [vmem:[%s3613 + $0x172] sm:$0xff]
  %3902 = vst.msk [vmem:[#allocation4 + $0x20] sm:$0xff] %vm26, %v3870
  %3903 = vst.msk [vmem:[#allocation4 + $0x48] sm:$0xff] %vm26, %v3871
  %3904 = vst.msk [vmem:[#allocation4 + $0x70] sm:$0xff] %vm26, %v3872
  %3905 = vst.msk [vmem:[#allocation4 + $0x98] sm:$0xff] %vm26, %v3873
  %3906 = vst.msk [vmem:[#allocation4 + $0xc0] sm:$0xff] %vm26, %v3874
  %3907 = vst.msk [vmem:[#allocation4 + $0xe8] sm:$0xff] %vm26, %v3875
  %3908 = vst.msk [vmem:[#allocation4 + $0x110] sm:$0xff] %vm26, %v3876
  %3909 = vst.msk [vmem:[#allocation4 + $0x138] sm:$0xff] %vm26, %v3877
  %3910 = vst.msk [vmem:[#allocation4 + $0x160] sm:$0xff] %vm26, %v3878
  %3911 = vst.msk [vmem:[#allocation4 + $0x188] sm:$0xff] %vm26, %v3879
  %3912 = vst.msk [vmem:[#allocation4 + $0x1b0] sm:$0xff] %vm26, %v3880
  %3913 = vst.msk [vmem:[#allocation4 + $0x1d8] sm:$0xff] %vm26, %v3881
  %3914 = vst.msk [vmem:[#allocation4 + $0x200] sm:$0xff] %vm26, %v3882
  %3915 = vst.msk [vmem:[#allocation4 + $0x228] sm:$0xff] %vm26, %v3883
  %3916 = vst.msk [vmem:[#allocation4 + $0x250] sm:$0xff] %vm26, %v3884
  %3917 = vst.msk [vmem:[#allocation4 + $0x278] sm:$0xff] %vm26, %v3885
  %3918 = vst.msk [vmem:[#allocation4 + $0x2a0] sm:$0xff] %vm26, %v3886
  %3919 = vst.msk [vmem:[#allocation4 + $0x2c8] sm:$0xff] %vm26, %v3887
  %3920 = vst.msk [vmem:[#allocation4 + $0x2f0] sm:$0xff] %vm26, %v3888
  %3921 = vst.msk [vmem:[#allocation4 + $0x318] sm:$0xff] %vm26, %v3889
  %3922 = vst.msk [vmem:[#allocation4 + $0x340] sm:$0xff] %vm26, %v3890
  %3923 = vst.msk [vmem:[#allocation4 + $0x368] sm:$0xff] %vm26, %v3891
  %3924 = vst.msk [vmem:[#allocation4 + $0x390] sm:$0xff] %vm26, %v3892
  %3925 = vst.msk [vmem:[#allocation4 + $0x3b8] sm:$0xff] %vm26, %v3893
  %3926 = vst.msk [vmem:[#allocation4 + $0x3e0] sm:$0xff] %vm26, %v3894
  %3927 = vst.msk [vmem:[#allocation4 + $0x408] sm:$0xff] %vm26, %v3895
  %3928 = vst.msk [vmem:[#allocation4 + $0x430] sm:$0xff] %vm26, %v3896
  %3929 = vst.msk [vmem:[#allocation4 + $0x458] sm:$0xff] %vm26, %v3897
  %3930 = vst.msk [vmem:[#allocation4 + $0x480] sm:$0xff] %vm26, %v3898
  %3931 = vst.msk [vmem:[#allocation4 + $0x4a8] sm:$0xff] %vm26, %v3899
  %3932 = vst.msk [vmem:[#allocation4 + $0x4d0] sm:$0xff] %vm26, %v3900
  %3933 = vst.msk [vmem:[#allocation4 + $0x4f8] sm:$0xff] %vm26, %v3901
  %v3934 = vld [vmem:[#allocation4] sm:$0xff]
  %v3935 = vld [vmem:[#allocation4 + $0x8] sm:$0xff]
  %v3936 = vld [vmem:[#allocation4 + $0x10] sm:$0xff]
  %v3937 = vld [vmem:[#allocation4 + $0x18] sm:$0xff]
  %v3938 = vld [vmem:[#allocation4 + $0x20] sm:$0xff]
  %v3939 = vld [vmem:[#allocation4 + $0x28] sm:$0xff]
  %v3940 = vld [vmem:[#allocation4 + $0x30] sm:$0xff]
  %v3941 = vld [vmem:[#allocation4 + $0x38] sm:$0xff]
  %v3942 = vld [vmem:[#allocation4 + $0x40] sm:$0xff]
  %v3943 = vld [vmem:[#allocation4 + $0x48] sm:$0xff]
  %v3944 = vld [vmem:[#allocation4 + $0x50] sm:$0xff]
  %v3945 = vld [vmem:[#allocation4 + $0x58] sm:$0xff]
  %v3946 = vld [vmem:[#allocation4 + $0x60] sm:$0xff]
  %v3947 = vld [vmem:[#allocation4 + $0x68] sm:$0xff]
  %v3948 = vld [vmem:[#allocation4 + $0x70] sm:$0xff]
  %v3949 = vld [vmem:[#allocation4 + $0x78] sm:$0xff]
  %v3950 = vld [vmem:[#allocation4 + $0x80] sm:$0xff]
  %v3951 = vld [vmem:[#allocation4 + $0x88] sm:$0xff]
  %v3952 = vld [vmem:[#allocation4 + $0x90] sm:$0xff]
  %v3953 = vld [vmem:[#allocation4 + $0x98] sm:$0xff]
  %v3954 = vld [vmem:[#allocation4 + $0xa0] sm:$0xff]
  %v3955 = vld [vmem:[#allocation4 + $0xa8] sm:$0xff]
  %v3956 = vld [vmem:[#allocation4 + $0xb0] sm:$0xff]
  %v3957 = vld [vmem:[#allocation4 + $0xb8] sm:$0xff]
  %v3958 = vld [vmem:[#allocation4 + $0xc0] sm:$0xff]
  %v3959 = vld [vmem:[#allocation4 + $0xc8] sm:$0xff]
  %v3960 = vld [vmem:[#allocation4 + $0xd0] sm:$0xff]
  %v3961 = vld [vmem:[#allocation4 + $0xd8] sm:$0xff]
  %v3962 = vld [vmem:[#allocation4 + $0xe0] sm:$0xff]
  %v3963 = vld [vmem:[#allocation4 + $0xe8] sm:$0xff]
  %v3964 = vld [vmem:[#allocation4 + $0xf0] sm:$0xff]
  %v3965 = vld [vmem:[#allocation4 + $0xf8] sm:$0xff]
  %v3966 = vld [vmem:[#allocation4 + $0x100] sm:$0xff]
  %v3967 = vld [vmem:[#allocation4 + $0x108] sm:$0xff]
  %v3968 = vld [vmem:[#allocation4 + $0x110] sm:$0xff]
  %v3969 = vld [vmem:[#allocation4 + $0x118] sm:$0xff]
  %v3970 = vld [vmem:[#allocation4 + $0x120] sm:$0xff]
  %v3971 = vld [vmem:[#allocation4 + $0x128] sm:$0xff]
  %v3972 = vld [vmem:[#allocation4 + $0x130] sm:$0xff]
  %v3973 = vld [vmem:[#allocation4 + $0x138] sm:$0xff]
  %v3974 = vld [vmem:[#allocation4 + $0x140] sm:$0xff]
  %v3975 = vld [vmem:[#allocation4 + $0x148] sm:$0xff]
  %v3976 = vld [vmem:[#allocation4 + $0x150] sm:$0xff]
  %v3977 = vld [vmem:[#allocation4 + $0x158] sm:$0xff]
  %v3978 = vld [vmem:[#allocation4 + $0x160] sm:$0xff]
  %v3979 = vld [vmem:[#allocation4 + $0x168] sm:$0xff]
  %v3980 = vld [vmem:[#allocation4 + $0x170] sm:$0xff]
  %v3981 = vld [vmem:[#allocation4 + $0x178] sm:$0xff]
  %v3982 = vld [vmem:[#allocation4 + $0x180] sm:$0xff]
  %v3983 = vld [vmem:[#allocation4 + $0x188] sm:$0xff]
  %v3984 = vld [vmem:[#allocation4 + $0x190] sm:$0xff]
  %v3985 = vld [vmem:[#allocation4 + $0x198] sm:$0xff]
  %v3986 = vld [vmem:[#allocation4 + $0x1a0] sm:$0xff]
  %v3987 = vld [vmem:[#allocation4 + $0x1a8] sm:$0xff]
  %v3988 = vld [vmem:[#allocation4 + $0x1b0] sm:$0xff]
  %v3989 = vld [vmem:[#allocation4 + $0x1b8] sm:$0xff]
  %v3990 = vld [vmem:[#allocation4 + $0x1c0] sm:$0xff]
  %v3991 = vld [vmem:[#allocation4 + $0x1c8] sm:$0xff]
  %v3992 = vld [vmem:[#allocation4 + $0x1d0] sm:$0xff]
  %v3993 = vld [vmem:[#allocation4 + $0x1d8] sm:$0xff]
  %v3994 = vld [vmem:[#allocation4 + $0x1e0] sm:$0xff]
  %v3995 = vld [vmem:[#allocation4 + $0x1e8] sm:$0xff]
  %v3996 = vld [vmem:[#allocation4 + $0x1f0] sm:$0xff]
  %v3997 = vld [vmem:[#allocation4 + $0x1f8] sm:$0xff]
  %v3998 = vld [vmem:[#allocation4 + $0x200] sm:$0xff]
  %v3999 = vld [vmem:[#allocation4 + $0x208] sm:$0xff]
  %v4000 = vld [vmem:[#allocation4 + $0x210] sm:$0xff]
  %v4001 = vld [vmem:[#allocation4 + $0x218] sm:$0xff]
  %v4002 = vld [vmem:[#allocation4 + $0x220] sm:$0xff]
  %v4003 = vld [vmem:[#allocation4 + $0x228] sm:$0xff]
  %v4004 = vld [vmem:[#allocation4 + $0x230] sm:$0xff]
  %v4005 = vld [vmem:[#allocation4 + $0x238] sm:$0xff]
  %v4006 = vld [vmem:[#allocation4 + $0x240] sm:$0xff]
  %v4007 = vld [vmem:[#allocation4 + $0x248] sm:$0xff]
  %v4008 = vld [vmem:[#allocation4 + $0x250] sm:$0xff]
  %v4009 = vld [vmem:[#allocation4 + $0x258] sm:$0xff]
  %v4010 = vld [vmem:[#allocation4 + $0x260] sm:$0xff]
  %v4011 = vld [vmem:[#allocation4 + $0x268] sm:$0xff]
  %v4012 = vld [vmem:[#allocation4 + $0x270] sm:$0xff]
  %v4013 = vld [vmem:[#allocation4 + $0x278] sm:$0xff]
  %v4014 = vld [vmem:[#allocation4 + $0x280] sm:$0xff]
  %v4015 = vld [vmem:[#allocation4 + $0x288] sm:$0xff]
  %v4016 = vld [vmem:[#allocation4 + $0x290] sm:$0xff]
  %v4017 = vld [vmem:[#allocation4 + $0x298] sm:$0xff]
  %v4018 = vld [vmem:[#allocation4 + $0x2a0] sm:$0xff]
  %v4019 = vld [vmem:[#allocation4 + $0x2a8] sm:$0xff]
  %v4020 = vld [vmem:[#allocation4 + $0x2b0] sm:$0xff]
  %v4021 = vld [vmem:[#allocation4 + $0x2b8] sm:$0xff]
  %v4022 = vld [vmem:[#allocation4 + $0x2c0] sm:$0xff]
  %v4023 = vld [vmem:[#allocation4 + $0x2c8] sm:$0xff]
  %v4024 = vld [vmem:[#allocation4 + $0x2d0] sm:$0xff]
  %v4025 = vld [vmem:[#allocation4 + $0x2d8] sm:$0xff]
  %v4026 = vld [vmem:[#allocation4 + $0x2e0] sm:$0xff]
  %v4027 = vld [vmem:[#allocation4 + $0x2e8] sm:$0xff]
  %v4028 = vld [vmem:[#allocation4 + $0x2f0] sm:$0xff]
  %v4029 = vld [vmem:[#allocation4 + $0x2f8] sm:$0xff]
  %v4030 = vld [vmem:[#allocation4 + $0x300] sm:$0xff]
  %v4031 = vld [vmem:[#allocation4 + $0x308] sm:$0xff]
  %v4032 = vld [vmem:[#allocation4 + $0x310] sm:$0xff]
  %v4033 = vld [vmem:[#allocation4 + $0x318] sm:$0xff]
  %v4034 = vld [vmem:[#allocation4 + $0x320] sm:$0xff]
  %v4035 = vld [vmem:[#allocation4 + $0x328] sm:$0xff]
  %v4036 = vld [vmem:[#allocation4 + $0x330] sm:$0xff]
  %v4037 = vld [vmem:[#allocation4 + $0x338] sm:$0xff]
  %v4038 = vld [vmem:[#allocation4 + $0x340] sm:$0xff]
  %v4039 = vld [vmem:[#allocation4 + $0x348] sm:$0xff]
  %v4040 = vld [vmem:[#allocation4 + $0x350] sm:$0xff]
  %v4041 = vld [vmem:[#allocation4 + $0x358] sm:$0xff]
  %v4042 = vld [vmem:[#allocation4 + $0x360] sm:$0xff]
  %v4043 = vld [vmem:[#allocation4 + $0x368] sm:$0xff]
  %v4044 = vld [vmem:[#allocation4 + $0x370] sm:$0xff]
  %v4045 = vld [vmem:[#allocation4 + $0x378] sm:$0xff]
  %v4046 = vld [vmem:[#allocation4 + $0x380] sm:$0xff]
  %v4047 = vld [vmem:[#allocation4 + $0x388] sm:$0xff]
  %v4048 = vld [vmem:[#allocation4 + $0x390] sm:$0xff]
  %v4049 = vld [vmem:[#allocation4 + $0x398] sm:$0xff]
  %v4050 = vld [vmem:[#allocation4 + $0x3a0] sm:$0xff]
  %v4051 = vld [vmem:[#allocation4 + $0x3a8] sm:$0xff]
  %v4052 = vld [vmem:[#allocation4 + $0x3b0] sm:$0xff]
  %v4053 = vld [vmem:[#allocation4 + $0x3b8] sm:$0xff]
  %v4054 = vld [vmem:[#allocation4 + $0x3c0] sm:$0xff]
  %v4055 = vld [vmem:[#allocation4 + $0x3c8] sm:$0xff]
  %v4056 = vld [vmem:[#allocation4 + $0x3d0] sm:$0xff]
  %v4057 = vld [vmem:[#allocation4 + $0x3d8] sm:$0xff]
  %v4058 = vld [vmem:[#allocation4 + $0x3e0] sm:$0xff]
  %v4059 = vld [vmem:[#allocation4 + $0x3e8] sm:$0xff]
  %v4060 = vld [vmem:[#allocation4 + $0x3f0] sm:$0xff]
  %v4061 = vld [vmem:[#allocation4 + $0x3f8] sm:$0xff]
  %v4062 = vld [vmem:[#allocation4 + $0x400] sm:$0xff]
  %v4063 = vld [vmem:[#allocation4 + $0x408] sm:$0xff]
  %v4064 = vld [vmem:[#allocation4 + $0x410] sm:$0xff]
  %v4065 = vld [vmem:[#allocation4 + $0x418] sm:$0xff]
  %v4066 = vld [vmem:[#allocation4 + $0x420] sm:$0xff]
  %v4067 = vld [vmem:[#allocation4 + $0x428] sm:$0xff]
  %v4068 = vld [vmem:[#allocation4 + $0x430] sm:$0xff]
  %v4069 = vld [vmem:[#allocation4 + $0x438] sm:$0xff]
  %v4070 = vld [vmem:[#allocation4 + $0x440] sm:$0xff]
  %v4071 = vld [vmem:[#allocation4 + $0x448] sm:$0xff]
  %v4072 = vld [vmem:[#allocation4 + $0x450] sm:$0xff]
  %v4073 = vld [vmem:[#allocation4 + $0x458] sm:$0xff]
  %v4074 = vld [vmem:[#allocation4 + $0x460] sm:$0xff]
  %v4075 = vld [vmem:[#allocation4 + $0x468] sm:$0xff]
  %v4076 = vld [vmem:[#allocation4 + $0x470] sm:$0xff]
  %v4077 = vld [vmem:[#allocation4 + $0x478] sm:$0xff]
  %v4078 = vld [vmem:[#allocation4 + $0x480] sm:$0xff]
  %v4079 = vld [vmem:[#allocation4 + $0x488] sm:$0xff]
  %v4080 = vld [vmem:[#allocation4 + $0x490] sm:$0xff]
  %v4081 = vld [vmem:[#allocation4 + $0x498] sm:$0xff]
  %v4082 = vld [vmem:[#allocation4 + $0x4a0] sm:$0xff]
  %v4083 = vld [vmem:[#allocation4 + $0x4a8] sm:$0xff]
  %v4084 = vld [vmem:[#allocation4 + $0x4b0] sm:$0xff]
  %v4085 = vld [vmem:[#allocation4 + $0x4b8] sm:$0xff]
  %v4086 = vld [vmem:[#allocation4 + $0x4c0] sm:$0xff]
  %v4087 = vld [vmem:[#allocation4 + $0x4c8] sm:$0xff]
  %v4088 = vld [vmem:[#allocation4 + $0x4d0] sm:$0xff]
  %v4089 = vld [vmem:[#allocation4 + $0x4d8] sm:$0xff]
  %v4090 = vld [vmem:[#allocation4 + $0x4e0] sm:$0xff]
  %v4091 = vld [vmem:[#allocation4 + $0x4e8] sm:$0xff]
  %v4092 = vld [vmem:[#allocation4 + $0x4f0] sm:$0xff]
  %v4093 = vld [vmem:[#allocation4 + $0x4f8] sm:$0xff]
  %v4094 = vld [vmem:[%s2] sm:$0xff]
  %v4095 = vld [vmem:[%s2 + $0x8] sm:$0xff]
  %v4096 = vld [vmem:[%s2 + $0x10] sm:$0xff]
  %v4097 = vld [vmem:[%s2 + $0x18] sm:$0xff]
  %v4098 = vld [vmem:[%s2 + $0x20] sm:$0xff]
  %v4099 = vld [vmem:[%s2 + $0x28] sm:$0xff]
  %v4100 = vld [vmem:[%s2 + $0x30] sm:$0xff]
  %v4101 = vld [vmem:[%s2 + $0x38] sm:$0xff]
  %v4102 = vld [vmem:[%s2 + $0x40] sm:$0xff]
  %v4103 = vld [vmem:[%s2 + $0x48] sm:$0xff]
  %v4104 = vld [vmem:[%s2 + $0x50] sm:$0xff]
  %v4105 = vld [vmem:[%s2 + $0x58] sm:$0xff]
  %v4106 = vld [vmem:[%s2 + $0x60] sm:$0xff]
  %v4107 = vld [vmem:[%s2 + $0x68] sm:$0xff]
  %v4108 = vld [vmem:[%s2 + $0x70] sm:$0xff]
  %v4109 = vld [vmem:[%s2 + $0x78] sm:$0xff]
  %v4110 = vld [vmem:[%s2 + $0x80] sm:$0xff]
  %v4111 = vld [vmem:[%s2 + $0x88] sm:$0xff]
  %v4112 = vld [vmem:[%s2 + $0x90] sm:$0xff]
  %v4113 = vld [vmem:[%s2 + $0x98] sm:$0xff]
  %v4114 = vld [vmem:[%s2 + $0xa0] sm:$0xff]
  %v4115 = vld [vmem:[%s2 + $0xa8] sm:$0xff]
  %v4116 = vld [vmem:[%s2 + $0xb0] sm:$0xff]
  %v4117 = vld [vmem:[%s2 + $0xb8] sm:$0xff]
  %v4118 = vld [vmem:[%s2 + $0xc0] sm:$0xff]
  %v4119 = vld [vmem:[%s2 + $0xc8] sm:$0xff]
  %v4120 = vld [vmem:[%s2 + $0xd0] sm:$0xff]
  %v4121 = vld [vmem:[%s2 + $0xd8] sm:$0xff]
  %v4122 = vld [vmem:[%s2 + $0xe0] sm:$0xff]
  %v4123 = vld [vmem:[%s2 + $0xe8] sm:$0xff]
  %v4124 = vld [vmem:[%s2 + $0xf0] sm:$0xff]
  %v4125 = vld [vmem:[%s2 + $0xf8] sm:$0xff]
  %v4126 = vld [vmem:[%s2 + $0x100] sm:$0xff]
  %v4127 = vld [vmem:[%s2 + $0x108] sm:$0xff]
  %v4128 = vld [vmem:[%s2 + $0x110] sm:$0xff]
  %v4129 = vld [vmem:[%s2 + $0x118] sm:$0xff]
  %v4130 = vld [vmem:[%s2 + $0x120] sm:$0xff]
  %v4131 = vld [vmem:[%s2 + $0x128] sm:$0xff]
  %v4132 = vld [vmem:[%s2 + $0x130] sm:$0xff]
  %v4133 = vld [vmem:[%s2 + $0x138] sm:$0xff]
  %v4134 = vld [vmem:[%s2 + $0x140] sm:$0xff]
  %v4135 = vld [vmem:[%s2 + $0x148] sm:$0xff]
  %v4136 = vld [vmem:[%s2 + $0x150] sm:$0xff]
  %v4137 = vld [vmem:[%s2 + $0x158] sm:$0xff]
  %v4138 = vld [vmem:[%s2 + $0x160] sm:$0xff]
  %v4139 = vld [vmem:[%s2 + $0x168] sm:$0xff]
  %v4140 = vld [vmem:[%s2 + $0x170] sm:$0xff]
  %v4141 = vld [vmem:[%s2 + $0x178] sm:$0xff]
  %v4142 = vld [vmem:[%s2 + $0x180] sm:$0xff]
  %v4143 = vld [vmem:[%s2 + $0x188] sm:$0xff]
  %v4144 = vld [vmem:[%s2 + $0x190] sm:$0xff]
  %v4145 = vld [vmem:[%s2 + $0x198] sm:$0xff]
  %v4146 = vld [vmem:[%s2 + $0x1a0] sm:$0xff]
  %v4147 = vld [vmem:[%s2 + $0x1a8] sm:$0xff]
  %v4148 = vld [vmem:[%s2 + $0x1b0] sm:$0xff]
  %v4149 = vld [vmem:[%s2 + $0x1b8] sm:$0xff]
  %v4150 = vld [vmem:[%s2 + $0x1c0] sm:$0xff]
  %v4151 = vld [vmem:[%s2 + $0x1c8] sm:$0xff]
  %v4152 = vld [vmem:[%s2 + $0x1d0] sm:$0xff]
  %v4153 = vld [vmem:[%s2 + $0x1d8] sm:$0xff]
  %v4154 = vld [vmem:[%s2 + $0x1e0] sm:$0xff]
  %v4155 = vld [vmem:[%s2 + $0x1e8] sm:$0xff]
  %v4156 = vld [vmem:[%s2 + $0x1f0] sm:$0xff]
  %v4157 = vld [vmem:[%s2 + $0x1f8] sm:$0xff]
  %v4158 = vld [vmem:[%s2 + $0x200] sm:$0xff]
  %v4159 = vld [vmem:[%s2 + $0x208] sm:$0xff]
  %v4160 = vld [vmem:[%s2 + $0x210] sm:$0xff]
  %v4161 = vld [vmem:[%s2 + $0x218] sm:$0xff]
  %v4162 = vld [vmem:[%s2 + $0x220] sm:$0xff]
  %v4163 = vld [vmem:[%s2 + $0x228] sm:$0xff]
  %v4164 = vld [vmem:[%s2 + $0x230] sm:$0xff]
  %v4165 = vld [vmem:[%s2 + $0x238] sm:$0xff]
  %v4167 = vsel %vm26, %v3938, 0
  %v4170 = vsel %vm26, %v3943, 0
  %v4173 = vsel %vm26, %v3948, 0
  %v4176 = vsel %vm26, %v3953, 0
  %v4179 = vsel %vm26, %v3958, 0
  %v4182 = vsel %vm26, %v3963, 0
  %v4185 = vsel %vm26, %v3968, 0
  %v4188 = vsel %vm26, %v3973, 0
  %v4191 = vsel %vm26, %v3978, 0
  %v4194 = vsel %vm26, %v3983, 0
  %v4197 = vsel %vm26, %v3988, 0
  %v4200 = vsel %vm26, %v3993, 0
  %v4203 = vsel %vm26, %v3998, 0
  %v4206 = vsel %vm26, %v4003, 0
  %v4209 = vsel %vm26, %v4008, 0
  %v4212 = vsel %vm26, %v4013, 0
  %v4215 = vsel %vm26, %v4018, 0
  %v4218 = vsel %vm26, %v4023, 0
  %v4221 = vsel %vm26, %v4028, 0
  %v4224 = vsel %vm26, %v4033, 0
  %v4227 = vsel %vm26, %v4038, 0
  %v4230 = vsel %vm26, %v4043, 0
  %v4233 = vsel %vm26, %v4048, 0
  %v4236 = vsel %vm26, %v4053, 0
  %v4239 = vsel %vm26, %v4058, 0
  %v4242 = vsel %vm26, %v4063, 0
  %v4245 = vsel %vm26, %v4068, 0
  %v4248 = vsel %vm26, %v4073, 0
  %v4251 = vsel %vm26, %v4078, 0
  %v4254 = vsel %vm26, %v4083, 0
  %v4257 = vsel %vm26, %v4088, 0
  %v4260 = vsel %vm26, %v4093, 0
  %4262 = vmatprep.subr.mxu0 0.0
  %4263 = vmatpush1.msra.mxu0 %v4094
  %4264 = vmatprep.subr.mxu0 0.0
  %4265 = vmatpush1.msra.mxu0 %v4095
  %4266 = vmatprep.subr.mxu0 0.0
  %4267 = vmatpush1.msra.mxu0 %v4096
  %4268 = vmatprep.subr.mxu0 0.0
  %4269 = vmatpush1.msra.mxu0 %v4097
  %4270 = vmatprep.subr.mxu0 0.0
  %4271 = vmatpush1.msra.mxu0 %v4098
  %4272 = vmatprep.subr.mxu0 0.0
  %4273 = vmatpush1.msra.mxu0 %v4099
  %4274 = vmatprep.subr.mxu0 0.0
  %4275 = vmatpush1.msra.mxu0 %v4100
  %4276 = vmatprep.subr.mxu0 0.0
  %4277 = vmatpush1.msra.mxu0 %v4101
  %4278 = vmatprep.subr.mxu0 0.0
  %4279 = vmatpush1.msra.mxu0 %v4102
  %4280 = vmatprep.subr.mxu0 0.0
  %4281 = vmatpush1.msra.mxu0 %v4103
  %4282 = vmatprep.subr.mxu0 0.0
  %4283 = vmatpush1.msra.mxu0 %v4104
  %4284 = vmatprep.subr.mxu0 0.0
  %4285 = vmatpush1.msra.mxu0 %v4105
  %4286 = vmatprep.subr.mxu0 0.0
  %4287 = vmatpush1.msra.mxu0 %v4106
  %4288 = vmatprep.subr.mxu0 0.0
  %4289 = vmatpush1.msra.mxu0 %v4107
  %4290 = vmatprep.subr.mxu0 0.0
  %4291 = vmatpush1.msra.mxu0 %v4108
  %4292 = vmatprep.subr.mxu0 0.0
  %4293 = vmatpush1.msra.mxu0 %v4109
  %4294 = vmatprep.subr.mxu0 0.0
  %4295 = vmatpush1.msra.mxu0 %v4110
  %4296 = vmatprep.subr.mxu0 0.0
  %4297 = vmatpush1.msra.mxu0 %v4111
  %4298 = vmatprep.subr.mxu0 0.0
  %4299 = vmatpush1.msra.mxu0 %v4112
  %4300 = vmatprep.subr.mxu0 0.0
  %4301 = vmatpush1.msra.mxu0 %v4113
  %4302 = vmatprep.subr.mxu0 0.0
  %4303 = vmatpush1.msra.mxu0 %v4114
  %4304 = vmatprep.subr.mxu0 0.0
  %4305 = vmatpush1.msra.mxu0 %v4115
  %4306 = vmatprep.subr.mxu0 0.0
  %4307 = vmatpush1.msra.mxu0 %v4116
  %4308 = vmatprep.subr.mxu0 0.0
  %4309 = vmatpush1.msra.mxu0 %v4117
  %4310 = vmatprep.subr.mxu0 0.0
  %4311 = vmatpush1.msra.mxu0 %v4118
  %4312 = vmatprep.subr.mxu0 0.0
  %4313 = vmatpush1.msra.mxu0 %v4119
  %4314 = vmatprep.subr.mxu0 0.0
  %4315 = vmatpush1.msra.mxu0 %v4120
  %4316 = vmatprep.subr.mxu0 0.0
  %4317 = vmatpush1.msra.mxu0 %v4121
  %4318 = vmatprep.subr.mxu0 0.0
  %4319 = vmatpush1.msra.mxu0 %v4122
  %4320 = vmatprep.subr.mxu0 0.0
  %4321 = vmatpush1.msra.mxu0 %v4123
  %4322 = vmatprep.subr.mxu0 0.0
  %4323 = vmatpush1.msra.mxu0 %v4124
  %4324 = vmatprep.subr.mxu0 0.0
  %4325 = vmatpush1.msra.mxu0 %v4125
  %4326 = vmatprep.mubr.f32.mxu0 %v3935
  %4327 = vmatmul.mubr.f32.gmra.mrb[0].mxu0 %v3934
  %v4328 = vpop.f32.mrb[0].mxu0
  %v4329 = vadd.f32 0.0, %v4328
  %v4330 = vpop.f32.mrb[0].mxu0
  %4331 = vmatprep.mubr.f32.mxu0 %v3940
  %4332 = vmatmul.mubr.f32.gmra.mrb[0].mxu0 %v3939
  %v4333 = vpop.f32.mrb[0].mxu0
  %v4334 = vadd.f32 0.0, %v4333
  %v4335 = vpop.f32.mrb[0].mxu0
  %4336 = vmatprep.mubr.f32.mxu0 %v3945
  %4337 = vmatmul.mubr.f32.gmra.mrb[0].mxu0 %v3944
  %v4338 = vpop.f32.mrb[0].mxu0
  %v4339 = vadd.f32 0.0, %v4338
  %v4340 = vpop.f32.mrb[0].mxu0
  %4341 = vmatprep.mubr.f32.mxu0 %v3950
  %4342 = vmatmul.mubr.f32.gmra.mrb[0].mxu0 %v3949
  %v4343 = vpop.f32.mrb[0].mxu0
  %v4344 = vadd.f32 0.0, %v4343
  %v4345 = vpop.f32.mrb[0].mxu0
  %4346 = vmatprep.mubr.f32.mxu0 %v3955
  %4347 = vmatmul.mubr.f32.gmra.mrb[0].mxu0 %v3954
  %v4348 = vpop.f32.mrb[0].mxu0
  %v4349 = vadd.f32 0.0, %v4348
  %v4350 = vpop.f32.mrb[0].mxu0
  %4351 = vmatprep.mubr.f32.mxu0 %v3960
  %4352 = vmatmul.mubr.f32.gmra.mrb[0].mxu0 %v3959
  %v4353 = vpop.f32.mrb[0].mxu0
  %v4354 = vadd.f32 0.0, %v4353
  %v4355 = vpop.f32.mrb[0].mxu0
  %4356 = vmatprep.mubr.f32.mxu0 %v3965
  %4357 = vmatmul.mubr.f32.gmra.mrb[0].mxu0 %v3964
  %v4358 = vpop.f32.mrb[0].mxu0
  %v4359 = vadd.f32 0.0, %v4358
  %v4360 = vpop.f32.mrb[0].mxu0
  %4361 = vmatprep.mubr.f32.mxu0 %v3970
  %4362 = vmatmul.mubr.f32.gmra.mrb[0].mxu0 %v3969
  %v4363 = vpop.f32.mrb[0].mxu0
  %v4364 = vadd.f32 0.0, %v4363
  %v4365 = vpop.f32.mrb[0].mxu0
  %4366 = vmatprep.mubr.f32.mxu0 %v3975
  %4367 = vmatmul.mubr.f32.gmra.mrb[0].mxu0 %v3974
  %v4368 = vpop.f32.mrb[0].mxu0
  %v4369 = vadd.f32 0.0, %v4368
  %v4370 = vpop.f32.mrb[0].mxu0
  %4371 = vmatprep.mubr.f32.mxu0 %v3980
  %4372 = vmatmul.mubr.f32.gmra.mrb[0].mxu0 %v3979
  %v4373 = vpop.f32.mrb[0].mxu0
  %v4374 = vadd.f32 0.0, %v4373
  %v4375 = vpop.f32.mrb[0].mxu0
  %4376 = vmatprep.mubr.f32.mxu0 %v3985
  %4377 = vmatmul.mubr.f32.gmra.mrb[0].mxu0 %v3984
  %v4378 = vpop.f32.mrb[0].mxu0
  %v4379 = vadd.f32 0.0, %v4378
  %v4380 = vpop.f32.mrb[0].mxu0
  %4381 = vmatprep.mubr.f32.mxu0 %v3990
  %4382 = vmatmul.mubr.f32.gmra.mrb[0].mxu0 %v3989
  %v4383 = vpop.f32.mrb[0].mxu0
  %v4384 = vadd.f32 0.0, %v4383
  %v4385 = vpop.f32.mrb[0].mxu0
  %4386 = vmatprep.mubr.f32.mxu0 %v3995
  %4387 = vmatmul.mubr.f32.gmra.mrb[0].mxu0 %v3994
  %v4388 = vpop.f32.mrb[0].mxu0
  %v4389 = vadd.f32 0.0, %v4388
  %v4390 = vpop.f32.mrb[0].mxu0
  %4391 = vmatprep.mubr.f32.mxu0 %v4000
  %4392 = vmatmul.mubr.f32.gmra.mrb[0].mxu0 %v3999
  %v4393 = vpop.f32.mrb[0].mxu0
  %v4394 = vadd.f32 0.0, %v4393
  %v4395 = vpop.f32.mrb[0].mxu0
  %4396 = vmatprep.mubr.f32.mxu0 %v4005
  %4397 = vmatmul.mubr.f32.gmra.mrb[0].mxu0 %v4004
  %v4398 = vpop.f32.mrb[0].mxu0
  %v4399 = vadd.f32 0.0, %v4398
  %v4400 = vpop.f32.mrb[0].mxu0
  %4401 = vmatprep.mubr.f32.mxu0 %v4010
  %4402 = vmatmul.mubr.f32.gmra.mrb[0].mxu0 %v4009
  %v4403 = vpop.f32.mrb[0].mxu0
  %v4404 = vadd.f32 0.0, %v4403
  %v4405 = vpop.f32.mrb[0].mxu0
  %4406 = vmatprep.mubr.f32.mxu0 %v4015
  %4407 = vmatmul.mubr.f32.gmra.mrb[0].mxu0 %v4014
  %v4408 = vpop.f32.mrb[0].mxu0
  %v4409 = vadd.f32 0.0, %v4408
  %v4410 = vpop.f32.mrb[0].mxu0
  %4411 = vmatprep.mubr.f32.mxu0 %v4020
  %4412 = vmatmul.mubr.f32.gmra.mrb[0].mxu0 %v4019
  %v4413 = vpop.f32.mrb[0].mxu0
  %v4414 = vadd.f32 0.0, %v4413
  %v4415 = vpop.f32.mrb[0].mxu0
  %4416 = vmatprep.mubr.f32.mxu0 %v4025
  %4417 = vmatmul.mubr.f32.gmra.mrb[0].mxu0 %v4024
  %v4418 = vpop.f32.mrb[0].mxu0
  %v4419 = vadd.f32 0.0, %v4418
  %v4420 = vpop.f32.mrb[0].mxu0
  %4421 = vmatprep.mubr.f32.mxu0 %v4030
  %4422 = vmatmul.mubr.f32.gmra.mrb[0].mxu0 %v4029
  %v4423 = vpop.f32.mrb[0].mxu0
  %v4424 = vadd.f32 0.0, %v4423
  %v4425 = vpop.f32.mrb[0].mxu0
  %4426 = vmatprep.mubr.f32.mxu0 %v4035
  %4427 = vmatmul.mubr.f32.gmra.mrb[0].mxu0 %v4034
  %v4428 = vpop.f32.mrb[0].mxu0
  %v4429 = vadd.f32 0.0, %v4428
  %v4430 = vpop.f32.mrb[0].mxu0
  %4431 = vmatprep.mubr.f32.mxu0 %v4040
  %4432 = vmatmul.mubr.f32.gmra.mrb[0].mxu0 %v4039
  %v4433 = vpop.f32.mrb[0].mxu0
  %v4434 = vadd.f32 0.0, %v4433
  %v4435 = vpop.f32.mrb[0].mxu0
  %4436 = vmatprep.mubr.f32.mxu0 %v4045
  %4437 = vmatmul.mubr.f32.gmra.mrb[0].mxu0 %v4044
  %v4438 = vpop.f32.mrb[0].mxu0
  %v4439 = vadd.f32 0.0, %v4438
  %v4440 = vpop.f32.mrb[0].mxu0
  %4441 = vmatprep.mubr.f32.mxu0 %v4050
  %4442 = vmatmul.mubr.f32.gmra.mrb[0].mxu0 %v4049
  %v4443 = vpop.f32.mrb[0].mxu0
  %v4444 = vadd.f32 0.0, %v4443
  %v4445 = vpop.f32.mrb[0].mxu0
  %4446 = vmatprep.mubr.f32.mxu0 %v4055
  %4447 = vmatmul.mubr.f32.gmra.mrb[0].mxu0 %v4054
  %v4448 = vpop.f32.mrb[0].mxu0
  %v4449 = vadd.f32 0.0, %v4448
  %v4450 = vpop.f32.mrb[0].mxu0
  %4451 = vmatprep.mubr.f32.mxu0 %v4060
  %4452 = vmatmul.mubr.f32.gmra.mrb[0].mxu0 %v4059
  %v4453 = vpop.f32.mrb[0].mxu0
  %v4454 = vadd.f32 0.0, %v4453
  %v4455 = vpop.f32.mrb[0].mxu0
  %4456 = vmatprep.mubr.f32.mxu0 %v4065
  %4457 = vmatmul.mubr.f32.gmra.mrb[0].mxu0 %v4064
  %v4458 = vpop.f32.mrb[0].mxu0
  %v4459 = vadd.f32 0.0, %v4458
  %v4460 = vpop.f32.mrb[0].mxu0
  %4461 = vmatprep.mubr.f32.mxu0 %v4070
  %4462 = vmatmul.mubr.f32.gmra.mrb[0].mxu0 %v4069
  %v4463 = vpop.f32.mrb[0].mxu0
  %v4464 = vadd.f32 0.0, %v4463
  %v4465 = vpop.f32.mrb[0].mxu0
  %4466 = vmatprep.mubr.f32.mxu0 %v4075
  %4467 = vmatmul.mubr.f32.gmra.mrb[0].mxu0 %v4074
  %v4468 = vpop.f32.mrb[0].mxu0
  %v4469 = vadd.f32 0.0, %v4468
  %v4470 = vpop.f32.mrb[0].mxu0
  %4471 = vmatprep.mubr.f32.mxu0 %v4080
  %4472 = vmatmul.mubr.f32.gmra.mrb[0].mxu0 %v4079
  %v4473 = vpop.f32.mrb[0].mxu0
  %v4474 = vadd.f32 0.0, %v4473
  %v4475 = vpop.f32.mrb[0].mxu0
  %4476 = vmatprep.mubr.f32.mxu0 %v4085
  %4477 = vmatmul.mubr.f32.gmra.mrb[0].mxu0 %v4084
  %v4478 = vpop.f32.mrb[0].mxu0
  %v4479 = vadd.f32 0.0, %v4478
  %v4480 = vpop.f32.mrb[0].mxu0
  %4481 = vmatprep.mubr.f32.mxu0 %v4090
  %4482 = vmatmul.mubr.f32.gmra.mrb[0].mxu0 %v4089
  %v4483 = vpop.f32.mrb[0].mxu0
  %v4484 = vadd.f32 0.0, %v4483
  %v4485 = vpop.f32.mrb[0].mxu0
  %4486 = vdwg.mxu0
  %4487 = vmatprep.subr.mxu0 0.0
  %4488 = vmatpush1.msra.mxu0 %v4126
  %4489 = vmatprep.subr.mxu0 0.0
  %4490 = vmatpush1.msra.mxu0 %v4127
  %4491 = vmatprep.subr.mxu0 0.0
  %4492 = vmatpush1.msra.mxu0 %v4128
  %4493 = vmatprep.subr.mxu0 0.0
  %4494 = vmatpush1.msra.mxu0 %v4129
  %4495 = vmatprep.subr.mxu0 0.0
  %4496 = vmatpush1.msra.mxu0 %v4130
  %4497 = vmatprep.subr.mxu0 0.0
  %4498 = vmatpush1.msra.mxu0 %v4131
  %4499 = vmatprep.subr.mxu0 0.0
  %4500 = vmatpush1.msra.mxu0 %v4132
  %4501 = vmatprep.subr.mxu0 0.0
  %4502 = vmatpush1.msra.mxu0 %v4133
  %4503 = vmatprep.subr.mxu0 0.0
  %4504 = vmatpush1.msra.mxu0 %v4134
  %4505 = vmatprep.subr.mxu0 0.0
  %4506 = vmatpush1.msra.mxu0 %v4135
  %4507 = vmatprep.subr.mxu0 0.0
  %4508 = vmatpush1.msra.mxu0 %v4136
  %4509 = vmatprep.subr.mxu0 0.0
  %4510 = vmatpush1.msra.mxu0 %v4137
  %4511 = vmatprep.subr.mxu0 0.0
  %4512 = vmatpush1.msra.mxu0 %v4138
  %4513 = vmatprep.subr.mxu0 0.0
  %4514 = vmatpush1.msra.mxu0 %v4139
  %4515 = vmatprep.subr.mxu0 0.0
  %4516 = vmatpush1.msra.mxu0 %v4140
  %4517 = vmatprep.subr.mxu0 0.0
  %4518 = vmatpush1.msra.mxu0 %v4141
  %4519 = vmatprep.subr.mxu0 0.0
  %4520 = vmatpush1.msra.mxu0 %v4142
  %4521 = vmatprep.subr.mxu0 0.0
  %4522 = vmatpush1.msra.mxu0 %v4143
  %4523 = vmatprep.subr.mxu0 0.0
  %4524 = vmatpush1.msra.mxu0 %v4144
  %4525 = vmatprep.subr.mxu0 0.0
  %4526 = vmatpush1.msra.mxu0 %v4145
  %4527 = vmatprep.subr.mxu0 0.0
  %4528 = vmatpush1.msra.mxu0 %v4146
  %4529 = vmatprep.subr.mxu0 0.0
  %4530 = vmatpush1.msra.mxu0 %v4147
  %4531 = vmatprep.subr.mxu0 0.0
  %4532 = vmatpush1.msra.mxu0 %v4148
  %4533 = vmatprep.subr.mxu0 0.0
  %4534 = vmatpush1.msra.mxu0 %v4149
  %4535 = vmatprep.subr.mxu0 0.0
  %4536 = vmatpush1.msra.mxu0 %v4150
  %4537 = vmatprep.subr.mxu0 0.0
  %4538 = vmatpush1.msra.mxu0 %v4151
  %4539 = vmatprep.subr.mxu0 0.0
  %4540 = vmatpush1.msra.mxu0 %v4152
  %4541 = vmatprep.subr.mxu0 0.0
  %4542 = vmatpush1.msra.mxu0 %v4153
  %4543 = vmatprep.subr.mxu0 0.0
  %4544 = vmatpush1.msra.mxu0 %v4154
  %4545 = vmatprep.subr.mxu0 0.0
  %4546 = vmatpush1.msra.mxu0 %v4155
  %4547 = vmatprep.subr.mxu0 0.0
  %4548 = vmatpush1.msra.mxu0 %v4156
  %4549 = vmatprep.subr.mxu0 0.0
  %4550 = vmatpush1.msra.mxu0 %v4157
  %4551 = vmatprep.mubr.f32.mxu0 %v3937
  %4552 = vmatmul.mubr.f32.gmra.mrb[0].mxu0 %v3936
  %v4553 = vpop.f32.mrb[0].mxu0
  %v4554 = vadd.f32 %v4329, %v4553
  %v4555 = vpop.f32.mrb[0].mxu0
  %4556 = vmatprep.mubr.f32.mxu0 %v3942
  %4557 = vmatmul.mubr.f32.gmra.mrb[0].mxu0 %v3941
  %v4558 = vpop.f32.mrb[0].mxu0
  %v4559 = vadd.f32 %v4334, %v4558
  %v4560 = vpop.f32.mrb[0].mxu0
  %4561 = vmatprep.mubr.f32.mxu0 %v3947
  %4562 = vmatmul.mubr.f32.gmra.mrb[0].mxu0 %v3946
  %v4563 = vpop.f32.mrb[0].mxu0
  %v4564 = vadd.f32 %v4339, %v4563
  %v4565 = vpop.f32.mrb[0].mxu0
  %4566 = vmatprep.mubr.f32.mxu0 %v3952
  %4567 = vmatmul.mubr.f32.gmra.mrb[0].mxu0 %v3951
  %v4568 = vpop.f32.mrb[0].mxu0
  %v4569 = vadd.f32 %v4344, %v4568
  %v4570 = vpop.f32.mrb[0].mxu0
  %4571 = vmatprep.mubr.f32.mxu0 %v3957
  %4572 = vmatmul.mubr.f32.gmra.mrb[0].mxu0 %v3956
  %v4573 = vpop.f32.mrb[0].mxu0
  %v4574 = vadd.f32 %v4349, %v4573
  %v4575 = vpop.f32.mrb[0].mxu0
  %4576 = vmatprep.mubr.f32.mxu0 %v3962
  %4577 = vmatmul.mubr.f32.gmra.mrb[0].mxu0 %v3961
  %v4578 = vpop.f32.mrb[0].mxu0
  %v4579 = vadd.f32 %v4354, %v4578
  %v4580 = vpop.f32.mrb[0].mxu0
  %4581 = vmatprep.mubr.f32.mxu0 %v3967
  %4582 = vmatmul.mubr.f32.gmra.mrb[0].mxu0 %v3966
  %v4583 = vpop.f32.mrb[0].mxu0
  %v4584 = vadd.f32 %v4359, %v4583
  %v4585 = vpop.f32.mrb[0].mxu0
  %4586 = vmatprep.mubr.f32.mxu0 %v3972
  %4587 = vmatmul.mubr.f32.gmra.mrb[0].mxu0 %v3971
  %v4588 = vpop.f32.mrb[0].mxu0
  %v4589 = vadd.f32 %v4364, %v4588
  %v4590 = vpop.f32.mrb[0].mxu0
  %4591 = vmatprep.mubr.f32.mxu0 %v3977
  %4592 = vmatmul.mubr.f32.gmra.mrb[0].mxu0 %v3976
  %v4593 = vpop.f32.mrb[0].mxu0
  %v4594 = vadd.f32 %v4369, %v4593
  %v4595 = vpop.f32.mrb[0].mxu0
  %4596 = vmatprep.mubr.f32.mxu0 %v3982
  %4597 = vmatmul.mubr.f32.gmra.mrb[0].mxu0 %v3981
  %v4598 = vpop.f32.mrb[0].mxu0
  %v4599 = vadd.f32 %v4374, %v4598
  %v4600 = vpop.f32.mrb[0].mxu0
  %4601 = vmatprep.mubr.f32.mxu0 %v3987
  %4602 = vmatmul.mubr.f32.gmra.mrb[0].mxu0 %v3986
  %v4603 = vpop.f32.mrb[0].mxu0
  %v4604 = vadd.f32 %v4379, %v4603
  %v4605 = vpop.f32.mrb[0].mxu0
  %4606 = vmatprep.mubr.f32.mxu0 %v3992
  %4607 = vmatmul.mubr.f32.gmra.mrb[0].mxu0 %v3991
  %v4608 = vpop.f32.mrb[0].mxu0
  %v4609 = vadd.f32 %v4384, %v4608
  %v4610 = vpop.f32.mrb[0].mxu0
  %4611 = vmatprep.mubr.f32.mxu0 %v3997
  %4612 = vmatmul.mubr.f32.gmra.mrb[0].mxu0 %v3996
  %v4613 = vpop.f32.mrb[0].mxu0
  %v4614 = vadd.f32 %v4389, %v4613
  %v4615 = vpop.f32.mrb[0].mxu0
  %4616 = vmatprep.mubr.f32.mxu0 %v4002
  %4617 = vmatmul.mubr.f32.gmra.mrb[0].mxu0 %v4001
  %v4618 = vpop.f32.mrb[0].mxu0
  %v4619 = vadd.f32 %v4394, %v4618
  %v4620 = vpop.f32.mrb[0].mxu0
  %4621 = vmatprep.mubr.f32.mxu0 %v4007
  %4622 = vmatmul.mubr.f32.gmra.mrb[0].mxu0 %v4006
  %v4623 = vpop.f32.mrb[0].mxu0
  %v4624 = vadd.f32 %v4399, %v4623
  %v4625 = vpop.f32.mrb[0].mxu0
  %4626 = vmatprep.mubr.f32.mxu0 %v4012
  %4627 = vmatmul.mubr.f32.gmra.mrb[0].mxu0 %v4011
  %v4628 = vpop.f32.mrb[0].mxu0
  %v4629 = vadd.f32 %v4404, %v4628
  %v4630 = vpop.f32.mrb[0].mxu0
  %4631 = vmatprep.mubr.f32.mxu0 %v4017
  %4632 = vmatmul.mubr.f32.gmra.mrb[0].mxu0 %v4016
  %v4633 = vpop.f32.mrb[0].mxu0
  %v4634 = vadd.f32 %v4409, %v4633
  %v4635 = vpop.f32.mrb[0].mxu0
  %4636 = vmatprep.mubr.f32.mxu0 %v4022
  %4637 = vmatmul.mubr.f32.gmra.mrb[0].mxu0 %v4021
  %v4638 = vpop.f32.mrb[0].mxu0
  %v4639 = vadd.f32 %v4414, %v4638
  %v4640 = vpop.f32.mrb[0].mxu0
  %4641 = vmatprep.mubr.f32.mxu0 %v4027
  %4642 = vmatmul.mubr.f32.gmra.mrb[0].mxu0 %v4026
  %v4643 = vpop.f32.mrb[0].mxu0
  %v4644 = vadd.f32 %v4419, %v4643
  %v4645 = vpop.f32.mrb[0].mxu0
  %4646 = vmatprep.mubr.f32.mxu0 %v4032
  %4647 = vmatmul.mubr.f32.gmra.mrb[0].mxu0 %v4031
  %v4648 = vpop.f32.mrb[0].mxu0
  %v4649 = vadd.f32 %v4424, %v4648
  %v4650 = vpop.f32.mrb[0].mxu0
  %4651 = vmatprep.mubr.f32.mxu0 %v4037
  %4652 = vmatmul.mubr.f32.gmra.mrb[0].mxu0 %v4036
  %v4653 = vpop.f32.mrb[0].mxu0
  %v4654 = vadd.f32 %v4429, %v4653
  %v4655 = vpop.f32.mrb[0].mxu0
  %4656 = vmatprep.mubr.f32.mxu0 %v4042
  %4657 = vmatmul.mubr.f32.gmra.mrb[0].mxu0 %v4041
  %v4658 = vpop.f32.mrb[0].mxu0
  %v4659 = vadd.f32 %v4434, %v4658
  %v4660 = vpop.f32.mrb[0].mxu0
  %4661 = vmatprep.mubr.f32.mxu0 %v4047
  %4662 = vmatmul.mubr.f32.gmra.mrb[0].mxu0 %v4046
  %v4663 = vpop.f32.mrb[0].mxu0
  %v4664 = vadd.f32 %v4439, %v4663
  %v4665 = vpop.f32.mrb[0].mxu0
  %4666 = vmatprep.mubr.f32.mxu0 %v4052
  %4667 = vmatmul.mubr.f32.gmra.mrb[0].mxu0 %v4051
  %v4668 = vpop.f32.mrb[0].mxu0
  %v4669 = vadd.f32 %v4444, %v4668
  %v4670 = vpop.f32.mrb[0].mxu0
  %4671 = vmatprep.mubr.f32.mxu0 %v4057
  %4672 = vmatmul.mubr.f32.gmra.mrb[0].mxu0 %v4056
  %v4673 = vpop.f32.mrb[0].mxu0
  %v4674 = vadd.f32 %v4449, %v4673
  %v4675 = vpop.f32.mrb[0].mxu0
  %4676 = vmatprep.mubr.f32.mxu0 %v4062
  %4677 = vmatmul.mubr.f32.gmra.mrb[0].mxu0 %v4061
  %v4678 = vpop.f32.mrb[0].mxu0
  %v4679 = vadd.f32 %v4454, %v4678
  %v4680 = vpop.f32.mrb[0].mxu0
  %4681 = vmatprep.mubr.f32.mxu0 %v4067
  %4682 = vmatmul.mubr.f32.gmra.mrb[0].mxu0 %v4066
  %v4683 = vpop.f32.mrb[0].mxu0
  %v4684 = vadd.f32 %v4459, %v4683
  %v4685 = vpop.f32.mrb[0].mxu0
  %4686 = vmatprep.mubr.f32.mxu0 %v4072
  %4687 = vmatmul.mubr.f32.gmra.mrb[0].mxu0 %v4071
  %v4688 = vpop.f32.mrb[0].mxu0
  %v4689 = vadd.f32 %v4464, %v4688
  %v4690 = vpop.f32.mrb[0].mxu0
  %4691 = vmatprep.mubr.f32.mxu0 %v4077
  %4692 = vmatmul.mubr.f32.gmra.mrb[0].mxu0 %v4076
  %v4693 = vpop.f32.mrb[0].mxu0
  %v4694 = vadd.f32 %v4469, %v4693
  %v4695 = vpop.f32.mrb[0].mxu0
  %4696 = vmatprep.mubr.f32.mxu0 %v4082
  %4697 = vmatmul.mubr.f32.gmra.mrb[0].mxu0 %v4081
  %v4698 = vpop.f32.mrb[0].mxu0
  %v4699 = vadd.f32 %v4474, %v4698
  %v4700 = vpop.f32.mrb[0].mxu0
  %4701 = vmatprep.mubr.f32.mxu0 %v4087
  %4702 = vmatmul.mubr.f32.gmra.mrb[0].mxu0 %v4086
  %v4703 = vpop.f32.mrb[0].mxu0
  %v4704 = vadd.f32 %v4479, %v4703
  %v4705 = vpop.f32.mrb[0].mxu0
  %4706 = vmatprep.mubr.f32.mxu0 %v4092
  %4707 = vmatmul.mubr.f32.gmra.mrb[0].mxu0 %v4091
  %v4708 = vpop.f32.mrb[0].mxu0
  %v4709 = vadd.f32 %v4484, %v4708
  %v4710 = vpop.f32.mrb[0].mxu0
  %4711 = vdwg.mxu0
  %4712 = vmatprep.subr.mxu0 0.0
  %4713 = vmatpush1.msra.mxu0 %v4158
  %4714 = vmatprep.subr.mxu0 0.0
  %4715 = vmatpush1.msra.mxu0 %v4159
  %4716 = vmatprep.subr.mxu0 0.0
  %4717 = vmatpush1.msra.mxu0 %v4160
  %4718 = vmatprep.subr.mxu0 0.0
  %4719 = vmatpush1.msra.mxu0 %v4161
  %4720 = vmatprep.subr.mxu0 0.0
  %4721 = vmatpush1.msra.mxu0 %v4162
  %4722 = vmatprep.subr.mxu0 0.0
  %4723 = vmatpush1.msra.mxu0 %v4163
  %4724 = vmatprep.subr.mxu0 0.0
  %4725 = vmatpush1.msra.mxu0 %v4164
  %4726 = vmatprep.subr.mxu0 0.0
  %4727 = vmatpush1.msra.mxu0 %v4165
  %4728 = vmatprep.subr.mxu0 0.0
  %4729 = vmatpush1.msra.mxu0 0.0
  %4730 = vmatprep.subr.mxu0 0.0
  %4731 = vmatpush1.msra.mxu0 0.0
  %4732 = vmatprep.subr.mxu0 0.0
  %4733 = vmatpush1.msra.mxu0 0.0
  %4734 = vmatprep.subr.mxu0 0.0
  %4735 = vmatpush1.msra.mxu0 0.0
  %4736 = vmatprep.subr.mxu0 0.0
  %4737 = vmatpush1.msra.mxu0 0.0
  %4738 = vmatprep.subr.mxu0 0.0
  %4739 = vmatpush1.msra.mxu0 0.0
  %4740 = vmatprep.subr.mxu0 0.0
  %4741 = vmatpush1.msra.mxu0 0.0
  %4742 = vmatprep.subr.mxu0 0.0
  %4743 = vmatpush1.msra.mxu0 0.0
  %4744 = vmatprep.subr.mxu0 0.0
  %4745 = vmatpush1.msra.mxu0 0.0
  %4746 = vmatprep.subr.mxu0 0.0
  %4747 = vmatpush1.msra.mxu0 0.0
  %4748 = vmatprep.subr.mxu0 0.0
  %4749 = vmatpush1.msra.mxu0 0.0
  %4750 = vmatprep.subr.mxu0 0.0
  %4751 = vmatpush1.msra.mxu0 0.0
  %4752 = vmatprep.subr.mxu0 0.0
  %4753 = vmatpush1.msra.mxu0 0.0
  %4754 = vmatprep.subr.mxu0 0.0
  %4755 = vmatpush1.msra.mxu0 0.0
  %4756 = vmatprep.subr.mxu0 0.0
  %4757 = vmatpush1.msra.mxu0 0.0
  %4758 = vmatprep.subr.mxu0 0.0
  %4759 = vmatpush1.msra.mxu0 0.0
  %4760 = vmatprep.subr.mxu0 0.0
  %4761 = vmatpush1.msra.mxu0 0.0
  %4762 = vmatprep.subr.mxu0 0.0
  %4763 = vmatpush1.msra.mxu0 0.0
  %4764 = vmatprep.subr.mxu0 0.0
  %4765 = vmatpush1.msra.mxu0 0.0
  %4766 = vmatprep.subr.mxu0 0.0
  %4767 = vmatpush1.msra.mxu0 0.0
  %4768 = vmatprep.subr.mxu0 0.0
  %4769 = vmatpush1.msra.mxu0 0.0
  %4770 = vmatprep.subr.mxu0 0.0
  %4771 = vmatpush1.msra.mxu0 0.0
  %4772 = vmatprep.subr.mxu0 0.0
  %4773 = vmatpush1.msra.mxu0 0.0
  %4774 = vmatprep.subr.mxu0 0.0
  %4775 = vmatpush1.msra.mxu0 0.0
  %4776 = vmatprep.mubr.f32.mxu0 0.0
  %4777 = vmatmul.mubr.f32.gmra.mrb[0].mxu0 %v4167
  %v4778 = vpop.f32.mrb[0].mxu0
  %v4779 = vadd.f32 %v4554, %v4778
  %v4780 = vpop.f32.mrb[0].mxu0
  %4781 = vmatprep.mubr.f32.mxu0 0.0
  %4782 = vmatmul.mubr.f32.gmra.mrb[0].mxu0 %v4170
  %v4783 = vpop.f32.mrb[0].mxu0
  %v4784 = vadd.f32 %v4559, %v4783
  %v4785 = vpop.f32.mrb[0].mxu0
  %4786 = vmatprep.mubr.f32.mxu0 0.0
  %4787 = vmatmul.mubr.f32.gmra.mrb[0].mxu0 %v4173
  %v4788 = vpop.f32.mrb[0].mxu0
  %v4789 = vadd.f32 %v4564, %v4788
  %v4790 = vpop.f32.mrb[0].mxu0
  %4791 = vmatprep.mubr.f32.mxu0 0.0
  %4792 = vmatmul.mubr.f32.gmra.mrb[0].mxu0 %v4176
  %v4793 = vpop.f32.mrb[0].mxu0
  %v4794 = vadd.f32 %v4569, %v4793
  %v4795 = vpop.f32.mrb[0].mxu0
  %4796 = vmatprep.mubr.f32.mxu0 0.0
  %4797 = vmatmul.mubr.f32.gmra.mrb[0].mxu0 %v4179
  %v4798 = vpop.f32.mrb[0].mxu0
  %v4799 = vadd.f32 %v4574, %v4798
  %v4800 = vpop.f32.mrb[0].mxu0
  %4801 = vmatprep.mubr.f32.mxu0 0.0
  %4802 = vmatmul.mubr.f32.gmra.mrb[0].mxu0 %v4182
  %v4803 = vpop.f32.mrb[0].mxu0
  %v4804 = vadd.f32 %v4579, %v4803
  %v4805 = vpop.f32.mrb[0].mxu0
  %4806 = vmatprep.mubr.f32.mxu0 0.0
  %4807 = vmatmul.mubr.f32.gmra.mrb[0].mxu0 %v4185
  %v4808 = vpop.f32.mrb[0].mxu0
  %v4809 = vadd.f32 %v4584, %v4808
  %v4810 = vpop.f32.mrb[0].mxu0
  %4811 = vmatprep.mubr.f32.mxu0 0.0
  %4812 = vmatmul.mubr.f32.gmra.mrb[0].mxu0 %v4188
  %v4813 = vpop.f32.mrb[0].mxu0
  %v4814 = vadd.f32 %v4589, %v4813
  %v4815 = vpop.f32.mrb[0].mxu0
  %4816 = vmatprep.mubr.f32.mxu0 0.0
  %4817 = vmatmul.mubr.f32.gmra.mrb[0].mxu0 %v4191
  %v4818 = vpop.f32.mrb[0].mxu0
  %v4819 = vadd.f32 %v4594, %v4818
  %v4820 = vpop.f32.mrb[0].mxu0
  %4821 = vmatprep.mubr.f32.mxu0 0.0
  %4822 = vmatmul.mubr.f32.gmra.mrb[0].mxu0 %v4194
  %v4823 = vpop.f32.mrb[0].mxu0
  %v4824 = vadd.f32 %v4599, %v4823
  %v4825 = vpop.f32.mrb[0].mxu0
  %4826 = vmatprep.mubr.f32.mxu0 0.0
  %4827 = vmatmul.mubr.f32.gmra.mrb[0].mxu0 %v4197
  %v4828 = vpop.f32.mrb[0].mxu0
  %v4829 = vadd.f32 %v4604, %v4828
  %v4830 = vpop.f32.mrb[0].mxu0
  %4831 = vmatprep.mubr.f32.mxu0 0.0
  %4832 = vmatmul.mubr.f32.gmra.mrb[0].mxu0 %v4200
  %v4833 = vpop.f32.mrb[0].mxu0
  %v4834 = vadd.f32 %v4609, %v4833
  %v4835 = vpop.f32.mrb[0].mxu0
  %4836 = vmatprep.mubr.f32.mxu0 0.0
  %4837 = vmatmul.mubr.f32.gmra.mrb[0].mxu0 %v4203
  %v4838 = vpop.f32.mrb[0].mxu0
  %v4839 = vadd.f32 %v4614, %v4838
  %v4840 = vpop.f32.mrb[0].mxu0
  %4841 = vmatprep.mubr.f32.mxu0 0.0
  %4842 = vmatmul.mubr.f32.gmra.mrb[0].mxu0 %v4206
  %v4843 = vpop.f32.mrb[0].mxu0
  %v4844 = vadd.f32 %v4619, %v4843
  %v4845 = vpop.f32.mrb[0].mxu0
  %4846 = vmatprep.mubr.f32.mxu0 0.0
  %4847 = vmatmul.mubr.f32.gmra.mrb[0].mxu0 %v4209
  %v4848 = vpop.f32.mrb[0].mxu0
  %v4849 = vadd.f32 %v4624, %v4848
  %v4850 = vpop.f32.mrb[0].mxu0
  %4851 = vmatprep.mubr.f32.mxu0 0.0
  %4852 = vmatmul.mubr.f32.gmra.mrb[0].mxu0 %v4212
  %v4853 = vpop.f32.mrb[0].mxu0
  %v4854 = vadd.f32 %v4629, %v4853
  %v4855 = vpop.f32.mrb[0].mxu0
  %4856 = vmatprep.mubr.f32.mxu0 0.0
  %4857 = vmatmul.mubr.f32.gmra.mrb[0].mxu0 %v4215
  %v4858 = vpop.f32.mrb[0].mxu0
  %v4859 = vadd.f32 %v4634, %v4858
  %v4860 = vpop.f32.mrb[0].mxu0
  %4861 = vmatprep.mubr.f32.mxu0 0.0
  %4862 = vmatmul.mubr.f32.gmra.mrb[0].mxu0 %v4218
  %v4863 = vpop.f32.mrb[0].mxu0
  %v4864 = vadd.f32 %v4639, %v4863
  %v4865 = vpop.f32.mrb[0].mxu0
  %4866 = vmatprep.mubr.f32.mxu0 0.0
  %4867 = vmatmul.mubr.f32.gmra.mrb[0].mxu0 %v4221
  %v4868 = vpop.f32.mrb[0].mxu0
  %v4869 = vadd.f32 %v4644, %v4868
  %v4870 = vpop.f32.mrb[0].mxu0
  %4871 = vmatprep.mubr.f32.mxu0 0.0
  %4872 = vmatmul.mubr.f32.gmra.mrb[0].mxu0 %v4224
  %v4873 = vpop.f32.mrb[0].mxu0
  %v4874 = vadd.f32 %v4649, %v4873
  %v4875 = vpop.f32.mrb[0].mxu0
  %4876 = vmatprep.mubr.f32.mxu0 0.0
  %4877 = vmatmul.mubr.f32.gmra.mrb[0].mxu0 %v4227
  %v4878 = vpop.f32.mrb[0].mxu0
  %v4879 = vadd.f32 %v4654, %v4878
  %v4880 = vpop.f32.mrb[0].mxu0
  %4881 = vmatprep.mubr.f32.mxu0 0.0
  %4882 = vmatmul.mubr.f32.gmra.mrb[0].mxu0 %v4230
  %v4883 = vpop.f32.mrb[0].mxu0
  %v4884 = vadd.f32 %v4659, %v4883
  %v4885 = vpop.f32.mrb[0].mxu0
  %4886 = vmatprep.mubr.f32.mxu0 0.0
  %4887 = vmatmul.mubr.f32.gmra.mrb[0].mxu0 %v4233
  %v4888 = vpop.f32.mrb[0].mxu0
  %v4889 = vadd.f32 %v4664, %v4888
  %v4890 = vpop.f32.mrb[0].mxu0
  %4891 = vmatprep.mubr.f32.mxu0 0.0
  %4892 = vmatmul.mubr.f32.gmra.mrb[0].mxu0 %v4236
  %v4893 = vpop.f32.mrb[0].mxu0
  %v4894 = vadd.f32 %v4669, %v4893
  %v4895 = vpop.f32.mrb[0].mxu0
  %4896 = vmatprep.mubr.f32.mxu0 0.0
  %4897 = vmatmul.mubr.f32.gmra.mrb[0].mxu0 %v4239
  %v4898 = vpop.f32.mrb[0].mxu0
  %v4899 = vadd.f32 %v4674, %v4898
  %v4900 = vpop.f32.mrb[0].mxu0
  %4901 = vmatprep.mubr.f32.mxu0 0.0
  %4902 = vmatmul.mubr.f32.gmra.mrb[0].mxu0 %v4242
  %v4903 = vpop.f32.mrb[0].mxu0
  %v4904 = vadd.f32 %v4679, %v4903
  %v4905 = vpop.f32.mrb[0].mxu0
  %4906 = vmatprep.mubr.f32.mxu0 0.0
  %4907 = vmatmul.mubr.f32.gmra.mrb[0].mxu0 %v4245
  %v4908 = vpop.f32.mrb[0].mxu0
  %v4909 = vadd.f32 %v4684, %v4908
  %v4910 = vpop.f32.mrb[0].mxu0
  %4911 = vmatprep.mubr.f32.mxu0 0.0
  %4912 = vmatmul.mubr.f32.gmra.mrb[0].mxu0 %v4248
  %v4913 = vpop.f32.mrb[0].mxu0
  %v4914 = vadd.f32 %v4689, %v4913
  %v4915 = vpop.f32.mrb[0].mxu0
  %4916 = vmatprep.mubr.f32.mxu0 0.0
  %4917 = vmatmul.mubr.f32.gmra.mrb[0].mxu0 %v4251
  %v4918 = vpop.f32.mrb[0].mxu0
  %v4919 = vadd.f32 %v4694, %v4918
  %v4920 = vpop.f32.mrb[0].mxu0
  %4921 = vmatprep.mubr.f32.mxu0 0.0
  %4922 = vmatmul.mubr.f32.gmra.mrb[0].mxu0 %v4254
  %v4923 = vpop.f32.mrb[0].mxu0
  %v4924 = vadd.f32 %v4699, %v4923
  %v4925 = vpop.f32.mrb[0].mxu0
  %4926 = vmatprep.mubr.f32.mxu0 0.0
  %4927 = vmatmul.mubr.f32.gmra.mrb[0].mxu0 %v4257
  %v4928 = vpop.f32.mrb[0].mxu0
  %v4929 = vadd.f32 %v4704, %v4928
  %v4930 = vpop.f32.mrb[0].mxu0
  %4931 = vmatprep.mubr.f32.mxu0 0.0
  %4932 = vmatmul.mubr.f32.gmra.mrb[0].mxu0 %v4260
  %v4933 = vpop.f32.mrb[0].mxu0
  %v4934 = vadd.f32 %v4709, %v4933
  %v4935 = vpop.f32.mrb[0].mxu0
  %4936 = vdwg.mxu0
  %v4937 = vsel %vm26, %v4779, 0.0
  %v4938 = vsel %vm26, %v4784, 0.0
  %v4939 = vadd.f32 %v4937, %v4938
  %v4940 = vsel %vm26, %v4789, 0.0
  %v4941 = vadd.f32 %v4939, %v4940
  %v4942 = vsel %vm26, %v4794, 0.0
  %v4943 = vadd.f32 %v4941, %v4942
  %v4944 = vsel %vm26, %v4799, 0.0
  %v4945 = vadd.f32 %v4943, %v4944
  %v4946 = vsel %vm26, %v4804, 0.0
  %v4947 = vadd.f32 %v4945, %v4946
  %v4948 = vsel %vm26, %v4809, 0.0
  %v4949 = vadd.f32 %v4947, %v4948
  %v4950 = vsel %vm26, %v4814, 0.0
  %v4951 = vadd.f32 %v4949, %v4950
  %v4952 = vsel %vm26, %v4819, 0.0
  %v4953 = vadd.f32 %v4951, %v4952
  %v4954 = vsel %vm26, %v4824, 0.0
  %v4955 = vadd.f32 %v4953, %v4954
  %v4956 = vsel %vm26, %v4829, 0.0
  %v4957 = vadd.f32 %v4955, %v4956
  %v4958 = vsel %vm26, %v4834, 0.0
  %v4959 = vadd.f32 %v4957, %v4958
  %v4960 = vsel %vm26, %v4839, 0.0
  %v4961 = vadd.f32 %v4959, %v4960
  %v4962 = vsel %vm26, %v4844, 0.0
  %v4963 = vadd.f32 %v4961, %v4962
  %v4964 = vsel %vm26, %v4849, 0.0
  %v4965 = vadd.f32 %v4963, %v4964
  %v4966 = vsel %vm26, %v4854, 0.0
  %v4967 = vadd.f32 %v4965, %v4966
  %v4968 = vsel %vm26, %v4859, 0.0
  %v4969 = vadd.f32 %v4967, %v4968
  %v4970 = vsel %vm26, %v4864, 0.0
  %v4971 = vadd.f32 %v4969, %v4970
  %v4972 = vsel %vm26, %v4869, 0.0
  %v4973 = vadd.f32 %v4971, %v4972
  %v4974 = vsel %vm26, %v4874, 0.0
  %v4975 = vadd.f32 %v4973, %v4974
  %v4976 = vsel %vm26, %v4879, 0.0
  %v4977 = vadd.f32 %v4975, %v4976
  %v4978 = vsel %vm26, %v4884, 0.0
  %v4979 = vadd.f32 %v4977, %v4978
  %v4980 = vsel %vm26, %v4889, 0.0
  %v4981 = vadd.f32 %v4979, %v4980
  %v4982 = vsel %vm26, %v4894, 0.0
  %v4983 = vadd.f32 %v4981, %v4982
  %v4984 = vsel %vm26, %v4899, 0.0
  %v4985 = vadd.f32 %v4983, %v4984
  %v4986 = vsel %vm26, %v4904, 0.0
  %v4987 = vadd.f32 %v4985, %v4986
  %v4988 = vsel %vm26, %v4909, 0.0
  %v4989 = vadd.f32 %v4987, %v4988
  %v4990 = vsel %vm26, %v4914, 0.0
  %v4991 = vadd.f32 %v4989, %v4990
  %v4992 = vsel %vm26, %v4919, 0.0
  %v4993 = vadd.f32 %v4991, %v4992
  %v4994 = vsel %vm26, %v4924, 0.0
  %v4995 = vadd.f32 %v4993, %v4994
  %v4996 = vsel %vm26, %v4929, 0.0
  %v4997 = vadd.f32 %v4995, %v4996
  %v4998 = vsel %vm26, %v4934, 0.0
  %v4999 = vadd.f32 %v4997, %v4998
  %v5000 = vrot.slane %v4999, 4
  %v5001 = vadd.f32 %v4999, %v5000
  %v5002 = vrot.slane %v5001, 2
  %v5003 = vadd.f32 %v5001, %v5002
  %v5004 = vrot.slane %v5003, 1
  %v5005 = vadd.f32 %v5003, %v5004
  %v5006 = vmul.f32 %v4779, %v4779
  %v5007 = vmul.f32 %v4784, %v4784
  %v5008 = vmul.f32 %v4789, %v4789
  %v5009 = vmul.f32 %v4794, %v4794
  %v5010 = vmul.f32 %v4799, %v4799
  %v5011 = vmul.f32 %v4804, %v4804
  %v5012 = vmul.f32 %v4809, %v4809
  %v5013 = vmul.f32 %v4814, %v4814
  %v5014 = vmul.f32 %v4819, %v4819
  %v5015 = vmul.f32 %v4824, %v4824
  %v5016 = vmul.f32 %v4829, %v4829
  %v5017 = vmul.f32 %v4834, %v4834
  %v5018 = vmul.f32 %v4839, %v4839
  %v5019 = vmul.f32 %v4844, %v4844
  %v5020 = vmul.f32 %v4849, %v4849
  %v5021 = vmul.f32 %v4854, %v4854
  %v5022 = vmul.f32 %v4859, %v4859
  %v5023 = vmul.f32 %v4864, %v4864
  %v5024 = vmul.f32 %v4869, %v4869
  %v5025 = vmul.f32 %v4874, %v4874
  %v5026 = vmul.f32 %v4879, %v4879
  %v5027 = vmul.f32 %v4884, %v4884
  %v5028 = vmul.f32 %v4889, %v4889
  %v5029 = vmul.f32 %v4894, %v4894
  %v5030 = vmul.f32 %v4899, %v4899
  %v5031 = vmul.f32 %v4904, %v4904
  %v5032 = vmul.f32 %v4909, %v4909
  %v5033 = vmul.f32 %v4914, %v4914
  %v5034 = vmul.f32 %v4919, %v4919
  %v5035 = vmul.f32 %v4924, %v4924
  %v5036 = vmul.f32 %v4929, %v4929
  %v5037 = vmul.f32 %v4934, %v4934
  %v5038 = vsel %vm26, %v5006, 0.0
  %v5039 = vsel %vm26, %v5007, 0.0
  %v5040 = vadd.f32 %v5038, %v5039
  %v5041 = vsel %vm26, %v5008, 0.0
  %v5042 = vadd.f32 %v5040, %v5041
  %v5043 = vsel %vm26, %v5009, 0.0
  %v5044 = vadd.f32 %v5042, %v5043
  %v5045 = vsel %vm26, %v5010, 0.0
  %v5046 = vadd.f32 %v5044, %v5045
  %v5047 = vsel %vm26, %v5011, 0.0
  %v5048 = vadd.f32 %v5046, %v5047
  %v5049 = vsel %vm26, %v5012, 0.0
  %v5050 = vadd.f32 %v5048, %v5049
  %v5051 = vsel %vm26, %v5013, 0.0
  %v5052 = vadd.f32 %v5050, %v5051
  %v5053 = vsel %vm26, %v5014, 0.0
  %v5054 = vadd.f32 %v5052, %v5053
  %v5055 = vsel %vm26, %v5015, 0.0
  %v5056 = vadd.f32 %v5054, %v5055
  %v5057 = vsel %vm26, %v5016, 0.0
  %v5058 = vadd.f32 %v5056, %v5057
  %v5059 = vsel %vm26, %v5017, 0.0
  %v5060 = vadd.f32 %v5058, %v5059
  %v5061 = vsel %vm26, %v5018, 0.0
  %v5062 = vadd.f32 %v5060, %v5061
  %v5063 = vsel %vm26, %v5019, 0.0
  %v5064 = vadd.f32 %v5062, %v5063
  %v5065 = vsel %vm26, %v5020, 0.0
  %v5066 = vadd.f32 %v5064, %v5065
  %v5067 = vsel %vm26, %v5021, 0.0
  %v5068 = vadd.f32 %v5066, %v5067
  %v5069 = vsel %vm26, %v5022, 0.0
  %v5070 = vadd.f32 %v5068, %v5069
  %v5071 = vsel %vm26, %v5023, 0.0
  %v5072 = vadd.f32 %v5070, %v5071
  %v5073 = vsel %vm26, %v5024, 0.0
  %v5074 = vadd.f32 %v5072, %v5073
  %v5075 = vsel %vm26, %v5025, 0.0
  %v5076 = vadd.f32 %v5074, %v5075
  %v5077 = vsel %vm26, %v5026, 0.0
  %v5078 = vadd.f32 %v5076, %v5077
  %v5079 = vsel %vm26, %v5027, 0.0
  %v5080 = vadd.f32 %v5078, %v5079
  %v5081 = vsel %vm26, %v5028, 0.0
  %v5082 = vadd.f32 %v5080, %v5081
  %v5083 = vsel %vm26, %v5029, 0.0
  %v5084 = vadd.f32 %v5082, %v5083
  %v5085 = vsel %vm26, %v5030, 0.0
  %v5086 = vadd.f32 %v5084, %v5085
  %v5087 = vsel %vm26, %v5031, 0.0
  %v5088 = vadd.f32 %v5086, %v5087
  %v5089 = vsel %vm26, %v5032, 0.0
  %v5090 = vadd.f32 %v5088, %v5089
  %v5091 = vsel %vm26, %v5033, 0.0
  %v5092 = vadd.f32 %v5090, %v5091
  %v5093 = vsel %vm26, %v5034, 0.0
  %v5094 = vadd.f32 %v5092, %v5093
  %v5095 = vsel %vm26, %v5035, 0.0
  %v5096 = vadd.f32 %v5094, %v5095
  %v5097 = vsel %vm26, %v5036, 0.0
  %v5098 = vadd.f32 %v5096, %v5097
  %v5099 = vsel %vm26, %v5037, 0.0
  %v5100 = vadd.f32 %v5098, %v5099
  %v5101 = vrot.slane %v5100, 4
  %v5102 = vadd.f32 %v5100, %v5101
  %v5103 = vrot.slane %v5102, 2
  %v5104 = vadd.f32 %v5102, %v5103
  %v5105 = vrot.slane %v5104, 1
  %v5106 = vadd.f32 %v5104, %v5105
  %v5107 = vmul.f32 %v5005, 0.00390625
  %v5108 = vmul.f32 %v5106, 0.00390625
  %v5109 = vmul.f32 %v5107, %v5107
  %v5110 = vsub.f32 %v5108, %v5109
  %v5111 = vadd.f32 %v5110, 1e-05
  %v5112 = vrsqrt.pop %v5111
  %v5113 = vmul.f32 %v115, %v5112
  %v5114 = vmul.f32 %v5107, %v5113
  %v5116 = vrot.slane %v5114, 4
  %v5118 = vsub.f32 %v115, %v5116
  %v5119 = vlaneseq
  %v5120 = vshrl.u32 %v5119, 7
  %v5121 = vsub.s32 1, %v5120
  %v5122 = vrot.slane %v5113, %v5121
  %v5123 = vmul.f32 %v4779, %v5122
  %v5124 = vmul.f32 %v4784, %v5122
  %v5125 = vmul.f32 %v4789, %v5122
  %v5126 = vmul.f32 %v4794, %v5122
  %v5127 = vmul.f32 %v4799, %v5122
  %v5128 = vmul.f32 %v4804, %v5122
  %v5129 = vmul.f32 %v4809, %v5122
  %v5130 = vmul.f32 %v4814, %v5122
  %v5131 = vmul.f32 %v4819, %v5122
  %v5132 = vmul.f32 %v4824, %v5122
  %v5133 = vmul.f32 %v4829, %v5122
  %v5134 = vmul.f32 %v4834, %v5122
  %v5135 = vmul.f32 %v4839, %v5122
  %v5136 = vmul.f32 %v4844, %v5122
  %v5137 = vmul.f32 %v4849, %v5122
  %v5138 = vmul.f32 %v4854, %v5122
  %v5139 = vmul.f32 %v4859, %v5122
  %v5140 = vmul.f32 %v4864, %v5122
  %v5141 = vmul.f32 %v4869, %v5122
  %v5142 = vmul.f32 %v4874, %v5122
  %v5143 = vmul.f32 %v4879, %v5122
  %v5144 = vmul.f32 %v4884, %v5122
  %v5145 = vmul.f32 %v4889, %v5122
  %v5146 = vmul.f32 %v4894, %v5122
  %v5147 = vmul.f32 %v4899, %v5122
  %v5148 = vmul.f32 %v4904, %v5122
  %v5149 = vmul.f32 %v4909, %v5122
  %v5150 = vmul.f32 %v4914, %v5122
  %v5151 = vmul.f32 %v4919, %v5122
  %v5152 = vmul.f32 %v4924, %v5122
  %v5153 = vmul.f32 %v4929, %v5122
  %v5154 = vmul.f32 %v4934, %v5122
  %v5155 = vlaneseq
  %v5156 = vshrl.u32 %v5155, 7
  %v5157 = vsub.s32 5, %v5156
  %v5158 = vrot.slane %v5118, %v5157
  %v5159 = vadd.f32 %v5123, %v5158
  %v5160 = vadd.f32 %v5124, %v5158
  %v5161 = vadd.f32 %v5125, %v5158
  %v5162 = vadd.f32 %v5126, %v5158
  %v5163 = vadd.f32 %v5127, %v5158
  %v5164 = vadd.f32 %v5128, %v5158
  %v5165 = vadd.f32 %v5129, %v5158
  %v5166 = vadd.f32 %v5130, %v5158
  %v5167 = vadd.f32 %v5131, %v5158
  %v5168 = vadd.f32 %v5132, %v5158
  %v5169 = vadd.f32 %v5133, %v5158
  %v5170 = vadd.f32 %v5134, %v5158
  %v5171 = vadd.f32 %v5135, %v5158
  %v5172 = vadd.f32 %v5136, %v5158
  %v5173 = vadd.f32 %v5137, %v5158
  %v5174 = vadd.f32 %v5138, %v5158
  %v5175 = vadd.f32 %v5139, %v5158
  %v5176 = vadd.f32 %v5140, %v5158
  %v5177 = vadd.f32 %v5141, %v5158
  %v5178 = vadd.f32 %v5142, %v5158
  %v5179 = vadd.f32 %v5143, %v5158
  %v5180 = vadd.f32 %v5144, %v5158
  %v5181 = vadd.f32 %v5145, %v5158
  %v5182 = vadd.f32 %v5146, %v5158
  %v5183 = vadd.f32 %v5147, %v5158
  %v5184 = vadd.f32 %v5148, %v5158
  %v5185 = vadd.f32 %v5149, %v5158
  %v5186 = vadd.f32 %v5150, %v5158
  %v5187 = vadd.f32 %v5151, %v5158
  %v5188 = vadd.f32 %v5152, %v5158
  %v5189 = vadd.f32 %v5153, %v5158
  %v5190 = vadd.f32 %v5154, %v5158
  %v5191 = vmax.f32 %v5159, 0.0
  %v5192 = vmax.f32 %v5160, 0.0
  %v5193 = vmax.f32 %v5161, 0.0
  %v5194 = vmax.f32 %v5162, 0.0
  %v5195 = vmax.f32 %v5163, 0.0
  %v5196 = vmax.f32 %v5164, 0.0
  %v5197 = vmax.f32 %v5165, 0.0
  %v5198 = vmax.f32 %v5166, 0.0
  %v5199 = vmax.f32 %v5167, 0.0
  %v5200 = vmax.f32 %v5168, 0.0
  %v5201 = vmax.f32 %v5169, 0.0
  %v5202 = vmax.f32 %v5170, 0.0
  %v5203 = vmax.f32 %v5171, 0.0
  %v5204 = vmax.f32 %v5172, 0.0
  %v5205 = vmax.f32 %v5173, 0.0
  %v5206 = vmax.f32 %v5174, 0.0
  %v5207 = vmax.f32 %v5175, 0.0
  %v5208 = vmax.f32 %v5176, 0.0
  %v5209 = vmax.f32 %v5177, 0.0
  %v5210 = vmax.f32 %v5178, 0.0
  %v5211 = vmax.f32 %v5179, 0.0
  %v5212 = vmax.f32 %v5180, 0.0
  %v5213 = vmax.f32 %v5181, 0.0
  %v5214 = vmax.f32 %v5182, 0.0
  %v5215 = vmax.f32 %v5183, 0.0
  %v5216 = vmax.f32 %v5184, 0.0
  %v5217 = vmax.f32 %v5185, 0.0
  %v5218 = vmax.f32 %v5186, 0.0
  %v5219 = vmax.f32 %v5187, 0.0
  %v5220 = vmax.f32 %v5188, 0.0
  %v5221 = vmax.f32 %v5189, 0.0
  %v5222 = vmax.f32 %v5190, 0.0
  %5223 = vst.msk [vmem:[%s148 + $0x1] sm:$0xff] %vm26, %v5191
  %5224 = vst.msk [vmem:[%s148 + $0x9] sm:$0xff] %vm26, %v5192
  %5225 = vst.msk [vmem:[%s148 + $0x19] sm:$0xff] %vm26, %v5193
  %5226 = vst.msk [vmem:[%s148 + $0x21] sm:$0xff] %vm26, %v5194
  %5227 = vst.msk [vmem:[%s148 + $0x31] sm:$0xff] %vm26, %v5195
  %5228 = vst.msk [vmem:[%s148 + $0x39] sm:$0xff] %vm26, %v5196
  %5229 = vst.msk [vmem:[%s148 + $0x49] sm:$0xff] %vm26, %v5197
  %5230 = vst.msk [vmem:[%s148 + $0x51] sm:$0xff] %vm26, %v5198
  %5231 = vst.msk [vmem:[%s148 + $0x61] sm:$0xff] %vm26, %v5199
  %5232 = vst.msk [vmem:[%s148 + $0x69] sm:$0xff] %vm26, %v5200
  %5233 = vst.msk [vmem:[%s148 + $0x79] sm:$0xff] %vm26, %v5201
  %5234 = vst.msk [vmem:[%s148 + $0x81] sm:$0xff] %vm26, %v5202
  %5235 = vst.msk [vmem:[%s148 + $0x91] sm:$0xff] %vm26, %v5203
  %5236 = vst.msk [vmem:[%s148 + $0x99] sm:$0xff] %vm26, %v5204
  %5237 = vst.msk [vmem:[%s148 + $0xa9] sm:$0xff] %vm26, %v5205
  %5238 = vst.msk [vmem:[%s148 + $0xb1] sm:$0xff] %vm26, %v5206
  %5239 = vst.msk [vmem:[%s148 + $0xc1] sm:$0xff] %vm26, %v5207
  %5240 = vst.msk [vmem:[%s148 + $0xc9] sm:$0xff] %vm26, %v5208
  %5241 = vst.msk [vmem:[%s148 + $0xd9] sm:$0xff] %vm26, %v5209
  %5242 = vst.msk [vmem:[%s148 + $0xe1] sm:$0xff] %vm26, %v5210
  %5243 = vst.msk [vmem:[%s148 + $0xf1] sm:$0xff] %vm26, %v5211
  %5244 = vst.msk [vmem:[%s148 + $0xf9] sm:$0xff] %vm26, %v5212
  %5245 = vst.msk [vmem:[%s148 + $0x109] sm:$0xff] %vm26, %v5213
  %5246 = vst.msk [vmem:[%s148 + $0x111] sm:$0xff] %vm26, %v5214
  %5247 = vst.msk [vmem:[%s148 + $0x121] sm:$0xff] %vm26, %v5215
  %5248 = vst.msk [vmem:[%s148 + $0x129] sm:$0xff] %vm26, %v5216
  %5249 = vst.msk [vmem:[%s148 + $0x139] sm:$0xff] %vm26, %v5217
  %5250 = vst.msk [vmem:[%s148 + $0x141] sm:$0xff] %vm26, %v5218
  %5251 = vst.msk [vmem:[%s148 + $0x151] sm:$0xff] %vm26, %v5219
  %5252 = vst.msk [vmem:[%s148 + $0x159] sm:$0xff] %vm26, %v5220
  %5253 = vst.msk [vmem:[%s148 + $0x169] sm:$0xff] %vm26, %v5221
  %5254 = vst.msk [vmem:[%s148 + $0x171] sm:$0xff] %vm26, %v5222
  %v5255 = vld [vmem:[#allocation2] sm:$0xff]
  %v5256 = vld [vmem:[#allocation2 + $0x8] sm:$0xff]
  %v5257 = vld [vmem:[#allocation2 + $0x18] sm:$0xff]
  %v5258 = vld [vmem:[#allocation2 + $0x20] sm:$0xff]
  %v5259 = vld [vmem:[#allocation2 + $0x30] sm:$0xff]
  %v5260 = vld [vmem:[#allocation2 + $0x38] sm:$0xff]
  %v5261 = vld [vmem:[#allocation2 + $0x48] sm:$0xff]
  %v5262 = vld [vmem:[#allocation2 + $0x50] sm:$0xff]
  %v5263 = vld [vmem:[#allocation2 + $0x60] sm:$0xff]
  %v5264 = vld [vmem:[#allocation2 + $0x68] sm:$0xff]
  %v5265 = vld [vmem:[#allocation2 + $0x78] sm:$0xff]
  %v5266 = vld [vmem:[#allocation2 + $0x80] sm:$0xff]
  %v5267 = vld [vmem:[#allocation2 + $0x90] sm:$0xff]
  %v5268 = vld [vmem:[#allocation2 + $0x98] sm:$0xff]
  %v5269 = vld [vmem:[#allocation2 + $0xa8] sm:$0xff]
  %v5270 = vld [vmem:[#allocation2 + $0xb0] sm:$0xff]
  %v5271 = vld [vmem:[#allocation2 + $0xc0] sm:$0xff]
  %v5272 = vld [vmem:[#allocation2 + $0xc8] sm:$0xff]
  %v5273 = vld [vmem:[#allocation2 + $0xd8] sm:$0xff]
  %v5274 = vld [vmem:[#allocation2 + $0xe0] sm:$0xff]
  %v5275 = vld [vmem:[#allocation2 + $0xf0] sm:$0xff]
  %v5276 = vld [vmem:[#allocation2 + $0xf8] sm:$0xff]
  %v5277 = vld [vmem:[#allocation2 + $0x108] sm:$0xff]
  %v5278 = vld [vmem:[#allocation2 + $0x110] sm:$0xff]
  %v5279 = vld [vmem:[#allocation2 + $0x120] sm:$0xff]
  %v5280 = vld [vmem:[#allocation2 + $0x128] sm:$0xff]
  %v5281 = vld [vmem:[#allocation2 + $0x138] sm:$0xff]
  %v5282 = vld [vmem:[#allocation2 + $0x140] sm:$0xff]
  %v5283 = vld [vmem:[#allocation2 + $0x150] sm:$0xff]
  %v5284 = vld [vmem:[#allocation2 + $0x158] sm:$0xff]
  %v5285 = vld [vmem:[#allocation2 + $0x168] sm:$0xff]
  %v5286 = vld [vmem:[#allocation2 + $0x170] sm:$0xff]
  %5287 = vst.msk [vmem:[#allocation4] sm:$0xff] %vm26, %v5255
  %5288 = vst.msk [vmem:[#allocation4 + $0x28] sm:$0xff] %vm26, %v5256
  %5289 = vst.msk [vmem:[#allocation4 + $0x50] sm:$0xff] %vm26, %v5257
  %5290 = vst.msk [vmem:[#allocation4 + $0x78] sm:$0xff] %vm26, %v5258
  %5291 = vst.msk [vmem:[#allocation4 + $0xa0] sm:$0xff] %vm26, %v5259
  %5292 = vst.msk [vmem:[#allocation4 + $0xc8] sm:$0xff] %vm26, %v5260
  %5293 = vst.msk [vmem:[#allocation4 + $0xf0] sm:$0xff] %vm26, %v5261
  %5294 = vst.msk [vmem:[#allocation4 + $0x118] sm:$0xff] %vm26, %v5262
  %5295 = vst.msk [vmem:[#allocation4 + $0x140] sm:$0xff] %vm26, %v5263
  %5296 = vst.msk [vmem:[#allocation4 + $0x168] sm:$0xff] %vm26, %v5264
  %5297 = vst.msk [vmem:[#allocation4 + $0x190] sm:$0xff] %vm26, %v5265
  %5298 = vst.msk [vmem:[#allocation4 + $0x1b8] sm:$0xff] %vm26, %v5266
  %5299 = vst.msk [vmem:[#allocation4 + $0x1e0] sm:$0xff] %vm26, %v5267
  %5300 = vst.msk [vmem:[#allocation4 + $0x208] sm:$0xff] %vm26, %v5268
  %5301 = vst.msk [vmem:[#allocation4 + $0x230] sm:$0xff] %vm26, %v5269
  %5302 = vst.msk [vmem:[#allocation4 + $0x258] sm:$0xff] %vm26, %v5270
  %5303 = vst.msk [vmem:[#allocation4 + $0x280] sm:$0xff] %vm26, %v5271
  %5304 = vst.msk [vmem:[#allocation4 + $0x2a8] sm:$0xff] %vm26, %v5272
  %5305 = vst.msk [vmem:[#allocation4 + $0x2d0] sm:$0xff] %vm26, %v5273
  %5306 = vst.msk [vmem:[#allocation4 + $0x2f8] sm:$0xff] %vm26, %v5274
  %5307 = vst.msk [vmem:[#allocation4 + $0x320] sm:$0xff] %vm26, %v5275
  %5308 = vst.msk [vmem:[#allocation4 + $0x348] sm:$0xff] %vm26, %v5276
  %5309 = vst.msk [vmem:[#allocation4 + $0x370] sm:$0xff] %vm26, %v5277
  %5310 = vst.msk [vmem:[#allocation4 + $0x398] sm:$0xff] %vm26, %v5278
  %5311 = vst.msk [vmem:[#allocation4 + $0x3c0] sm:$0xff] %vm26, %v5279
  %5312 = vst.msk [vmem:[#allocation4 + $0x3e8] sm:$0xff] %vm26, %v5280
  %5313 = vst.msk [vmem:[#allocation4 + $0x410] sm:$0xff] %vm26, %v5281
  %5314 = vst.msk [vmem:[#allocation4 + $0x438] sm:$0xff] %vm26, %v5282
  %5315 = vst.msk [vmem:[#allocation4 + $0x460] sm:$0xff] %vm26, %v5283
  %5316 = vst.msk [vmem:[#allocation4 + $0x488] sm:$0xff] %vm26, %v5284
  %5317 = vst.msk [vmem:[#allocation4 + $0x4b0] sm:$0xff] %vm26, %v5285
  %5318 = vst.msk [vmem:[#allocation4 + $0x4d8] sm:$0xff] %vm26, %v5286
  %v5319 = vld [vmem:[#allocation2 + $0x1] sm:$0xff]
  %v5320 = vld [vmem:[#allocation2 + $0x9] sm:$0xff]
  %v5321 = vld [vmem:[#allocation2 + $0x19] sm:$0xff]
  %v5322 = vld [vmem:[#allocation2 + $0x21] sm:$0xff]
  %v5323 = vld [vmem:[#allocation2 + $0x31] sm:$0xff]
  %v5324 = vld [vmem:[#allocation2 + $0x39] sm:$0xff]
  %v5325 = vld [vmem:[#allocation2 + $0x49] sm:$0xff]
  %v5326 = vld [vmem:[#allocation2 + $0x51] sm:$0xff]
  %v5327 = vld [vmem:[#allocation2 + $0x61] sm:$0xff]
  %v5328 = vld [vmem:[#allocation2 + $0x69] sm:$0xff]
  %v5329 = vld [vmem:[#allocation2 + $0x79] sm:$0xff]
  %v5330 = vld [vmem:[#allocation2 + $0x81] sm:$0xff]
  %v5331 = vld [vmem:[#allocation2 + $0x91] sm:$0xff]
  %v5332 = vld [vmem:[#allocation2 + $0x99] sm:$0xff]
  %v5333 = vld [vmem:[#allocation2 + $0xa9] sm:$0xff]
  %v5334 = vld [vmem:[#allocation2 + $0xb1] sm:$0xff]
  %v5335 = vld [vmem:[#allocation2 + $0xc1] sm:$0xff]
  %v5336 = vld [vmem:[#allocation2 + $0xc9] sm:$0xff]
  %v5337 = vld [vmem:[#allocation2 + $0xd9] sm:$0xff]
  %v5338 = vld [vmem:[#allocation2 + $0xe1] sm:$0xff]
  %v5339 = vld [vmem:[#allocation2 + $0xf1] sm:$0xff]
  %v5340 = vld [vmem:[#allocation2 + $0xf9] sm:$0xff]
  %v5341 = vld [vmem:[#allocation2 + $0x109] sm:$0xff]
  %v5342 = vld [vmem:[#allocation2 + $0x111] sm:$0xff]
  %v5343 = vld [vmem:[#allocation2 + $0x121] sm:$0xff]
  %v5344 = vld [vmem:[#allocation2 + $0x129] sm:$0xff]
  %v5345 = vld [vmem:[#allocation2 + $0x139] sm:$0xff]
  %v5346 = vld [vmem:[#allocation2 + $0x141] sm:$0xff]
  %v5347 = vld [vmem:[#allocation2 + $0x151] sm:$0xff]
  %v5348 = vld [vmem:[#allocation2 + $0x159] sm:$0xff]
  %v5349 = vld [vmem:[#allocation2 + $0x169] sm:$0xff]
  %v5350 = vld [vmem:[#allocation2 + $0x171] sm:$0xff]
  %5383 = vrot.lane.b32.xlu0 %v5319, 64
  %v5384 = vpop.permute.xlu0 %5383
  %5385 = vrot.lane.b32.xlu0 %v5320, 64
  %v5386 = vpop.permute.xlu0 %5385
  %5387 = vrot.lane.b32.xlu0 %v5321, 64
  %v5388 = vpop.permute.xlu0 %5387
  %5389 = vrot.lane.b32.xlu0 %v5322, 64
  %v5390 = vpop.permute.xlu0 %5389
  %5391 = vrot.lane.b32.xlu0 %v5323, 64
  %v5392 = vpop.permute.xlu0 %5391
  %5393 = vrot.lane.b32.xlu0 %v5324, 64
  %v5394 = vpop.permute.xlu0 %5393
  %5395 = vrot.lane.b32.xlu0 %v5325, 64
  %v5396 = vpop.permute.xlu0 %5395
  %5397 = vrot.lane.b32.xlu0 %v5326, 64
  %v5398 = vpop.permute.xlu0 %5397
  %5399 = vrot.lane.b32.xlu0 %v5327, 64
  %v5400 = vpop.permute.xlu0 %5399
  %5401 = vrot.lane.b32.xlu0 %v5328, 64
  %v5402 = vpop.permute.xlu0 %5401
  %5403 = vrot.lane.b32.xlu0 %v5329, 64
  %v5404 = vpop.permute.xlu0 %5403
  %5405 = vrot.lane.b32.xlu0 %v5330, 64
  %v5406 = vpop.permute.xlu0 %5405
  %5407 = vrot.lane.b32.xlu0 %v5331, 64
  %v5408 = vpop.permute.xlu0 %5407
  %5409 = vrot.lane.b32.xlu0 %v5332, 64
  %v5410 = vpop.permute.xlu0 %5409
  %5411 = vrot.lane.b32.xlu0 %v5333, 64
  %v5412 = vpop.permute.xlu0 %5411
  %5413 = vrot.lane.b32.xlu0 %v5334, 64
  %v5414 = vpop.permute.xlu0 %5413
  %5415 = vrot.lane.b32.xlu0 %v5335, 64
  %v5416 = vpop.permute.xlu0 %5415
  %5417 = vrot.lane.b32.xlu0 %v5336, 64
  %v5418 = vpop.permute.xlu0 %5417
  %5419 = vrot.lane.b32.xlu0 %v5337, 64
  %v5420 = vpop.permute.xlu0 %5419
  %5421 = vrot.lane.b32.xlu0 %v5338, 64
  %v5422 = vpop.permute.xlu0 %5421
  %5423 = vrot.lane.b32.xlu0 %v5339, 64
  %v5424 = vpop.permute.xlu0 %5423
  %5425 = vrot.lane.b32.xlu0 %v5340, 64
  %v5426 = vpop.permute.xlu0 %5425
  %5427 = vrot.lane.b32.xlu0 %v5341, 64
  %v5428 = vpop.permute.xlu0 %5427
  %5429 = vrot.lane.b32.xlu0 %v5342, 64
  %v5430 = vpop.permute.xlu0 %5429
  %5431 = vrot.lane.b32.xlu0 %v5343, 64
  %v5432 = vpop.permute.xlu0 %5431
  %5433 = vrot.lane.b32.xlu0 %v5344, 64
  %v5434 = vpop.permute.xlu0 %5433
  %5435 = vrot.lane.b32.xlu0 %v5345, 64
  %v5436 = vpop.permute.xlu0 %5435
  %5437 = vrot.lane.b32.xlu0 %v5346, 64
  %v5438 = vpop.permute.xlu0 %5437
  %5439 = vrot.lane.b32.xlu0 %v5347, 64
  %v5440 = vpop.permute.xlu0 %5439
  %5441 = vrot.lane.b32.xlu0 %v5348, 64
  %v5442 = vpop.permute.xlu0 %5441
  %5443 = vrot.lane.b32.xlu0 %v5349, 64
  %v5444 = vpop.permute.xlu0 %5443
  %5445 = vrot.lane.b32.xlu0 %v5350, 64
  %v5446 = vpop.permute.xlu0 %5445
  %5479 = vst.msk [vmem:[#allocation4] sm:$0xff] %vm3068, %v5384
  %5480 = vst.msk [vmem:[#allocation4 + $0x28] sm:$0xff] %vm3068, %v5386
  %5481 = vst.msk [vmem:[#allocation4 + $0x50] sm:$0xff] %vm3068, %v5388
  %5482 = vst.msk [vmem:[#allocation4 + $0x78] sm:$0xff] %vm3068, %v5390
  %5483 = vst.msk [vmem:[#allocation4 + $0xa0] sm:$0xff] %vm3068, %v5392
  %5484 = vst.msk [vmem:[#allocation4 + $0xc8] sm:$0xff] %vm3068, %v5394
  %5485 = vst.msk [vmem:[#allocation4 + $0xf0] sm:$0xff] %vm3068, %v5396
  %5486 = vst.msk [vmem:[#allocation4 + $0x118] sm:$0xff] %vm3068, %v5398
  %5487 = vst.msk [vmem:[#allocation4 + $0x140] sm:$0xff] %vm3068, %v5400
  %5488 = vst.msk [vmem:[#allocation4 + $0x168] sm:$0xff] %vm3068, %v5402
  %5489 = vst.msk [vmem:[#allocation4 + $0x190] sm:$0xff] %vm3068, %v5404
  %5490 = vst.msk [vmem:[#allocation4 + $0x1b8] sm:$0xff] %vm3068, %v5406
  %5491 = vst.msk [vmem:[#allocation4 + $0x1e0] sm:$0xff] %vm3068, %v5408
  %5492 = vst.msk [vmem:[#allocation4 + $0x208] sm:$0xff] %vm3068, %v5410
  %5493 = vst.msk [vmem:[#allocation4 + $0x230] sm:$0xff] %vm3068, %v5412
  %5494 = vst.msk [vmem:[#allocation4 + $0x258] sm:$0xff] %vm3068, %v5414
  %5495 = vst.msk [vmem:[#allocation4 + $0x280] sm:$0xff] %vm3068, %v5416
  %5496 = vst.msk [vmem:[#allocation4 + $0x2a8] sm:$0xff] %vm3068, %v5418
  %5497 = vst.msk [vmem:[#allocation4 + $0x2d0] sm:$0xff] %vm3068, %v5420
  %5498 = vst.msk [vmem:[#allocation4 + $0x2f8] sm:$0xff] %vm3068, %v5422
  %5499 = vst.msk [vmem:[#allocation4 + $0x320] sm:$0xff] %vm3068, %v5424
  %5500 = vst.msk [vmem:[#allocation4 + $0x348] sm:$0xff] %vm3068, %v5426
  %5501 = vst.msk [vmem:[#allocation4 + $0x370] sm:$0xff] %vm3068, %v5428
  %5502 = vst.msk [vmem:[#allocation4 + $0x398] sm:$0xff] %vm3068, %v5430
  %5503 = vst.msk [vmem:[#allocation4 + $0x3c0] sm:$0xff] %vm3068, %v5432
  %5504 = vst.msk [vmem:[#allocation4 + $0x3e8] sm:$0xff] %vm3068, %v5434
  %5505 = vst.msk [vmem:[#allocation4 + $0x410] sm:$0xff] %vm3068, %v5436
  %5506 = vst.msk [vmem:[#allocation4 + $0x438] sm:$0xff] %vm3068, %v5438
  %5507 = vst.msk [vmem:[#allocation4 + $0x460] sm:$0xff] %vm3068, %v5440
  %5508 = vst.msk [vmem:[#allocation4 + $0x488] sm:$0xff] %vm3068, %v5442
  %5509 = vst.msk [vmem:[#allocation4 + $0x4b0] sm:$0xff] %vm3068, %v5444
  %5510 = vst.msk [vmem:[#allocation4 + $0x4d8] sm:$0xff] %vm3068, %v5446
  %v5511 = vld [vmem:[#allocation2 + $0x2] sm:$0xff]
  %v5512 = vld [vmem:[#allocation2 + $0xa] sm:$0xff]
  %v5513 = vld [vmem:[#allocation2 + $0x1a] sm:$0xff]
  %v5514 = vld [vmem:[#allocation2 + $0x22] sm:$0xff]
  %v5515 = vld [vmem:[#allocation2 + $0x32] sm:$0xff]
  %v5516 = vld [vmem:[#allocation2 + $0x3a] sm:$0xff]
  %v5517 = vld [vmem:[#allocation2 + $0x4a] sm:$0xff]
  %v5518 = vld [vmem:[#allocation2 + $0x52] sm:$0xff]
  %v5519 = vld [vmem:[#allocation2 + $0x62] sm:$0xff]
  %v5520 = vld [vmem:[#allocation2 + $0x6a] sm:$0xff]
  %v5521 = vld [vmem:[#allocation2 + $0x7a] sm:$0xff]
  %v5522 = vld [vmem:[#allocation2 + $0x82] sm:$0xff]
  %v5523 = vld [vmem:[#allocation2 + $0x92] sm:$0xff]
  %v5524 = vld [vmem:[#allocation2 + $0x9a] sm:$0xff]
  %v5525 = vld [vmem:[#allocation2 + $0xaa] sm:$0xff]
  %v5526 = vld [vmem:[#allocation2 + $0xb2] sm:$0xff]
  %v5527 = vld [vmem:[#allocation2 + $0xc2] sm:$0xff]
  %v5528 = vld [vmem:[#allocation2 + $0xca] sm:$0xff]
  %v5529 = vld [vmem:[#allocation2 + $0xda] sm:$0xff]
  %v5530 = vld [vmem:[#allocation2 + $0xe2] sm:$0xff]
  %v5531 = vld [vmem:[#allocation2 + $0xf2] sm:$0xff]
  %v5532 = vld [vmem:[#allocation2 + $0xfa] sm:$0xff]
  %v5533 = vld [vmem:[#allocation2 + $0x10a] sm:$0xff]
  %v5534 = vld [vmem:[#allocation2 + $0x112] sm:$0xff]
  %v5535 = vld [vmem:[#allocation2 + $0x122] sm:$0xff]
  %v5536 = vld [vmem:[#allocation2 + $0x12a] sm:$0xff]
  %v5537 = vld [vmem:[#allocation2 + $0x13a] sm:$0xff]
  %v5538 = vld [vmem:[#allocation2 + $0x142] sm:$0xff]
  %v5539 = vld [vmem:[#allocation2 + $0x152] sm:$0xff]
  %v5540 = vld [vmem:[#allocation2 + $0x15a] sm:$0xff]
  %v5541 = vld [vmem:[#allocation2 + $0x16a] sm:$0xff]
  %v5542 = vld [vmem:[#allocation2 + $0x172] sm:$0xff]
  %5543 = vst.msk [vmem:[#allocation4 + $0x8] sm:$0xff] %vm26, %v5511
  %5544 = vst.msk [vmem:[#allocation4 + $0x30] sm:$0xff] %vm26, %v5512
  %5545 = vst.msk [vmem:[#allocation4 + $0x58] sm:$0xff] %vm26, %v5513
  %5546 = vst.msk [vmem:[#allocation4 + $0x80] sm:$0xff] %vm26, %v5514
  %5547 = vst.msk [vmem:[#allocation4 + $0xa8] sm:$0xff] %vm26, %v5515
  %5548 = vst.msk [vmem:[#allocation4 + $0xd0] sm:$0xff] %vm26, %v5516
  %5549 = vst.msk [vmem:[#allocation4 + $0xf8] sm:$0xff] %vm26, %v5517
  %5550 = vst.msk [vmem:[#allocation4 + $0x120] sm:$0xff] %vm26, %v5518
  %5551 = vst.msk [vmem:[#allocation4 + $0x148] sm:$0xff] %vm26, %v5519
  %5552 = vst.msk [vmem:[#allocation4 + $0x170] sm:$0xff] %vm26, %v5520
  %5553 = vst.msk [vmem:[#allocation4 + $0x198] sm:$0xff] %vm26, %v5521
  %5554 = vst.msk [vmem:[#allocation4 + $0x1c0] sm:$0xff] %vm26, %v5522
  %5555 = vst.msk [vmem:[#allocation4 + $0x1e8] sm:$0xff] %vm26, %v5523
  %5556 = vst.msk [vmem:[#allocation4 + $0x210] sm:$0xff] %vm26, %v5524
  %5557 = vst.msk [vmem:[#allocation4 + $0x238] sm:$0xff] %vm26, %v5525
  %5558 = vst.msk [vmem:[#allocation4 + $0x260] sm:$0xff] %vm26, %v5526
  %5559 = vst.msk [vmem:[#allocation4 + $0x288] sm:$0xff] %vm26, %v5527
  %5560 = vst.msk [vmem:[#allocation4 + $0x2b0] sm:$0xff] %vm26, %v5528
  %5561 = vst.msk [vmem:[#allocation4 + $0x2d8] sm:$0xff] %vm26, %v5529
  %5562 = vst.msk [vmem:[#allocation4 + $0x300] sm:$0xff] %vm26, %v5530
  %5563 = vst.msk [vmem:[#allocation4 + $0x328] sm:$0xff] %vm26, %v5531
  %5564 = vst.msk [vmem:[#allocation4 + $0x350] sm:$0xff] %vm26, %v5532
  %5565 = vst.msk [vmem:[#allocation4 + $0x378] sm:$0xff] %vm26, %v5533
  %5566 = vst.msk [vmem:[#allocation4 + $0x3a0] sm:$0xff] %vm26, %v5534
  %5567 = vst.msk [vmem:[#allocation4 + $0x3c8] sm:$0xff] %vm26, %v5535
  %5568 = vst.msk [vmem:[#allocation4 + $0x3f0] sm:$0xff] %vm26, %v5536
  %5569 = vst.msk [vmem:[#allocation4 + $0x418] sm:$0xff] %vm26, %v5537
  %5570 = vst.msk [vmem:[#allocation4 + $0x440] sm:$0xff] %vm26, %v5538
  %5571 = vst.msk [vmem:[#allocation4 + $0x468] sm:$0xff] %vm26, %v5539
  %5572 = vst.msk [vmem:[#allocation4 + $0x490] sm:$0xff] %vm26, %v5540
  %5573 = vst.msk [vmem:[#allocation4 + $0x4b8] sm:$0xff] %vm26, %v5541
  %5574 = vst.msk [vmem:[#allocation4 + $0x4e0] sm:$0xff] %vm26, %v5542
  %v5575 = vld [vmem:[%s148] sm:$0xff]
  %v5576 = vld [vmem:[%s148 + $0x8] sm:$0xff]
  %v5577 = vld [vmem:[%s148 + $0x18] sm:$0xff]
  %v5578 = vld [vmem:[%s148 + $0x20] sm:$0xff]
  %v5579 = vld [vmem:[%s148 + $0x30] sm:$0xff]
  %v5580 = vld [vmem:[%s148 + $0x38] sm:$0xff]
  %v5581 = vld [vmem:[%s148 + $0x48] sm:$0xff]
  %v5582 = vld [vmem:[%s148 + $0x50] sm:$0xff]
  %v5583 = vld [vmem:[%s148 + $0x60] sm:$0xff]
  %v5584 = vld [vmem:[%s148 + $0x68] sm:$0xff]
  %v5585 = vld [vmem:[%s148 + $0x78] sm:$0xff]
  %v5586 = vld [vmem:[%s148 + $0x80] sm:$0xff]
  %v5587 = vld [vmem:[%s148 + $0x90] sm:$0xff]
  %v5588 = vld [vmem:[%s148 + $0x98] sm:$0xff]
  %v5589 = vld [vmem:[%s148 + $0xa8] sm:$0xff]
  %v5590 = vld [vmem:[%s148 + $0xb0] sm:$0xff]
  %v5591 = vld [vmem:[%s148 + $0xc0] sm:$0xff]
  %v5592 = vld [vmem:[%s148 + $0xc8] sm:$0xff]
  %v5593 = vld [vmem:[%s148 + $0xd8] sm:$0xff]
  %v5594 = vld [vmem:[%s148 + $0xe0] sm:$0xff]
  %v5595 = vld [vmem:[%s148 + $0xf0] sm:$0xff]
  %v5596 = vld [vmem:[%s148 + $0xf8] sm:$0xff]
  %v5597 = vld [vmem:[%s148 + $0x108] sm:$0xff]
  %v5598 = vld [vmem:[%s148 + $0x110] sm:$0xff]
  %v5599 = vld [vmem:[%s148 + $0x120] sm:$0xff]
  %v5600 = vld [vmem:[%s148 + $0x128] sm:$0xff]
  %v5601 = vld [vmem:[%s148 + $0x138] sm:$0xff]
  %v5602 = vld [vmem:[%s148 + $0x140] sm:$0xff]
  %v5603 = vld [vmem:[%s148 + $0x150] sm:$0xff]
  %v5604 = vld [vmem:[%s148 + $0x158] sm:$0xff]
  %v5605 = vld [vmem:[%s148 + $0x168] sm:$0xff]
  %v5606 = vld [vmem:[%s148 + $0x170] sm:$0xff]
  %5639 = vrot.lane.b32.xlu0 %v5575, 64
  %v5640 = vpop.permute.xlu0 %5639
  %5641 = vrot.lane.b32.xlu0 %v5576, 64
  %v5642 = vpop.permute.xlu0 %5641
  %5643 = vrot.lane.b32.xlu0 %v5577, 64
  %v5644 = vpop.permute.xlu0 %5643
  %5645 = vrot.lane.b32.xlu0 %v5578, 64
  %v5646 = vpop.permute.xlu0 %5645
  %5647 = vrot.lane.b32.xlu0 %v5579, 64
  %v5648 = vpop.permute.xlu0 %5647
  %5649 = vrot.lane.b32.xlu0 %v5580, 64
  %v5650 = vpop.permute.xlu0 %5649
  %5651 = vrot.lane.b32.xlu0 %v5581, 64
  %v5652 = vpop.permute.xlu0 %5651
  %5653 = vrot.lane.b32.xlu0 %v5582, 64
  %v5654 = vpop.permute.xlu0 %5653
  %5655 = vrot.lane.b32.xlu0 %v5583, 64
  %v5656 = vpop.permute.xlu0 %5655
  %5657 = vrot.lane.b32.xlu0 %v5584, 64
  %v5658 = vpop.permute.xlu0 %5657
  %5659 = vrot.lane.b32.xlu0 %v5585, 64
  %v5660 = vpop.permute.xlu0 %5659
  %5661 = vrot.lane.b32.xlu0 %v5586, 64
  %v5662 = vpop.permute.xlu0 %5661
  %5663 = vrot.lane.b32.xlu0 %v5587, 64
  %v5664 = vpop.permute.xlu0 %5663
  %5665 = vrot.lane.b32.xlu0 %v5588, 64
  %v5666 = vpop.permute.xlu0 %5665
  %5667 = vrot.lane.b32.xlu0 %v5589, 64
  %v5668 = vpop.permute.xlu0 %5667
  %5669 = vrot.lane.b32.xlu0 %v5590, 64
  %v5670 = vpop.permute.xlu0 %5669
  %5671 = vrot.lane.b32.xlu0 %v5591, 64
  %v5672 = vpop.permute.xlu0 %5671
  %5673 = vrot.lane.b32.xlu0 %v5592, 64
  %v5674 = vpop.permute.xlu0 %5673
  %5675 = vrot.lane.b32.xlu0 %v5593, 64
  %v5676 = vpop.permute.xlu0 %5675
  %5677 = vrot.lane.b32.xlu0 %v5594, 64
  %v5678 = vpop.permute.xlu0 %5677
  %5679 = vrot.lane.b32.xlu0 %v5595, 64
  %v5680 = vpop.permute.xlu0 %5679
  %5681 = vrot.lane.b32.xlu0 %v5596, 64
  %v5682 = vpop.permute.xlu0 %5681
  %5683 = vrot.lane.b32.xlu0 %v5597, 64
  %v5684 = vpop.permute.xlu0 %5683
  %5685 = vrot.lane.b32.xlu0 %v5598, 64
  %v5686 = vpop.permute.xlu0 %5685
  %5687 = vrot.lane.b32.xlu0 %v5599, 64
  %v5688 = vpop.permute.xlu0 %5687
  %5689 = vrot.lane.b32.xlu0 %v5600, 64
  %v5690 = vpop.permute.xlu0 %5689
  %5691 = vrot.lane.b32.xlu0 %v5601, 64
  %v5692 = vpop.permute.xlu0 %5691
  %5693 = vrot.lane.b32.xlu0 %v5602, 64
  %v5694 = vpop.permute.xlu0 %5693
  %5695 = vrot.lane.b32.xlu0 %v5603, 64
  %v5696 = vpop.permute.xlu0 %5695
  %5697 = vrot.lane.b32.xlu0 %v5604, 64
  %v5698 = vpop.permute.xlu0 %5697
  %5699 = vrot.lane.b32.xlu0 %v5605, 64
  %v5700 = vpop.permute.xlu0 %5699
  %5701 = vrot.lane.b32.xlu0 %v5606, 64
  %v5702 = vpop.permute.xlu0 %5701
  %5735 = vst.msk [vmem:[#allocation4 + $0x8] sm:$0xff] %vm3068, %v5640
  %5736 = vst.msk [vmem:[#allocation4 + $0x30] sm:$0xff] %vm3068, %v5642
  %5737 = vst.msk [vmem:[#allocation4 + $0x58] sm:$0xff] %vm3068, %v5644
  %5738 = vst.msk [vmem:[#allocation4 + $0x80] sm:$0xff] %vm3068, %v5646
  %5739 = vst.msk [vmem:[#allocation4 + $0xa8] sm:$0xff] %vm3068, %v5648
  %5740 = vst.msk [vmem:[#allocation4 + $0xd0] sm:$0xff] %vm3068, %v5650
  %5741 = vst.msk [vmem:[#allocation4 + $0xf8] sm:$0xff] %vm3068, %v5652
  %5742 = vst.msk [vmem:[#allocation4 + $0x120] sm:$0xff] %vm3068, %v5654
  %5743 = vst.msk [vmem:[#allocation4 + $0x148] sm:$0xff] %vm3068, %v5656
  %5744 = vst.msk [vmem:[#allocation4 + $0x170] sm:$0xff] %vm3068, %v5658
  %5745 = vst.msk [vmem:[#allocation4 + $0x198] sm:$0xff] %vm3068, %v5660
  %5746 = vst.msk [vmem:[#allocation4 + $0x1c0] sm:$0xff] %vm3068, %v5662
  %5747 = vst.msk [vmem:[#allocation4 + $0x1e8] sm:$0xff] %vm3068, %v5664
  %5748 = vst.msk [vmem:[#allocation4 + $0x210] sm:$0xff] %vm3068, %v5666
  %5749 = vst.msk [vmem:[#allocation4 + $0x238] sm:$0xff] %vm3068, %v5668
  %5750 = vst.msk [vmem:[#allocation4 + $0x260] sm:$0xff] %vm3068, %v5670
  %5751 = vst.msk [vmem:[#allocation4 + $0x288] sm:$0xff] %vm3068, %v5672
  %5752 = vst.msk [vmem:[#allocation4 + $0x2b0] sm:$0xff] %vm3068, %v5674
  %5753 = vst.msk [vmem:[#allocation4 + $0x2d8] sm:$0xff] %vm3068, %v5676
  %5754 = vst.msk [vmem:[#allocation4 + $0x300] sm:$0xff] %vm3068, %v5678
  %5755 = vst.msk [vmem:[#allocation4 + $0x328] sm:$0xff] %vm3068, %v5680
  %5756 = vst.msk [vmem:[#allocation4 + $0x350] sm:$0xff] %vm3068, %v5682
  %5757 = vst.msk [vmem:[#allocation4 + $0x378] sm:$0xff] %vm3068, %v5684
  %5758 = vst.msk [vmem:[#allocation4 + $0x3a0] sm:$0xff] %vm3068, %v5686
  %5759 = vst.msk [vmem:[#allocation4 + $0x3c8] sm:$0xff] %vm3068, %v5688
  %5760 = vst.msk [vmem:[#allocation4 + $0x3f0] sm:$0xff] %vm3068, %v5690
  %5761 = vst.msk [vmem:[#allocation4 + $0x418] sm:$0xff] %vm3068, %v5692
  %5762 = vst.msk [vmem:[#allocation4 + $0x440] sm:$0xff] %vm3068, %v5694
  %5763 = vst.msk [vmem:[#allocation4 + $0x468] sm:$0xff] %vm3068, %v5696
  %5764 = vst.msk [vmem:[#allocation4 + $0x490] sm:$0xff] %vm3068, %v5698
  %5765 = vst.msk [vmem:[#allocation4 + $0x4b8] sm:$0xff] %vm3068, %v5700
  %5766 = vst.msk [vmem:[#allocation4 + $0x4e0] sm:$0xff] %vm3068, %v5702
  %v5767 = vld [vmem:[%s148 + $0x1] sm:$0xff]
  %v5768 = vld [vmem:[%s148 + $0x9] sm:$0xff]
  %v5769 = vld [vmem:[%s148 + $0x19] sm:$0xff]
  %v5770 = vld [vmem:[%s148 + $0x21] sm:$0xff]
  %v5771 = vld [vmem:[%s148 + $0x31] sm:$0xff]
  %v5772 = vld [vmem:[%s148 + $0x39] sm:$0xff]
  %v5773 = vld [vmem:[%s148 + $0x49] sm:$0xff]
  %v5774 = vld [vmem:[%s148 + $0x51] sm:$0xff]
  %v5775 = vld [vmem:[%s148 + $0x61] sm:$0xff]
  %v5776 = vld [vmem:[%s148 + $0x69] sm:$0xff]
  %v5777 = vld [vmem:[%s148 + $0x79] sm:$0xff]
  %v5778 = vld [vmem:[%s148 + $0x81] sm:$0xff]
  %v5779 = vld [vmem:[%s148 + $0x91] sm:$0xff]
  %v5780 = vld [vmem:[%s148 + $0x99] sm:$0xff]
  %v5781 = vld [vmem:[%s148 + $0xa9] sm:$0xff]
  %v5782 = vld [vmem:[%s148 + $0xb1] sm:$0xff]
  %v5783 = vld [vmem:[%s148 + $0xc1] sm:$0xff]
  %v5784 = vld [vmem:[%s148 + $0xc9] sm:$0xff]
  %v5785 = vld [vmem:[%s148 + $0xd9] sm:$0xff]
  %v5786 = vld [vmem:[%s148 + $0xe1] sm:$0xff]
  %v5787 = vld [vmem:[%s148 + $0xf1] sm:$0xff]
  %v5788 = vld [vmem:[%s148 + $0xf9] sm:$0xff]
  %v5789 = vld [vmem:[%s148 + $0x109] sm:$0xff]
  %v5790 = vld [vmem:[%s148 + $0x111] sm:$0xff]
  %v5791 = vld [vmem:[%s148 + $0x121] sm:$0xff]
  %v5792 = vld [vmem:[%s148 + $0x129] sm:$0xff]
  %v5793 = vld [vmem:[%s148 + $0x139] sm:$0xff]
  %v5794 = vld [vmem:[%s148 + $0x141] sm:$0xff]
  %v5795 = vld [vmem:[%s148 + $0x151] sm:$0xff]
  %v5796 = vld [vmem:[%s148 + $0x159] sm:$0xff]
  %v5797 = vld [vmem:[%s148 + $0x169] sm:$0xff]
  %v5798 = vld [vmem:[%s148 + $0x171] sm:$0xff]
  %5799 = vst.msk [vmem:[#allocation4 + $0x10] sm:$0xff] %vm26, %v5767
  %5800 = vst.msk [vmem:[#allocation4 + $0x38] sm:$0xff] %vm26, %v5768
  %5801 = vst.msk [vmem:[#allocation4 + $0x60] sm:$0xff] %vm26, %v5769
  %5802 = vst.msk [vmem:[#allocation4 + $0x88] sm:$0xff] %vm26, %v5770
  %5803 = vst.msk [vmem:[#allocation4 + $0xb0] sm:$0xff] %vm26, %v5771
  %5804 = vst.msk [vmem:[#allocation4 + $0xd8] sm:$0xff] %vm26, %v5772
  %5805 = vst.msk [vmem:[#allocation4 + $0x100] sm:$0xff] %vm26, %v5773
  %5806 = vst.msk [vmem:[#allocation4 + $0x128] sm:$0xff] %vm26, %v5774
  %5807 = vst.msk [vmem:[#allocation4 + $0x150] sm:$0xff] %vm26, %v5775
  %5808 = vst.msk [vmem:[#allocation4 + $0x178] sm:$0xff] %vm26, %v5776
  %5809 = vst.msk [vmem:[#allocation4 + $0x1a0] sm:$0xff] %vm26, %v5777
  %5810 = vst.msk [vmem:[#allocation4 + $0x1c8] sm:$0xff] %vm26, %v5778
  %5811 = vst.msk [vmem:[#allocation4 + $0x1f0] sm:$0xff] %vm26, %v5779
  %5812 = vst.msk [vmem:[#allocation4 + $0x218] sm:$0xff] %vm26, %v5780
  %5813 = vst.msk [vmem:[#allocation4 + $0x240] sm:$0xff] %vm26, %v5781
  %5814 = vst.msk [vmem:[#allocation4 + $0x268] sm:$0xff] %vm26, %v5782
  %5815 = vst.msk [vmem:[#allocation4 + $0x290] sm:$0xff] %vm26, %v5783
  %5816 = vst.msk [vmem:[#allocation4 + $0x2b8] sm:$0xff] %vm26, %v5784
  %5817 = vst.msk [vmem:[#allocation4 + $0x2e0] sm:$0xff] %vm26, %v5785
  %5818 = vst.msk [vmem:[#allocation4 + $0x308] sm:$0xff] %vm26, %v5786
  %5819 = vst.msk [vmem:[#allocation4 + $0x330] sm:$0xff] %vm26, %v5787
  %5820 = vst.msk [vmem:[#allocation4 + $0x358] sm:$0xff] %vm26, %v5788
  %5821 = vst.msk [vmem:[#allocation4 + $0x380] sm:$0xff] %vm26, %v5789
  %5822 = vst.msk [vmem:[#allocation4 + $0x3a8] sm:$0xff] %vm26, %v5790
  %5823 = vst.msk [vmem:[#allocation4 + $0x3d0] sm:$0xff] %vm26, %v5791
  %5824 = vst.msk [vmem:[#allocation4 + $0x3f8] sm:$0xff] %vm26, %v5792
  %5825 = vst.msk [vmem:[#allocation4 + $0x420] sm:$0xff] %vm26, %v5793
  %5826 = vst.msk [vmem:[#allocation4 + $0x448] sm:$0xff] %vm26, %v5794
  %5827 = vst.msk [vmem:[#allocation4 + $0x470] sm:$0xff] %vm26, %v5795
  %5828 = vst.msk [vmem:[#allocation4 + $0x498] sm:$0xff] %vm26, %v5796
  %5829 = vst.msk [vmem:[#allocation4 + $0x4c0] sm:$0xff] %vm26, %v5797
  %5830 = vst.msk [vmem:[#allocation4 + $0x4e8] sm:$0xff] %vm26, %v5798
  %v5831 = vld [vmem:[%s148 + $0x2] sm:$0xff]
  %v5832 = vld [vmem:[%s148 + $0xa] sm:$0xff]
  %v5833 = vld [vmem:[%s148 + $0x1a] sm:$0xff]
  %v5834 = vld [vmem:[%s148 + $0x22] sm:$0xff]
  %v5835 = vld [vmem:[%s148 + $0x32] sm:$0xff]
  %v5836 = vld [vmem:[%s148 + $0x3a] sm:$0xff]
  %v5837 = vld [vmem:[%s148 + $0x4a] sm:$0xff]
  %v5838 = vld [vmem:[%s148 + $0x52] sm:$0xff]
  %v5839 = vld [vmem:[%s148 + $0x62] sm:$0xff]
  %v5840 = vld [vmem:[%s148 + $0x6a] sm:$0xff]
  %v5841 = vld [vmem:[%s148 + $0x7a] sm:$0xff]
  %v5842 = vld [vmem:[%s148 + $0x82] sm:$0xff]
  %v5843 = vld [vmem:[%s148 + $0x92] sm:$0xff]
  %v5844 = vld [vmem:[%s148 + $0x9a] sm:$0xff]
  %v5845 = vld [vmem:[%s148 + $0xaa] sm:$0xff]
  %v5846 = vld [vmem:[%s148 + $0xb2] sm:$0xff]
  %v5847 = vld [vmem:[%s148 + $0xc2] sm:$0xff]
  %v5848 = vld [vmem:[%s148 + $0xca] sm:$0xff]
  %v5849 = vld [vmem:[%s148 + $0xda] sm:$0xff]
  %v5850 = vld [vmem:[%s148 + $0xe2] sm:$0xff]
  %v5851 = vld [vmem:[%s148 + $0xf2] sm:$0xff]
  %v5852 = vld [vmem:[%s148 + $0xfa] sm:$0xff]
  %v5853 = vld [vmem:[%s148 + $0x10a] sm:$0xff]
  %v5854 = vld [vmem:[%s148 + $0x112] sm:$0xff]
  %v5855 = vld [vmem:[%s148 + $0x122] sm:$0xff]
  %v5856 = vld [vmem:[%s148 + $0x12a] sm:$0xff]
  %v5857 = vld [vmem:[%s148 + $0x13a] sm:$0xff]
  %v5858 = vld [vmem:[%s148 + $0x142] sm:$0xff]
  %v5859 = vld [vmem:[%s148 + $0x152] sm:$0xff]
  %v5860 = vld [vmem:[%s148 + $0x15a] sm:$0xff]
  %v5861 = vld [vmem:[%s148 + $0x16a] sm:$0xff]
  %v5862 = vld [vmem:[%s148 + $0x172] sm:$0xff]
  %5895 = vrot.lane.b32.xlu0 %v5831, 64
  %v5896 = vpop.permute.xlu0 %5895
  %5897 = vrot.lane.b32.xlu0 %v5832, 64
  %v5898 = vpop.permute.xlu0 %5897
  %5899 = vrot.lane.b32.xlu0 %v5833, 64
  %v5900 = vpop.permute.xlu0 %5899
  %5901 = vrot.lane.b32.xlu0 %v5834, 64
  %v5902 = vpop.permute.xlu0 %5901
  %5903 = vrot.lane.b32.xlu0 %v5835, 64
  %v5904 = vpop.permute.xlu0 %5903
  %5905 = vrot.lane.b32.xlu0 %v5836, 64
  %v5906 = vpop.permute.xlu0 %5905
  %5907 = vrot.lane.b32.xlu0 %v5837, 64
  %v5908 = vpop.permute.xlu0 %5907
  %5909 = vrot.lane.b32.xlu0 %v5838, 64
  %v5910 = vpop.permute.xlu0 %5909
  %5911 = vrot.lane.b32.xlu0 %v5839, 64
  %v5912 = vpop.permute.xlu0 %5911
  %5913 = vrot.lane.b32.xlu0 %v5840, 64
  %v5914 = vpop.permute.xlu0 %5913
  %5915 = vrot.lane.b32.xlu0 %v5841, 64
  %v5916 = vpop.permute.xlu0 %5915
  %5917 = vrot.lane.b32.xlu0 %v5842, 64
  %v5918 = vpop.permute.xlu0 %5917
  %5919 = vrot.lane.b32.xlu0 %v5843, 64
  %v5920 = vpop.permute.xlu0 %5919
  %5921 = vrot.lane.b32.xlu0 %v5844, 64
  %v5922 = vpop.permute.xlu0 %5921
  %5923 = vrot.lane.b32.xlu0 %v5845, 64
  %v5924 = vpop.permute.xlu0 %5923
  %5925 = vrot.lane.b32.xlu0 %v5846, 64
  %v5926 = vpop.permute.xlu0 %5925
  %5927 = vrot.lane.b32.xlu0 %v5847, 64
  %v5928 = vpop.permute.xlu0 %5927
  %5929 = vrot.lane.b32.xlu0 %v5848, 64
  %v5930 = vpop.permute.xlu0 %5929
  %5931 = vrot.lane.b32.xlu0 %v5849, 64
  %v5932 = vpop.permute.xlu0 %5931
  %5933 = vrot.lane.b32.xlu0 %v5850, 64
  %v5934 = vpop.permute.xlu0 %5933
  %5935 = vrot.lane.b32.xlu0 %v5851, 64
  %v5936 = vpop.permute.xlu0 %5935
  %5937 = vrot.lane.b32.xlu0 %v5852, 64
  %v5938 = vpop.permute.xlu0 %5937
  %5939 = vrot.lane.b32.xlu0 %v5853, 64
  %v5940 = vpop.permute.xlu0 %5939
  %5941 = vrot.lane.b32.xlu0 %v5854, 64
  %v5942 = vpop.permute.xlu0 %5941
  %5943 = vrot.lane.b32.xlu0 %v5855, 64
  %v5944 = vpop.permute.xlu0 %5943
  %5945 = vrot.lane.b32.xlu0 %v5856, 64
  %v5946 = vpop.permute.xlu0 %5945
  %5947 = vrot.lane.b32.xlu0 %v5857, 64
  %v5948 = vpop.permute.xlu0 %5947
  %5949 = vrot.lane.b32.xlu0 %v5858, 64
  %v5950 = vpop.permute.xlu0 %5949
  %5951 = vrot.lane.b32.xlu0 %v5859, 64
  %v5952 = vpop.permute.xlu0 %5951
  %5953 = vrot.lane.b32.xlu0 %v5860, 64
  %v5954 = vpop.permute.xlu0 %5953
  %5955 = vrot.lane.b32.xlu0 %v5861, 64
  %v5956 = vpop.permute.xlu0 %5955
  %5957 = vrot.lane.b32.xlu0 %v5862, 64
  %v5958 = vpop.permute.xlu0 %5957
  %5991 = vst.msk [vmem:[#allocation4 + $0x10] sm:$0xff] %vm3068, %v5896
  %5992 = vst.msk [vmem:[#allocation4 + $0x38] sm:$0xff] %vm3068, %v5898
  %5993 = vst.msk [vmem:[#allocation4 + $0x60] sm:$0xff] %vm3068, %v5900
  %5994 = vst.msk [vmem:[#allocation4 + $0x88] sm:$0xff] %vm3068, %v5902
  %5995 = vst.msk [vmem:[#allocation4 + $0xb0] sm:$0xff] %vm3068, %v5904
  %5996 = vst.msk [vmem:[#allocation4 + $0xd8] sm:$0xff] %vm3068, %v5906
  %5997 = vst.msk [vmem:[#allocation4 + $0x100] sm:$0xff] %vm3068, %v5908
  %5998 = vst.msk [vmem:[#allocation4 + $0x128] sm:$0xff] %vm3068, %v5910
  %5999 = vst.msk [vmem:[#allocation4 + $0x150] sm:$0xff] %vm3068, %v5912
  %6000 = vst.msk [vmem:[#allocation4 + $0x178] sm:$0xff] %vm3068, %v5914
  %6001 = vst.msk [vmem:[#allocation4 + $0x1a0] sm:$0xff] %vm3068, %v5916
  %6002 = vst.msk [vmem:[#allocation4 + $0x1c8] sm:$0xff] %vm3068, %v5918
  %6003 = vst.msk [vmem:[#allocation4 + $0x1f0] sm:$0xff] %vm3068, %v5920
  %6004 = vst.msk [vmem:[#allocation4 + $0x218] sm:$0xff] %vm3068, %v5922
  %6005 = vst.msk [vmem:[#allocation4 + $0x240] sm:$0xff] %vm3068, %v5924
  %6006 = vst.msk [vmem:[#allocation4 + $0x268] sm:$0xff] %vm3068, %v5926
  %6007 = vst.msk [vmem:[#allocation4 + $0x290] sm:$0xff] %vm3068, %v5928
  %6008 = vst.msk [vmem:[#allocation4 + $0x2b8] sm:$0xff] %vm3068, %v5930
  %6009 = vst.msk [vmem:[#allocation4 + $0x2e0] sm:$0xff] %vm3068, %v5932
  %6010 = vst.msk [vmem:[#allocation4 + $0x308] sm:$0xff] %vm3068, %v5934
  %6011 = vst.msk [vmem:[#allocation4 + $0x330] sm:$0xff] %vm3068, %v5936
  %6012 = vst.msk [vmem:[#allocation4 + $0x358] sm:$0xff] %vm3068, %v5938
  %6013 = vst.msk [vmem:[#allocation4 + $0x380] sm:$0xff] %vm3068, %v5940
  %6014 = vst.msk [vmem:[#allocation4 + $0x3a8] sm:$0xff] %vm3068, %v5942
  %6015 = vst.msk [vmem:[#allocation4 + $0x3d0] sm:$0xff] %vm3068, %v5944
  %6016 = vst.msk [vmem:[#allocation4 + $0x3f8] sm:$0xff] %vm3068, %v5946
  %6017 = vst.msk [vmem:[#allocation4 + $0x420] sm:$0xff] %vm3068, %v5948
  %6018 = vst.msk [vmem:[#allocation4 + $0x448] sm:$0xff] %vm3068, %v5950
  %6019 = vst.msk [vmem:[#allocation4 + $0x470] sm:$0xff] %vm3068, %v5952
  %6020 = vst.msk [vmem:[#allocation4 + $0x498] sm:$0xff] %vm3068, %v5954
  %6021 = vst.msk [vmem:[#allocation4 + $0x4c0] sm:$0xff] %vm3068, %v5956
  %6022 = vst.msk [vmem:[#allocation4 + $0x4e8] sm:$0xff] %vm3068, %v5958
  %v6023 = vld [vmem:[%s1744] sm:$0xff]
  %v6024 = vld [vmem:[%s1744 + $0x8] sm:$0xff]
  %v6025 = vld [vmem:[%s1744 + $0x18] sm:$0xff]
  %v6026 = vld [vmem:[%s1744 + $0x20] sm:$0xff]
  %v6027 = vld [vmem:[%s1744 + $0x30] sm:$0xff]
  %v6028 = vld [vmem:[%s1744 + $0x38] sm:$0xff]
  %v6029 = vld [vmem:[%s1744 + $0x48] sm:$0xff]
  %v6030 = vld [vmem:[%s1744 + $0x50] sm:$0xff]
  %v6031 = vld [vmem:[%s1744 + $0x60] sm:$0xff]
  %v6032 = vld [vmem:[%s1744 + $0x68] sm:$0xff]
  %v6033 = vld [vmem:[%s1744 + $0x78] sm:$0xff]
  %v6034 = vld [vmem:[%s1744 + $0x80] sm:$0xff]
  %v6035 = vld [vmem:[%s1744 + $0x90] sm:$0xff]
  %v6036 = vld [vmem:[%s1744 + $0x98] sm:$0xff]
  %v6037 = vld [vmem:[%s1744 + $0xa8] sm:$0xff]
  %v6038 = vld [vmem:[%s1744 + $0xb0] sm:$0xff]
  %v6039 = vld [vmem:[%s1744 + $0xc0] sm:$0xff]
  %v6040 = vld [vmem:[%s1744 + $0xc8] sm:$0xff]
  %v6041 = vld [vmem:[%s1744 + $0xd8] sm:$0xff]
  %v6042 = vld [vmem:[%s1744 + $0xe0] sm:$0xff]
  %v6043 = vld [vmem:[%s1744 + $0xf0] sm:$0xff]
  %v6044 = vld [vmem:[%s1744 + $0xf8] sm:$0xff]
  %v6045 = vld [vmem:[%s1744 + $0x108] sm:$0xff]
  %v6046 = vld [vmem:[%s1744 + $0x110] sm:$0xff]
  %v6047 = vld [vmem:[%s1744 + $0x120] sm:$0xff]
  %v6048 = vld [vmem:[%s1744 + $0x128] sm:$0xff]
  %v6049 = vld [vmem:[%s1744 + $0x138] sm:$0xff]
  %v6050 = vld [vmem:[%s1744 + $0x140] sm:$0xff]
  %v6051 = vld [vmem:[%s1744 + $0x150] sm:$0xff]
  %v6052 = vld [vmem:[%s1744 + $0x158] sm:$0xff]
  %v6053 = vld [vmem:[%s1744 + $0x168] sm:$0xff]
  %v6054 = vld [vmem:[%s1744 + $0x170] sm:$0xff]
  %6055 = vst.msk [vmem:[#allocation4 + $0x18] sm:$0xff] %vm26, %v6023
  %6056 = vst.msk [vmem:[#allocation4 + $0x40] sm:$0xff] %vm26, %v6024
  %6057 = vst.msk [vmem:[#allocation4 + $0x68] sm:$0xff] %vm26, %v6025
  %6058 = vst.msk [vmem:[#allocation4 + $0x90] sm:$0xff] %vm26, %v6026
  %6059 = vst.msk [vmem:[#allocation4 + $0xb8] sm:$0xff] %vm26, %v6027
  %6060 = vst.msk [vmem:[#allocation4 + $0xe0] sm:$0xff] %vm26, %v6028
  %6061 = vst.msk [vmem:[#allocation4 + $0x108] sm:$0xff] %vm26, %v6029
  %6062 = vst.msk [vmem:[#allocation4 + $0x130] sm:$0xff] %vm26, %v6030
  %6063 = vst.msk [vmem:[#allocation4 + $0x158] sm:$0xff] %vm26, %v6031
  %6064 = vst.msk [vmem:[#allocation4 + $0x180] sm:$0xff] %vm26, %v6032
  %6065 = vst.msk [vmem:[#allocation4 + $0x1a8] sm:$0xff] %vm26, %v6033
  %6066 = vst.msk [vmem:[#allocation4 + $0x1d0] sm:$0xff] %vm26, %v6034
  %6067 = vst.msk [vmem:[#allocation4 + $0x1f8] sm:$0xff] %vm26, %v6035
  %6068 = vst.msk [vmem:[#allocation4 + $0x220] sm:$0xff] %vm26, %v6036
  %6069 = vst.msk [vmem:[#allocation4 + $0x248] sm:$0xff] %vm26, %v6037
  %6070 = vst.msk [vmem:[#allocation4 + $0x270] sm:$0xff] %vm26, %v6038
  %6071 = vst.msk [vmem:[#allocation4 + $0x298] sm:$0xff] %vm26, %v6039
  %6072 = vst.msk [vmem:[#allocation4 + $0x2c0] sm:$0xff] %vm26, %v6040
  %6073 = vst.msk [vmem:[#allocation4 + $0x2e8] sm:$0xff] %vm26, %v6041
  %6074 = vst.msk [vmem:[#allocation4 + $0x310] sm:$0xff] %vm26, %v6042
  %6075 = vst.msk [vmem:[#allocation4 + $0x338] sm:$0xff] %vm26, %v6043
  %6076 = vst.msk [vmem:[#allocation4 + $0x360] sm:$0xff] %vm26, %v6044
  %6077 = vst.msk [vmem:[#allocation4 + $0x388] sm:$0xff] %vm26, %v6045
  %6078 = vst.msk [vmem:[#allocation4 + $0x3b0] sm:$0xff] %vm26, %v6046
  %6079 = vst.msk [vmem:[#allocation4 + $0x3d8] sm:$0xff] %vm26, %v6047
  %6080 = vst.msk [vmem:[#allocation4 + $0x400] sm:$0xff] %vm26, %v6048
  %6081 = vst.msk [vmem:[#allocation4 + $0x428] sm:$0xff] %vm26, %v6049
  %6082 = vst.msk [vmem:[#allocation4 + $0x450] sm:$0xff] %vm26, %v6050
  %6083 = vst.msk [vmem:[#allocation4 + $0x478] sm:$0xff] %vm26, %v6051
  %6084 = vst.msk [vmem:[#allocation4 + $0x4a0] sm:$0xff] %vm26, %v6052
  %6085 = vst.msk [vmem:[#allocation4 + $0x4c8] sm:$0xff] %vm26, %v6053
  %6086 = vst.msk [vmem:[#allocation4 + $0x4f0] sm:$0xff] %vm26, %v6054
  %v6087 = vld [vmem:[%s1744 + $0x1] sm:$0xff]
  %v6088 = vld [vmem:[%s1744 + $0x9] sm:$0xff]
  %v6089 = vld [vmem:[%s1744 + $0x19] sm:$0xff]
  %v6090 = vld [vmem:[%s1744 + $0x21] sm:$0xff]
  %v6091 = vld [vmem:[%s1744 + $0x31] sm:$0xff]
  %v6092 = vld [vmem:[%s1744 + $0x39] sm:$0xff]
  %v6093 = vld [vmem:[%s1744 + $0x49] sm:$0xff]
  %v6094 = vld [vmem:[%s1744 + $0x51] sm:$0xff]
  %v6095 = vld [vmem:[%s1744 + $0x61] sm:$0xff]
  %v6096 = vld [vmem:[%s1744 + $0x69] sm:$0xff]
  %v6097 = vld [vmem:[%s1744 + $0x79] sm:$0xff]
  %v6098 = vld [vmem:[%s1744 + $0x81] sm:$0xff]
  %v6099 = vld [vmem:[%s1744 + $0x91] sm:$0xff]
  %v6100 = vld [vmem:[%s1744 + $0x99] sm:$0xff]
  %v6101 = vld [vmem:[%s1744 + $0xa9] sm:$0xff]
  %v6102 = vld [vmem:[%s1744 + $0xb1] sm:$0xff]
  %v6103 = vld [vmem:[%s1744 + $0xc1] sm:$0xff]
  %v6104 = vld [vmem:[%s1744 + $0xc9] sm:$0xff]
  %v6105 = vld [vmem:[%s1744 + $0xd9] sm:$0xff]
  %v6106 = vld [vmem:[%s1744 + $0xe1] sm:$0xff]
  %v6107 = vld [vmem:[%s1744 + $0xf1] sm:$0xff]
  %v6108 = vld [vmem:[%s1744 + $0xf9] sm:$0xff]
  %v6109 = vld [vmem:[%s1744 + $0x109] sm:$0xff]
  %v6110 = vld [vmem:[%s1744 + $0x111] sm:$0xff]
  %v6111 = vld [vmem:[%s1744 + $0x121] sm:$0xff]
  %v6112 = vld [vmem:[%s1744 + $0x129] sm:$0xff]
  %v6113 = vld [vmem:[%s1744 + $0x139] sm:$0xff]
  %v6114 = vld [vmem:[%s1744 + $0x141] sm:$0xff]
  %v6115 = vld [vmem:[%s1744 + $0x151] sm:$0xff]
  %v6116 = vld [vmem:[%s1744 + $0x159] sm:$0xff]
  %v6117 = vld [vmem:[%s1744 + $0x169] sm:$0xff]
  %v6118 = vld [vmem:[%s1744 + $0x171] sm:$0xff]
  %6151 = vrot.lane.b32.xlu0 %v6087, 64
  %v6152 = vpop.permute.xlu0 %6151
  %6153 = vrot.lane.b32.xlu0 %v6088, 64
  %v6154 = vpop.permute.xlu0 %6153
  %6155 = vrot.lane.b32.xlu0 %v6089, 64
  %v6156 = vpop.permute.xlu0 %6155
  %6157 = vrot.lane.b32.xlu0 %v6090, 64
  %v6158 = vpop.permute.xlu0 %6157
  %6159 = vrot.lane.b32.xlu0 %v6091, 64
  %v6160 = vpop.permute.xlu0 %6159
  %6161 = vrot.lane.b32.xlu0 %v6092, 64
  %v6162 = vpop.permute.xlu0 %6161
  %6163 = vrot.lane.b32.xlu0 %v6093, 64
  %v6164 = vpop.permute.xlu0 %6163
  %6165 = vrot.lane.b32.xlu0 %v6094, 64
  %v6166 = vpop.permute.xlu0 %6165
  %6167 = vrot.lane.b32.xlu0 %v6095, 64
  %v6168 = vpop.permute.xlu0 %6167
  %6169 = vrot.lane.b32.xlu0 %v6096, 64
  %v6170 = vpop.permute.xlu0 %6169
  %6171 = vrot.lane.b32.xlu0 %v6097, 64
  %v6172 = vpop.permute.xlu0 %6171
  %6173 = vrot.lane.b32.xlu0 %v6098, 64
  %v6174 = vpop.permute.xlu0 %6173
  %6175 = vrot.lane.b32.xlu0 %v6099, 64
  %v6176 = vpop.permute.xlu0 %6175
  %6177 = vrot.lane.b32.xlu0 %v6100, 64
  %v6178 = vpop.permute.xlu0 %6177
  %6179 = vrot.lane.b32.xlu0 %v6101, 64
  %v6180 = vpop.permute.xlu0 %6179
  %6181 = vrot.lane.b32.xlu0 %v6102, 64
  %v6182 = vpop.permute.xlu0 %6181
  %6183 = vrot.lane.b32.xlu0 %v6103, 64
  %v6184 = vpop.permute.xlu0 %6183
  %6185 = vrot.lane.b32.xlu0 %v6104, 64
  %v6186 = vpop.permute.xlu0 %6185
  %6187 = vrot.lane.b32.xlu0 %v6105, 64
  %v6188 = vpop.permute.xlu0 %6187
  %6189 = vrot.lane.b32.xlu0 %v6106, 64
  %v6190 = vpop.permute.xlu0 %6189
  %6191 = vrot.lane.b32.xlu0 %v6107, 64
  %v6192 = vpop.permute.xlu0 %6191
  %6193 = vrot.lane.b32.xlu0 %v6108, 64
  %v6194 = vpop.permute.xlu0 %6193
  %6195 = vrot.lane.b32.xlu0 %v6109, 64
  %v6196 = vpop.permute.xlu0 %6195
  %6197 = vrot.lane.b32.xlu0 %v6110, 64
  %v6198 = vpop.permute.xlu0 %6197
  %6199 = vrot.lane.b32.xlu0 %v6111, 64
  %v6200 = vpop.permute.xlu0 %6199
  %6201 = vrot.lane.b32.xlu0 %v6112, 64
  %v6202 = vpop.permute.xlu0 %6201
  %6203 = vrot.lane.b32.xlu0 %v6113, 64
  %v6204 = vpop.permute.xlu0 %6203
  %6205 = vrot.lane.b32.xlu0 %v6114, 64
  %v6206 = vpop.permute.xlu0 %6205
  %6207 = vrot.lane.b32.xlu0 %v6115, 64
  %v6208 = vpop.permute.xlu0 %6207
  %6209 = vrot.lane.b32.xlu0 %v6116, 64
  %v6210 = vpop.permute.xlu0 %6209
  %6211 = vrot.lane.b32.xlu0 %v6117, 64
  %v6212 = vpop.permute.xlu0 %6211
  %6213 = vrot.lane.b32.xlu0 %v6118, 64
  %v6214 = vpop.permute.xlu0 %6213
  %6247 = vst.msk [vmem:[#allocation4 + $0x18] sm:$0xff] %vm3068, %v6152
  %6248 = vst.msk [vmem:[#allocation4 + $0x40] sm:$0xff] %vm3068, %v6154
  %6249 = vst.msk [vmem:[#allocation4 + $0x68] sm:$0xff] %vm3068, %v6156
  %6250 = vst.msk [vmem:[#allocation4 + $0x90] sm:$0xff] %vm3068, %v6158
  %6251 = vst.msk [vmem:[#allocation4 + $0xb8] sm:$0xff] %vm3068, %v6160
  %6252 = vst.msk [vmem:[#allocation4 + $0xe0] sm:$0xff] %vm3068, %v6162
  %6253 = vst.msk [vmem:[#allocation4 + $0x108] sm:$0xff] %vm3068, %v6164
  %6254 = vst.msk [vmem:[#allocation4 + $0x130] sm:$0xff] %vm3068, %v6166
  %6255 = vst.msk [vmem:[#allocation4 + $0x158] sm:$0xff] %vm3068, %v6168
  %6256 = vst.msk [vmem:[#allocation4 + $0x180] sm:$0xff] %vm3068, %v6170
  %6257 = vst.msk [vmem:[#allocation4 + $0x1a8] sm:$0xff] %vm3068, %v6172
  %6258 = vst.msk [vmem:[#allocation4 + $0x1d0] sm:$0xff] %vm3068, %v6174
  %6259 = vst.msk [vmem:[#allocation4 + $0x1f8] sm:$0xff] %vm3068, %v6176
  %6260 = vst.msk [vmem:[#allocation4 + $0x220] sm:$0xff] %vm3068, %v6178
  %6261 = vst.msk [vmem:[#allocation4 + $0x248] sm:$0xff] %vm3068, %v6180
  %6262 = vst.msk [vmem:[#allocation4 + $0x270] sm:$0xff] %vm3068, %v6182
  %6263 = vst.msk [vmem:[#allocation4 + $0x298] sm:$0xff] %vm3068, %v6184
  %6264 = vst.msk [vmem:[#allocation4 + $0x2c0] sm:$0xff] %vm3068, %v6186
  %6265 = vst.msk [vmem:[#allocation4 + $0x2e8] sm:$0xff] %vm3068, %v6188
  %6266 = vst.msk [vmem:[#allocation4 + $0x310] sm:$0xff] %vm3068, %v6190
  %6267 = vst.msk [vmem:[#allocation4 + $0x338] sm:$0xff] %vm3068, %v6192
  %6268 = vst.msk [vmem:[#allocation4 + $0x360] sm:$0xff] %vm3068, %v6194
  %6269 = vst.msk [vmem:[#allocation4 + $0x388] sm:$0xff] %vm3068, %v6196
  %6270 = vst.msk [vmem:[#allocation4 + $0x3b0] sm:$0xff] %vm3068, %v6198
  %6271 = vst.msk [vmem:[#allocation4 + $0x3d8] sm:$0xff] %vm3068, %v6200
  %6272 = vst.msk [vmem:[#allocation4 + $0x400] sm:$0xff] %vm3068, %v6202
  %6273 = vst.msk [vmem:[#allocation4 + $0x428] sm:$0xff] %vm3068, %v6204
  %6274 = vst.msk [vmem:[#allocation4 + $0x450] sm:$0xff] %vm3068, %v6206
  %6275 = vst.msk [vmem:[#allocation4 + $0x478] sm:$0xff] %vm3068, %v6208
  %6276 = vst.msk [vmem:[#allocation4 + $0x4a0] sm:$0xff] %vm3068, %v6210
  %6277 = vst.msk [vmem:[#allocation4 + $0x4c8] sm:$0xff] %vm3068, %v6212
  %6278 = vst.msk [vmem:[#allocation4 + $0x4f0] sm:$0xff] %vm3068, %v6214
  %v6279 = vld [vmem:[%s1744 + $0x2] sm:$0xff]
  %v6280 = vld [vmem:[%s1744 + $0xa] sm:$0xff]
  %v6281 = vld [vmem:[%s1744 + $0x1a] sm:$0xff]
  %v6282 = vld [vmem:[%s1744 + $0x22] sm:$0xff]
  %v6283 = vld [vmem:[%s1744 + $0x32] sm:$0xff]
  %v6284 = vld [vmem:[%s1744 + $0x3a] sm:$0xff]
  %v6285 = vld [vmem:[%s1744 + $0x4a] sm:$0xff]
  %v6286 = vld [vmem:[%s1744 + $0x52] sm:$0xff]
  %v6287 = vld [vmem:[%s1744 + $0x62] sm:$0xff]
  %v6288 = vld [vmem:[%s1744 + $0x6a] sm:$0xff]
  %v6289 = vld [vmem:[%s1744 + $0x7a] sm:$0xff]
  %v6290 = vld [vmem:[%s1744 + $0x82] sm:$0xff]
  %v6291 = vld [vmem:[%s1744 + $0x92] sm:$0xff]
  %v6292 = vld [vmem:[%s1744 + $0x9a] sm:$0xff]
  %v6293 = vld [vmem:[%s1744 + $0xaa] sm:$0xff]
  %v6294 = vld [vmem:[%s1744 + $0xb2] sm:$0xff]
  %v6295 = vld [vmem:[%s1744 + $0xc2] sm:$0xff]
  %v6296 = vld [vmem:[%s1744 + $0xca] sm:$0xff]
  %v6297 = vld [vmem:[%s1744 + $0xda] sm:$0xff]
  %v6298 = vld [vmem:[%s1744 + $0xe2] sm:$0xff]
  %v6299 = vld [vmem:[%s1744 + $0xf2] sm:$0xff]
  %v6300 = vld [vmem:[%s1744 + $0xfa] sm:$0xff]
  %v6301 = vld [vmem:[%s1744 + $0x10a] sm:$0xff]
  %v6302 = vld [vmem:[%s1744 + $0x112] sm:$0xff]
  %v6303 = vld [vmem:[%s1744 + $0x122] sm:$0xff]
  %v6304 = vld [vmem:[%s1744 + $0x12a] sm:$0xff]
  %v6305 = vld [vmem:[%s1744 + $0x13a] sm:$0xff]
  %v6306 = vld [vmem:[%s1744 + $0x142] sm:$0xff]
  %v6307 = vld [vmem:[%s1744 + $0x152] sm:$0xff]
  %v6308 = vld [vmem:[%s1744 + $0x15a] sm:$0xff]
  %v6309 = vld [vmem:[%s1744 + $0x16a] sm:$0xff]
  %v6310 = vld [vmem:[%s1744 + $0x172] sm:$0xff]
  %6311 = vst.msk [vmem:[#allocation4 + $0x20] sm:$0xff] %vm26, %v6279
  %6312 = vst.msk [vmem:[#allocation4 + $0x48] sm:$0xff] %vm26, %v6280
  %6313 = vst.msk [vmem:[#allocation4 + $0x70] sm:$0xff] %vm26, %v6281
  %6314 = vst.msk [vmem:[#allocation4 + $0x98] sm:$0xff] %vm26, %v6282
  %6315 = vst.msk [vmem:[#allocation4 + $0xc0] sm:$0xff] %vm26, %v6283
  %6316 = vst.msk [vmem:[#allocation4 + $0xe8] sm:$0xff] %vm26, %v6284
  %6317 = vst.msk [vmem:[#allocation4 + $0x110] sm:$0xff] %vm26, %v6285
  %6318 = vst.msk [vmem:[#allocation4 + $0x138] sm:$0xff] %vm26, %v6286
  %6319 = vst.msk [vmem:[#allocation4 + $0x160] sm:$0xff] %vm26, %v6287
  %6320 = vst.msk [vmem:[#allocation4 + $0x188] sm:$0xff] %vm26, %v6288
  %6321 = vst.msk [vmem:[#allocation4 + $0x1b0] sm:$0xff] %vm26, %v6289
  %6322 = vst.msk [vmem:[#allocation4 + $0x1d8] sm:$0xff] %vm26, %v6290
  %6323 = vst.msk [vmem:[#allocation4 + $0x200] sm:$0xff] %vm26, %v6291
  %6324 = vst.msk [vmem:[#allocation4 + $0x228] sm:$0xff] %vm26, %v6292
  %6325 = vst.msk [vmem:[#allocation4 + $0x250] sm:$0xff] %vm26, %v6293
  %6326 = vst.msk [vmem:[#allocation4 + $0x278] sm:$0xff] %vm26, %v6294
  %6327 = vst.msk [vmem:[#allocation4 + $0x2a0] sm:$0xff] %vm26, %v6295
  %6328 = vst.msk [vmem:[#allocation4 + $0x2c8] sm:$0xff] %vm26, %v6296
  %6329 = vst.msk [vmem:[#allocation4 + $0x2f0] sm:$0xff] %vm26, %v6297
  %6330 = vst.msk [vmem:[#allocation4 + $0x318] sm:$0xff] %vm26, %v6298
  %6331 = vst.msk [vmem:[#allocation4 + $0x340] sm:$0xff] %vm26, %v6299
  %6332 = vst.msk [vmem:[#allocation4 + $0x368] sm:$0xff] %vm26, %v6300
  %6333 = vst.msk [vmem:[#allocation4 + $0x390] sm:$0xff] %vm26, %v6301
  %6334 = vst.msk [vmem:[#allocation4 + $0x3b8] sm:$0xff] %vm26, %v6302
  %6335 = vst.msk [vmem:[#allocation4 + $0x3e0] sm:$0xff] %vm26, %v6303
  %6336 = vst.msk [vmem:[#allocation4 + $0x408] sm:$0xff] %vm26, %v6304
  %6337 = vst.msk [vmem:[#allocation4 + $0x430] sm:$0xff] %vm26, %v6305
  %6338 = vst.msk [vmem:[#allocation4 + $0x458] sm:$0xff] %vm26, %v6306
  %6339 = vst.msk [vmem:[#allocation4 + $0x480] sm:$0xff] %vm26, %v6307
  %6340 = vst.msk [vmem:[#allocation4 + $0x4a8] sm:$0xff] %vm26, %v6308
  %6341 = vst.msk [vmem:[#allocation4 + $0x4d0] sm:$0xff] %vm26, %v6309
  %6342 = vst.msk [vmem:[#allocation4 + $0x4f8] sm:$0xff] %vm26, %v6310
  %v6343 = vld [vmem:[#allocation4] sm:$0xff]
  %v6344 = vld [vmem:[#allocation4 + $0x8] sm:$0xff]
  %v6345 = vld [vmem:[#allocation4 + $0x10] sm:$0xff]
  %v6346 = vld [vmem:[#allocation4 + $0x18] sm:$0xff]
  %v6347 = vld [vmem:[#allocation4 + $0x20] sm:$0xff]
  %v6348 = vld [vmem:[#allocation4 + $0x28] sm:$0xff]
  %v6349 = vld [vmem:[#allocation4 + $0x30] sm:$0xff]
  %v6350 = vld [vmem:[#allocation4 + $0x38] sm:$0xff]
  %v6351 = vld [vmem:[#allocation4 + $0x40] sm:$0xff]
  %v6352 = vld [vmem:[#allocation4 + $0x48] sm:$0xff]
  %v6353 = vld [vmem:[#allocation4 + $0x50] sm:$0xff]
  %v6354 = vld [vmem:[#allocation4 + $0x58] sm:$0xff]
  %v6355 = vld [vmem:[#allocation4 + $0x60] sm:$0xff]
  %v6356 = vld [vmem:[#allocation4 + $0x68] sm:$0xff]
  %v6357 = vld [vmem:[#allocation4 + $0x70] sm:$0xff]
  %v6358 = vld [vmem:[#allocation4 + $0x78] sm:$0xff]
  %v6359 = vld [vmem:[#allocation4 + $0x80] sm:$0xff]
  %v6360 = vld [vmem:[#allocation4 + $0x88] sm:$0xff]
  %v6361 = vld [vmem:[#allocation4 + $0x90] sm:$0xff]
  %v6362 = vld [vmem:[#allocation4 + $0x98] sm:$0xff]
  %v6363 = vld [vmem:[#allocation4 + $0xa0] sm:$0xff]
  %v6364 = vld [vmem:[#allocation4 + $0xa8] sm:$0xff]
  %v6365 = vld [vmem:[#allocation4 + $0xb0] sm:$0xff]
  %v6366 = vld [vmem:[#allocation4 + $0xb8] sm:$0xff]
  %v6367 = vld [vmem:[#allocation4 + $0xc0] sm:$0xff]
  %v6368 = vld [vmem:[#allocation4 + $0xc8] sm:$0xff]
  %v6369 = vld [vmem:[#allocation4 + $0xd0] sm:$0xff]
  %v6370 = vld [vmem:[#allocation4 + $0xd8] sm:$0xff]
  %v6371 = vld [vmem:[#allocation4 + $0xe0] sm:$0xff]
  %v6372 = vld [vmem:[#allocation4 + $0xe8] sm:$0xff]
  %v6373 = vld [vmem:[#allocation4 + $0xf0] sm:$0xff]
  %v6374 = vld [vmem:[#allocation4 + $0xf8] sm:$0xff]
  %v6375 = vld [vmem:[#allocation4 + $0x100] sm:$0xff]
  %v6376 = vld [vmem:[#allocation4 + $0x108] sm:$0xff]
  %v6377 = vld [vmem:[#allocation4 + $0x110] sm:$0xff]
  %v6378 = vld [vmem:[#allocation4 + $0x118] sm:$0xff]
  %v6379 = vld [vmem:[#allocation4 + $0x120] sm:$0xff]
  %v6380 = vld [vmem:[#allocation4 + $0x128] sm:$0xff]
  %v6381 = vld [vmem:[#allocation4 + $0x130] sm:$0xff]
  %v6382 = vld [vmem:[#allocation4 + $0x138] sm:$0xff]
  %v6383 = vld [vmem:[#allocation4 + $0x140] sm:$0xff]
  %v6384 = vld [vmem:[#allocation4 + $0x148] sm:$0xff]
  %v6385 = vld [vmem:[#allocation4 + $0x150] sm:$0xff]
  %v6386 = vld [vmem:[#allocation4 + $0x158] sm:$0xff]
  %v6387 = vld [vmem:[#allocation4 + $0x160] sm:$0xff]
  %v6388 = vld [vmem:[#allocation4 + $0x168] sm:$0xff]
  %v6389 = vld [vmem:[#allocation4 + $0x170] sm:$0xff]
  %v6390 = vld [vmem:[#allocation4 + $0x178] sm:$0xff]
  %v6391 = vld [vmem:[#allocation4 + $0x180] sm:$0xff]
  %v6392 = vld [vmem:[#allocation4 + $0x188] sm:$0xff]
  %v6393 = vld [vmem:[#allocation4 + $0x190] sm:$0xff]
  %v6394 = vld [vmem:[#allocation4 + $0x198] sm:$0xff]
  %v6395 = vld [vmem:[#allocation4 + $0x1a0] sm:$0xff]
  %v6396 = vld [vmem:[#allocation4 + $0x1a8] sm:$0xff]
  %v6397 = vld [vmem:[#allocation4 + $0x1b0] sm:$0xff]
  %v6398 = vld [vmem:[#allocation4 + $0x1b8] sm:$0xff]
  %v6399 = vld [vmem:[#allocation4 + $0x1c0] sm:$0xff]
  %v6400 = vld [vmem:[#allocation4 + $0x1c8] sm:$0xff]
  %v6401 = vld [vmem:[#allocation4 + $0x1d0] sm:$0xff]
  %v6402 = vld [vmem:[#allocation4 + $0x1d8] sm:$0xff]
  %v6403 = vld [vmem:[#allocation4 + $0x1e0] sm:$0xff]
  %v6404 = vld [vmem:[#allocation4 + $0x1e8] sm:$0xff]
  %v6405 = vld [vmem:[#allocation4 + $0x1f0] sm:$0xff]
  %v6406 = vld [vmem:[#allocation4 + $0x1f8] sm:$0xff]
  %v6407 = vld [vmem:[#allocation4 + $0x200] sm:$0xff]
  %v6408 = vld [vmem:[#allocation4 + $0x208] sm:$0xff]
  %v6409 = vld [vmem:[#allocation4 + $0x210] sm:$0xff]
  %v6410 = vld [vmem:[#allocation4 + $0x218] sm:$0xff]
  %v6411 = vld [vmem:[#allocation4 + $0x220] sm:$0xff]
  %v6412 = vld [vmem:[#allocation4 + $0x228] sm:$0xff]
  %v6413 = vld [vmem:[#allocation4 + $0x230] sm:$0xff]
  %v6414 = vld [vmem:[#allocation4 + $0x238] sm:$0xff]
  %v6415 = vld [vmem:[#allocation4 + $0x240] sm:$0xff]
  %v6416 = vld [vmem:[#allocation4 + $0x248] sm:$0xff]
  %v6417 = vld [vmem:[#allocation4 + $0x250] sm:$0xff]
  %v6418 = vld [vmem:[#allocation4 + $0x258] sm:$0xff]
  %v6419 = vld [vmem:[#allocation4 + $0x260] sm:$0xff]
  %v6420 = vld [vmem:[#allocation4 + $0x268] sm:$0xff]
  %v6421 = vld [vmem:[#allocation4 + $0x270] sm:$0xff]
  %v6422 = vld [vmem:[#allocation4 + $0x278] sm:$0xff]
  %v6423 = vld [vmem:[#allocation4 + $0x280] sm:$0xff]
  %v6424 = vld [vmem:[#allocation4 + $0x288] sm:$0xff]
  %v6425 = vld [vmem:[#allocation4 + $0x290] sm:$0xff]
  %v6426 = vld [vmem:[#allocation4 + $0x298] sm:$0xff]
  %v6427 = vld [vmem:[#allocation4 + $0x2a0] sm:$0xff]
  %v6428 = vld [vmem:[#allocation4 + $0x2a8] sm:$0xff]
  %v6429 = vld [vmem:[#allocation4 + $0x2b0] sm:$0xff]
  %v6430 = vld [vmem:[#allocation4 + $0x2b8] sm:$0xff]
  %v6431 = vld [vmem:[#allocation4 + $0x2c0] sm:$0xff]
  %v6432 = vld [vmem:[#allocation4 + $0x2c8] sm:$0xff]
  %v6433 = vld [vmem:[#allocation4 + $0x2d0] sm:$0xff]
  %v6434 = vld [vmem:[#allocation4 + $0x2d8] sm:$0xff]
  %v6435 = vld [vmem:[#allocation4 + $0x2e0] sm:$0xff]
  %v6436 = vld [vmem:[#allocation4 + $0x2e8] sm:$0xff]
  %v6437 = vld [vmem:[#allocation4 + $0x2f0] sm:$0xff]
  %v6438 = vld [vmem:[#allocation4 + $0x2f8] sm:$0xff]
  %v6439 = vld [vmem:[#allocation4 + $0x300] sm:$0xff]
  %v6440 = vld [vmem:[#allocation4 + $0x308] sm:$0xff]
  %v6441 = vld [vmem:[#allocation4 + $0x310] sm:$0xff]
  %v6442 = vld [vmem:[#allocation4 + $0x318] sm:$0xff]
  %v6443 = vld [vmem:[#allocation4 + $0x320] sm:$0xff]
  %v6444 = vld [vmem:[#allocation4 + $0x328] sm:$0xff]
  %v6445 = vld [vmem:[#allocation4 + $0x330] sm:$0xff]
  %v6446 = vld [vmem:[#allocation4 + $0x338] sm:$0xff]
  %v6447 = vld [vmem:[#allocation4 + $0x340] sm:$0xff]
  %v6448 = vld [vmem:[#allocation4 + $0x348] sm:$0xff]
  %v6449 = vld [vmem:[#allocation4 + $0x350] sm:$0xff]
  %v6450 = vld [vmem:[#allocation4 + $0x358] sm:$0xff]
  %v6451 = vld [vmem:[#allocation4 + $0x360] sm:$0xff]
  %v6452 = vld [vmem:[#allocation4 + $0x368] sm:$0xff]
  %v6453 = vld [vmem:[#allocation4 + $0x370] sm:$0xff]
  %v6454 = vld [vmem:[#allocation4 + $0x378] sm:$0xff]
  %v6455 = vld [vmem:[#allocation4 + $0x380] sm:$0xff]
  %v6456 = vld [vmem:[#allocation4 + $0x388] sm:$0xff]
  %v6457 = vld [vmem:[#allocation4 + $0x390] sm:$0xff]
  %v6458 = vld [vmem:[#allocation4 + $0x398] sm:$0xff]
  %v6459 = vld [vmem:[#allocation4 + $0x3a0] sm:$0xff]
  %v6460 = vld [vmem:[#allocation4 + $0x3a8] sm:$0xff]
  %v6461 = vld [vmem:[#allocation4 + $0x3b0] sm:$0xff]
  %v6462 = vld [vmem:[#allocation4 + $0x3b8] sm:$0xff]
  %v6463 = vld [vmem:[#allocation4 + $0x3c0] sm:$0xff]
  %v6464 = vld [vmem:[#allocation4 + $0x3c8] sm:$0xff]
  %v6465 = vld [vmem:[#allocation4 + $0x3d0] sm:$0xff]
  %v6466 = vld [vmem:[#allocation4 + $0x3d8] sm:$0xff]
  %v6467 = vld [vmem:[#allocation4 + $0x3e0] sm:$0xff]
  %v6468 = vld [vmem:[#allocation4 + $0x3e8] sm:$0xff]
  %v6469 = vld [vmem:[#allocation4 + $0x3f0] sm:$0xff]
  %v6470 = vld [vmem:[#allocation4 + $0x3f8] sm:$0xff]
  %v6471 = vld [vmem:[#allocation4 + $0x400] sm:$0xff]
  %v6472 = vld [vmem:[#allocation4 + $0x408] sm:$0xff]
  %v6473 = vld [vmem:[#allocation4 + $0x410] sm:$0xff]
  %v6474 = vld [vmem:[#allocation4 + $0x418] sm:$0xff]
  %v6475 = vld [vmem:[#allocation4 + $0x420] sm:$0xff]
  %v6476 = vld [vmem:[#allocation4 + $0x428] sm:$0xff]
  %v6477 = vld [vmem:[#allocation4 + $0x430] sm:$0xff]
  %v6478 = vld [vmem:[#allocation4 + $0x438] sm:$0xff]
  %v6479 = vld [vmem:[#allocation4 + $0x440] sm:$0xff]
  %v6480 = vld [vmem:[#allocation4 + $0x448] sm:$0xff]
  %v6481 = vld [vmem:[#allocation4 + $0x450] sm:$0xff]
  %v6482 = vld [vmem:[#allocation4 + $0x458] sm:$0xff]
  %v6483 = vld [vmem:[#allocation4 + $0x460] sm:$0xff]
  %v6484 = vld [vmem:[#allocation4 + $0x468] sm:$0xff]
  %v6485 = vld [vmem:[#allocation4 + $0x470] sm:$0xff]
  %v6486 = vld [vmem:[#allocation4 + $0x478] sm:$0xff]
  %v6487 = vld [vmem:[#allocation4 + $0x480] sm:$0xff]
  %v6488 = vld [vmem:[#allocation4 + $0x488] sm:$0xff]
  %v6489 = vld [vmem:[#allocation4 + $0x490] sm:$0xff]
  %v6490 = vld [vmem:[#allocation4 + $0x498] sm:$0xff]
  %v6491 = vld [vmem:[#allocation4 + $0x4a0] sm:$0xff]
  %v6492 = vld [vmem:[#allocation4 + $0x4a8] sm:$0xff]
  %v6493 = vld [vmem:[#allocation4 + $0x4b0] sm:$0xff]
  %v6494 = vld [vmem:[#allocation4 + $0x4b8] sm:$0xff]
  %v6495 = vld [vmem:[#allocation4 + $0x4c0] sm:$0xff]
  %v6496 = vld [vmem:[#allocation4 + $0x4c8] sm:$0xff]
  %v6497 = vld [vmem:[#allocation4 + $0x4d0] sm:$0xff]
  %v6498 = vld [vmem:[#allocation4 + $0x4d8] sm:$0xff]
  %v6499 = vld [vmem:[#allocation4 + $0x4e0] sm:$0xff]
  %v6500 = vld [vmem:[#allocation4 + $0x4e8] sm:$0xff]
  %v6501 = vld [vmem:[#allocation4 + $0x4f0] sm:$0xff]
  %v6502 = vld [vmem:[#allocation4 + $0x4f8] sm:$0xff]
  %v6503 = vld [vmem:[%s3] sm:$0xff]
  %v6504 = vld [vmem:[%s3 + $0x8] sm:$0xff]
  %v6505 = vld [vmem:[%s3 + $0x10] sm:$0xff]
  %v6506 = vld [vmem:[%s3 + $0x18] sm:$0xff]
  %v6507 = vld [vmem:[%s3 + $0x20] sm:$0xff]
  %v6508 = vld [vmem:[%s3 + $0x28] sm:$0xff]
  %v6509 = vld [vmem:[%s3 + $0x30] sm:$0xff]
  %v6510 = vld [vmem:[%s3 + $0x38] sm:$0xff]
  %v6511 = vld [vmem:[%s3 + $0x40] sm:$0xff]
  %v6512 = vld [vmem:[%s3 + $0x48] sm:$0xff]
  %v6513 = vld [vmem:[%s3 + $0x50] sm:$0xff]
  %v6514 = vld [vmem:[%s3 + $0x58] sm:$0xff]
  %v6515 = vld [vmem:[%s3 + $0x60] sm:$0xff]
  %v6516 = vld [vmem:[%s3 + $0x68] sm:$0xff]
  %v6517 = vld [vmem:[%s3 + $0x70] sm:$0xff]
  %v6518 = vld [vmem:[%s3 + $0x78] sm:$0xff]
  %v6519 = vld [vmem:[%s3 + $0x80] sm:$0xff]
  %v6520 = vld [vmem:[%s3 + $0x88] sm:$0xff]
  %v6521 = vld [vmem:[%s3 + $0x90] sm:$0xff]
  %v6522 = vld [vmem:[%s3 + $0x98] sm:$0xff]
  %v6523 = vld [vmem:[%s3 + $0xa0] sm:$0xff]
  %v6524 = vld [vmem:[%s3 + $0xa8] sm:$0xff]
  %v6525 = vld [vmem:[%s3 + $0xb0] sm:$0xff]
  %v6526 = vld [vmem:[%s3 + $0xb8] sm:$0xff]
  %v6527 = vld [vmem:[%s3 + $0xc0] sm:$0xff]
  %v6528 = vld [vmem:[%s3 + $0xc8] sm:$0xff]
  %v6529 = vld [vmem:[%s3 + $0xd0] sm:$0xff]
  %v6530 = vld [vmem:[%s3 + $0xd8] sm:$0xff]
  %v6531 = vld [vmem:[%s3 + $0xe0] sm:$0xff]
  %v6532 = vld [vmem:[%s3 + $0xe8] sm:$0xff]
  %v6533 = vld [vmem:[%s3 + $0xf0] sm:$0xff]
  %v6534 = vld [vmem:[%s3 + $0xf8] sm:$0xff]
  %v6535 = vld [vmem:[%s3 + $0x100] sm:$0xff]
  %v6536 = vld [vmem:[%s3 + $0x108] sm:$0xff]
  %v6537 = vld [vmem:[%s3 + $0x110] sm:$0xff]
  %v6538 = vld [vmem:[%s3 + $0x118] sm:$0xff]
  %v6539 = vld [vmem:[%s3 + $0x120] sm:$0xff]
  %v6540 = vld [vmem:[%s3 + $0x128] sm:$0xff]
  %v6541 = vld [vmem:[%s3 + $0x130] sm:$0xff]
  %v6542 = vld [vmem:[%s3 + $0x138] sm:$0xff]
  %v6543 = vld [vmem:[%s3 + $0x140] sm:$0xff]
  %v6544 = vld [vmem:[%s3 + $0x148] sm:$0xff]
  %v6545 = vld [vmem:[%s3 + $0x150] sm:$0xff]
  %v6546 = vld [vmem:[%s3 + $0x158] sm:$0xff]
  %v6547 = vld [vmem:[%s3 + $0x160] sm:$0xff]
  %v6548 = vld [vmem:[%s3 + $0x168] sm:$0xff]
  %v6549 = vld [vmem:[%s3 + $0x170] sm:$0xff]
  %v6550 = vld [vmem:[%s3 + $0x178] sm:$0xff]
  %v6551 = vld [vmem:[%s3 + $0x180] sm:$0xff]
  %v6552 = vld [vmem:[%s3 + $0x188] sm:$0xff]
  %v6553 = vld [vmem:[%s3 + $0x190] sm:$0xff]
  %v6554 = vld [vmem:[%s3 + $0x198] sm:$0xff]
  %v6555 = vld [vmem:[%s3 + $0x1a0] sm:$0xff]
  %v6556 = vld [vmem:[%s3 + $0x1a8] sm:$0xff]
  %v6557 = vld [vmem:[%s3 + $0x1b0] sm:$0xff]
  %v6558 = vld [vmem:[%s3 + $0x1b8] sm:$0xff]
  %v6559 = vld [vmem:[%s3 + $0x1c0] sm:$0xff]
  %v6560 = vld [vmem:[%s3 + $0x1c8] sm:$0xff]
  %v6561 = vld [vmem:[%s3 + $0x1d0] sm:$0xff]
  %v6562 = vld [vmem:[%s3 + $0x1d8] sm:$0xff]
  %v6563 = vld [vmem:[%s3 + $0x1e0] sm:$0xff]
  %v6564 = vld [vmem:[%s3 + $0x1e8] sm:$0xff]
  %v6565 = vld [vmem:[%s3 + $0x1f0] sm:$0xff]
  %v6566 = vld [vmem:[%s3 + $0x1f8] sm:$0xff]
  %v6567 = vld [vmem:[%s3 + $0x200] sm:$0xff]
  %v6568 = vld [vmem:[%s3 + $0x208] sm:$0xff]
  %v6569 = vld [vmem:[%s3 + $0x210] sm:$0xff]
  %v6570 = vld [vmem:[%s3 + $0x218] sm:$0xff]
  %v6571 = vld [vmem:[%s3 + $0x220] sm:$0xff]
  %v6572 = vld [vmem:[%s3 + $0x228] sm:$0xff]
  %v6573 = vld [vmem:[%s3 + $0x230] sm:$0xff]
  %v6574 = vld [vmem:[%s3 + $0x238] sm:$0xff]
  %v6576 = vsel %vm26, %v6347, 0
  %v6579 = vsel %vm26, %v6352, 0
  %v6582 = vsel %vm26, %v6357, 0
  %v6585 = vsel %vm26, %v6362, 0
  %v6588 = vsel %vm26, %v6367, 0
  %v6591 = vsel %vm26, %v6372, 0
  %v6594 = vsel %vm26, %v6377, 0
  %v6597 = vsel %vm26, %v6382, 0
  %v6600 = vsel %vm26, %v6387, 0
  %v6603 = vsel %vm26, %v6392, 0
  %v6606 = vsel %vm26, %v6397, 0
  %v6609 = vsel %vm26, %v6402, 0
  %v6612 = vsel %vm26, %v6407, 0
  %v6615 = vsel %vm26, %v6412, 0
  %v6618 = vsel %vm26, %v6417, 0
  %v6621 = vsel %vm26, %v6422, 0
  %v6624 = vsel %vm26, %v6427, 0
  %v6627 = vsel %vm26, %v6432, 0
  %v6630 = vsel %vm26, %v6437, 0
  %v6633 = vsel %vm26, %v6442, 0
  %v6636 = vsel %vm26, %v6447, 0
  %v6639 = vsel %vm26, %v6452, 0
  %v6642 = vsel %vm26, %v6457, 0
  %v6645 = vsel %vm26, %v6462, 0
  %v6648 = vsel %vm26, %v6467, 0
  %v6651 = vsel %vm26, %v6472, 0
  %v6654 = vsel %vm26, %v6477, 0
  %v6657 = vsel %vm26, %v6482, 0
  %v6660 = vsel %vm26, %v6487, 0
  %v6663 = vsel %vm26, %v6492, 0
  %v6666 = vsel %vm26, %v6497, 0
  %v6669 = vsel %vm26, %v6502, 0
  %6671 = vmatprep.subr.mxu0 0.0
  %6672 = vmatpush1.msra.mxu0 %v6503
  %6673 = vmatprep.subr.mxu0 0.0
  %6674 = vmatpush1.msra.mxu0 %v6504
  %6675 = vmatprep.subr.mxu0 0.0
  %6676 = vmatpush1.msra.mxu0 %v6505
  %6677 = vmatprep.subr.mxu0 0.0
  %6678 = vmatpush1.msra.mxu0 %v6506
  %6679 = vmatprep.subr.mxu0 0.0
  %6680 = vmatpush1.msra.mxu0 %v6507
  %6681 = vmatprep.subr.mxu0 0.0
  %6682 = vmatpush1.msra.mxu0 %v6508
  %6683 = vmatprep.subr.mxu0 0.0
  %6684 = vmatpush1.msra.mxu0 %v6509
  %6685 = vmatprep.subr.mxu0 0.0
  %6686 = vmatpush1.msra.mxu0 %v6510
  %6687 = vmatprep.subr.mxu0 0.0
  %6688 = vmatpush1.msra.mxu0 %v6511
  %6689 = vmatprep.subr.mxu0 0.0
  %6690 = vmatpush1.msra.mxu0 %v6512
  %6691 = vmatprep.subr.mxu0 0.0
  %6692 = vmatpush1.msra.mxu0 %v6513
  %6693 = vmatprep.subr.mxu0 0.0
  %6694 = vmatpush1.msra.mxu0 %v6514
  %6695 = vmatprep.subr.mxu0 0.0
  %6696 = vmatpush1.msra.mxu0 %v6515
  %6697 = vmatprep.subr.mxu0 0.0
  %6698 = vmatpush1.msra.mxu0 %v6516
  %6699 = vmatprep.subr.mxu0 0.0
  %6700 = vmatpush1.msra.mxu0 %v6517
  %6701 = vmatprep.subr.mxu0 0.0
  %6702 = vmatpush1.msra.mxu0 %v6518
  %6703 = vmatprep.subr.mxu0 0.0
  %6704 = vmatpush1.msra.mxu0 %v6519
  %6705 = vmatprep.subr.mxu0 0.0
  %6706 = vmatpush1.msra.mxu0 %v6520
  %6707 = vmatprep.subr.mxu0 0.0
  %6708 = vmatpush1.msra.mxu0 %v6521
  %6709 = vmatprep.subr.mxu0 0.0
  %6710 = vmatpush1.msra.mxu0 %v6522
  %6711 = vmatprep.subr.mxu0 0.0
  %6712 = vmatpush1.msra.mxu0 %v6523
  %6713 = vmatprep.subr.mxu0 0.0
  %6714 = vmatpush1.msra.mxu0 %v6524
  %6715 = vmatprep.subr.mxu0 0.0
  %6716 = vmatpush1.msra.mxu0 %v6525
  %6717 = vmatprep.subr.mxu0 0.0
  %6718 = vmatpush1.msra.mxu0 %v6526
  %6719 = vmatprep.subr.mxu0 0.0
  %6720 = vmatpush1.msra.mxu0 %v6527
  %6721 = vmatprep.subr.mxu0 0.0
  %6722 = vmatpush1.msra.mxu0 %v6528
  %6723 = vmatprep.subr.mxu0 0.0
  %6724 = vmatpush1.msra.mxu0 %v6529
  %6725 = vmatprep.subr.mxu0 0.0
  %6726 = vmatpush1.msra.mxu0 %v6530
  %6727 = vmatprep.subr.mxu0 0.0
  %6728 = vmatpush1.msra.mxu0 %v6531
  %6729 = vmatprep.subr.mxu0 0.0
  %6730 = vmatpush1.msra.mxu0 %v6532
  %6731 = vmatprep.subr.mxu0 0.0
  %6732 = vmatpush1.msra.mxu0 %v6533
  %6733 = vmatprep.subr.mxu0 0.0
  %6734 = vmatpush1.msra.mxu0 %v6534
  %6735 = vmatprep.mubr.f32.mxu0 %v6344
  %6736 = vmatmul.mubr.f32.gmra.mrb[0].mxu0 %v6343
  %v6737 = vpop.f32.mrb[0].mxu0
  %v6738 = vadd.f32 0.0, %v6737
  %v6739 = vpop.f32.mrb[0].mxu0
  %6740 = vmatprep.mubr.f32.mxu0 %v6349
  %6741 = vmatmul.mubr.f32.gmra.mrb[0].mxu0 %v6348
  %v6742 = vpop.f32.mrb[0].mxu0
  %v6743 = vadd.f32 0.0, %v6742
  %v6744 = vpop.f32.mrb[0].mxu0
  %6745 = vmatprep.mubr.f32.mxu0 %v6354
  %6746 = vmatmul.mubr.f32.gmra.mrb[0].mxu0 %v6353
  %v6747 = vpop.f32.mrb[0].mxu0
  %v6748 = vadd.f32 0.0, %v6747
  %v6749 = vpop.f32.mrb[0].mxu0
  %6750 = vmatprep.mubr.f32.mxu0 %v6359
  %6751 = vmatmul.mubr.f32.gmra.mrb[0].mxu0 %v6358
  %v6752 = vpop.f32.mrb[0].mxu0
  %v6753 = vadd.f32 0.0, %v6752
  %v6754 = vpop.f32.mrb[0].mxu0
  %6755 = vmatprep.mubr.f32.mxu0 %v6364
  %6756 = vmatmul.mubr.f32.gmra.mrb[0].mxu0 %v6363
  %v6757 = vpop.f32.mrb[0].mxu0
  %v6758 = vadd.f32 0.0, %v6757
  %v6759 = vpop.f32.mrb[0].mxu0
  %6760 = vmatprep.mubr.f32.mxu0 %v6369
  %6761 = vmatmul.mubr.f32.gmra.mrb[0].mxu0 %v6368
  %v6762 = vpop.f32.mrb[0].mxu0
  %v6763 = vadd.f32 0.0, %v6762
  %v6764 = vpop.f32.mrb[0].mxu0
  %6765 = vmatprep.mubr.f32.mxu0 %v6374
  %6766 = vmatmul.mubr.f32.gmra.mrb[0].mxu0 %v6373
  %v6767 = vpop.f32.mrb[0].mxu0
  %v6768 = vadd.f32 0.0, %v6767
  %v6769 = vpop.f32.mrb[0].mxu0
  %6770 = vmatprep.mubr.f32.mxu0 %v6379
  %6771 = vmatmul.mubr.f32.gmra.mrb[0].mxu0 %v6378
  %v6772 = vpop.f32.mrb[0].mxu0
  %v6773 = vadd.f32 0.0, %v6772
  %v6774 = vpop.f32.mrb[0].mxu0
  %6775 = vmatprep.mubr.f32.mxu0 %v6384
  %6776 = vmatmul.mubr.f32.gmra.mrb[0].mxu0 %v6383
  %v6777 = vpop.f32.mrb[0].mxu0
  %v6778 = vadd.f32 0.0, %v6777
  %v6779 = vpop.f32.mrb[0].mxu0
  %6780 = vmatprep.mubr.f32.mxu0 %v6389
  %6781 = vmatmul.mubr.f32.gmra.mrb[0].mxu0 %v6388
  %v6782 = vpop.f32.mrb[0].mxu0
  %v6783 = vadd.f32 0.0, %v6782
  %v6784 = vpop.f32.mrb[0].mxu0
  %6785 = vmatprep.mubr.f32.mxu0 %v6394
  %6786 = vmatmul.mubr.f32.gmra.mrb[0].mxu0 %v6393
  %v6787 = vpop.f32.mrb[0].mxu0
  %v6788 = vadd.f32 0.0, %v6787
  %v6789 = vpop.f32.mrb[0].mxu0
  %6790 = vmatprep.mubr.f32.mxu0 %v6399
  %6791 = vmatmul.mubr.f32.gmra.mrb[0].mxu0 %v6398
  %v6792 = vpop.f32.mrb[0].mxu0
  %v6793 = vadd.f32 0.0, %v6792
  %v6794 = vpop.f32.mrb[0].mxu0
  %6795 = vmatprep.mubr.f32.mxu0 %v6404
  %6796 = vmatmul.mubr.f32.gmra.mrb[0].mxu0 %v6403
  %v6797 = vpop.f32.mrb[0].mxu0
  %v6798 = vadd.f32 0.0, %v6797
  %v6799 = vpop.f32.mrb[0].mxu0
  %6800 = vmatprep.mubr.f32.mxu0 %v6409
  %6801 = vmatmul.mubr.f32.gmra.mrb[0].mxu0 %v6408
  %v6802 = vpop.f32.mrb[0].mxu0
  %v6803 = vadd.f32 0.0, %v6802
  %v6804 = vpop.f32.mrb[0].mxu0
  %6805 = vmatprep.mubr.f32.mxu0 %v6414
  %6806 = vmatmul.mubr.f32.gmra.mrb[0].mxu0 %v6413
  %v6807 = vpop.f32.mrb[0].mxu0
  %v6808 = vadd.f32 0.0, %v6807
  %v6809 = vpop.f32.mrb[0].mxu0
  %6810 = vmatprep.mubr.f32.mxu0 %v6419
  %6811 = vmatmul.mubr.f32.gmra.mrb[0].mxu0 %v6418
  %v6812 = vpop.f32.mrb[0].mxu0
  %v6813 = vadd.f32 0.0, %v6812
  %v6814 = vpop.f32.mrb[0].mxu0
  %6815 = vmatprep.mubr.f32.mxu0 %v6424
  %6816 = vmatmul.mubr.f32.gmra.mrb[0].mxu0 %v6423
  %v6817 = vpop.f32.mrb[0].mxu0
  %v6818 = vadd.f32 0.0, %v6817
  %v6819 = vpop.f32.mrb[0].mxu0
  %6820 = vmatprep.mubr.f32.mxu0 %v6429
  %6821 = vmatmul.mubr.f32.gmra.mrb[0].mxu0 %v6428
  %v6822 = vpop.f32.mrb[0].mxu0
  %v6823 = vadd.f32 0.0, %v6822
  %v6824 = vpop.f32.mrb[0].mxu0
  %6825 = vmatprep.mubr.f32.mxu0 %v6434
  %6826 = vmatmul.mubr.f32.gmra.mrb[0].mxu0 %v6433
  %v6827 = vpop.f32.mrb[0].mxu0
  %v6828 = vadd.f32 0.0, %v6827
  %v6829 = vpop.f32.mrb[0].mxu0
  %6830 = vmatprep.mubr.f32.mxu0 %v6439
  %6831 = vmatmul.mubr.f32.gmra.mrb[0].mxu0 %v6438
  %v6832 = vpop.f32.mrb[0].mxu0
  %v6833 = vadd.f32 0.0, %v6832
  %v6834 = vpop.f32.mrb[0].mxu0
  %6835 = vmatprep.mubr.f32.mxu0 %v6444
  %6836 = vmatmul.mubr.f32.gmra.mrb[0].mxu0 %v6443
  %v6837 = vpop.f32.mrb[0].mxu0
  %v6838 = vadd.f32 0.0, %v6837
  %v6839 = vpop.f32.mrb[0].mxu0
  %6840 = vmatprep.mubr.f32.mxu0 %v6449
  %6841 = vmatmul.mubr.f32.gmra.mrb[0].mxu0 %v6448
  %v6842 = vpop.f32.mrb[0].mxu0
  %v6843 = vadd.f32 0.0, %v6842
  %v6844 = vpop.f32.mrb[0].mxu0
  %6845 = vmatprep.mubr.f32.mxu0 %v6454
  %6846 = vmatmul.mubr.f32.gmra.mrb[0].mxu0 %v6453
  %v6847 = vpop.f32.mrb[0].mxu0
  %v6848 = vadd.f32 0.0, %v6847
  %v6849 = vpop.f32.mrb[0].mxu0
  %6850 = vmatprep.mubr.f32.mxu0 %v6459
  %6851 = vmatmul.mubr.f32.gmra.mrb[0].mxu0 %v6458
  %v6852 = vpop.f32.mrb[0].mxu0
  %v6853 = vadd.f32 0.0, %v6852
  %v6854 = vpop.f32.mrb[0].mxu0
  %6855 = vmatprep.mubr.f32.mxu0 %v6464
  %6856 = vmatmul.mubr.f32.gmra.mrb[0].mxu0 %v6463
  %v6857 = vpop.f32.mrb[0].mxu0
  %v6858 = vadd.f32 0.0, %v6857
  %v6859 = vpop.f32.mrb[0].mxu0
  %6860 = vmatprep.mubr.f32.mxu0 %v6469
  %6861 = vmatmul.mubr.f32.gmra.mrb[0].mxu0 %v6468
  %v6862 = vpop.f32.mrb[0].mxu0
  %v6863 = vadd.f32 0.0, %v6862
  %v6864 = vpop.f32.mrb[0].mxu0
  %6865 = vmatprep.mubr.f32.mxu0 %v6474
  %6866 = vmatmul.mubr.f32.gmra.mrb[0].mxu0 %v6473
  %v6867 = vpop.f32.mrb[0].mxu0
  %v6868 = vadd.f32 0.0, %v6867
  %v6869 = vpop.f32.mrb[0].mxu0
  %6870 = vmatprep.mubr.f32.mxu0 %v6479
  %6871 = vmatmul.mubr.f32.gmra.mrb[0].mxu0 %v6478
  %v6872 = vpop.f32.mrb[0].mxu0
  %v6873 = vadd.f32 0.0, %v6872
  %v6874 = vpop.f32.mrb[0].mxu0
  %6875 = vmatprep.mubr.f32.mxu0 %v6484
  %6876 = vmatmul.mubr.f32.gmra.mrb[0].mxu0 %v6483
  %v6877 = vpop.f32.mrb[0].mxu0
  %v6878 = vadd.f32 0.0, %v6877
  %v6879 = vpop.f32.mrb[0].mxu0
  %6880 = vmatprep.mubr.f32.mxu0 %v6489
  %6881 = vmatmul.mubr.f32.gmra.mrb[0].mxu0 %v6488
  %v6882 = vpop.f32.mrb[0].mxu0
  %v6883 = vadd.f32 0.0, %v6882
  %v6884 = vpop.f32.mrb[0].mxu0
  %6885 = vmatprep.mubr.f32.mxu0 %v6494
  %6886 = vmatmul.mubr.f32.gmra.mrb[0].mxu0 %v6493
  %v6887 = vpop.f32.mrb[0].mxu0
  %v6888 = vadd.f32 0.0, %v6887
  %v6889 = vpop.f32.mrb[0].mxu0
  %6890 = vmatprep.mubr.f32.mxu0 %v6499
  %6891 = vmatmul.mubr.f32.gmra.mrb[0].mxu0 %v6498
  %v6892 = vpop.f32.mrb[0].mxu0
  %v6893 = vadd.f32 0.0, %v6892
  %v6894 = vpop.f32.mrb[0].mxu0
  %6895 = vdwg.mxu0
  %6896 = vmatprep.subr.mxu0 0.0
  %6897 = vmatpush1.msra.mxu0 %v6535
  %6898 = vmatprep.subr.mxu0 0.0
  %6899 = vmatpush1.msra.mxu0 %v6536
  %6900 = vmatprep.subr.mxu0 0.0
  %6901 = vmatpush1.msra.mxu0 %v6537
  %6902 = vmatprep.subr.mxu0 0.0
  %6903 = vmatpush1.msra.mxu0 %v6538
  %6904 = vmatprep.subr.mxu0 0.0
  %6905 = vmatpush1.msra.mxu0 %v6539
  %6906 = vmatprep.subr.mxu0 0.0
  %6907 = vmatpush1.msra.mxu0 %v6540
  %6908 = vmatprep.subr.mxu0 0.0
  %6909 = vmatpush1.msra.mxu0 %v6541
  %6910 = vmatprep.subr.mxu0 0.0
  %6911 = vmatpush1.msra.mxu0 %v6542
  %6912 = vmatprep.subr.mxu0 0.0
  %6913 = vmatpush1.msra.mxu0 %v6543
  %6914 = vmatprep.subr.mxu0 0.0
  %6915 = vmatpush1.msra.mxu0 %v6544
  %6916 = vmatprep.subr.mxu0 0.0
  %6917 = vmatpush1.msra.mxu0 %v6545
  %6918 = vmatprep.subr.mxu0 0.0
  %6919 = vmatpush1.msra.mxu0 %v6546
  %6920 = vmatprep.subr.mxu0 0.0
  %6921 = vmatpush1.msra.mxu0 %v6547
  %6922 = vmatprep.subr.mxu0 0.0
  %6923 = vmatpush1.msra.mxu0 %v6548
  %6924 = vmatprep.subr.mxu0 0.0
  %6925 = vmatpush1.msra.mxu0 %v6549
  %6926 = vmatprep.subr.mxu0 0.0
  %6927 = vmatpush1.msra.mxu0 %v6550
  %6928 = vmatprep.subr.mxu0 0.0
  %6929 = vmatpush1.msra.mxu0 %v6551
  %6930 = vmatprep.subr.mxu0 0.0
  %6931 = vmatpush1.msra.mxu0 %v6552
  %6932 = vmatprep.subr.mxu0 0.0
  %6933 = vmatpush1.msra.mxu0 %v6553
  %6934 = vmatprep.subr.mxu0 0.0
  %6935 = vmatpush1.msra.mxu0 %v6554
  %6936 = vmatprep.subr.mxu0 0.0
  %6937 = vmatpush1.msra.mxu0 %v6555
  %6938 = vmatprep.subr.mxu0 0.0
  %6939 = vmatpush1.msra.mxu0 %v6556
  %6940 = vmatprep.subr.mxu0 0.0
  %6941 = vmatpush1.msra.mxu0 %v6557
  %6942 = vmatprep.subr.mxu0 0.0
  %6943 = vmatpush1.msra.mxu0 %v6558
  %6944 = vmatprep.subr.mxu0 0.0
  %6945 = vmatpush1.msra.mxu0 %v6559
  %6946 = vmatprep.subr.mxu0 0.0
  %6947 = vmatpush1.msra.mxu0 %v6560
  %6948 = vmatprep.subr.mxu0 0.0
  %6949 = vmatpush1.msra.mxu0 %v6561
  %6950 = vmatprep.subr.mxu0 0.0
  %6951 = vmatpush1.msra.mxu0 %v6562
  %6952 = vmatprep.subr.mxu0 0.0
  %6953 = vmatpush1.msra.mxu0 %v6563
  %6954 = vmatprep.subr.mxu0 0.0
  %6955 = vmatpush1.msra.mxu0 %v6564
  %6956 = vmatprep.subr.mxu0 0.0
  %6957 = vmatpush1.msra.mxu0 %v6565
  %6958 = vmatprep.subr.mxu0 0.0
  %6959 = vmatpush1.msra.mxu0 %v6566
  %6960 = vmatprep.mubr.f32.mxu0 %v6346
  %6961 = vmatmul.mubr.f32.gmra.mrb[0].mxu0 %v6345
  %v6962 = vpop.f32.mrb[0].mxu0
  %v6963 = vadd.f32 %v6738, %v6962
  %v6964 = vpop.f32.mrb[0].mxu0
  %6965 = vmatprep.mubr.f32.mxu0 %v6351
  %6966 = vmatmul.mubr.f32.gmra.mrb[0].mxu0 %v6350
  %v6967 = vpop.f32.mrb[0].mxu0
  %v6968 = vadd.f32 %v6743, %v6967
  %v6969 = vpop.f32.mrb[0].mxu0
  %6970 = vmatprep.mubr.f32.mxu0 %v6356
  %6971 = vmatmul.mubr.f32.gmra.mrb[0].mxu0 %v6355
  %v6972 = vpop.f32.mrb[0].mxu0
  %v6973 = vadd.f32 %v6748, %v6972
  %v6974 = vpop.f32.mrb[0].mxu0
  %6975 = vmatprep.mubr.f32.mxu0 %v6361
  %6976 = vmatmul.mubr.f32.gmra.mrb[0].mxu0 %v6360
  %v6977 = vpop.f32.mrb[0].mxu0
  %v6978 = vadd.f32 %v6753, %v6977
  %v6979 = vpop.f32.mrb[0].mxu0
  %6980 = vmatprep.mubr.f32.mxu0 %v6366
  %6981 = vmatmul.mubr.f32.gmra.mrb[0].mxu0 %v6365
  %v6982 = vpop.f32.mrb[0].mxu0
  %v6983 = vadd.f32 %v6758, %v6982
  %v6984 = vpop.f32.mrb[0].mxu0
  %6985 = vmatprep.mubr.f32.mxu0 %v6371
  %6986 = vmatmul.mubr.f32.gmra.mrb[0].mxu0 %v6370
  %v6987 = vpop.f32.mrb[0].mxu0
  %v6988 = vadd.f32 %v6763, %v6987
  %v6989 = vpop.f32.mrb[0].mxu0
  %6990 = vmatprep.mubr.f32.mxu0 %v6376
  %6991 = vmatmul.mubr.f32.gmra.mrb[0].mxu0 %v6375
  %v6992 = vpop.f32.mrb[0].mxu0
  %v6993 = vadd.f32 %v6768, %v6992
  %v6994 = vpop.f32.mrb[0].mxu0
  %6995 = vmatprep.mubr.f32.mxu0 %v6381
  %6996 = vmatmul.mubr.f32.gmra.mrb[0].mxu0 %v6380
  %v6997 = vpop.f32.mrb[0].mxu0
  %v6998 = vadd.f32 %v6773, %v6997
  %v6999 = vpop.f32.mrb[0].mxu0
  %7000 = vmatprep.mubr.f32.mxu0 %v6386
  %7001 = vmatmul.mubr.f32.gmra.mrb[0].mxu0 %v6385
  %v7002 = vpop.f32.mrb[0].mxu0
  %v7003 = vadd.f32 %v6778, %v7002
  %v7004 = vpop.f32.mrb[0].mxu0
  %7005 = vmatprep.mubr.f32.mxu0 %v6391
  %7006 = vmatmul.mubr.f32.gmra.mrb[0].mxu0 %v6390
  %v7007 = vpop.f32.mrb[0].mxu0
  %v7008 = vadd.f32 %v6783, %v7007
  %v7009 = vpop.f32.mrb[0].mxu0
  %7010 = vmatprep.mubr.f32.mxu0 %v6396
  %7011 = vmatmul.mubr.f32.gmra.mrb[0].mxu0 %v6395
  %v7012 = vpop.f32.mrb[0].mxu0
  %v7013 = vadd.f32 %v6788, %v7012
  %v7014 = vpop.f32.mrb[0].mxu0
  %7015 = vmatprep.mubr.f32.mxu0 %v6401
  %7016 = vmatmul.mubr.f32.gmra.mrb[0].mxu0 %v6400
  %v7017 = vpop.f32.mrb[0].mxu0
  %v7018 = vadd.f32 %v6793, %v7017
  %v7019 = vpop.f32.mrb[0].mxu0
  %7020 = vmatprep.mubr.f32.mxu0 %v6406
  %7021 = vmatmul.mubr.f32.gmra.mrb[0].mxu0 %v6405
  %v7022 = vpop.f32.mrb[0].mxu0
  %v7023 = vadd.f32 %v6798, %v7022
  %v7024 = vpop.f32.mrb[0].mxu0
  %7025 = vmatprep.mubr.f32.mxu0 %v6411
  %7026 = vmatmul.mubr.f32.gmra.mrb[0].mxu0 %v6410
  %v7027 = vpop.f32.mrb[0].mxu0
  %v7028 = vadd.f32 %v6803, %v7027
  %v7029 = vpop.f32.mrb[0].mxu0
  %7030 = vmatprep.mubr.f32.mxu0 %v6416
  %7031 = vmatmul.mubr.f32.gmra.mrb[0].mxu0 %v6415
  %v7032 = vpop.f32.mrb[0].mxu0
  %v7033 = vadd.f32 %v6808, %v7032
  %v7034 = vpop.f32.mrb[0].mxu0
  %7035 = vmatprep.mubr.f32.mxu0 %v6421
  %7036 = vmatmul.mubr.f32.gmra.mrb[0].mxu0 %v6420
  %v7037 = vpop.f32.mrb[0].mxu0
  %v7038 = vadd.f32 %v6813, %v7037
  %v7039 = vpop.f32.mrb[0].mxu0
  %7040 = vmatprep.mubr.f32.mxu0 %v6426
  %7041 = vmatmul.mubr.f32.gmra.mrb[0].mxu0 %v6425
  %v7042 = vpop.f32.mrb[0].mxu0
  %v7043 = vadd.f32 %v6818, %v7042
  %v7044 = vpop.f32.mrb[0].mxu0
  %7045 = vmatprep.mubr.f32.mxu0 %v6431
  %7046 = vmatmul.mubr.f32.gmra.mrb[0].mxu0 %v6430
  %v7047 = vpop.f32.mrb[0].mxu0
  %v7048 = vadd.f32 %v6823, %v7047
  %v7049 = vpop.f32.mrb[0].mxu0
  %7050 = vmatprep.mubr.f32.mxu0 %v6436
  %7051 = vmatmul.mubr.f32.gmra.mrb[0].mxu0 %v6435
  %v7052 = vpop.f32.mrb[0].mxu0
  %v7053 = vadd.f32 %v6828, %v7052
  %v7054 = vpop.f32.mrb[0].mxu0
  %7055 = vmatprep.mubr.f32.mxu0 %v6441
  %7056 = vmatmul.mubr.f32.gmra.mrb[0].mxu0 %v6440
  %v7057 = vpop.f32.mrb[0].mxu0
  %v7058 = vadd.f32 %v6833, %v7057
  %v7059 = vpop.f32.mrb[0].mxu0
  %7060 = vmatprep.mubr.f32.mxu0 %v6446
  %7061 = vmatmul.mubr.f32.gmra.mrb[0].mxu0 %v6445
  %v7062 = vpop.f32.mrb[0].mxu0
  %v7063 = vadd.f32 %v6838, %v7062
  %v7064 = vpop.f32.mrb[0].mxu0
  %7065 = vmatprep.mubr.f32.mxu0 %v6451
  %7066 = vmatmul.mubr.f32.gmra.mrb[0].mxu0 %v6450
  %v7067 = vpop.f32.mrb[0].mxu0
  %v7068 = vadd.f32 %v6843, %v7067
  %v7069 = vpop.f32.mrb[0].mxu0
  %7070 = vmatprep.mubr.f32.mxu0 %v6456
  %7071 = vmatmul.mubr.f32.gmra.mrb[0].mxu0 %v6455
  %v7072 = vpop.f32.mrb[0].mxu0
  %v7073 = vadd.f32 %v6848, %v7072
  %v7074 = vpop.f32.mrb[0].mxu0
  %7075 = vmatprep.mubr.f32.mxu0 %v6461
  %7076 = vmatmul.mubr.f32.gmra.mrb[0].mxu0 %v6460
  %v7077 = vpop.f32.mrb[0].mxu0
  %v7078 = vadd.f32 %v6853, %v7077
  %v7079 = vpop.f32.mrb[0].mxu0
  %7080 = vmatprep.mubr.f32.mxu0 %v6466
  %7081 = vmatmul.mubr.f32.gmra.mrb[0].mxu0 %v6465
  %v7082 = vpop.f32.mrb[0].mxu0
  %v7083 = vadd.f32 %v6858, %v7082
  %v7084 = vpop.f32.mrb[0].mxu0
  %7085 = vmatprep.mubr.f32.mxu0 %v6471
  %7086 = vmatmul.mubr.f32.gmra.mrb[0].mxu0 %v6470
  %v7087 = vpop.f32.mrb[0].mxu0
  %v7088 = vadd.f32 %v6863, %v7087
  %v7089 = vpop.f32.mrb[0].mxu0
  %7090 = vmatprep.mubr.f32.mxu0 %v6476
  %7091 = vmatmul.mubr.f32.gmra.mrb[0].mxu0 %v6475
  %v7092 = vpop.f32.mrb[0].mxu0
  %v7093 = vadd.f32 %v6868, %v7092
  %v7094 = vpop.f32.mrb[0].mxu0
  %7095 = vmatprep.mubr.f32.mxu0 %v6481
  %7096 = vmatmul.mubr.f32.gmra.mrb[0].mxu0 %v6480
  %v7097 = vpop.f32.mrb[0].mxu0
  %v7098 = vadd.f32 %v6873, %v7097
  %v7099 = vpop.f32.mrb[0].mxu0
  %7100 = vmatprep.mubr.f32.mxu0 %v6486
  %7101 = vmatmul.mubr.f32.gmra.mrb[0].mxu0 %v6485
  %v7102 = vpop.f32.mrb[0].mxu0
  %v7103 = vadd.f32 %v6878, %v7102
  %v7104 = vpop.f32.mrb[0].mxu0
  %7105 = vmatprep.mubr.f32.mxu0 %v6491
  %7106 = vmatmul.mubr.f32.gmra.mrb[0].mxu0 %v6490
  %v7107 = vpop.f32.mrb[0].mxu0
  %v7108 = vadd.f32 %v6883, %v7107
  %v7109 = vpop.f32.mrb[0].mxu0
  %7110 = vmatprep.mubr.f32.mxu0 %v6496
  %7111 = vmatmul.mubr.f32.gmra.mrb[0].mxu0 %v6495
  %v7112 = vpop.f32.mrb[0].mxu0
  %v7113 = vadd.f32 %v6888, %v7112
  %v7114 = vpop.f32.mrb[0].mxu0
  %7115 = vmatprep.mubr.f32.mxu0 %v6501
  %7116 = vmatmul.mubr.f32.gmra.mrb[0].mxu0 %v6500
  %v7117 = vpop.f32.mrb[0].mxu0
  %v7118 = vadd.f32 %v6893, %v7117
  %v7119 = vpop.f32.mrb[0].mxu0
  %7120 = vdwg.mxu0
  %7121 = vmatprep.subr.mxu0 0.0
  %7122 = vmatpush1.msra.mxu0 %v6567
  %7123 = vmatprep.subr.mxu0 0.0
  %7124 = vmatpush1.msra.mxu0 %v6568
  %7125 = vmatprep.subr.mxu0 0.0
  %7126 = vmatpush1.msra.mxu0 %v6569
  %7127 = vmatprep.subr.mxu0 0.0
  %7128 = vmatpush1.msra.mxu0 %v6570
  %7129 = vmatprep.subr.mxu0 0.0
  %7130 = vmatpush1.msra.mxu0 %v6571
  %7131 = vmatprep.subr.mxu0 0.0
  %7132 = vmatpush1.msra.mxu0 %v6572
  %7133 = vmatprep.subr.mxu0 0.0
  %7134 = vmatpush1.msra.mxu0 %v6573
  %7135 = vmatprep.subr.mxu0 0.0
  %7136 = vmatpush1.msra.mxu0 %v6574
  %7137 = vmatprep.subr.mxu0 0.0
  %7138 = vmatpush1.msra.mxu0 0.0
  %7139 = vmatprep.subr.mxu0 0.0
  %7140 = vmatpush1.msra.mxu0 0.0
  %7141 = vmatprep.subr.mxu0 0.0
  %7142 = vmatpush1.msra.mxu0 0.0
  %7143 = vmatprep.subr.mxu0 0.0
  %7144 = vmatpush1.msra.mxu0 0.0
  %7145 = vmatprep.subr.mxu0 0.0
  %7146 = vmatpush1.msra.mxu0 0.0
  %7147 = vmatprep.subr.mxu0 0.0
  %7148 = vmatpush1.msra.mxu0 0.0
  %7149 = vmatprep.subr.mxu0 0.0
  %7150 = vmatpush1.msra.mxu0 0.0
  %7151 = vmatprep.subr.mxu0 0.0
  %7152 = vmatpush1.msra.mxu0 0.0
  %7153 = vmatprep.subr.mxu0 0.0
  %7154 = vmatpush1.msra.mxu0 0.0
  %7155 = vmatprep.subr.mxu0 0.0
  %7156 = vmatpush1.msra.mxu0 0.0
  %7157 = vmatprep.subr.mxu0 0.0
  %7158 = vmatpush1.msra.mxu0 0.0
  %7159 = vmatprep.subr.mxu0 0.0
  %7160 = vmatpush1.msra.mxu0 0.0
  %7161 = vmatprep.subr.mxu0 0.0
  %7162 = vmatpush1.msra.mxu0 0.0
  %7163 = vmatprep.subr.mxu0 0.0
  %7164 = vmatpush1.msra.mxu0 0.0
  %7165 = vmatprep.subr.mxu0 0.0
  %7166 = vmatpush1.msra.mxu0 0.0
  %7167 = vmatprep.subr.mxu0 0.0
  %7168 = vmatpush1.msra.mxu0 0.0
  %7169 = vmatprep.subr.mxu0 0.0
  %7170 = vmatpush1.msra.mxu0 0.0
  %7171 = vmatprep.subr.mxu0 0.0
  %7172 = vmatpush1.msra.mxu0 0.0
  %7173 = vmatprep.subr.mxu0 0.0
  %7174 = vmatpush1.msra.mxu0 0.0
  %7175 = vmatprep.subr.mxu0 0.0
  %7176 = vmatpush1.msra.mxu0 0.0
  %7177 = vmatprep.subr.mxu0 0.0
  %7178 = vmatpush1.msra.mxu0 0.0
  %7179 = vmatprep.subr.mxu0 0.0
  %7180 = vmatpush1.msra.mxu0 0.0
  %7181 = vmatprep.subr.mxu0 0.0
  %7182 = vmatpush1.msra.mxu0 0.0
  %7183 = vmatprep.subr.mxu0 0.0
  %7184 = vmatpush1.msra.mxu0 0.0
  %7185 = vmatprep.mubr.f32.mxu0 0.0
  %7186 = vmatmul.mubr.f32.gmra.mrb[0].mxu0 %v6576
  %v7187 = vpop.f32.mrb[0].mxu0
  %v7188 = vadd.f32 %v6963, %v7187
  %v7189 = vpop.f32.mrb[0].mxu0
  %7190 = vmatprep.mubr.f32.mxu0 0.0
  %7191 = vmatmul.mubr.f32.gmra.mrb[0].mxu0 %v6579
  %v7192 = vpop.f32.mrb[0].mxu0
  %v7193 = vadd.f32 %v6968, %v7192
  %v7194 = vpop.f32.mrb[0].mxu0
  %7195 = vmatprep.mubr.f32.mxu0 0.0
  %7196 = vmatmul.mubr.f32.gmra.mrb[0].mxu0 %v6582
  %v7197 = vpop.f32.mrb[0].mxu0
  %v7198 = vadd.f32 %v6973, %v7197
  %v7199 = vpop.f32.mrb[0].mxu0
  %7200 = vmatprep.mubr.f32.mxu0 0.0
  %7201 = vmatmul.mubr.f32.gmra.mrb[0].mxu0 %v6585
  %v7202 = vpop.f32.mrb[0].mxu0
  %v7203 = vadd.f32 %v6978, %v7202
  %v7204 = vpop.f32.mrb[0].mxu0
  %7205 = vmatprep.mubr.f32.mxu0 0.0
  %7206 = vmatmul.mubr.f32.gmra.mrb[0].mxu0 %v6588
  %v7207 = vpop.f32.mrb[0].mxu0
  %v7208 = vadd.f32 %v6983, %v7207
  %v7209 = vpop.f32.mrb[0].mxu0
  %7210 = vmatprep.mubr.f32.mxu0 0.0
  %7211 = vmatmul.mubr.f32.gmra.mrb[0].mxu0 %v6591
  %v7212 = vpop.f32.mrb[0].mxu0
  %v7213 = vadd.f32 %v6988, %v7212
  %v7214 = vpop.f32.mrb[0].mxu0
  %7215 = vmatprep.mubr.f32.mxu0 0.0
  %7216 = vmatmul.mubr.f32.gmra.mrb[0].mxu0 %v6594
  %v7217 = vpop.f32.mrb[0].mxu0
  %v7218 = vadd.f32 %v6993, %v7217
  %v7219 = vpop.f32.mrb[0].mxu0
  %7220 = vmatprep.mubr.f32.mxu0 0.0
  %7221 = vmatmul.mubr.f32.gmra.mrb[0].mxu0 %v6597
  %v7222 = vpop.f32.mrb[0].mxu0
  %v7223 = vadd.f32 %v6998, %v7222
  %v7224 = vpop.f32.mrb[0].mxu0
  %7225 = vmatprep.mubr.f32.mxu0 0.0
  %7226 = vmatmul.mubr.f32.gmra.mrb[0].mxu0 %v6600
  %v7227 = vpop.f32.mrb[0].mxu0
  %v7228 = vadd.f32 %v7003, %v7227
  %v7229 = vpop.f32.mrb[0].mxu0
  %7230 = vmatprep.mubr.f32.mxu0 0.0
  %7231 = vmatmul.mubr.f32.gmra.mrb[0].mxu0 %v6603
  %v7232 = vpop.f32.mrb[0].mxu0
  %v7233 = vadd.f32 %v7008, %v7232
  %v7234 = vpop.f32.mrb[0].mxu0
  %7235 = vmatprep.mubr.f32.mxu0 0.0
  %7236 = vmatmul.mubr.f32.gmra.mrb[0].mxu0 %v6606
  %v7237 = vpop.f32.mrb[0].mxu0
  %v7238 = vadd.f32 %v7013, %v7237
  %v7239 = vpop.f32.mrb[0].mxu0
  %7240 = vmatprep.mubr.f32.mxu0 0.0
  %7241 = vmatmul.mubr.f32.gmra.mrb[0].mxu0 %v6609
  %v7242 = vpop.f32.mrb[0].mxu0
  %v7243 = vadd.f32 %v7018, %v7242
  %v7244 = vpop.f32.mrb[0].mxu0
  %7245 = vmatprep.mubr.f32.mxu0 0.0
  %7246 = vmatmul.mubr.f32.gmra.mrb[0].mxu0 %v6612
  %v7247 = vpop.f32.mrb[0].mxu0
  %v7248 = vadd.f32 %v7023, %v7247
  %v7249 = vpop.f32.mrb[0].mxu0
  %7250 = vmatprep.mubr.f32.mxu0 0.0
  %7251 = vmatmul.mubr.f32.gmra.mrb[0].mxu0 %v6615
  %v7252 = vpop.f32.mrb[0].mxu0
  %v7253 = vadd.f32 %v7028, %v7252
  %v7254 = vpop.f32.mrb[0].mxu0
  %7255 = vmatprep.mubr.f32.mxu0 0.0
  %7256 = vmatmul.mubr.f32.gmra.mrb[0].mxu0 %v6618
  %v7257 = vpop.f32.mrb[0].mxu0
  %v7258 = vadd.f32 %v7033, %v7257
  %v7259 = vpop.f32.mrb[0].mxu0
  %7260 = vmatprep.mubr.f32.mxu0 0.0
  %7261 = vmatmul.mubr.f32.gmra.mrb[0].mxu0 %v6621
  %v7262 = vpop.f32.mrb[0].mxu0
  %v7263 = vadd.f32 %v7038, %v7262
  %v7264 = vpop.f32.mrb[0].mxu0
  %7265 = vmatprep.mubr.f32.mxu0 0.0
  %7266 = vmatmul.mubr.f32.gmra.mrb[0].mxu0 %v6624
  %v7267 = vpop.f32.mrb[0].mxu0
  %v7268 = vadd.f32 %v7043, %v7267
  %v7269 = vpop.f32.mrb[0].mxu0
  %7270 = vmatprep.mubr.f32.mxu0 0.0
  %7271 = vmatmul.mubr.f32.gmra.mrb[0].mxu0 %v6627
  %v7272 = vpop.f32.mrb[0].mxu0
  %v7273 = vadd.f32 %v7048, %v7272
  %v7274 = vpop.f32.mrb[0].mxu0
  %7275 = vmatprep.mubr.f32.mxu0 0.0
  %7276 = vmatmul.mubr.f32.gmra.mrb[0].mxu0 %v6630
  %v7277 = vpop.f32.mrb[0].mxu0
  %v7278 = vadd.f32 %v7053, %v7277
  %v7279 = vpop.f32.mrb[0].mxu0
  %7280 = vmatprep.mubr.f32.mxu0 0.0
  %7281 = vmatmul.mubr.f32.gmra.mrb[0].mxu0 %v6633
  %v7282 = vpop.f32.mrb[0].mxu0
  %v7283 = vadd.f32 %v7058, %v7282
  %v7284 = vpop.f32.mrb[0].mxu0
  %7285 = vmatprep.mubr.f32.mxu0 0.0
  %7286 = vmatmul.mubr.f32.gmra.mrb[0].mxu0 %v6636
  %v7287 = vpop.f32.mrb[0].mxu0
  %v7288 = vadd.f32 %v7063, %v7287
  %v7289 = vpop.f32.mrb[0].mxu0
  %7290 = vmatprep.mubr.f32.mxu0 0.0
  %7291 = vmatmul.mubr.f32.gmra.mrb[0].mxu0 %v6639
  %v7292 = vpop.f32.mrb[0].mxu0
  %v7293 = vadd.f32 %v7068, %v7292
  %v7294 = vpop.f32.mrb[0].mxu0
  %7295 = vmatprep.mubr.f32.mxu0 0.0
  %7296 = vmatmul.mubr.f32.gmra.mrb[0].mxu0 %v6642
  %v7297 = vpop.f32.mrb[0].mxu0
  %v7298 = vadd.f32 %v7073, %v7297
  %v7299 = vpop.f32.mrb[0].mxu0
  %7300 = vmatprep.mubr.f32.mxu0 0.0
  %7301 = vmatmul.mubr.f32.gmra.mrb[0].mxu0 %v6645
  %v7302 = vpop.f32.mrb[0].mxu0
  %v7303 = vadd.f32 %v7078, %v7302
  %v7304 = vpop.f32.mrb[0].mxu0
  %7305 = vmatprep.mubr.f32.mxu0 0.0
  %7306 = vmatmul.mubr.f32.gmra.mrb[0].mxu0 %v6648
  %v7307 = vpop.f32.mrb[0].mxu0
  %v7308 = vadd.f32 %v7083, %v7307
  %v7309 = vpop.f32.mrb[0].mxu0
  %7310 = vmatprep.mubr.f32.mxu0 0.0
  %7311 = vmatmul.mubr.f32.gmra.mrb[0].mxu0 %v6651
  %v7312 = vpop.f32.mrb[0].mxu0
  %v7313 = vadd.f32 %v7088, %v7312
  %v7314 = vpop.f32.mrb[0].mxu0
  %7315 = vmatprep.mubr.f32.mxu0 0.0
  %7316 = vmatmul.mubr.f32.gmra.mrb[0].mxu0 %v6654
  %v7317 = vpop.f32.mrb[0].mxu0
  %v7318 = vadd.f32 %v7093, %v7317
  %v7319 = vpop.f32.mrb[0].mxu0
  %7320 = vmatprep.mubr.f32.mxu0 0.0
  %7321 = vmatmul.mubr.f32.gmra.mrb[0].mxu0 %v6657
  %v7322 = vpop.f32.mrb[0].mxu0
  %v7323 = vadd.f32 %v7098, %v7322
  %v7324 = vpop.f32.mrb[0].mxu0
  %7325 = vmatprep.mubr.f32.mxu0 0.0
  %7326 = vmatmul.mubr.f32.gmra.mrb[0].mxu0 %v6660
  %v7327 = vpop.f32.mrb[0].mxu0
  %v7328 = vadd.f32 %v7103, %v7327
  %v7329 = vpop.f32.mrb[0].mxu0
  %7330 = vmatprep.mubr.f32.mxu0 0.0
  %7331 = vmatmul.mubr.f32.gmra.mrb[0].mxu0 %v6663
  %v7332 = vpop.f32.mrb[0].mxu0
  %v7333 = vadd.f32 %v7108, %v7332
  %v7334 = vpop.f32.mrb[0].mxu0
  %7335 = vmatprep.mubr.f32.mxu0 0.0
  %7336 = vmatmul.mubr.f32.gmra.mrb[0].mxu0 %v6666
  %v7337 = vpop.f32.mrb[0].mxu0
  %v7338 = vadd.f32 %v7113, %v7337
  %v7339 = vpop.f32.mrb[0].mxu0
  %7340 = vmatprep.mubr.f32.mxu0 0.0
  %7341 = vmatmul.mubr.f32.gmra.mrb[0].mxu0 %v6669
  %v7342 = vpop.f32.mrb[0].mxu0
  %v7343 = vadd.f32 %v7118, %v7342
  %v7344 = vpop.f32.mrb[0].mxu0
  %7345 = vdwg.mxu0
  %v7346 = vsel %vm26, %v7188, 0.0
  %v7347 = vsel %vm26, %v7193, 0.0
  %v7348 = vadd.f32 %v7346, %v7347
  %v7349 = vsel %vm26, %v7198, 0.0
  %v7350 = vadd.f32 %v7348, %v7349
  %v7351 = vsel %vm26, %v7203, 0.0
  %v7352 = vadd.f32 %v7350, %v7351
  %v7353 = vsel %vm26, %v7208, 0.0
  %v7354 = vadd.f32 %v7352, %v7353
  %v7355 = vsel %vm26, %v7213, 0.0
  %v7356 = vadd.f32 %v7354, %v7355
  %v7357 = vsel %vm26, %v7218, 0.0
  %v7358 = vadd.f32 %v7356, %v7357
  %v7359 = vsel %vm26, %v7223, 0.0
  %v7360 = vadd.f32 %v7358, %v7359
  %v7361 = vsel %vm26, %v7228, 0.0
  %v7362 = vadd.f32 %v7360, %v7361
  %v7363 = vsel %vm26, %v7233, 0.0
  %v7364 = vadd.f32 %v7362, %v7363
  %v7365 = vsel %vm26, %v7238, 0.0
  %v7366 = vadd.f32 %v7364, %v7365
  %v7367 = vsel %vm26, %v7243, 0.0
  %v7368 = vadd.f32 %v7366, %v7367
  %v7369 = vsel %vm26, %v7248, 0.0
  %v7370 = vadd.f32 %v7368, %v7369
  %v7371 = vsel %vm26, %v7253, 0.0
  %v7372 = vadd.f32 %v7370, %v7371
  %v7373 = vsel %vm26, %v7258, 0.0
  %v7374 = vadd.f32 %v7372, %v7373
  %v7375 = vsel %vm26, %v7263, 0.0
  %v7376 = vadd.f32 %v7374, %v7375
  %v7377 = vsel %vm26, %v7268, 0.0
  %v7378 = vadd.f32 %v7376, %v7377
  %v7379 = vsel %vm26, %v7273, 0.0
  %v7380 = vadd.f32 %v7378, %v7379
  %v7381 = vsel %vm26, %v7278, 0.0
  %v7382 = vadd.f32 %v7380, %v7381
  %v7383 = vsel %vm26, %v7283, 0.0
  %v7384 = vadd.f32 %v7382, %v7383
  %v7385 = vsel %vm26, %v7288, 0.0
  %v7386 = vadd.f32 %v7384, %v7385
  %v7387 = vsel %vm26, %v7293, 0.0
  %v7388 = vadd.f32 %v7386, %v7387
  %v7389 = vsel %vm26, %v7298, 0.0
  %v7390 = vadd.f32 %v7388, %v7389
  %v7391 = vsel %vm26, %v7303, 0.0
  %v7392 = vadd.f32 %v7390, %v7391
  %v7393 = vsel %vm26, %v7308, 0.0
  %v7394 = vadd.f32 %v7392, %v7393
  %v7395 = vsel %vm26, %v7313, 0.0
  %v7396 = vadd.f32 %v7394, %v7395
  %v7397 = vsel %vm26, %v7318, 0.0
  %v7398 = vadd.f32 %v7396, %v7397
  %v7399 = vsel %vm26, %v7323, 0.0
  %v7400 = vadd.f32 %v7398, %v7399
  %v7401 = vsel %vm26, %v7328, 0.0
  %v7402 = vadd.f32 %v7400, %v7401
  %v7403 = vsel %vm26, %v7333, 0.0
  %v7404 = vadd.f32 %v7402, %v7403
  %v7405 = vsel %vm26, %v7338, 0.0
  %v7406 = vadd.f32 %v7404, %v7405
  %v7407 = vsel %vm26, %v7343, 0.0
  %v7408 = vadd.f32 %v7406, %v7407
  %v7409 = vrot.slane %v7408, 4
  %v7410 = vadd.f32 %v7408, %v7409
  %v7411 = vrot.slane %v7410, 2
  %v7412 = vadd.f32 %v7410, %v7411
  %v7413 = vrot.slane %v7412, 1
  %v7414 = vadd.f32 %v7412, %v7413
  %v7415 = vmul.f32 %v7188, %v7188
  %v7416 = vmul.f32 %v7193, %v7193
  %v7417 = vmul.f32 %v7198, %v7198
  %v7418 = vmul.f32 %v7203, %v7203
  %v7419 = vmul.f32 %v7208, %v7208
  %v7420 = vmul.f32 %v7213, %v7213
  %v7421 = vmul.f32 %v7218, %v7218
  %v7422 = vmul.f32 %v7223, %v7223
  %v7423 = vmul.f32 %v7228, %v7228
  %v7424 = vmul.f32 %v7233, %v7233
  %v7425 = vmul.f32 %v7238, %v7238
  %v7426 = vmul.f32 %v7243, %v7243
  %v7427 = vmul.f32 %v7248, %v7248
  %v7428 = vmul.f32 %v7253, %v7253
  %v7429 = vmul.f32 %v7258, %v7258
  %v7430 = vmul.f32 %v7263, %v7263
  %v7431 = vmul.f32 %v7268, %v7268
  %v7432 = vmul.f32 %v7273, %v7273
  %v7433 = vmul.f32 %v7278, %v7278
  %v7434 = vmul.f32 %v7283, %v7283
  %v7435 = vmul.f32 %v7288, %v7288
  %v7436 = vmul.f32 %v7293, %v7293
  %v7437 = vmul.f32 %v7298, %v7298
  %v7438 = vmul.f32 %v7303, %v7303
  %v7439 = vmul.f32 %v7308, %v7308
  %v7440 = vmul.f32 %v7313, %v7313
  %v7441 = vmul.f32 %v7318, %v7318
  %v7442 = vmul.f32 %v7323, %v7323
  %v7443 = vmul.f32 %v7328, %v7328
  %v7444 = vmul.f32 %v7333, %v7333
  %v7445 = vmul.f32 %v7338, %v7338
  %v7446 = vmul.f32 %v7343, %v7343
  %v7447 = vsel %vm26, %v7415, 0.0
  %v7448 = vsel %vm26, %v7416, 0.0
  %v7449 = vadd.f32 %v7447, %v7448
  %v7450 = vsel %vm26, %v7417, 0.0
  %v7451 = vadd.f32 %v7449, %v7450
  %v7452 = vsel %vm26, %v7418, 0.0
  %v7453 = vadd.f32 %v7451, %v7452
  %v7454 = vsel %vm26, %v7419, 0.0
  %v7455 = vadd.f32 %v7453, %v7454
  %v7456 = vsel %vm26, %v7420, 0.0
  %v7457 = vadd.f32 %v7455, %v7456
  %v7458 = vsel %vm26, %v7421, 0.0
  %v7459 = vadd.f32 %v7457, %v7458
  %v7460 = vsel %vm26, %v7422, 0.0
  %v7461 = vadd.f32 %v7459, %v7460
  %v7462 = vsel %vm26, %v7423, 0.0
  %v7463 = vadd.f32 %v7461, %v7462
  %v7464 = vsel %vm26, %v7424, 0.0
  %v7465 = vadd.f32 %v7463, %v7464
  %v7466 = vsel %vm26, %v7425, 0.0
  %v7467 = vadd.f32 %v7465, %v7466
  %v7468 = vsel %vm26, %v7426, 0.0
  %v7469 = vadd.f32 %v7467, %v7468
  %v7470 = vsel %vm26, %v7427, 0.0
  %v7471 = vadd.f32 %v7469, %v7470
  %v7472 = vsel %vm26, %v7428, 0.0
  %v7473 = vadd.f32 %v7471, %v7472
  %v7474 = vsel %vm26, %v7429, 0.0
  %v7475 = vadd.f32 %v7473, %v7474
  %v7476 = vsel %vm26, %v7430, 0.0
  %v7477 = vadd.f32 %v7475, %v7476
  %v7478 = vsel %vm26, %v7431, 0.0
  %v7479 = vadd.f32 %v7477, %v7478
  %v7480 = vsel %vm26, %v7432, 0.0
  %v7481 = vadd.f32 %v7479, %v7480
  %v7482 = vsel %vm26, %v7433, 0.0
  %v7483 = vadd.f32 %v7481, %v7482
  %v7484 = vsel %vm26, %v7434, 0.0
  %v7485 = vadd.f32 %v7483, %v7484
  %v7486 = vsel %vm26, %v7435, 0.0
  %v7487 = vadd.f32 %v7485, %v7486
  %v7488 = vsel %vm26, %v7436, 0.0
  %v7489 = vadd.f32 %v7487, %v7488
  %v7490 = vsel %vm26, %v7437, 0.0
  %v7491 = vadd.f32 %v7489, %v7490
  %v7492 = vsel %vm26, %v7438, 0.0
  %v7493 = vadd.f32 %v7491, %v7492
  %v7494 = vsel %vm26, %v7439, 0.0
  %v7495 = vadd.f32 %v7493, %v7494
  %v7496 = vsel %vm26, %v7440, 0.0
  %v7497 = vadd.f32 %v7495, %v7496
  %v7498 = vsel %vm26, %v7441, 0.0
  %v7499 = vadd.f32 %v7497, %v7498
  %v7500 = vsel %vm26, %v7442, 0.0
  %v7501 = vadd.f32 %v7499, %v7500
  %v7502 = vsel %vm26, %v7443, 0.0
  %v7503 = vadd.f32 %v7501, %v7502
  %v7504 = vsel %vm26, %v7444, 0.0
  %v7505 = vadd.f32 %v7503, %v7504
  %v7506 = vsel %vm26, %v7445, 0.0
  %v7507 = vadd.f32 %v7505, %v7506
  %v7508 = vsel %vm26, %v7446, 0.0
  %v7509 = vadd.f32 %v7507, %v7508
  %v7510 = vrot.slane %v7509, 4
  %v7511 = vadd.f32 %v7509, %v7510
  %v7512 = vrot.slane %v7511, 2
  %v7513 = vadd.f32 %v7511, %v7512
  %v7514 = vrot.slane %v7513, 1
  %v7515 = vadd.f32 %v7513, %v7514
  %v7516 = vmul.f32 %v7414, 0.00390625
  %v7517 = vmul.f32 %v7515, 0.00390625
  %v7518 = vmul.f32 %v7516, %v7516
  %v7519 = vsub.f32 %v7517, %v7518
  %v7520 = vadd.f32 %v7519, 1e-05
  %v7521 = vrsqrt.pop %v7520
  %v7522 = vmul.f32 %v115, %v7521
  %v7523 = vmul.f32 %v7516, %v7522
  %v7525 = vrot.slane %v7523, 4
  %v7527 = vsub.f32 %v115, %v7525
  %v7528 = vlaneseq
  %v7529 = vshrl.u32 %v7528, 7
  %v7530 = vsub.s32 2, %v7529
  %v7531 = vrot.slane %v7522, %v7530
  %v7532 = vmul.f32 %v7188, %v7531
  %v7533 = vmul.f32 %v7193, %v7531
  %v7534 = vmul.f32 %v7198, %v7531
  %v7535 = vmul.f32 %v7203, %v7531
  %v7536 = vmul.f32 %v7208, %v7531
  %v7537 = vmul.f32 %v7213, %v7531
  %v7538 = vmul.f32 %v7218, %v7531
  %v7539 = vmul.f32 %v7223, %v7531
  %v7540 = vmul.f32 %v7228, %v7531
  %v7541 = vmul.f32 %v7233, %v7531
  %v7542 = vmul.f32 %v7238, %v7531
  %v7543 = vmul.f32 %v7243, %v7531
  %v7544 = vmul.f32 %v7248, %v7531
  %v7545 = vmul.f32 %v7253, %v7531
  %v7546 = vmul.f32 %v7258, %v7531
  %v7547 = vmul.f32 %v7263, %v7531
  %v7548 = vmul.f32 %v7268, %v7531
  %v7549 = vmul.f32 %v7273, %v7531
  %v7550 = vmul.f32 %v7278, %v7531
  %v7551 = vmul.f32 %v7283, %v7531
  %v7552 = vmul.f32 %v7288, %v7531
  %v7553 = vmul.f32 %v7293, %v7531
  %v7554 = vmul.f32 %v7298, %v7531
  %v7555 = vmul.f32 %v7303, %v7531
  %v7556 = vmul.f32 %v7308, %v7531
  %v7557 = vmul.f32 %v7313, %v7531
  %v7558 = vmul.f32 %v7318, %v7531
  %v7559 = vmul.f32 %v7323, %v7531
  %v7560 = vmul.f32 %v7328, %v7531
  %v7561 = vmul.f32 %v7333, %v7531
  %v7562 = vmul.f32 %v7338, %v7531
  %v7563 = vmul.f32 %v7343, %v7531
  %v7564 = vlaneseq
  %v7565 = vshrl.u32 %v7564, 7
  %v7566 = vsub.s32 6, %v7565
  %v7567 = vrot.slane %v7527, %v7566
  %v7568 = vadd.f32 %v7532, %v7567
  %v7569 = vadd.f32 %v7533, %v7567
  %v7570 = vadd.f32 %v7534, %v7567
  %v7571 = vadd.f32 %v7535, %v7567
  %v7572 = vadd.f32 %v7536, %v7567
  %v7573 = vadd.f32 %v7537, %v7567
  %v7574 = vadd.f32 %v7538, %v7567
  %v7575 = vadd.f32 %v7539, %v7567
  %v7576 = vadd.f32 %v7540, %v7567
  %v7577 = vadd.f32 %v7541, %v7567
  %v7578 = vadd.f32 %v7542, %v7567
  %v7579 = vadd.f32 %v7543, %v7567
  %v7580 = vadd.f32 %v7544, %v7567
  %v7581 = vadd.f32 %v7545, %v7567
  %v7582 = vadd.f32 %v7546, %v7567
  %v7583 = vadd.f32 %v7547, %v7567
  %v7584 = vadd.f32 %v7548, %v7567
  %v7585 = vadd.f32 %v7549, %v7567
  %v7586 = vadd.f32 %v7550, %v7567
  %v7587 = vadd.f32 %v7551, %v7567
  %v7588 = vadd.f32 %v7552, %v7567
  %v7589 = vadd.f32 %v7553, %v7567
  %v7590 = vadd.f32 %v7554, %v7567
  %v7591 = vadd.f32 %v7555, %v7567
  %v7592 = vadd.f32 %v7556, %v7567
  %v7593 = vadd.f32 %v7557, %v7567
  %v7594 = vadd.f32 %v7558, %v7567
  %v7595 = vadd.f32 %v7559, %v7567
  %v7596 = vadd.f32 %v7560, %v7567
  %v7597 = vadd.f32 %v7561, %v7567
  %v7598 = vadd.f32 %v7562, %v7567
  %v7599 = vadd.f32 %v7563, %v7567
  %v7600 = vmax.f32 %v7568, 0.0
  %v7601 = vmax.f32 %v7569, 0.0
  %v7602 = vmax.f32 %v7570, 0.0
  %v7603 = vmax.f32 %v7571, 0.0
  %v7604 = vmax.f32 %v7572, 0.0
  %v7605 = vmax.f32 %v7573, 0.0
  %v7606 = vmax.f32 %v7574, 0.0
  %v7607 = vmax.f32 %v7575, 0.0
  %v7608 = vmax.f32 %v7576, 0.0
  %v7609 = vmax.f32 %v7577, 0.0
  %v7610 = vmax.f32 %v7578, 0.0
  %v7611 = vmax.f32 %v7579, 0.0
  %v7612 = vmax.f32 %v7580, 0.0
  %v7613 = vmax.f32 %v7581, 0.0
  %v7614 = vmax.f32 %v7582, 0.0
  %v7615 = vmax.f32 %v7583, 0.0
  %v7616 = vmax.f32 %v7584, 0.0
  %v7617 = vmax.f32 %v7585, 0.0
  %v7618 = vmax.f32 %v7586, 0.0
  %v7619 = vmax.f32 %v7587, 0.0
  %v7620 = vmax.f32 %v7588, 0.0
  %v7621 = vmax.f32 %v7589, 0.0
  %v7622 = vmax.f32 %v7590, 0.0
  %v7623 = vmax.f32 %v7591, 0.0
  %v7624 = vmax.f32 %v7592, 0.0
  %v7625 = vmax.f32 %v7593, 0.0
  %v7626 = vmax.f32 %v7594, 0.0
  %v7627 = vmax.f32 %v7595, 0.0
  %v7628 = vmax.f32 %v7596, 0.0
  %v7629 = vmax.f32 %v7597, 0.0
  %v7630 = vmax.f32 %v7598, 0.0
  %v7631 = vmax.f32 %v7599, 0.0
  %7632 = vst.msk [vmem:[%s2811 + $0x1] sm:$0xff] %vm26, %v7600
  %7633 = vst.msk [vmem:[%s2811 + $0x9] sm:$0xff] %vm26, %v7601
  %7634 = vst.msk [vmem:[%s2811 + $0x19] sm:$0xff] %vm26, %v7602
  %7635 = vst.msk [vmem:[%s2811 + $0x21] sm:$0xff] %vm26, %v7603
  %7636 = vst.msk [vmem:[%s2811 + $0x31] sm:$0xff] %vm26, %v7604
  %7637 = vst.msk [vmem:[%s2811 + $0x39] sm:$0xff] %vm26, %v7605
  %7638 = vst.msk [vmem:[%s2811 + $0x49] sm:$0xff] %vm26, %v7606
  %7639 = vst.msk [vmem:[%s2811 + $0x51] sm:$0xff] %vm26, %v7607
  %7640 = vst.msk [vmem:[%s2811 + $0x61] sm:$0xff] %vm26, %v7608
  %7641 = vst.msk [vmem:[%s2811 + $0x69] sm:$0xff] %vm26, %v7609
  %7642 = vst.msk [vmem:[%s2811 + $0x79] sm:$0xff] %vm26, %v7610
  %7643 = vst.msk [vmem:[%s2811 + $0x81] sm:$0xff] %vm26, %v7611
  %7644 = vst.msk [vmem:[%s2811 + $0x91] sm:$0xff] %vm26, %v7612
  %7645 = vst.msk [vmem:[%s2811 + $0x99] sm:$0xff] %vm26, %v7613
  %7646 = vst.msk [vmem:[%s2811 + $0xa9] sm:$0xff] %vm26, %v7614
  %7647 = vst.msk [vmem:[%s2811 + $0xb1] sm:$0xff] %vm26, %v7615
  %7648 = vst.msk [vmem:[%s2811 + $0xc1] sm:$0xff] %vm26, %v7616
  %7649 = vst.msk [vmem:[%s2811 + $0xc9] sm:$0xff] %vm26, %v7617
  %7650 = vst.msk [vmem:[%s2811 + $0xd9] sm:$0xff] %vm26, %v7618
  %7651 = vst.msk [vmem:[%s2811 + $0xe1] sm:$0xff] %vm26, %v7619
  %7652 = vst.msk [vmem:[%s2811 + $0xf1] sm:$0xff] %vm26, %v7620
  %7653 = vst.msk [vmem:[%s2811 + $0xf9] sm:$0xff] %vm26, %v7621
  %7654 = vst.msk [vmem:[%s2811 + $0x109] sm:$0xff] %vm26, %v7622
  %7655 = vst.msk [vmem:[%s2811 + $0x111] sm:$0xff] %vm26, %v7623
  %7656 = vst.msk [vmem:[%s2811 + $0x121] sm:$0xff] %vm26, %v7624
  %7657 = vst.msk [vmem:[%s2811 + $0x129] sm:$0xff] %vm26, %v7625
  %7658 = vst.msk [vmem:[%s2811 + $0x139] sm:$0xff] %vm26, %v7626
  %7659 = vst.msk [vmem:[%s2811 + $0x141] sm:$0xff] %vm26, %v7627
  %7660 = vst.msk [vmem:[%s2811 + $0x151] sm:$0xff] %vm26, %v7628
  %7661 = vst.msk [vmem:[%s2811 + $0x159] sm:$0xff] %vm26, %v7629
  %7662 = vst.msk [vmem:[%s2811 + $0x169] sm:$0xff] %vm26, %v7630
  %7663 = vst.msk [vmem:[%s2811 + $0x171] sm:$0xff] %vm26, %v7631
  %v7664 = vld [vmem:[#allocation3] sm:$0xff]
  %v7665 = vld [vmem:[#allocation3 + $0x8] sm:$0xff]
  %v7666 = vld [vmem:[#allocation3 + $0x18] sm:$0xff]
  %v7667 = vld [vmem:[#allocation3 + $0x20] sm:$0xff]
  %v7668 = vld [vmem:[#allocation3 + $0x30] sm:$0xff]
  %v7669 = vld [vmem:[#allocation3 + $0x38] sm:$0xff]
  %v7670 = vld [vmem:[#allocation3 + $0x48] sm:$0xff]
  %v7671 = vld [vmem:[#allocation3 + $0x50] sm:$0xff]
  %v7672 = vld [vmem:[#allocation3 + $0x60] sm:$0xff]
  %v7673 = vld [vmem:[#allocation3 + $0x68] sm:$0xff]
  %v7674 = vld [vmem:[#allocation3 + $0x78] sm:$0xff]
  %v7675 = vld [vmem:[#allocation3 + $0x80] sm:$0xff]
  %v7676 = vld [vmem:[#allocation3 + $0x90] sm:$0xff]
  %v7677 = vld [vmem:[#allocation3 + $0x98] sm:$0xff]
  %v7678 = vld [vmem:[#allocation3 + $0xa8] sm:$0xff]
  %v7679 = vld [vmem:[#allocation3 + $0xb0] sm:$0xff]
  %v7680 = vld [vmem:[#allocation3 + $0xc0] sm:$0xff]
  %v7681 = vld [vmem:[#allocation3 + $0xc8] sm:$0xff]
  %v7682 = vld [vmem:[#allocation3 + $0xd8] sm:$0xff]
  %v7683 = vld [vmem:[#allocation3 + $0xe0] sm:$0xff]
  %v7684 = vld [vmem:[#allocation3 + $0xf0] sm:$0xff]
  %v7685 = vld [vmem:[#allocation3 + $0xf8] sm:$0xff]
  %v7686 = vld [vmem:[#allocation3 + $0x108] sm:$0xff]
  %v7687 = vld [vmem:[#allocation3 + $0x110] sm:$0xff]
  %v7688 = vld [vmem:[#allocation3 + $0x120] sm:$0xff]
  %v7689 = vld [vmem:[#allocation3 + $0x128] sm:$0xff]
  %v7690 = vld [vmem:[#allocation3 + $0x138] sm:$0xff]
  %v7691 = vld [vmem:[#allocation3 + $0x140] sm:$0xff]
  %v7692 = vld [vmem:[#allocation3 + $0x150] sm:$0xff]
  %v7693 = vld [vmem:[#allocation3 + $0x158] sm:$0xff]
  %v7694 = vld [vmem:[#allocation3 + $0x168] sm:$0xff]
  %v7695 = vld [vmem:[#allocation3 + $0x170] sm:$0xff]
  %7696 = vst.msk [vmem:[#allocation4] sm:$0xff] %vm26, %v7664
  %7697 = vst.msk [vmem:[#allocation4 + $0x28] sm:$0xff] %vm26, %v7665
  %7698 = vst.msk [vmem:[#allocation4 + $0x50] sm:$0xff] %vm26, %v7666
  %7699 = vst.msk [vmem:[#allocation4 + $0x78] sm:$0xff] %vm26, %v7667
  %7700 = vst.msk [vmem:[#allocation4 + $0xa0] sm:$0xff] %vm26, %v7668
  %7701 = vst.msk [vmem:[#allocation4 + $0xc8] sm:$0xff] %vm26, %v7669
  %7702 = vst.msk [vmem:[#allocation4 + $0xf0] sm:$0xff] %vm26, %v7670
  %7703 = vst.msk [vmem:[#allocation4 + $0x118] sm:$0xff] %vm26, %v7671
  %7704 = vst.msk [vmem:[#allocation4 + $0x140] sm:$0xff] %vm26, %v7672
  %7705 = vst.msk [vmem:[#allocation4 + $0x168] sm:$0xff] %vm26, %v7673
  %7706 = vst.msk [vmem:[#allocation4 + $0x190] sm:$0xff] %vm26, %v7674
  %7707 = vst.msk [vmem:[#allocation4 + $0x1b8] sm:$0xff] %vm26, %v7675
  %7708 = vst.msk [vmem:[#allocation4 + $0x1e0] sm:$0xff] %vm26, %v7676
  %7709 = vst.msk [vmem:[#allocation4 + $0x208] sm:$0xff] %vm26, %v7677
  %7710 = vst.msk [vmem:[#allocation4 + $0x230] sm:$0xff] %vm26, %v7678
  %7711 = vst.msk [vmem:[#allocation4 + $0x258] sm:$0xff] %vm26, %v7679
  %7712 = vst.msk [vmem:[#allocation4 + $0x280] sm:$0xff] %vm26, %v7680
  %7713 = vst.msk [vmem:[#allocation4 + $0x2a8] sm:$0xff] %vm26, %v7681
  %7714 = vst.msk [vmem:[#allocation4 + $0x2d0] sm:$0xff] %vm26, %v7682
  %7715 = vst.msk [vmem:[#allocation4 + $0x2f8] sm:$0xff] %vm26, %v7683
  %7716 = vst.msk [vmem:[#allocation4 + $0x320] sm:$0xff] %vm26, %v7684
  %7717 = vst.msk [vmem:[#allocation4 + $0x348] sm:$0xff] %vm26, %v7685
  %7718 = vst.msk [vmem:[#allocation4 + $0x370] sm:$0xff] %vm26, %v7686
  %7719 = vst.msk [vmem:[#allocation4 + $0x398] sm:$0xff] %vm26, %v7687
  %7720 = vst.msk [vmem:[#allocation4 + $0x3c0] sm:$0xff] %vm26, %v7688
  %7721 = vst.msk [vmem:[#allocation4 + $0x3e8] sm:$0xff] %vm26, %v7689
  %7722 = vst.msk [vmem:[#allocation4 + $0x410] sm:$0xff] %vm26, %v7690
  %7723 = vst.msk [vmem:[#allocation4 + $0x438] sm:$0xff] %vm26, %v7691
  %7724 = vst.msk [vmem:[#allocation4 + $0x460] sm:$0xff] %vm26, %v7692
  %7725 = vst.msk [vmem:[#allocation4 + $0x488] sm:$0xff] %vm26, %v7693
  %7726 = vst.msk [vmem:[#allocation4 + $0x4b0] sm:$0xff] %vm26, %v7694
  %7727 = vst.msk [vmem:[#allocation4 + $0x4d8] sm:$0xff] %vm26, %v7695
  %v7728 = vld [vmem:[#allocation3 + $0x1] sm:$0xff]
  %v7729 = vld [vmem:[#allocation3 + $0x9] sm:$0xff]
  %v7730 = vld [vmem:[#allocation3 + $0x19] sm:$0xff]
  %v7731 = vld [vmem:[#allocation3 + $0x21] sm:$0xff]
  %v7732 = vld [vmem:[#allocation3 + $0x31] sm:$0xff]
  %v7733 = vld [vmem:[#allocation3 + $0x39] sm:$0xff]
  %v7734 = vld [vmem:[#allocation3 + $0x49] sm:$0xff]
  %v7735 = vld [vmem:[#allocation3 + $0x51] sm:$0xff]
  %v7736 = vld [vmem:[#allocation3 + $0x61] sm:$0xff]
  %v7737 = vld [vmem:[#allocation3 + $0x69] sm:$0xff]
  %v7738 = vld [vmem:[#allocation3 + $0x79] sm:$0xff]
  %v7739 = vld [vmem:[#allocation3 + $0x81] sm:$0xff]
  %v7740 = vld [vmem:[#allocation3 + $0x91] sm:$0xff]
  %v7741 = vld [vmem:[#allocation3 + $0x99] sm:$0xff]
  %v7742 = vld [vmem:[#allocation3 + $0xa9] sm:$0xff]
  %v7743 = vld [vmem:[#allocation3 + $0xb1] sm:$0xff]
  %v7744 = vld [vmem:[#allocation3 + $0xc1] sm:$0xff]
  %v7745 = vld [vmem:[#allocation3 + $0xc9] sm:$0xff]
  %v7746 = vld [vmem:[#allocation3 + $0xd9] sm:$0xff]
  %v7747 = vld [vmem:[#allocation3 + $0xe1] sm:$0xff]
  %v7748 = vld [vmem:[#allocation3 + $0xf1] sm:$0xff]
  %v7749 = vld [vmem:[#allocation3 + $0xf9] sm:$0xff]
  %v7750 = vld [vmem:[#allocation3 + $0x109] sm:$0xff]
  %v7751 = vld [vmem:[#allocation3 + $0x111] sm:$0xff]
  %v7752 = vld [vmem:[#allocation3 + $0x121] sm:$0xff]
  %v7753 = vld [vmem:[#allocation3 + $0x129] sm:$0xff]
  %v7754 = vld [vmem:[#allocation3 + $0x139] sm:$0xff]
  %v7755 = vld [vmem:[#allocation3 + $0x141] sm:$0xff]
  %v7756 = vld [vmem:[#allocation3 + $0x151] sm:$0xff]
  %v7757 = vld [vmem:[#allocation3 + $0x159] sm:$0xff]
  %v7758 = vld [vmem:[#allocation3 + $0x169] sm:$0xff]
  %v7759 = vld [vmem:[#allocation3 + $0x171] sm:$0xff]
  %7792 = vrot.lane.b32.xlu0 %v7728, 64
  %v7793 = vpop.permute.xlu0 %7792
  %7794 = vrot.lane.b32.xlu0 %v7729, 64
  %v7795 = vpop.permute.xlu0 %7794
  %7796 = vrot.lane.b32.xlu0 %v7730, 64
  %v7797 = vpop.permute.xlu0 %7796
  %7798 = vrot.lane.b32.xlu0 %v7731, 64
  %v7799 = vpop.permute.xlu0 %7798
  %7800 = vrot.lane.b32.xlu0 %v7732, 64
  %v7801 = vpop.permute.xlu0 %7800
  %7802 = vrot.lane.b32.xlu0 %v7733, 64
  %v7803 = vpop.permute.xlu0 %7802
  %7804 = vrot.lane.b32.xlu0 %v7734, 64
  %v7805 = vpop.permute.xlu0 %7804
  %7806 = vrot.lane.b32.xlu0 %v7735, 64
  %v7807 = vpop.permute.xlu0 %7806
  %7808 = vrot.lane.b32.xlu0 %v7736, 64
  %v7809 = vpop.permute.xlu0 %7808
  %7810 = vrot.lane.b32.xlu0 %v7737, 64
  %v7811 = vpop.permute.xlu0 %7810
  %7812 = vrot.lane.b32.xlu0 %v7738, 64
  %v7813 = vpop.permute.xlu0 %7812
  %7814 = vrot.lane.b32.xlu0 %v7739, 64
  %v7815 = vpop.permute.xlu0 %7814
  %7816 = vrot.lane.b32.xlu0 %v7740, 64
  %v7817 = vpop.permute.xlu0 %7816
  %7818 = vrot.lane.b32.xlu0 %v7741, 64
  %v7819 = vpop.permute.xlu0 %7818
  %7820 = vrot.lane.b32.xlu0 %v7742, 64
  %v7821 = vpop.permute.xlu0 %7820
  %7822 = vrot.lane.b32.xlu0 %v7743, 64
  %v7823 = vpop.permute.xlu0 %7822
  %7824 = vrot.lane.b32.xlu0 %v7744, 64
  %v7825 = vpop.permute.xlu0 %7824
  %7826 = vrot.lane.b32.xlu0 %v7745, 64
  %v7827 = vpop.permute.xlu0 %7826
  %7828 = vrot.lane.b32.xlu0 %v7746, 64
  %v7829 = vpop.permute.xlu0 %7828
  %7830 = vrot.lane.b32.xlu0 %v7747, 64
  %v7831 = vpop.permute.xlu0 %7830
  %7832 = vrot.lane.b32.xlu0 %v7748, 64
  %v7833 = vpop.permute.xlu0 %7832
  %7834 = vrot.lane.b32.xlu0 %v7749, 64
  %v7835 = vpop.permute.xlu0 %7834
  %7836 = vrot.lane.b32.xlu0 %v7750, 64
  %v7837 = vpop.permute.xlu0 %7836
  %7838 = vrot.lane.b32.xlu0 %v7751, 64
  %v7839 = vpop.permute.xlu0 %7838
  %7840 = vrot.lane.b32.xlu0 %v7752, 64
  %v7841 = vpop.permute.xlu0 %7840
  %7842 = vrot.lane.b32.xlu0 %v7753, 64
  %v7843 = vpop.permute.xlu0 %7842
  %7844 = vrot.lane.b32.xlu0 %v7754, 64
  %v7845 = vpop.permute.xlu0 %7844
  %7846 = vrot.lane.b32.xlu0 %v7755, 64
  %v7847 = vpop.permute.xlu0 %7846
  %7848 = vrot.lane.b32.xlu0 %v7756, 64
  %v7849 = vpop.permute.xlu0 %7848
  %7850 = vrot.lane.b32.xlu0 %v7757, 64
  %v7851 = vpop.permute.xlu0 %7850
  %7852 = vrot.lane.b32.xlu0 %v7758, 64
  %v7853 = vpop.permute.xlu0 %7852
  %7854 = vrot.lane.b32.xlu0 %v7759, 64
  %v7855 = vpop.permute.xlu0 %7854
  %7888 = vst.msk [vmem:[#allocation4] sm:$0xff] %vm3068, %v7793
  %7889 = vst.msk [vmem:[#allocation4 + $0x28] sm:$0xff] %vm3068, %v7795
  %7890 = vst.msk [vmem:[#allocation4 + $0x50] sm:$0xff] %vm3068, %v7797
  %7891 = vst.msk [vmem:[#allocation4 + $0x78] sm:$0xff] %vm3068, %v7799
  %7892 = vst.msk [vmem:[#allocation4 + $0xa0] sm:$0xff] %vm3068, %v7801
  %7893 = vst.msk [vmem:[#allocation4 + $0xc8] sm:$0xff] %vm3068, %v7803
  %7894 = vst.msk [vmem:[#allocation4 + $0xf0] sm:$0xff] %vm3068, %v7805
  %7895 = vst.msk [vmem:[#allocation4 + $0x118] sm:$0xff] %vm3068, %v7807
  %7896 = vst.msk [vmem:[#allocation4 + $0x140] sm:$0xff] %vm3068, %v7809
  %7897 = vst.msk [vmem:[#allocation4 + $0x168] sm:$0xff] %vm3068, %v7811
  %7898 = vst.msk [vmem:[#allocation4 + $0x190] sm:$0xff] %vm3068, %v7813
  %7899 = vst.msk [vmem:[#allocation4 + $0x1b8] sm:$0xff] %vm3068, %v7815
  %7900 = vst.msk [vmem:[#allocation4 + $0x1e0] sm:$0xff] %vm3068, %v7817
  %7901 = vst.msk [vmem:[#allocation4 + $0x208] sm:$0xff] %vm3068, %v7819
  %7902 = vst.msk [vmem:[#allocation4 + $0x230] sm:$0xff] %vm3068, %v7821
  %7903 = vst.msk [vmem:[#allocation4 + $0x258] sm:$0xff] %vm3068, %v7823
  %7904 = vst.msk [vmem:[#allocation4 + $0x280] sm:$0xff] %vm3068, %v7825
  %7905 = vst.msk [vmem:[#allocation4 + $0x2a8] sm:$0xff] %vm3068, %v7827
  %7906 = vst.msk [vmem:[#allocation4 + $0x2d0] sm:$0xff] %vm3068, %v7829
  %7907 = vst.msk [vmem:[#allocation4 + $0x2f8] sm:$0xff] %vm3068, %v7831
  %7908 = vst.msk [vmem:[#allocation4 + $0x320] sm:$0xff] %vm3068, %v7833
  %7909 = vst.msk [vmem:[#allocation4 + $0x348] sm:$0xff] %vm3068, %v7835
  %7910 = vst.msk [vmem:[#allocation4 + $0x370] sm:$0xff] %vm3068, %v7837
  %7911 = vst.msk [vmem:[#allocation4 + $0x398] sm:$0xff] %vm3068, %v7839
  %7912 = vst.msk [vmem:[#allocation4 + $0x3c0] sm:$0xff] %vm3068, %v7841
  %7913 = vst.msk [vmem:[#allocation4 + $0x3e8] sm:$0xff] %vm3068, %v7843
  %7914 = vst.msk [vmem:[#allocation4 + $0x410] sm:$0xff] %vm3068, %v7845
  %7915 = vst.msk [vmem:[#allocation4 + $0x438] sm:$0xff] %vm3068, %v7847
  %7916 = vst.msk [vmem:[#allocation4 + $0x460] sm:$0xff] %vm3068, %v7849
  %7917 = vst.msk [vmem:[#allocation4 + $0x488] sm:$0xff] %vm3068, %v7851
  %7918 = vst.msk [vmem:[#allocation4 + $0x4b0] sm:$0xff] %vm3068, %v7853
  %7919 = vst.msk [vmem:[#allocation4 + $0x4d8] sm:$0xff] %vm3068, %v7855
  %v7920 = vld [vmem:[#allocation3 + $0x2] sm:$0xff]
  %v7921 = vld [vmem:[#allocation3 + $0xa] sm:$0xff]
  %v7922 = vld [vmem:[#allocation3 + $0x1a] sm:$0xff]
  %v7923 = vld [vmem:[#allocation3 + $0x22] sm:$0xff]
  %v7924 = vld [vmem:[#allocation3 + $0x32] sm:$0xff]
  %v7925 = vld [vmem:[#allocation3 + $0x3a] sm:$0xff]
  %v7926 = vld [vmem:[#allocation3 + $0x4a] sm:$0xff]
  %v7927 = vld [vmem:[#allocation3 + $0x52] sm:$0xff]
  %v7928 = vld [vmem:[#allocation3 + $0x62] sm:$0xff]
  %v7929 = vld [vmem:[#allocation3 + $0x6a] sm:$0xff]
  %v7930 = vld [vmem:[#allocation3 + $0x7a] sm:$0xff]
  %v7931 = vld [vmem:[#allocation3 + $0x82] sm:$0xff]
  %v7932 = vld [vmem:[#allocation3 + $0x92] sm:$0xff]
  %v7933 = vld [vmem:[#allocation3 + $0x9a] sm:$0xff]
  %v7934 = vld [vmem:[#allocation3 + $0xaa] sm:$0xff]
  %v7935 = vld [vmem:[#allocation3 + $0xb2] sm:$0xff]
  %v7936 = vld [vmem:[#allocation3 + $0xc2] sm:$0xff]
  %v7937 = vld [vmem:[#allocation3 + $0xca] sm:$0xff]
  %v7938 = vld [vmem:[#allocation3 + $0xda] sm:$0xff]
  %v7939 = vld [vmem:[#allocation3 + $0xe2] sm:$0xff]
  %v7940 = vld [vmem:[#allocation3 + $0xf2] sm:$0xff]
  %v7941 = vld [vmem:[#allocation3 + $0xfa] sm:$0xff]
  %v7942 = vld [vmem:[#allocation3 + $0x10a] sm:$0xff]
  %v7943 = vld [vmem:[#allocation3 + $0x112] sm:$0xff]
  %v7944 = vld [vmem:[#allocation3 + $0x122] sm:$0xff]
  %v7945 = vld [vmem:[#allocation3 + $0x12a] sm:$0xff]
  %v7946 = vld [vmem:[#allocation3 + $0x13a] sm:$0xff]
  %v7947 = vld [vmem:[#allocation3 + $0x142] sm:$0xff]
  %v7948 = vld [vmem:[#allocation3 + $0x152] sm:$0xff]
  %v7949 = vld [vmem:[#allocation3 + $0x15a] sm:$0xff]
  %v7950 = vld [vmem:[#allocation3 + $0x16a] sm:$0xff]
  %v7951 = vld [vmem:[#allocation3 + $0x172] sm:$0xff]
  %7952 = vst.msk [vmem:[#allocation4 + $0x8] sm:$0xff] %vm26, %v7920
  %7953 = vst.msk [vmem:[#allocation4 + $0x30] sm:$0xff] %vm26, %v7921
  %7954 = vst.msk [vmem:[#allocation4 + $0x58] sm:$0xff] %vm26, %v7922
  %7955 = vst.msk [vmem:[#allocation4 + $0x80] sm:$0xff] %vm26, %v7923
  %7956 = vst.msk [vmem:[#allocation4 + $0xa8] sm:$0xff] %vm26, %v7924
  %7957 = vst.msk [vmem:[#allocation4 + $0xd0] sm:$0xff] %vm26, %v7925
  %7958 = vst.msk [vmem:[#allocation4 + $0xf8] sm:$0xff] %vm26, %v7926
  %7959 = vst.msk [vmem:[#allocation4 + $0x120] sm:$0xff] %vm26, %v7927
  %7960 = vst.msk [vmem:[#allocation4 + $0x148] sm:$0xff] %vm26, %v7928
  %7961 = vst.msk [vmem:[#allocation4 + $0x170] sm:$0xff] %vm26, %v7929
  %7962 = vst.msk [vmem:[#allocation4 + $0x198] sm:$0xff] %vm26, %v7930
  %7963 = vst.msk [vmem:[#allocation4 + $0x1c0] sm:$0xff] %vm26, %v7931
  %7964 = vst.msk [vmem:[#allocation4 + $0x1e8] sm:$0xff] %vm26, %v7932
  %7965 = vst.msk [vmem:[#allocation4 + $0x210] sm:$0xff] %vm26, %v7933
  %7966 = vst.msk [vmem:[#allocation4 + $0x238] sm:$0xff] %vm26, %v7934
  %7967 = vst.msk [vmem:[#allocation4 + $0x260] sm:$0xff] %vm26, %v7935
  %7968 = vst.msk [vmem:[#allocation4 + $0x288] sm:$0xff] %vm26, %v7936
  %7969 = vst.msk [vmem:[#allocation4 + $0x2b0] sm:$0xff] %vm26, %v7937
  %7970 = vst.msk [vmem:[#allocation4 + $0x2d8] sm:$0xff] %vm26, %v7938
  %7971 = vst.msk [vmem:[#allocation4 + $0x300] sm:$0xff] %vm26, %v7939
  %7972 = vst.msk [vmem:[#allocation4 + $0x328] sm:$0xff] %vm26, %v7940
  %7973 = vst.msk [vmem:[#allocation4 + $0x350] sm:$0xff] %vm26, %v7941
  %7974 = vst.msk [vmem:[#allocation4 + $0x378] sm:$0xff] %vm26, %v7942
  %7975 = vst.msk [vmem:[#allocation4 + $0x3a0] sm:$0xff] %vm26, %v7943
  %7976 = vst.msk [vmem:[#allocation4 + $0x3c8] sm:$0xff] %vm26, %v7944
  %7977 = vst.msk [vmem:[#allocation4 + $0x3f0] sm:$0xff] %vm26, %v7945
  %7978 = vst.msk [vmem:[#allocation4 + $0x418] sm:$0xff] %vm26, %v7946
  %7979 = vst.msk [vmem:[#allocation4 + $0x440] sm:$0xff] %vm26, %v7947
  %7980 = vst.msk [vmem:[#allocation4 + $0x468] sm:$0xff] %vm26, %v7948
  %7981 = vst.msk [vmem:[#allocation4 + $0x490] sm:$0xff] %vm26, %v7949
  %7982 = vst.msk [vmem:[#allocation4 + $0x4b8] sm:$0xff] %vm26, %v7950
  %7983 = vst.msk [vmem:[#allocation4 + $0x4e0] sm:$0xff] %vm26, %v7951
  %v7984 = vld [vmem:[%s2811] sm:$0xff]
  %v7985 = vld [vmem:[%s2811 + $0x8] sm:$0xff]
  %v7986 = vld [vmem:[%s2811 + $0x18] sm:$0xff]
  %v7987 = vld [vmem:[%s2811 + $0x20] sm:$0xff]
  %v7988 = vld [vmem:[%s2811 + $0x30] sm:$0xff]
  %v7989 = vld [vmem:[%s2811 + $0x38] sm:$0xff]
  %v7990 = vld [vmem:[%s2811 + $0x48] sm:$0xff]
  %v7991 = vld [vmem:[%s2811 + $0x50] sm:$0xff]
  %v7992 = vld [vmem:[%s2811 + $0x60] sm:$0xff]
  %v7993 = vld [vmem:[%s2811 + $0x68] sm:$0xff]
  %v7994 = vld [vmem:[%s2811 + $0x78] sm:$0xff]
  %v7995 = vld [vmem:[%s2811 + $0x80] sm:$0xff]
  %v7996 = vld [vmem:[%s2811 + $0x90] sm:$0xff]
  %v7997 = vld [vmem:[%s2811 + $0x98] sm:$0xff]
  %v7998 = vld [vmem:[%s2811 + $0xa8] sm:$0xff]
  %v7999 = vld [vmem:[%s2811 + $0xb0] sm:$0xff]
  %v8000 = vld [vmem:[%s2811 + $0xc0] sm:$0xff]
  %v8001 = vld [vmem:[%s2811 + $0xc8] sm:$0xff]
  %v8002 = vld [vmem:[%s2811 + $0xd8] sm:$0xff]
  %v8003 = vld [vmem:[%s2811 + $0xe0] sm:$0xff]
  %v8004 = vld [vmem:[%s2811 + $0xf0] sm:$0xff]
  %v8005 = vld [vmem:[%s2811 + $0xf8] sm:$0xff]
  %v8006 = vld [vmem:[%s2811 + $0x108] sm:$0xff]
  %v8007 = vld [vmem:[%s2811 + $0x110] sm:$0xff]
  %v8008 = vld [vmem:[%s2811 + $0x120] sm:$0xff]
  %v8009 = vld [vmem:[%s2811 + $0x128] sm:$0xff]
  %v8010 = vld [vmem:[%s2811 + $0x138] sm:$0xff]
  %v8011 = vld [vmem:[%s2811 + $0x140] sm:$0xff]
  %v8012 = vld [vmem:[%s2811 + $0x150] sm:$0xff]
  %v8013 = vld [vmem:[%s2811 + $0x158] sm:$0xff]
  %v8014 = vld [vmem:[%s2811 + $0x168] sm:$0xff]
  %v8015 = vld [vmem:[%s2811 + $0x170] sm:$0xff]
  %8048 = vrot.lane.b32.xlu0 %v7984, 64
  %v8049 = vpop.permute.xlu0 %8048
  %8050 = vrot.lane.b32.xlu0 %v7985, 64
  %v8051 = vpop.permute.xlu0 %8050
  %8052 = vrot.lane.b32.xlu0 %v7986, 64
  %v8053 = vpop.permute.xlu0 %8052
  %8054 = vrot.lane.b32.xlu0 %v7987, 64
  %v8055 = vpop.permute.xlu0 %8054
  %8056 = vrot.lane.b32.xlu0 %v7988, 64
  %v8057 = vpop.permute.xlu0 %8056
  %8058 = vrot.lane.b32.xlu0 %v7989, 64
  %v8059 = vpop.permute.xlu0 %8058
  %8060 = vrot.lane.b32.xlu0 %v7990, 64
  %v8061 = vpop.permute.xlu0 %8060
  %8062 = vrot.lane.b32.xlu0 %v7991, 64
  %v8063 = vpop.permute.xlu0 %8062
  %8064 = vrot.lane.b32.xlu0 %v7992, 64
  %v8065 = vpop.permute.xlu0 %8064
  %8066 = vrot.lane.b32.xlu0 %v7993, 64
  %v8067 = vpop.permute.xlu0 %8066
  %8068 = vrot.lane.b32.xlu0 %v7994, 64
  %v8069 = vpop.permute.xlu0 %8068
  %8070 = vrot.lane.b32.xlu0 %v7995, 64
  %v8071 = vpop.permute.xlu0 %8070
  %8072 = vrot.lane.b32.xlu0 %v7996, 64
  %v8073 = vpop.permute.xlu0 %8072
  %8074 = vrot.lane.b32.xlu0 %v7997, 64
  %v8075 = vpop.permute.xlu0 %8074
  %8076 = vrot.lane.b32.xlu0 %v7998, 64
  %v8077 = vpop.permute.xlu0 %8076
  %8078 = vrot.lane.b32.xlu0 %v7999, 64
  %v8079 = vpop.permute.xlu0 %8078
  %8080 = vrot.lane.b32.xlu0 %v8000, 64
  %v8081 = vpop.permute.xlu0 %8080
  %8082 = vrot.lane.b32.xlu0 %v8001, 64
  %v8083 = vpop.permute.xlu0 %8082
  %8084 = vrot.lane.b32.xlu0 %v8002, 64
  %v8085 = vpop.permute.xlu0 %8084
  %8086 = vrot.lane.b32.xlu0 %v8003, 64
  %v8087 = vpop.permute.xlu0 %8086
  %8088 = vrot.lane.b32.xlu0 %v8004, 64
  %v8089 = vpop.permute.xlu0 %8088
  %8090 = vrot.lane.b32.xlu0 %v8005, 64
  %v8091 = vpop.permute.xlu0 %8090
  %8092 = vrot.lane.b32.xlu0 %v8006, 64
  %v8093 = vpop.permute.xlu0 %8092
  %8094 = vrot.lane.b32.xlu0 %v8007, 64
  %v8095 = vpop.permute.xlu0 %8094
  %8096 = vrot.lane.b32.xlu0 %v8008, 64
  %v8097 = vpop.permute.xlu0 %8096
  %8098 = vrot.lane.b32.xlu0 %v8009, 64
  %v8099 = vpop.permute.xlu0 %8098
  %8100 = vrot.lane.b32.xlu0 %v8010, 64
  %v8101 = vpop.permute.xlu0 %8100
  %8102 = vrot.lane.b32.xlu0 %v8011, 64
  %v8103 = vpop.permute.xlu0 %8102
  %8104 = vrot.lane.b32.xlu0 %v8012, 64
  %v8105 = vpop.permute.xlu0 %8104
  %8106 = vrot.lane.b32.xlu0 %v8013, 64
  %v8107 = vpop.permute.xlu0 %8106
  %8108 = vrot.lane.b32.xlu0 %v8014, 64
  %v8109 = vpop.permute.xlu0 %8108
  %8110 = vrot.lane.b32.xlu0 %v8015, 64
  %v8111 = vpop.permute.xlu0 %8110
  %8144 = vst.msk [vmem:[#allocation4 + $0x8] sm:$0xff] %vm3068, %v8049
  %8145 = vst.msk [vmem:[#allocation4 + $0x30] sm:$0xff] %vm3068, %v8051
  %8146 = vst.msk [vmem:[#allocation4 + $0x58] sm:$0xff] %vm3068, %v8053
  %8147 = vst.msk [vmem:[#allocation4 + $0x80] sm:$0xff] %vm3068, %v8055
  %8148 = vst.msk [vmem:[#allocation4 + $0xa8] sm:$0xff] %vm3068, %v8057
  %8149 = vst.msk [vmem:[#allocation4 + $0xd0] sm:$0xff] %vm3068, %v8059
  %8150 = vst.msk [vmem:[#allocation4 + $0xf8] sm:$0xff] %vm3068, %v8061
  %8151 = vst.msk [vmem:[#allocation4 + $0x120] sm:$0xff] %vm3068, %v8063
  %8152 = vst.msk [vmem:[#allocation4 + $0x148] sm:$0xff] %vm3068, %v8065
  %8153 = vst.msk [vmem:[#allocation4 + $0x170] sm:$0xff] %vm3068, %v8067
  %8154 = vst.msk [vmem:[#allocation4 + $0x198] sm:$0xff] %vm3068, %v8069
  %8155 = vst.msk [vmem:[#allocation4 + $0x1c0] sm:$0xff] %vm3068, %v8071
  %8156 = vst.msk [vmem:[#allocation4 + $0x1e8] sm:$0xff] %vm3068, %v8073
  %8157 = vst.msk [vmem:[#allocation4 + $0x210] sm:$0xff] %vm3068, %v8075
  %8158 = vst.msk [vmem:[#allocation4 + $0x238] sm:$0xff] %vm3068, %v8077
  %8159 = vst.msk [vmem:[#allocation4 + $0x260] sm:$0xff] %vm3068, %v8079
  %8160 = vst.msk [vmem:[#allocation4 + $0x288] sm:$0xff] %vm3068, %v8081
  %8161 = vst.msk [vmem:[#allocation4 + $0x2b0] sm:$0xff] %vm3068, %v8083
  %8162 = vst.msk [vmem:[#allocation4 + $0x2d8] sm:$0xff] %vm3068, %v8085
  %8163 = vst.msk [vmem:[#allocation4 + $0x300] sm:$0xff] %vm3068, %v8087
  %8164 = vst.msk [vmem:[#allocation4 + $0x328] sm:$0xff] %vm3068, %v8089
  %8165 = vst.msk [vmem:[#allocation4 + $0x350] sm:$0xff] %vm3068, %v8091
  %8166 = vst.msk [vmem:[#allocation4 + $0x378] sm:$0xff] %vm3068, %v8093
  %8167 = vst.msk [vmem:[#allocation4 + $0x3a0] sm:$0xff] %vm3068, %v8095
  %8168 = vst.msk [vmem:[#allocation4 + $0x3c8] sm:$0xff] %vm3068, %v8097
  %8169 = vst.msk [vmem:[#allocation4 + $0x3f0] sm:$0xff] %vm3068, %v8099
  %8170 = vst.msk [vmem:[#allocation4 + $0x418] sm:$0xff] %vm3068, %v8101
  %8171 = vst.msk [vmem:[#allocation4 + $0x440] sm:$0xff] %vm3068, %v8103
  %8172 = vst.msk [vmem:[#allocation4 + $0x468] sm:$0xff] %vm3068, %v8105
  %8173 = vst.msk [vmem:[#allocation4 + $0x490] sm:$0xff] %vm3068, %v8107
  %8174 = vst.msk [vmem:[#allocation4 + $0x4b8] sm:$0xff] %vm3068, %v8109
  %8175 = vst.msk [vmem:[#allocation4 + $0x4e0] sm:$0xff] %vm3068, %v8111
  %v8176 = vld [vmem:[%s2811 + $0x1] sm:$0xff]
  %v8177 = vld [vmem:[%s2811 + $0x9] sm:$0xff]
  %v8178 = vld [vmem:[%s2811 + $0x19] sm:$0xff]
  %v8179 = vld [vmem:[%s2811 + $0x21] sm:$0xff]
  %v8180 = vld [vmem:[%s2811 + $0x31] sm:$0xff]
  %v8181 = vld [vmem:[%s2811 + $0x39] sm:$0xff]
  %v8182 = vld [vmem:[%s2811 + $0x49] sm:$0xff]
  %v8183 = vld [vmem:[%s2811 + $0x51] sm:$0xff]
  %v8184 = vld [vmem:[%s2811 + $0x61] sm:$0xff]
  %v8185 = vld [vmem:[%s2811 + $0x69] sm:$0xff]
  %v8186 = vld [vmem:[%s2811 + $0x79] sm:$0xff]
  %v8187 = vld [vmem:[%s2811 + $0x81] sm:$0xff]
  %v8188 = vld [vmem:[%s2811 + $0x91] sm:$0xff]
  %v8189 = vld [vmem:[%s2811 + $0x99] sm:$0xff]
  %v8190 = vld [vmem:[%s2811 + $0xa9] sm:$0xff]
  %v8191 = vld [vmem:[%s2811 + $0xb1] sm:$0xff]
  %v8192 = vld [vmem:[%s2811 + $0xc1] sm:$0xff]
  %v8193 = vld [vmem:[%s2811 + $0xc9] sm:$0xff]
  %v8194 = vld [vmem:[%s2811 + $0xd9] sm:$0xff]
  %v8195 = vld [vmem:[%s2811 + $0xe1] sm:$0xff]
  %v8196 = vld [vmem:[%s2811 + $0xf1] sm:$0xff]
  %v8197 = vld [vmem:[%s2811 + $0xf9] sm:$0xff]
  %v8198 = vld [vmem:[%s2811 + $0x109] sm:$0xff]
  %v8199 = vld [vmem:[%s2811 + $0x111] sm:$0xff]
  %v8200 = vld [vmem:[%s2811 + $0x121] sm:$0xff]
  %v8201 = vld [vmem:[%s2811 + $0x129] sm:$0xff]
  %v8202 = vld [vmem:[%s2811 + $0x139] sm:$0xff]
  %v8203 = vld [vmem:[%s2811 + $0x141] sm:$0xff]
  %v8204 = vld [vmem:[%s2811 + $0x151] sm:$0xff]
  %v8205 = vld [vmem:[%s2811 + $0x159] sm:$0xff]
  %v8206 = vld [vmem:[%s2811 + $0x169] sm:$0xff]
  %v8207 = vld [vmem:[%s2811 + $0x171] sm:$0xff]
  %8208 = vst.msk [vmem:[#allocation4 + $0x10] sm:$0xff] %vm26, %v8176
  %8209 = vst.msk [vmem:[#allocation4 + $0x38] sm:$0xff] %vm26, %v8177
  %8210 = vst.msk [vmem:[#allocation4 + $0x60] sm:$0xff] %vm26, %v8178
  %8211 = vst.msk [vmem:[#allocation4 + $0x88] sm:$0xff] %vm26, %v8179
  %8212 = vst.msk [vmem:[#allocation4 + $0xb0] sm:$0xff] %vm26, %v8180
  %8213 = vst.msk [vmem:[#allocation4 + $0xd8] sm:$0xff] %vm26, %v8181
  %8214 = vst.msk [vmem:[#allocation4 + $0x100] sm:$0xff] %vm26, %v8182
  %8215 = vst.msk [vmem:[#allocation4 + $0x128] sm:$0xff] %vm26, %v8183
  %8216 = vst.msk [vmem:[#allocation4 + $0x150] sm:$0xff] %vm26, %v8184
  %8217 = vst.msk [vmem:[#allocation4 + $0x178] sm:$0xff] %vm26, %v8185
  %8218 = vst.msk [vmem:[#allocation4 + $0x1a0] sm:$0xff] %vm26, %v8186
  %8219 = vst.msk [vmem:[#allocation4 + $0x1c8] sm:$0xff] %vm26, %v8187
  %8220 = vst.msk [vmem:[#allocation4 + $0x1f0] sm:$0xff] %vm26, %v8188
  %8221 = vst.msk [vmem:[#allocation4 + $0x218] sm:$0xff] %vm26, %v8189
  %8222 = vst.msk [vmem:[#allocation4 + $0x240] sm:$0xff] %vm26, %v8190
  %8223 = vst.msk [vmem:[#allocation4 + $0x268] sm:$0xff] %vm26, %v8191
  %8224 = vst.msk [vmem:[#allocation4 + $0x290] sm:$0xff] %vm26, %v8192
  %8225 = vst.msk [vmem:[#allocation4 + $0x2b8] sm:$0xff] %vm26, %v8193
  %8226 = vst.msk [vmem:[#allocation4 + $0x2e0] sm:$0xff] %vm26, %v8194
  %8227 = vst.msk [vmem:[#allocation4 + $0x308] sm:$0xff] %vm26, %v8195
  %8228 = vst.msk [vmem:[#allocation4 + $0x330] sm:$0xff] %vm26, %v8196
  %8229 = vst.msk [vmem:[#allocation4 + $0x358] sm:$0xff] %vm26, %v8197
  %8230 = vst.msk [vmem:[#allocation4 + $0x380] sm:$0xff] %vm26, %v8198
  %8231 = vst.msk [vmem:[#allocation4 + $0x3a8] sm:$0xff] %vm26, %v8199
  %8232 = vst.msk [vmem:[#allocation4 + $0x3d0] sm:$0xff] %vm26, %v8200
  %8233 = vst.msk [vmem:[#allocation4 + $0x3f8] sm:$0xff] %vm26, %v8201
  %8234 = vst.msk [vmem:[#allocation4 + $0x420] sm:$0xff] %vm26, %v8202
  %8235 = vst.msk [vmem:[#allocation4 + $0x448] sm:$0xff] %vm26, %v8203
  %8236 = vst.msk [vmem:[#allocation4 + $0x470] sm:$0xff] %vm26, %v8204
  %8237 = vst.msk [vmem:[#allocation4 + $0x498] sm:$0xff] %vm26, %v8205
  %8238 = vst.msk [vmem:[#allocation4 + $0x4c0] sm:$0xff] %vm26, %v8206
  %8239 = vst.msk [vmem:[#allocation4 + $0x4e8] sm:$0xff] %vm26, %v8207
  %v8240 = vld [vmem:[%s2811 + $0x2] sm:$0xff]
  %v8241 = vld [vmem:[%s2811 + $0xa] sm:$0xff]
  %v8242 = vld [vmem:[%s2811 + $0x1a] sm:$0xff]
  %v8243 = vld [vmem:[%s2811 + $0x22] sm:$0xff]
  %v8244 = vld [vmem:[%s2811 + $0x32] sm:$0xff]
  %v8245 = vld [vmem:[%s2811 + $0x3a] sm:$0xff]
  %v8246 = vld [vmem:[%s2811 + $0x4a] sm:$0xff]
  %v8247 = vld [vmem:[%s2811 + $0x52] sm:$0xff]
  %v8248 = vld [vmem:[%s2811 + $0x62] sm:$0xff]
  %v8249 = vld [vmem:[%s2811 + $0x6a] sm:$0xff]
  %v8250 = vld [vmem:[%s2811 + $0x7a] sm:$0xff]
  %v8251 = vld [vmem:[%s2811 + $0x82] sm:$0xff]
  %v8252 = vld [vmem:[%s2811 + $0x92] sm:$0xff]
  %v8253 = vld [vmem:[%s2811 + $0x9a] sm:$0xff]
  %v8254 = vld [vmem:[%s2811 + $0xaa] sm:$0xff]
  %v8255 = vld [vmem:[%s2811 + $0xb2] sm:$0xff]
  %v8256 = vld [vmem:[%s2811 + $0xc2] sm:$0xff]
  %v8257 = vld [vmem:[%s2811 + $0xca] sm:$0xff]
  %v8258 = vld [vmem:[%s2811 + $0xda] sm:$0xff]
  %v8259 = vld [vmem:[%s2811 + $0xe2] sm:$0xff]
  %v8260 = vld [vmem:[%s2811 + $0xf2] sm:$0xff]
  %v8261 = vld [vmem:[%s2811 + $0xfa] sm:$0xff]
  %v8262 = vld [vmem:[%s2811 + $0x10a] sm:$0xff]
  %v8263 = vld [vmem:[%s2811 + $0x112] sm:$0xff]
  %v8264 = vld [vmem:[%s2811 + $0x122] sm:$0xff]
  %v8265 = vld [vmem:[%s2811 + $0x12a] sm:$0xff]
  %v8266 = vld [vmem:[%s2811 + $0x13a] sm:$0xff]
  %v8267 = vld [vmem:[%s2811 + $0x142] sm:$0xff]
  %v8268 = vld [vmem:[%s2811 + $0x152] sm:$0xff]
  %v8269 = vld [vmem:[%s2811 + $0x15a] sm:$0xff]
  %v8270 = vld [vmem:[%s2811 + $0x16a] sm:$0xff]
  %v8271 = vld [vmem:[%s2811 + $0x172] sm:$0xff]
  %8304 = vrot.lane.b32.xlu0 %v8240, 64
  %v8305 = vpop.permute.xlu0 %8304
  %8306 = vrot.lane.b32.xlu0 %v8241, 64
  %v8307 = vpop.permute.xlu0 %8306
  %8308 = vrot.lane.b32.xlu0 %v8242, 64
  %v8309 = vpop.permute.xlu0 %8308
  %8310 = vrot.lane.b32.xlu0 %v8243, 64
  %v8311 = vpop.permute.xlu0 %8310
  %8312 = vrot.lane.b32.xlu0 %v8244, 64
  %v8313 = vpop.permute.xlu0 %8312
  %8314 = vrot.lane.b32.xlu0 %v8245, 64
  %v8315 = vpop.permute.xlu0 %8314
  %8316 = vrot.lane.b32.xlu0 %v8246, 64
  %v8317 = vpop.permute.xlu0 %8316
  %8318 = vrot.lane.b32.xlu0 %v8247, 64
  %v8319 = vpop.permute.xlu0 %8318
  %8320 = vrot.lane.b32.xlu0 %v8248, 64
  %v8321 = vpop.permute.xlu0 %8320
  %8322 = vrot.lane.b32.xlu0 %v8249, 64
  %v8323 = vpop.permute.xlu0 %8322
  %8324 = vrot.lane.b32.xlu0 %v8250, 64
  %v8325 = vpop.permute.xlu0 %8324
  %8326 = vrot.lane.b32.xlu0 %v8251, 64
  %v8327 = vpop.permute.xlu0 %8326
  %8328 = vrot.lane.b32.xlu0 %v8252, 64
  %v8329 = vpop.permute.xlu0 %8328
  %8330 = vrot.lane.b32.xlu0 %v8253, 64
  %v8331 = vpop.permute.xlu0 %8330
  %8332 = vrot.lane.b32.xlu0 %v8254, 64
  %v8333 = vpop.permute.xlu0 %8332
  %8334 = vrot.lane.b32.xlu0 %v8255, 64
  %v8335 = vpop.permute.xlu0 %8334
  %8336 = vrot.lane.b32.xlu0 %v8256, 64
  %v8337 = vpop.permute.xlu0 %8336
  %8338 = vrot.lane.b32.xlu0 %v8257, 64
  %v8339 = vpop.permute.xlu0 %8338
  %8340 = vrot.lane.b32.xlu0 %v8258, 64
  %v8341 = vpop.permute.xlu0 %8340
  %8342 = vrot.lane.b32.xlu0 %v8259, 64
  %v8343 = vpop.permute.xlu0 %8342
  %8344 = vrot.lane.b32.xlu0 %v8260, 64
  %v8345 = vpop.permute.xlu0 %8344
  %8346 = vrot.lane.b32.xlu0 %v8261, 64
  %v8347 = vpop.permute.xlu0 %8346
  %8348 = vrot.lane.b32.xlu0 %v8262, 64
  %v8349 = vpop.permute.xlu0 %8348
  %8350 = vrot.lane.b32.xlu0 %v8263, 64
  %v8351 = vpop.permute.xlu0 %8350
  %8352 = vrot.lane.b32.xlu0 %v8264, 64
  %v8353 = vpop.permute.xlu0 %8352
  %8354 = vrot.lane.b32.xlu0 %v8265, 64
  %v8355 = vpop.permute.xlu0 %8354
  %8356 = vrot.lane.b32.xlu0 %v8266, 64
  %v8357 = vpop.permute.xlu0 %8356
  %8358 = vrot.lane.b32.xlu0 %v8267, 64
  %v8359 = vpop.permute.xlu0 %8358
  %8360 = vrot.lane.b32.xlu0 %v8268, 64
  %v8361 = vpop.permute.xlu0 %8360
  %8362 = vrot.lane.b32.xlu0 %v8269, 64
  %v8363 = vpop.permute.xlu0 %8362
  %8364 = vrot.lane.b32.xlu0 %v8270, 64
  %v8365 = vpop.permute.xlu0 %8364
  %8366 = vrot.lane.b32.xlu0 %v8271, 64
  %v8367 = vpop.permute.xlu0 %8366
  %8400 = vst.msk [vmem:[#allocation4 + $0x10] sm:$0xff] %vm3068, %v8305
  %8401 = vst.msk [vmem:[#allocation4 + $0x38] sm:$0xff] %vm3068, %v8307
  %8402 = vst.msk [vmem:[#allocation4 + $0x60] sm:$0xff] %vm3068, %v8309
  %8403 = vst.msk [vmem:[#allocation4 + $0x88] sm:$0xff] %vm3068, %v8311
  %8404 = vst.msk [vmem:[#allocation4 + $0xb0] sm:$0xff] %vm3068, %v8313
  %8405 = vst.msk [vmem:[#allocation4 + $0xd8] sm:$0xff] %vm3068, %v8315
  %8406 = vst.msk [vmem:[#allocation4 + $0x100] sm:$0xff] %vm3068, %v8317
  %8407 = vst.msk [vmem:[#allocation4 + $0x128] sm:$0xff] %vm3068, %v8319
  %8408 = vst.msk [vmem:[#allocation4 + $0x150] sm:$0xff] %vm3068, %v8321
  %8409 = vst.msk [vmem:[#allocation4 + $0x178] sm:$0xff] %vm3068, %v8323
  %8410 = vst.msk [vmem:[#allocation4 + $0x1a0] sm:$0xff] %vm3068, %v8325
  %8411 = vst.msk [vmem:[#allocation4 + $0x1c8] sm:$0xff] %vm3068, %v8327
  %8412 = vst.msk [vmem:[#allocation4 + $0x1f0] sm:$0xff] %vm3068, %v8329
  %8413 = vst.msk [vmem:[#allocation4 + $0x218] sm:$0xff] %vm3068, %v8331
  %8414 = vst.msk [vmem:[#allocation4 + $0x240] sm:$0xff] %vm3068, %v8333
  %8415 = vst.msk [vmem:[#allocation4 + $0x268] sm:$0xff] %vm3068, %v8335
  %8416 = vst.msk [vmem:[#allocation4 + $0x290] sm:$0xff] %vm3068, %v8337
  %8417 = vst.msk [vmem:[#allocation4 + $0x2b8] sm:$0xff] %vm3068, %v8339
  %8418 = vst.msk [vmem:[#allocation4 + $0x2e0] sm:$0xff] %vm3068, %v8341
  %8419 = vst.msk [vmem:[#allocation4 + $0x308] sm:$0xff] %vm3068, %v8343
  %8420 = vst.msk [vmem:[#allocation4 + $0x330] sm:$0xff] %vm3068, %v8345
  %8421 = vst.msk [vmem:[#allocation4 + $0x358] sm:$0xff] %vm3068, %v8347
  %8422 = vst.msk [vmem:[#allocation4 + $0x380] sm:$0xff] %vm3068, %v8349
  %8423 = vst.msk [vmem:[#allocation4 + $0x3a8] sm:$0xff] %vm3068, %v8351
  %8424 = vst.msk [vmem:[#allocation4 + $0x3d0] sm:$0xff] %vm3068, %v8353
  %8425 = vst.msk [vmem:[#allocation4 + $0x3f8] sm:$0xff] %vm3068, %v8355
  %8426 = vst.msk [vmem:[#allocation4 + $0x420] sm:$0xff] %vm3068, %v8357
  %8427 = vst.msk [vmem:[#allocation4 + $0x448] sm:$0xff] %vm3068, %v8359
  %8428 = vst.msk [vmem:[#allocation4 + $0x470] sm:$0xff] %vm3068, %v8361
  %8429 = vst.msk [vmem:[#allocation4 + $0x498] sm:$0xff] %vm3068, %v8363
  %8430 = vst.msk [vmem:[#allocation4 + $0x4c0] sm:$0xff] %vm3068, %v8365
  %8431 = vst.msk [vmem:[#allocation4 + $0x4e8] sm:$0xff] %vm3068, %v8367
  %v8432 = vld [vmem:[%s3613] sm:$0xff]
  %v8433 = vld [vmem:[%s3613 + $0x8] sm:$0xff]
  %v8434 = vld [vmem:[%s3613 + $0x18] sm:$0xff]
  %v8435 = vld [vmem:[%s3613 + $0x20] sm:$0xff]
  %v8436 = vld [vmem:[%s3613 + $0x30] sm:$0xff]
  %v8437 = vld [vmem:[%s3613 + $0x38] sm:$0xff]
  %v8438 = vld [vmem:[%s3613 + $0x48] sm:$0xff]
  %v8439 = vld [vmem:[%s3613 + $0x50] sm:$0xff]
  %v8440 = vld [vmem:[%s3613 + $0x60] sm:$0xff]
  %v8441 = vld [vmem:[%s3613 + $0x68] sm:$0xff]
  %v8442 = vld [vmem:[%s3613 + $0x78] sm:$0xff]
  %v8443 = vld [vmem:[%s3613 + $0x80] sm:$0xff]
  %v8444 = vld [vmem:[%s3613 + $0x90] sm:$0xff]
  %v8445 = vld [vmem:[%s3613 + $0x98] sm:$0xff]
  %v8446 = vld [vmem:[%s3613 + $0xa8] sm:$0xff]
  %v8447 = vld [vmem:[%s3613 + $0xb0] sm:$0xff]
  %v8448 = vld [vmem:[%s3613 + $0xc0] sm:$0xff]
  %v8449 = vld [vmem:[%s3613 + $0xc8] sm:$0xff]
  %v8450 = vld [vmem:[%s3613 + $0xd8] sm:$0xff]
  %v8451 = vld [vmem:[%s3613 + $0xe0] sm:$0xff]
  %v8452 = vld [vmem:[%s3613 + $0xf0] sm:$0xff]
  %v8453 = vld [vmem:[%s3613 + $0xf8] sm:$0xff]
  %v8454 = vld [vmem:[%s3613 + $0x108] sm:$0xff]
  %v8455 = vld [vmem:[%s3613 + $0x110] sm:$0xff]
  %v8456 = vld [vmem:[%s3613 + $0x120] sm:$0xff]
  %v8457 = vld [vmem:[%s3613 + $0x128] sm:$0xff]
  %v8458 = vld [vmem:[%s3613 + $0x138] sm:$0xff]
  %v8459 = vld [vmem:[%s3613 + $0x140] sm:$0xff]
  %v8460 = vld [vmem:[%s3613 + $0x150] sm:$0xff]
  %v8461 = vld [vmem:[%s3613 + $0x158] sm:$0xff]
  %v8462 = vld [vmem:[%s3613 + $0x168] sm:$0xff]
  %v8463 = vld [vmem:[%s3613 + $0x170] sm:$0xff]
  %8464 = vst.msk [vmem:[#allocation4 + $0x18] sm:$0xff] %vm26, %v8432
  %8465 = vst.msk [vmem:[#allocation4 + $0x40] sm:$0xff] %vm26, %v8433
  %8466 = vst.msk [vmem:[#allocation4 + $0x68] sm:$0xff] %vm26, %v8434
  %8467 = vst.msk [vmem:[#allocation4 + $0x90] sm:$0xff] %vm26, %v8435
  %8468 = vst.msk [vmem:[#allocation4 + $0xb8] sm:$0xff] %vm26, %v8436
  %8469 = vst.msk [vmem:[#allocation4 + $0xe0] sm:$0xff] %vm26, %v8437
  %8470 = vst.msk [vmem:[#allocation4 + $0x108] sm:$0xff] %vm26, %v8438
  %8471 = vst.msk [vmem:[#allocation4 + $0x130] sm:$0xff] %vm26, %v8439
  %8472 = vst.msk [vmem:[#allocation4 + $0x158] sm:$0xff] %vm26, %v8440
  %8473 = vst.msk [vmem:[#allocation4 + $0x180] sm:$0xff] %vm26, %v8441
  %8474 = vst.msk [vmem:[#allocation4 + $0x1a8] sm:$0xff] %vm26, %v8442
  %8475 = vst.msk [vmem:[#allocation4 + $0x1d0] sm:$0xff] %vm26, %v8443
  %8476 = vst.msk [vmem:[#allocation4 + $0x1f8] sm:$0xff] %vm26, %v8444
  %8477 = vst.msk [vmem:[#allocation4 + $0x220] sm:$0xff] %vm26, %v8445
  %8478 = vst.msk [vmem:[#allocation4 + $0x248] sm:$0xff] %vm26, %v8446
  %8479 = vst.msk [vmem:[#allocation4 + $0x270] sm:$0xff] %vm26, %v8447
  %8480 = vst.msk [vmem:[#allocation4 + $0x298] sm:$0xff] %vm26, %v8448
  %8481 = vst.msk [vmem:[#allocation4 + $0x2c0] sm:$0xff] %vm26, %v8449
  %8482 = vst.msk [vmem:[#allocation4 + $0x2e8] sm:$0xff] %vm26, %v8450
  %8483 = vst.msk [vmem:[#allocation4 + $0x310] sm:$0xff] %vm26, %v8451
  %8484 = vst.msk [vmem:[#allocation4 + $0x338] sm:$0xff] %vm26, %v8452
  %8485 = vst.msk [vmem:[#allocation4 + $0x360] sm:$0xff] %vm26, %v8453
  %8486 = vst.msk [vmem:[#allocation4 + $0x388] sm:$0xff] %vm26, %v8454
  %8487 = vst.msk [vmem:[#allocation4 + $0x3b0] sm:$0xff] %vm26, %v8455
  %8488 = vst.msk [vmem:[#allocation4 + $0x3d8] sm:$0xff] %vm26, %v8456
  %8489 = vst.msk [vmem:[#allocation4 + $0x400] sm:$0xff] %vm26, %v8457
  %8490 = vst.msk [vmem:[#allocation4 + $0x428] sm:$0xff] %vm26, %v8458
  %8491 = vst.msk [vmem:[#allocation4 + $0x450] sm:$0xff] %vm26, %v8459
  %8492 = vst.msk [vmem:[#allocation4 + $0x478] sm:$0xff] %vm26, %v8460
  %8493 = vst.msk [vmem:[#allocation4 + $0x4a0] sm:$0xff] %vm26, %v8461
  %8494 = vst.msk [vmem:[#allocation4 + $0x4c8] sm:$0xff] %vm26, %v8462
  %8495 = vst.msk [vmem:[#allocation4 + $0x4f0] sm:$0xff] %vm26, %v8463
  %v8496 = vld [vmem:[%s3613 + $0x1] sm:$0xff]
  %v8497 = vld [vmem:[%s3613 + $0x9] sm:$0xff]
  %v8498 = vld [vmem:[%s3613 + $0x19] sm:$0xff]
  %v8499 = vld [vmem:[%s3613 + $0x21] sm:$0xff]
  %v8500 = vld [vmem:[%s3613 + $0x31] sm:$0xff]
  %v8501 = vld [vmem:[%s3613 + $0x39] sm:$0xff]
  %v8502 = vld [vmem:[%s3613 + $0x49] sm:$0xff]
  %v8503 = vld [vmem:[%s3613 + $0x51] sm:$0xff]
  %v8504 = vld [vmem:[%s3613 + $0x61] sm:$0xff]
  %v8505 = vld [vmem:[%s3613 + $0x69] sm:$0xff]
  %v8506 = vld [vmem:[%s3613 + $0x79] sm:$0xff]
  %v8507 = vld [vmem:[%s3613 + $0x81] sm:$0xff]
  %v8508 = vld [vmem:[%s3613 + $0x91] sm:$0xff]
  %v8509 = vld [vmem:[%s3613 + $0x99] sm:$0xff]
  %v8510 = vld [vmem:[%s3613 + $0xa9] sm:$0xff]
  %v8511 = vld [vmem:[%s3613 + $0xb1] sm:$0xff]
  %v8512 = vld [vmem:[%s3613 + $0xc1] sm:$0xff]
  %v8513 = vld [vmem:[%s3613 + $0xc9] sm:$0xff]
  %v8514 = vld [vmem:[%s3613 + $0xd9] sm:$0xff]
  %v8515 = vld [vmem:[%s3613 + $0xe1] sm:$0xff]
  %v8516 = vld [vmem:[%s3613 + $0xf1] sm:$0xff]
  %v8517 = vld [vmem:[%s3613 + $0xf9] sm:$0xff]
  %v8518 = vld [vmem:[%s3613 + $0x109] sm:$0xff]
  %v8519 = vld [vmem:[%s3613 + $0x111] sm:$0xff]
  %v8520 = vld [vmem:[%s3613 + $0x121] sm:$0xff]
  %v8521 = vld [vmem:[%s3613 + $0x129] sm:$0xff]
  %v8522 = vld [vmem:[%s3613 + $0x139] sm:$0xff]
  %v8523 = vld [vmem:[%s3613 + $0x141] sm:$0xff]
  %v8524 = vld [vmem:[%s3613 + $0x151] sm:$0xff]
  %v8525 = vld [vmem:[%s3613 + $0x159] sm:$0xff]
  %v8526 = vld [vmem:[%s3613 + $0x169] sm:$0xff]
  %v8527 = vld [vmem:[%s3613 + $0x171] sm:$0xff]
  %8560 = vrot.lane.b32.xlu0 %v8496, 64
  %v8561 = vpop.permute.xlu0 %8560
  %8562 = vrot.lane.b32.xlu0 %v8497, 64
  %v8563 = vpop.permute.xlu0 %8562
  %8564 = vrot.lane.b32.xlu0 %v8498, 64
  %v8565 = vpop.permute.xlu0 %8564
  %8566 = vrot.lane.b32.xlu0 %v8499, 64
  %v8567 = vpop.permute.xlu0 %8566
  %8568 = vrot.lane.b32.xlu0 %v8500, 64
  %v8569 = vpop.permute.xlu0 %8568
  %8570 = vrot.lane.b32.xlu0 %v8501, 64
  %v8571 = vpop.permute.xlu0 %8570
  %8572 = vrot.lane.b32.xlu0 %v8502, 64
  %v8573 = vpop.permute.xlu0 %8572
  %8574 = vrot.lane.b32.xlu0 %v8503, 64
  %v8575 = vpop.permute.xlu0 %8574
  %8576 = vrot.lane.b32.xlu0 %v8504, 64
  %v8577 = vpop.permute.xlu0 %8576
  %8578 = vrot.lane.b32.xlu0 %v8505, 64
  %v8579 = vpop.permute.xlu0 %8578
  %8580 = vrot.lane.b32.xlu0 %v8506, 64
  %v8581 = vpop.permute.xlu0 %8580
  %8582 = vrot.lane.b32.xlu0 %v8507, 64
  %v8583 = vpop.permute.xlu0 %8582
  %8584 = vrot.lane.b32.xlu0 %v8508, 64
  %v8585 = vpop.permute.xlu0 %8584
  %8586 = vrot.lane.b32.xlu0 %v8509, 64
  %v8587 = vpop.permute.xlu0 %8586
  %8588 = vrot.lane.b32.xlu0 %v8510, 64
  %v8589 = vpop.permute.xlu0 %8588
  %8590 = vrot.lane.b32.xlu0 %v8511, 64
  %v8591 = vpop.permute.xlu0 %8590
  %8592 = vrot.lane.b32.xlu0 %v8512, 64
  %v8593 = vpop.permute.xlu0 %8592
  %8594 = vrot.lane.b32.xlu0 %v8513, 64
  %v8595 = vpop.permute.xlu0 %8594
  %8596 = vrot.lane.b32.xlu0 %v8514, 64
  %v8597 = vpop.permute.xlu0 %8596
  %8598 = vrot.lane.b32.xlu0 %v8515, 64
  %v8599 = vpop.permute.xlu0 %8598
  %8600 = vrot.lane.b32.xlu0 %v8516, 64
  %v8601 = vpop.permute.xlu0 %8600
  %8602 = vrot.lane.b32.xlu0 %v8517, 64
  %v8603 = vpop.permute.xlu0 %8602
  %8604 = vrot.lane.b32.xlu0 %v8518, 64
  %v8605 = vpop.permute.xlu0 %8604
  %8606 = vrot.lane.b32.xlu0 %v8519, 64
  %v8607 = vpop.permute.xlu0 %8606
  %8608 = vrot.lane.b32.xlu0 %v8520, 64
  %v8609 = vpop.permute.xlu0 %8608
  %8610 = vrot.lane.b32.xlu0 %v8521, 64
  %v8611 = vpop.permute.xlu0 %8610
  %8612 = vrot.lane.b32.xlu0 %v8522, 64
  %v8613 = vpop.permute.xlu0 %8612
  %8614 = vrot.lane.b32.xlu0 %v8523, 64
  %v8615 = vpop.permute.xlu0 %8614
  %8616 = vrot.lane.b32.xlu0 %v8524, 64
  %v8617 = vpop.permute.xlu0 %8616
  %8618 = vrot.lane.b32.xlu0 %v8525, 64
  %v8619 = vpop.permute.xlu0 %8618
  %8620 = vrot.lane.b32.xlu0 %v8526, 64
  %v8621 = vpop.permute.xlu0 %8620
  %8622 = vrot.lane.b32.xlu0 %v8527, 64
  %v8623 = vpop.permute.xlu0 %8622
  %8656 = vst.msk [vmem:[#allocation4 + $0x18] sm:$0xff] %vm3068, %v8561
  %8657 = vst.msk [vmem:[#allocation4 + $0x40] sm:$0xff] %vm3068, %v8563
  %8658 = vst.msk [vmem:[#allocation4 + $0x68] sm:$0xff] %vm3068, %v8565
  %8659 = vst.msk [vmem:[#allocation4 + $0x90] sm:$0xff] %vm3068, %v8567
  %8660 = vst.msk [vmem:[#allocation4 + $0xb8] sm:$0xff] %vm3068, %v8569
  %8661 = vst.msk [vmem:[#allocation4 + $0xe0] sm:$0xff] %vm3068, %v8571
  %8662 = vst.msk [vmem:[#allocation4 + $0x108] sm:$0xff] %vm3068, %v8573
  %8663 = vst.msk [vmem:[#allocation4 + $0x130] sm:$0xff] %vm3068, %v8575
  %8664 = vst.msk [vmem:[#allocation4 + $0x158] sm:$0xff] %vm3068, %v8577
  %8665 = vst.msk [vmem:[#allocation4 + $0x180] sm:$0xff] %vm3068, %v8579
  %8666 = vst.msk [vmem:[#allocation4 + $0x1a8] sm:$0xff] %vm3068, %v8581
  %8667 = vst.msk [vmem:[#allocation4 + $0x1d0] sm:$0xff] %vm3068, %v8583
  %8668 = vst.msk [vmem:[#allocation4 + $0x1f8] sm:$0xff] %vm3068, %v8585
  %8669 = vst.msk [vmem:[#allocation4 + $0x220] sm:$0xff] %vm3068, %v8587
  %8670 = vst.msk [vmem:[#allocation4 + $0x248] sm:$0xff] %vm3068, %v8589
  %8671 = vst.msk [vmem:[#allocation4 + $0x270] sm:$0xff] %vm3068, %v8591
  %8672 = vst.msk [vmem:[#allocation4 + $0x298] sm:$0xff] %vm3068, %v8593
  %8673 = vst.msk [vmem:[#allocation4 + $0x2c0] sm:$0xff] %vm3068, %v8595
  %8674 = vst.msk [vmem:[#allocation4 + $0x2e8] sm:$0xff] %vm3068, %v8597
  %8675 = vst.msk [vmem:[#allocation4 + $0x310] sm:$0xff] %vm3068, %v8599
  %8676 = vst.msk [vmem:[#allocation4 + $0x338] sm:$0xff] %vm3068, %v8601
  %8677 = vst.msk [vmem:[#allocation4 + $0x360] sm:$0xff] %vm3068, %v8603
  %8678 = vst.msk [vmem:[#allocation4 + $0x388] sm:$0xff] %vm3068, %v8605
  %8679 = vst.msk [vmem:[#allocation4 + $0x3b0] sm:$0xff] %vm3068, %v8607
  %8680 = vst.msk [vmem:[#allocation4 + $0x3d8] sm:$0xff] %vm3068, %v8609
  %8681 = vst.msk [vmem:[#allocation4 + $0x400] sm:$0xff] %vm3068, %v8611
  %8682 = vst.msk [vmem:[#allocation4 + $0x428] sm:$0xff] %vm3068, %v8613
  %8683 = vst.msk [vmem:[#allocation4 + $0x450] sm:$0xff] %vm3068, %v8615
  %8684 = vst.msk [vmem:[#allocation4 + $0x478] sm:$0xff] %vm3068, %v8617
  %8685 = vst.msk [vmem:[#allocation4 + $0x4a0] sm:$0xff] %vm3068, %v8619
  %8686 = vst.msk [vmem:[#allocation4 + $0x4c8] sm:$0xff] %vm3068, %v8621
  %8687 = vst.msk [vmem:[#allocation4 + $0x4f0] sm:$0xff] %vm3068, %v8623
  %v8688 = vld [vmem:[%s3613 + $0x2] sm:$0xff]
  %v8689 = vld [vmem:[%s3613 + $0xa] sm:$0xff]
  %v8690 = vld [vmem:[%s3613 + $0x1a] sm:$0xff]
  %v8691 = vld [vmem:[%s3613 + $0x22] sm:$0xff]
  %v8692 = vld [vmem:[%s3613 + $0x32] sm:$0xff]
  %v8693 = vld [vmem:[%s3613 + $0x3a] sm:$0xff]
  %v8694 = vld [vmem:[%s3613 + $0x4a] sm:$0xff]
  %v8695 = vld [vmem:[%s3613 + $0x52] sm:$0xff]
  %v8696 = vld [vmem:[%s3613 + $0x62] sm:$0xff]
  %v8697 = vld [vmem:[%s3613 + $0x6a] sm:$0xff]
  %v8698 = vld [vmem:[%s3613 + $0x7a] sm:$0xff]
  %v8699 = vld [vmem:[%s3613 + $0x82] sm:$0xff]
  %v8700 = vld [vmem:[%s3613 + $0x92] sm:$0xff]
  %v8701 = vld [vmem:[%s3613 + $0x9a] sm:$0xff]
  %v8702 = vld [vmem:[%s3613 + $0xaa] sm:$0xff]
  %v8703 = vld [vmem:[%s3613 + $0xb2] sm:$0xff]
  %v8704 = vld [vmem:[%s3613 + $0xc2] sm:$0xff]
  %v8705 = vld [vmem:[%s3613 + $0xca] sm:$0xff]
  %v8706 = vld [vmem:[%s3613 + $0xda] sm:$0xff]
  %v8707 = vld [vmem:[%s3613 + $0xe2] sm:$0xff]
  %v8708 = vld [vmem:[%s3613 + $0xf2] sm:$0xff]
  %v8709 = vld [vmem:[%s3613 + $0xfa] sm:$0xff]
  %v8710 = vld [vmem:[%s3613 + $0x10a] sm:$0xff]
  %v8711 = vld [vmem:[%s3613 + $0x112] sm:$0xff]
  %v8712 = vld [vmem:[%s3613 + $0x122] sm:$0xff]
  %v8713 = vld [vmem:[%s3613 + $0x12a] sm:$0xff]
  %v8714 = vld [vmem:[%s3613 + $0x13a] sm:$0xff]
  %v8715 = vld [vmem:[%s3613 + $0x142] sm:$0xff]
  %v8716 = vld [vmem:[%s3613 + $0x152] sm:$0xff]
  %v8717 = vld [vmem:[%s3613 + $0x15a] sm:$0xff]
  %v8718 = vld [vmem:[%s3613 + $0x16a] sm:$0xff]
  %v8719 = vld [vmem:[%s3613 + $0x172] sm:$0xff]
  %8720 = vst.msk [vmem:[#allocation4 + $0x20] sm:$0xff] %vm26, %v8688
  %8721 = vst.msk [vmem:[#allocation4 + $0x48] sm:$0xff] %vm26, %v8689
  %8722 = vst.msk [vmem:[#allocation4 + $0x70] sm:$0xff] %vm26, %v8690
  %8723 = vst.msk [vmem:[#allocation4 + $0x98] sm:$0xff] %vm26, %v8691
  %8724 = vst.msk [vmem:[#allocation4 + $0xc0] sm:$0xff] %vm26, %v8692
  %8725 = vst.msk [vmem:[#allocation4 + $0xe8] sm:$0xff] %vm26, %v8693
  %8726 = vst.msk [vmem:[#allocation4 + $0x110] sm:$0xff] %vm26, %v8694
  %8727 = vst.msk [vmem:[#allocation4 + $0x138] sm:$0xff] %vm26, %v8695
  %8728 = vst.msk [vmem:[#allocation4 + $0x160] sm:$0xff] %vm26, %v8696
  %8729 = vst.msk [vmem:[#allocation4 + $0x188] sm:$0xff] %vm26, %v8697
  %8730 = vst.msk [vmem:[#allocation4 + $0x1b0] sm:$0xff] %vm26, %v8698
  %8731 = vst.msk [vmem:[#allocation4 + $0x1d8] sm:$0xff] %vm26, %v8699
  %8732 = vst.msk [vmem:[#allocation4 + $0x200] sm:$0xff] %vm26, %v8700
  %8733 = vst.msk [vmem:[#allocation4 + $0x228] sm:$0xff] %vm26, %v8701
  %8734 = vst.msk [vmem:[#allocation4 + $0x250] sm:$0xff] %vm26, %v8702
  %8735 = vst.msk [vmem:[#allocation4 + $0x278] sm:$0xff] %vm26, %v8703
  %8736 = vst.msk [vmem:[#allocation4 + $0x2a0] sm:$0xff] %vm26, %v8704
  %8737 = vst.msk [vmem:[#allocation4 + $0x2c8] sm:$0xff] %vm26, %v8705
  %8738 = vst.msk [vmem:[#allocation4 + $0x2f0] sm:$0xff] %vm26, %v8706
  %8739 = vst.msk [vmem:[#allocation4 + $0x318] sm:$0xff] %vm26, %v8707
  %8740 = vst.msk [vmem:[#allocation4 + $0x340] sm:$0xff] %vm26, %v8708
  %8741 = vst.msk [vmem:[#allocation4 + $0x368] sm:$0xff] %vm26, %v8709
  %8742 = vst.msk [vmem:[#allocation4 + $0x390] sm:$0xff] %vm26, %v8710
  %8743 = vst.msk [vmem:[#allocation4 + $0x3b8] sm:$0xff] %vm26, %v8711
  %8744 = vst.msk [vmem:[#allocation4 + $0x3e0] sm:$0xff] %vm26, %v8712
  %8745 = vst.msk [vmem:[#allocation4 + $0x408] sm:$0xff] %vm26, %v8713
  %8746 = vst.msk [vmem:[#allocation4 + $0x430] sm:$0xff] %vm26, %v8714
  %8747 = vst.msk [vmem:[#allocation4 + $0x458] sm:$0xff] %vm26, %v8715
  %8748 = vst.msk [vmem:[#allocation4 + $0x480] sm:$0xff] %vm26, %v8716
  %8749 = vst.msk [vmem:[#allocation4 + $0x4a8] sm:$0xff] %vm26, %v8717
  %8750 = vst.msk [vmem:[#allocation4 + $0x4d0] sm:$0xff] %vm26, %v8718
  %8751 = vst.msk [vmem:[#allocation4 + $0x4f8] sm:$0xff] %vm26, %v8719
  %v8752 = vld [vmem:[#allocation4] sm:$0xff]
  %v8753 = vld [vmem:[#allocation4 + $0x8] sm:$0xff]
  %v8754 = vld [vmem:[#allocation4 + $0x10] sm:$0xff]
  %v8755 = vld [vmem:[#allocation4 + $0x18] sm:$0xff]
  %v8756 = vld [vmem:[#allocation4 + $0x20] sm:$0xff]
  %v8757 = vld [vmem:[#allocation4 + $0x28] sm:$0xff]
  %v8758 = vld [vmem:[#allocation4 + $0x30] sm:$0xff]
  %v8759 = vld [vmem:[#allocation4 + $0x38] sm:$0xff]
  %v8760 = vld [vmem:[#allocation4 + $0x40] sm:$0xff]
  %v8761 = vld [vmem:[#allocation4 + $0x48] sm:$0xff]
  %v8762 = vld [vmem:[#allocation4 + $0x50] sm:$0xff]
  %v8763 = vld [vmem:[#allocation4 + $0x58] sm:$0xff]
  %v8764 = vld [vmem:[#allocation4 + $0x60] sm:$0xff]
  %v8765 = vld [vmem:[#allocation4 + $0x68] sm:$0xff]
  %v8766 = vld [vmem:[#allocation4 + $0x70] sm:$0xff]
  %v8767 = vld [vmem:[#allocation4 + $0x78] sm:$0xff]
  %v8768 = vld [vmem:[#allocation4 + $0x80] sm:$0xff]
  %v8769 = vld [vmem:[#allocation4 + $0x88] sm:$0xff]
  %v8770 = vld [vmem:[#allocation4 + $0x90] sm:$0xff]
  %v8771 = vld [vmem:[#allocation4 + $0x98] sm:$0xff]
  %v8772 = vld [vmem:[#allocation4 + $0xa0] sm:$0xff]
  %v8773 = vld [vmem:[#allocation4 + $0xa8] sm:$0xff]
  %v8774 = vld [vmem:[#allocation4 + $0xb0] sm:$0xff]
  %v8775 = vld [vmem:[#allocation4 + $0xb8] sm:$0xff]
  %v8776 = vld [vmem:[#allocation4 + $0xc0] sm:$0xff]
  %v8777 = vld [vmem:[#allocation4 + $0xc8] sm:$0xff]
  %v8778 = vld [vmem:[#allocation4 + $0xd0] sm:$0xff]
  %v8779 = vld [vmem:[#allocation4 + $0xd8] sm:$0xff]
  %v8780 = vld [vmem:[#allocation4 + $0xe0] sm:$0xff]
  %v8781 = vld [vmem:[#allocation4 + $0xe8] sm:$0xff]
  %v8782 = vld [vmem:[#allocation4 + $0xf0] sm:$0xff]
  %v8783 = vld [vmem:[#allocation4 + $0xf8] sm:$0xff]
  %v8784 = vld [vmem:[#allocation4 + $0x100] sm:$0xff]
  %v8785 = vld [vmem:[#allocation4 + $0x108] sm:$0xff]
  %v8786 = vld [vmem:[#allocation4 + $0x110] sm:$0xff]
  %v8787 = vld [vmem:[#allocation4 + $0x118] sm:$0xff]
  %v8788 = vld [vmem:[#allocation4 + $0x120] sm:$0xff]
  %v8789 = vld [vmem:[#allocation4 + $0x128] sm:$0xff]
  %v8790 = vld [vmem:[#allocation4 + $0x130] sm:$0xff]
  %v8791 = vld [vmem:[#allocation4 + $0x138] sm:$0xff]
  %v8792 = vld [vmem:[#allocation4 + $0x140] sm:$0xff]
  %v8793 = vld [vmem:[#allocation4 + $0x148] sm:$0xff]
  %v8794 = vld [vmem:[#allocation4 + $0x150] sm:$0xff]
  %v8795 = vld [vmem:[#allocation4 + $0x158] sm:$0xff]
  %v8796 = vld [vmem:[#allocation4 + $0x160] sm:$0xff]
  %v8797 = vld [vmem:[#allocation4 + $0x168] sm:$0xff]
  %v8798 = vld [vmem:[#allocation4 + $0x170] sm:$0xff]
  %v8799 = vld [vmem:[#allocation4 + $0x178] sm:$0xff]
  %v8800 = vld [vmem:[#allocation4 + $0x180] sm:$0xff]
  %v8801 = vld [vmem:[#allocation4 + $0x188] sm:$0xff]
  %v8802 = vld [vmem:[#allocation4 + $0x190] sm:$0xff]
  %v8803 = vld [vmem:[#allocation4 + $0x198] sm:$0xff]
  %v8804 = vld [vmem:[#allocation4 + $0x1a0] sm:$0xff]
  %v8805 = vld [vmem:[#allocation4 + $0x1a8] sm:$0xff]
  %v8806 = vld [vmem:[#allocation4 + $0x1b0] sm:$0xff]
  %v8807 = vld [vmem:[#allocation4 + $0x1b8] sm:$0xff]
  %v8808 = vld [vmem:[#allocation4 + $0x1c0] sm:$0xff]
  %v8809 = vld [vmem:[#allocation4 + $0x1c8] sm:$0xff]
  %v8810 = vld [vmem:[#allocation4 + $0x1d0] sm:$0xff]
  %v8811 = vld [vmem:[#allocation4 + $0x1d8] sm:$0xff]
  %v8812 = vld [vmem:[#allocation4 + $0x1e0] sm:$0xff]
  %v8813 = vld [vmem:[#allocation4 + $0x1e8] sm:$0xff]
  %v8814 = vld [vmem:[#allocation4 + $0x1f0] sm:$0xff]
  %v8815 = vld [vmem:[#allocation4 + $0x1f8] sm:$0xff]
  %v8816 = vld [vmem:[#allocation4 + $0x200] sm:$0xff]
  %v8817 = vld [vmem:[#allocation4 + $0x208] sm:$0xff]
  %v8818 = vld [vmem:[#allocation4 + $0x210] sm:$0xff]
  %v8819 = vld [vmem:[#allocation4 + $0x218] sm:$0xff]
  %v8820 = vld [vmem:[#allocation4 + $0x220] sm:$0xff]
  %v8821 = vld [vmem:[#allocation4 + $0x228] sm:$0xff]
  %v8822 = vld [vmem:[#allocation4 + $0x230] sm:$0xff]
  %v8823 = vld [vmem:[#allocation4 + $0x238] sm:$0xff]
  %v8824 = vld [vmem:[#allocation4 + $0x240] sm:$0xff]
  %v8825 = vld [vmem:[#allocation4 + $0x248] sm:$0xff]
  %v8826 = vld [vmem:[#allocation4 + $0x250] sm:$0xff]
  %v8827 = vld [vmem:[#allocation4 + $0x258] sm:$0xff]
  %v8828 = vld [vmem:[#allocation4 + $0x260] sm:$0xff]
  %v8829 = vld [vmem:[#allocation4 + $0x268] sm:$0xff]
  %v8830 = vld [vmem:[#allocation4 + $0x270] sm:$0xff]
  %v8831 = vld [vmem:[#allocation4 + $0x278] sm:$0xff]
  %v8832 = vld [vmem:[#allocation4 + $0x280] sm:$0xff]
  %v8833 = vld [vmem:[#allocation4 + $0x288] sm:$0xff]
  %v8834 = vld [vmem:[#allocation4 + $0x290] sm:$0xff]
  %v8835 = vld [vmem:[#allocation4 + $0x298] sm:$0xff]
  %v8836 = vld [vmem:[#allocation4 + $0x2a0] sm:$0xff]
  %v8837 = vld [vmem:[#allocation4 + $0x2a8] sm:$0xff]
  %v8838 = vld [vmem:[#allocation4 + $0x2b0] sm:$0xff]
  %v8839 = vld [vmem:[#allocation4 + $0x2b8] sm:$0xff]
  %v8840 = vld [vmem:[#allocation4 + $0x2c0] sm:$0xff]
  %v8841 = vld [vmem:[#allocation4 + $0x2c8] sm:$0xff]
  %v8842 = vld [vmem:[#allocation4 + $0x2d0] sm:$0xff]
  %v8843 = vld [vmem:[#allocation4 + $0x2d8] sm:$0xff]
  %v8844 = vld [vmem:[#allocation4 + $0x2e0] sm:$0xff]
  %v8845 = vld [vmem:[#allocation4 + $0x2e8] sm:$0xff]
  %v8846 = vld [vmem:[#allocation4 + $0x2f0] sm:$0xff]
  %v8847 = vld [vmem:[#allocation4 + $0x2f8] sm:$0xff]
  %v8848 = vld [vmem:[#allocation4 + $0x300] sm:$0xff]
  %v8849 = vld [vmem:[#allocation4 + $0x308] sm:$0xff]
  %v8850 = vld [vmem:[#allocation4 + $0x310] sm:$0xff]
  %v8851 = vld [vmem:[#allocation4 + $0x318] sm:$0xff]
  %v8852 = vld [vmem:[#allocation4 + $0x320] sm:$0xff]
  %v8853 = vld [vmem:[#allocation4 + $0x328] sm:$0xff]
  %v8854 = vld [vmem:[#allocation4 + $0x330] sm:$0xff]
  %v8855 = vld [vmem:[#allocation4 + $0x338] sm:$0xff]
  %v8856 = vld [vmem:[#allocation4 + $0x340] sm:$0xff]
  %v8857 = vld [vmem:[#allocation4 + $0x348] sm:$0xff]
  %v8858 = vld [vmem:[#allocation4 + $0x350] sm:$0xff]
  %v8859 = vld [vmem:[#allocation4 + $0x358] sm:$0xff]
  %v8860 = vld [vmem:[#allocation4 + $0x360] sm:$0xff]
  %v8861 = vld [vmem:[#allocation4 + $0x368] sm:$0xff]
  %v8862 = vld [vmem:[#allocation4 + $0x370] sm:$0xff]
  %v8863 = vld [vmem:[#allocation4 + $0x378] sm:$0xff]
  %v8864 = vld [vmem:[#allocation4 + $0x380] sm:$0xff]
  %v8865 = vld [vmem:[#allocation4 + $0x388] sm:$0xff]
  %v8866 = vld [vmem:[#allocation4 + $0x390] sm:$0xff]
  %v8867 = vld [vmem:[#allocation4 + $0x398] sm:$0xff]
  %v8868 = vld [vmem:[#allocation4 + $0x3a0] sm:$0xff]
  %v8869 = vld [vmem:[#allocation4 + $0x3a8] sm:$0xff]
  %v8870 = vld [vmem:[#allocation4 + $0x3b0] sm:$0xff]
  %v8871 = vld [vmem:[#allocation4 + $0x3b8] sm:$0xff]
  %v8872 = vld [vmem:[#allocation4 + $0x3c0] sm:$0xff]
  %v8873 = vld [vmem:[#allocation4 + $0x3c8] sm:$0xff]
  %v8874 = vld [vmem:[#allocation4 + $0x3d0] sm:$0xff]
  %v8875 = vld [vmem:[#allocation4 + $0x3d8] sm:$0xff]
  %v8876 = vld [vmem:[#allocation4 + $0x3e0] sm:$0xff]
  %v8877 = vld [vmem:[#allocation4 + $0x3e8] sm:$0xff]
  %v8878 = vld [vmem:[#allocation4 + $0x3f0] sm:$0xff]
  %v8879 = vld [vmem:[#allocation4 + $0x3f8] sm:$0xff]
  %v8880 = vld [vmem:[#allocation4 + $0x400] sm:$0xff]
  %v8881 = vld [vmem:[#allocation4 + $0x408] sm:$0xff]
  %v8882 = vld [vmem:[#allocation4 + $0x410] sm:$0xff]
  %v8883 = vld [vmem:[#allocation4 + $0x418] sm:$0xff]
  %v8884 = vld [vmem:[#allocation4 + $0x420] sm:$0xff]
  %v8885 = vld [vmem:[#allocation4 + $0x428] sm:$0xff]
  %v8886 = vld [vmem:[#allocation4 + $0x430] sm:$0xff]
  %v8887 = vld [vmem:[#allocation4 + $0x438] sm:$0xff]
  %v8888 = vld [vmem:[#allocation4 + $0x440] sm:$0xff]
  %v8889 = vld [vmem:[#allocation4 + $0x448] sm:$0xff]
  %v8890 = vld [vmem:[#allocation4 + $0x450] sm:$0xff]
  %v8891 = vld [vmem:[#allocation4 + $0x458] sm:$0xff]
  %v8892 = vld [vmem:[#allocation4 + $0x460] sm:$0xff]
  %v8893 = vld [vmem:[#allocation4 + $0x468] sm:$0xff]
  %v8894 = vld [vmem:[#allocation4 + $0x470] sm:$0xff]
  %v8895 = vld [vmem:[#allocation4 + $0x478] sm:$0xff]
  %v8896 = vld [vmem:[#allocation4 + $0x480] sm:$0xff]
  %v8897 = vld [vmem:[#allocation4 + $0x488] sm:$0xff]
  %v8898 = vld [vmem:[#allocation4 + $0x490] sm:$0xff]
  %v8899 = vld [vmem:[#allocation4 + $0x498] sm:$0xff]
  %v8900 = vld [vmem:[#allocation4 + $0x4a0] sm:$0xff]
  %v8901 = vld [vmem:[#allocation4 + $0x4a8] sm:$0xff]
  %v8902 = vld [vmem:[#allocation4 + $0x4b0] sm:$0xff]
  %v8903 = vld [vmem:[#allocation4 + $0x4b8] sm:$0xff]
  %v8904 = vld [vmem:[#allocation4 + $0x4c0] sm:$0xff]
  %v8905 = vld [vmem:[#allocation4 + $0x4c8] sm:$0xff]
  %v8906 = vld [vmem:[#allocation4 + $0x4d0] sm:$0xff]
  %v8907 = vld [vmem:[#allocation4 + $0x4d8] sm:$0xff]
  %v8908 = vld [vmem:[#allocation4 + $0x4e0] sm:$0xff]
  %v8909 = vld [vmem:[#allocation4 + $0x4e8] sm:$0xff]
  %v8910 = vld [vmem:[#allocation4 + $0x4f0] sm:$0xff]
  %v8911 = vld [vmem:[#allocation4 + $0x4f8] sm:$0xff]
  %v8912 = vld [vmem:[%s4] sm:$0xff]
  %v8913 = vld [vmem:[%s4 + $0x8] sm:$0xff]
  %v8914 = vld [vmem:[%s4 + $0x10] sm:$0xff]
  %v8915 = vld [vmem:[%s4 + $0x18] sm:$0xff]
  %v8916 = vld [vmem:[%s4 + $0x20] sm:$0xff]
  %v8917 = vld [vmem:[%s4 + $0x28] sm:$0xff]
  %v8918 = vld [vmem:[%s4 + $0x30] sm:$0xff]
  %v8919 = vld [vmem:[%s4 + $0x38] sm:$0xff]
  %v8920 = vld [vmem:[%s4 + $0x40] sm:$0xff]
  %v8921 = vld [vmem:[%s4 + $0x48] sm:$0xff]
  %v8922 = vld [vmem:[%s4 + $0x50] sm:$0xff]
  %v8923 = vld [vmem:[%s4 + $0x58] sm:$0xff]
  %v8924 = vld [vmem:[%s4 + $0x60] sm:$0xff]
  %v8925 = vld [vmem:[%s4 + $0x68] sm:$0xff]
  %v8926 = vld [vmem:[%s4 + $0x70] sm:$0xff]
  %v8927 = vld [vmem:[%s4 + $0x78] sm:$0xff]
  %v8928 = vld [vmem:[%s4 + $0x80] sm:$0xff]
  %v8929 = vld [vmem:[%s4 + $0x88] sm:$0xff]
  %v8930 = vld [vmem:[%s4 + $0x90] sm:$0xff]
  %v8931 = vld [vmem:[%s4 + $0x98] sm:$0xff]
  %v8932 = vld [vmem:[%s4 + $0xa0] sm:$0xff]
  %v8933 = vld [vmem:[%s4 + $0xa8] sm:$0xff]
  %v8934 = vld [vmem:[%s4 + $0xb0] sm:$0xff]
  %v8935 = vld [vmem:[%s4 + $0xb8] sm:$0xff]
  %v8936 = vld [vmem:[%s4 + $0xc0] sm:$0xff]
  %v8937 = vld [vmem:[%s4 + $0xc8] sm:$0xff]
  %v8938 = vld [vmem:[%s4 + $0xd0] sm:$0xff]
  %v8939 = vld [vmem:[%s4 + $0xd8] sm:$0xff]
  %v8940 = vld [vmem:[%s4 + $0xe0] sm:$0xff]
  %v8941 = vld [vmem:[%s4 + $0xe8] sm:$0xff]
  %v8942 = vld [vmem:[%s4 + $0xf0] sm:$0xff]
  %v8943 = vld [vmem:[%s4 + $0xf8] sm:$0xff]
  %v8944 = vld [vmem:[%s4 + $0x100] sm:$0xff]
  %v8945 = vld [vmem:[%s4 + $0x108] sm:$0xff]
  %v8946 = vld [vmem:[%s4 + $0x110] sm:$0xff]
  %v8947 = vld [vmem:[%s4 + $0x118] sm:$0xff]
  %v8948 = vld [vmem:[%s4 + $0x120] sm:$0xff]
  %v8949 = vld [vmem:[%s4 + $0x128] sm:$0xff]
  %v8950 = vld [vmem:[%s4 + $0x130] sm:$0xff]
  %v8951 = vld [vmem:[%s4 + $0x138] sm:$0xff]
  %v8952 = vld [vmem:[%s4 + $0x140] sm:$0xff]
  %v8953 = vld [vmem:[%s4 + $0x148] sm:$0xff]
  %v8954 = vld [vmem:[%s4 + $0x150] sm:$0xff]
  %v8955 = vld [vmem:[%s4 + $0x158] sm:$0xff]
  %v8956 = vld [vmem:[%s4 + $0x160] sm:$0xff]
  %v8957 = vld [vmem:[%s4 + $0x168] sm:$0xff]
  %v8958 = vld [vmem:[%s4 + $0x170] sm:$0xff]
  %v8959 = vld [vmem:[%s4 + $0x178] sm:$0xff]
  %v8960 = vld [vmem:[%s4 + $0x180] sm:$0xff]
  %v8961 = vld [vmem:[%s4 + $0x188] sm:$0xff]
  %v8962 = vld [vmem:[%s4 + $0x190] sm:$0xff]
  %v8963 = vld [vmem:[%s4 + $0x198] sm:$0xff]
  %v8964 = vld [vmem:[%s4 + $0x1a0] sm:$0xff]
  %v8965 = vld [vmem:[%s4 + $0x1a8] sm:$0xff]
  %v8966 = vld [vmem:[%s4 + $0x1b0] sm:$0xff]
  %v8967 = vld [vmem:[%s4 + $0x1b8] sm:$0xff]
  %v8968 = vld [vmem:[%s4 + $0x1c0] sm:$0xff]
  %v8969 = vld [vmem:[%s4 + $0x1c8] sm:$0xff]
  %v8970 = vld [vmem:[%s4 + $0x1d0] sm:$0xff]
  %v8971 = vld [vmem:[%s4 + $0x1d8] sm:$0xff]
  %v8972 = vld [vmem:[%s4 + $0x1e0] sm:$0xff]
  %v8973 = vld [vmem:[%s4 + $0x1e8] sm:$0xff]
  %v8974 = vld [vmem:[%s4 + $0x1f0] sm:$0xff]
  %v8975 = vld [vmem:[%s4 + $0x1f8] sm:$0xff]
  %v8976 = vld [vmem:[%s4 + $0x200] sm:$0xff]
  %v8977 = vld [vmem:[%s4 + $0x208] sm:$0xff]
  %v8978 = vld [vmem:[%s4 + $0x210] sm:$0xff]
  %v8979 = vld [vmem:[%s4 + $0x218] sm:$0xff]
  %v8980 = vld [vmem:[%s4 + $0x220] sm:$0xff]
  %v8981 = vld [vmem:[%s4 + $0x228] sm:$0xff]
  %v8982 = vld [vmem:[%s4 + $0x230] sm:$0xff]
  %v8983 = vld [vmem:[%s4 + $0x238] sm:$0xff]
  %v8985 = vsel %vm26, %v8756, 0
  %v8988 = vsel %vm26, %v8761, 0
  %v8991 = vsel %vm26, %v8766, 0
  %v8994 = vsel %vm26, %v8771, 0
  %v8997 = vsel %vm26, %v8776, 0
  %v9000 = vsel %vm26, %v8781, 0
  %v9003 = vsel %vm26, %v8786, 0
  %v9006 = vsel %vm26, %v8791, 0
  %v9009 = vsel %vm26, %v8796, 0
  %v9012 = vsel %vm26, %v8801, 0
  %v9015 = vsel %vm26, %v8806, 0
  %v9018 = vsel %vm26, %v8811, 0
  %v9021 = vsel %vm26, %v8816, 0
  %v9024 = vsel %vm26, %v8821, 0
  %v9027 = vsel %vm26, %v8826, 0
  %v9030 = vsel %vm26, %v8831, 0
  %v9033 = vsel %vm26, %v8836, 0
  %v9036 = vsel %vm26, %v8841, 0
  %v9039 = vsel %vm26, %v8846, 0
  %v9042 = vsel %vm26, %v8851, 0
  %v9045 = vsel %vm26, %v8856, 0
  %v9048 = vsel %vm26, %v8861, 0
  %v9051 = vsel %vm26, %v8866, 0
  %v9054 = vsel %vm26, %v8871, 0
  %v9057 = vsel %vm26, %v8876, 0
  %v9060 = vsel %vm26, %v8881, 0
  %v9063 = vsel %vm26, %v8886, 0
  %v9066 = vsel %vm26, %v8891, 0
  %v9069 = vsel %vm26, %v8896, 0
  %v9072 = vsel %vm26, %v8901, 0
  %v9075 = vsel %vm26, %v8906, 0
  %v9078 = vsel %vm26, %v8911, 0
  %9080 = vmatprep.subr.mxu0 0.0
  %9081 = vmatpush1.msra.mxu0 %v8912
  %9082 = vmatprep.subr.mxu0 0.0
  %9083 = vmatpush1.msra.mxu0 %v8913
  %9084 = vmatprep.subr.mxu0 0.0
  %9085 = vmatpush1.msra.mxu0 %v8914
  %9086 = vmatprep.subr.mxu0 0.0
  %9087 = vmatpush1.msra.mxu0 %v8915
  %9088 = vmatprep.subr.mxu0 0.0
  %9089 = vmatpush1.msra.mxu0 %v8916
  %9090 = vmatprep.subr.mxu0 0.0
  %9091 = vmatpush1.msra.mxu0 %v8917
  %9092 = vmatprep.subr.mxu0 0.0
  %9093 = vmatpush1.msra.mxu0 %v8918
  %9094 = vmatprep.subr.mxu0 0.0
  %9095 = vmatpush1.msra.mxu0 %v8919
  %9096 = vmatprep.subr.mxu0 0.0
  %9097 = vmatpush1.msra.mxu0 %v8920
  %9098 = vmatprep.subr.mxu0 0.0
  %9099 = vmatpush1.msra.mxu0 %v8921
  %9100 = vmatprep.subr.mxu0 0.0
  %9101 = vmatpush1.msra.mxu0 %v8922
  %9102 = vmatprep.subr.mxu0 0.0
  %9103 = vmatpush1.msra.mxu0 %v8923
  %9104 = vmatprep.subr.mxu0 0.0
  %9105 = vmatpush1.msra.mxu0 %v8924
  %9106 = vmatprep.subr.mxu0 0.0
  %9107 = vmatpush1.msra.mxu0 %v8925
  %9108 = vmatprep.subr.mxu0 0.0
  %9109 = vmatpush1.msra.mxu0 %v8926
  %9110 = vmatprep.subr.mxu0 0.0
  %9111 = vmatpush1.msra.mxu0 %v8927
  %9112 = vmatprep.subr.mxu0 0.0
  %9113 = vmatpush1.msra.mxu0 %v8928
  %9114 = vmatprep.subr.mxu0 0.0
  %9115 = vmatpush1.msra.mxu0 %v8929
  %9116 = vmatprep.subr.mxu0 0.0
  %9117 = vmatpush1.msra.mxu0 %v8930
  %9118 = vmatprep.subr.mxu0 0.0
  %9119 = vmatpush1.msra.mxu0 %v8931
  %9120 = vmatprep.subr.mxu0 0.0
  %9121 = vmatpush1.msra.mxu0 %v8932
  %9122 = vmatprep.subr.mxu0 0.0
  %9123 = vmatpush1.msra.mxu0 %v8933
  %9124 = vmatprep.subr.mxu0 0.0
  %9125 = vmatpush1.msra.mxu0 %v8934
  %9126 = vmatprep.subr.mxu0 0.0
  %9127 = vmatpush1.msra.mxu0 %v8935
  %9128 = vmatprep.subr.mxu0 0.0
  %9129 = vmatpush1.msra.mxu0 %v8936
  %9130 = vmatprep.subr.mxu0 0.0
  %9131 = vmatpush1.msra.mxu0 %v8937
  %9132 = vmatprep.subr.mxu0 0.0
  %9133 = vmatpush1.msra.mxu0 %v8938
  %9134 = vmatprep.subr.mxu0 0.0
  %9135 = vmatpush1.msra.mxu0 %v8939
  %9136 = vmatprep.subr.mxu0 0.0
  %9137 = vmatpush1.msra.mxu0 %v8940
  %9138 = vmatprep.subr.mxu0 0.0
  %9139 = vmatpush1.msra.mxu0 %v8941
  %9140 = vmatprep.subr.mxu0 0.0
  %9141 = vmatpush1.msra.mxu0 %v8942
  %9142 = vmatprep.subr.mxu0 0.0
  %9143 = vmatpush1.msra.mxu0 %v8943
  %9144 = vmatprep.mubr.f32.mxu0 %v8753
  %9145 = vmatmul.mubr.f32.gmra.mrb[0].mxu0 %v8752
  %v9146 = vpop.f32.mrb[0].mxu0
  %v9147 = vadd.f32 0.0, %v9146
  %v9148 = vpop.f32.mrb[0].mxu0
  %9149 = vmatprep.mubr.f32.mxu0 %v8758
  %9150 = vmatmul.mubr.f32.gmra.mrb[0].mxu0 %v8757
  %v9151 = vpop.f32.mrb[0].mxu0
  %v9152 = vadd.f32 0.0, %v9151
  %v9153 = vpop.f32.mrb[0].mxu0
  %9154 = vmatprep.mubr.f32.mxu0 %v8763
  %9155 = vmatmul.mubr.f32.gmra.mrb[0].mxu0 %v8762
  %v9156 = vpop.f32.mrb[0].mxu0
  %v9157 = vadd.f32 0.0, %v9156
  %v9158 = vpop.f32.mrb[0].mxu0
  %9159 = vmatprep.mubr.f32.mxu0 %v8768
  %9160 = vmatmul.mubr.f32.gmra.mrb[0].mxu0 %v8767
  %v9161 = vpop.f32.mrb[0].mxu0
  %v9162 = vadd.f32 0.0, %v9161
  %v9163 = vpop.f32.mrb[0].mxu0
  %9164 = vmatprep.mubr.f32.mxu0 %v8773
  %9165 = vmatmul.mubr.f32.gmra.mrb[0].mxu0 %v8772
  %v9166 = vpop.f32.mrb[0].mxu0
  %v9167 = vadd.f32 0.0, %v9166
  %v9168 = vpop.f32.mrb[0].mxu0
  %9169 = vmatprep.mubr.f32.mxu0 %v8778
  %9170 = vmatmul.mubr.f32.gmra.mrb[0].mxu0 %v8777
  %v9171 = vpop.f32.mrb[0].mxu0
  %v9172 = vadd.f32 0.0, %v9171
  %v9173 = vpop.f32.mrb[0].mxu0
  %9174 = vmatprep.mubr.f32.mxu0 %v8783
  %9175 = vmatmul.mubr.f32.gmra.mrb[0].mxu0 %v8782
  %v9176 = vpop.f32.mrb[0].mxu0
  %v9177 = vadd.f32 0.0, %v9176
  %v9178 = vpop.f32.mrb[0].mxu0
  %9179 = vmatprep.mubr.f32.mxu0 %v8788
  %9180 = vmatmul.mubr.f32.gmra.mrb[0].mxu0 %v8787
  %v9181 = vpop.f32.mrb[0].mxu0
  %v9182 = vadd.f32 0.0, %v9181
  %v9183 = vpop.f32.mrb[0].mxu0
  %9184 = vmatprep.mubr.f32.mxu0 %v8793
  %9185 = vmatmul.mubr.f32.gmra.mrb[0].mxu0 %v8792
  %v9186 = vpop.f32.mrb[0].mxu0
  %v9187 = vadd.f32 0.0, %v9186
  %v9188 = vpop.f32.mrb[0].mxu0
  %9189 = vmatprep.mubr.f32.mxu0 %v8798
  %9190 = vmatmul.mubr.f32.gmra.mrb[0].mxu0 %v8797
  %v9191 = vpop.f32.mrb[0].mxu0
  %v9192 = vadd.f32 0.0, %v9191
  %v9193 = vpop.f32.mrb[0].mxu0
  %9194 = vmatprep.mubr.f32.mxu0 %v8803
  %9195 = vmatmul.mubr.f32.gmra.mrb[0].mxu0 %v8802
  %v9196 = vpop.f32.mrb[0].mxu0
  %v9197 = vadd.f32 0.0, %v9196
  %v9198 = vpop.f32.mrb[0].mxu0
  %9199 = vmatprep.mubr.f32.mxu0 %v8808
  %9200 = vmatmul.mubr.f32.gmra.mrb[0].mxu0 %v8807
  %v9201 = vpop.f32.mrb[0].mxu0
  %v9202 = vadd.f32 0.0, %v9201
  %v9203 = vpop.f32.mrb[0].mxu0
  %9204 = vmatprep.mubr.f32.mxu0 %v8813
  %9205 = vmatmul.mubr.f32.gmra.mrb[0].mxu0 %v8812
  %v9206 = vpop.f32.mrb[0].mxu0
  %v9207 = vadd.f32 0.0, %v9206
  %v9208 = vpop.f32.mrb[0].mxu0
  %9209 = vmatprep.mubr.f32.mxu0 %v8818
  %9210 = vmatmul.mubr.f32.gmra.mrb[0].mxu0 %v8817
  %v9211 = vpop.f32.mrb[0].mxu0
  %v9212 = vadd.f32 0.0, %v9211
  %v9213 = vpop.f32.mrb[0].mxu0
  %9214 = vmatprep.mubr.f32.mxu0 %v8823
  %9215 = vmatmul.mubr.f32.gmra.mrb[0].mxu0 %v8822
  %v9216 = vpop.f32.mrb[0].mxu0
  %v9217 = vadd.f32 0.0, %v9216
  %v9218 = vpop.f32.mrb[0].mxu0
  %9219 = vmatprep.mubr.f32.mxu0 %v8828
  %9220 = vmatmul.mubr.f32.gmra.mrb[0].mxu0 %v8827
  %v9221 = vpop.f32.mrb[0].mxu0
  %v9222 = vadd.f32 0.0, %v9221
  %v9223 = vpop.f32.mrb[0].mxu0
  %9224 = vmatprep.mubr.f32.mxu0 %v8833
  %9225 = vmatmul.mubr.f32.gmra.mrb[0].mxu0 %v8832
  %v9226 = vpop.f32.mrb[0].mxu0
  %v9227 = vadd.f32 0.0, %v9226
  %v9228 = vpop.f32.mrb[0].mxu0
  %9229 = vmatprep.mubr.f32.mxu0 %v8838
  %9230 = vmatmul.mubr.f32.gmra.mrb[0].mxu0 %v8837
  %v9231 = vpop.f32.mrb[0].mxu0
  %v9232 = vadd.f32 0.0, %v9231
  %v9233 = vpop.f32.mrb[0].mxu0
  %9234 = vmatprep.mubr.f32.mxu0 %v8843
  %9235 = vmatmul.mubr.f32.gmra.mrb[0].mxu0 %v8842
  %v9236 = vpop.f32.mrb[0].mxu0
  %v9237 = vadd.f32 0.0, %v9236
  %v9238 = vpop.f32.mrb[0].mxu0
  %9239 = vmatprep.mubr.f32.mxu0 %v8848
  %9240 = vmatmul.mubr.f32.gmra.mrb[0].mxu0 %v8847
  %v9241 = vpop.f32.mrb[0].mxu0
  %v9242 = vadd.f32 0.0, %v9241
  %v9243 = vpop.f32.mrb[0].mxu0
  %9244 = vmatprep.mubr.f32.mxu0 %v8853
  %9245 = vmatmul.mubr.f32.gmra.mrb[0].mxu0 %v8852
  %v9246 = vpop.f32.mrb[0].mxu0
  %v9247 = vadd.f32 0.0, %v9246
  %v9248 = vpop.f32.mrb[0].mxu0
  %9249 = vmatprep.mubr.f32.mxu0 %v8858
  %9250 = vmatmul.mubr.f32.gmra.mrb[0].mxu0 %v8857
  %v9251 = vpop.f32.mrb[0].mxu0
  %v9252 = vadd.f32 0.0, %v9251
  %v9253 = vpop.f32.mrb[0].mxu0
  %9254 = vmatprep.mubr.f32.mxu0 %v8863
  %9255 = vmatmul.mubr.f32.gmra.mrb[0].mxu0 %v8862
  %v9256 = vpop.f32.mrb[0].mxu0
  %v9257 = vadd.f32 0.0, %v9256
  %v9258 = vpop.f32.mrb[0].mxu0
  %9259 = vmatprep.mubr.f32.mxu0 %v8868
  %9260 = vmatmul.mubr.f32.gmra.mrb[0].mxu0 %v8867
  %v9261 = vpop.f32.mrb[0].mxu0
  %v9262 = vadd.f32 0.0, %v9261
  %v9263 = vpop.f32.mrb[0].mxu0
  %9264 = vmatprep.mubr.f32.mxu0 %v8873
  %9265 = vmatmul.mubr.f32.gmra.mrb[0].mxu0 %v8872
  %v9266 = vpop.f32.mrb[0].mxu0
  %v9267 = vadd.f32 0.0, %v9266
  %v9268 = vpop.f32.mrb[0].mxu0
  %9269 = vmatprep.mubr.f32.mxu0 %v8878
  %9270 = vmatmul.mubr.f32.gmra.mrb[0].mxu0 %v8877
  %v9271 = vpop.f32.mrb[0].mxu0
  %v9272 = vadd.f32 0.0, %v9271
  %v9273 = vpop.f32.mrb[0].mxu0
  %9274 = vmatprep.mubr.f32.mxu0 %v8883
  %9275 = vmatmul.mubr.f32.gmra.mrb[0].mxu0 %v8882
  %v9276 = vpop.f32.mrb[0].mxu0
  %v9277 = vadd.f32 0.0, %v9276
  %v9278 = vpop.f32.mrb[0].mxu0
  %9279 = vmatprep.mubr.f32.mxu0 %v8888
  %9280 = vmatmul.mubr.f32.gmra.mrb[0].mxu0 %v8887
  %v9281 = vpop.f32.mrb[0].mxu0
  %v9282 = vadd.f32 0.0, %v9281
  %v9283 = vpop.f32.mrb[0].mxu0
  %9284 = vmatprep.mubr.f32.mxu0 %v8893
  %9285 = vmatmul.mubr.f32.gmra.mrb[0].mxu0 %v8892
  %v9286 = vpop.f32.mrb[0].mxu0
  %v9287 = vadd.f32 0.0, %v9286
  %v9288 = vpop.f32.mrb[0].mxu0
  %9289 = vmatprep.mubr.f32.mxu0 %v8898
  %9290 = vmatmul.mubr.f32.gmra.mrb[0].mxu0 %v8897
  %v9291 = vpop.f32.mrb[0].mxu0
  %v9292 = vadd.f32 0.0, %v9291
  %v9293 = vpop.f32.mrb[0].mxu0
  %9294 = vmatprep.mubr.f32.mxu0 %v8903
  %9295 = vmatmul.mubr.f32.gmra.mrb[0].mxu0 %v8902
  %v9296 = vpop.f32.mrb[0].mxu0
  %v9297 = vadd.f32 0.0, %v9296
  %v9298 = vpop.f32.mrb[0].mxu0
  %9299 = vmatprep.mubr.f32.mxu0 %v8908
  %9300 = vmatmul.mubr.f32.gmra.mrb[0].mxu0 %v8907
  %v9301 = vpop.f32.mrb[0].mxu0
  %v9302 = vadd.f32 0.0, %v9301
  %v9303 = vpop.f32.mrb[0].mxu0
  %9304 = vdwg.mxu0
  %9305 = vmatprep.subr.mxu0 0.0
  %9306 = vmatpush1.msra.mxu0 %v8944
  %9307 = vmatprep.subr.mxu0 0.0
  %9308 = vmatpush1.msra.mxu0 %v8945
  %9309 = vmatprep.subr.mxu0 0.0
  %9310 = vmatpush1.msra.mxu0 %v8946
  %9311 = vmatprep.subr.mxu0 0.0
  %9312 = vmatpush1.msra.mxu0 %v8947
  %9313 = vmatprep.subr.mxu0 0.0
  %9314 = vmatpush1.msra.mxu0 %v8948
  %9315 = vmatprep.subr.mxu0 0.0
  %9316 = vmatpush1.msra.mxu0 %v8949
  %9317 = vmatprep.subr.mxu0 0.0
  %9318 = vmatpush1.msra.mxu0 %v8950
  %9319 = vmatprep.subr.mxu0 0.0
  %9320 = vmatpush1.msra.mxu0 %v8951
  %9321 = vmatprep.subr.mxu0 0.0
  %9322 = vmatpush1.msra.mxu0 %v8952
  %9323 = vmatprep.subr.mxu0 0.0
  %9324 = vmatpush1.msra.mxu0 %v8953
  %9325 = vmatprep.subr.mxu0 0.0
  %9326 = vmatpush1.msra.mxu0 %v8954
  %9327 = vmatprep.subr.mxu0 0.0
  %9328 = vmatpush1.msra.mxu0 %v8955
  %9329 = vmatprep.subr.mxu0 0.0
  %9330 = vmatpush1.msra.mxu0 %v8956
  %9331 = vmatprep.subr.mxu0 0.0
  %9332 = vmatpush1.msra.mxu0 %v8957
  %9333 = vmatprep.subr.mxu0 0.0
  %9334 = vmatpush1.msra.mxu0 %v8958
  %9335 = vmatprep.subr.mxu0 0.0
  %9336 = vmatpush1.msra.mxu0 %v8959
  %9337 = vmatprep.subr.mxu0 0.0
  %9338 = vmatpush1.msra.mxu0 %v8960
  %9339 = vmatprep.subr.mxu0 0.0
  %9340 = vmatpush1.msra.mxu0 %v8961
  %9341 = vmatprep.subr.mxu0 0.0
  %9342 = vmatpush1.msra.mxu0 %v8962
  %9343 = vmatprep.subr.mxu0 0.0
  %9344 = vmatpush1.msra.mxu0 %v8963
  %9345 = vmatprep.subr.mxu0 0.0
  %9346 = vmatpush1.msra.mxu0 %v8964
  %9347 = vmatprep.subr.mxu0 0.0
  %9348 = vmatpush1.msra.mxu0 %v8965
  %9349 = vmatprep.subr.mxu0 0.0
  %9350 = vmatpush1.msra.mxu0 %v8966
  %9351 = vmatprep.subr.mxu0 0.0
  %9352 = vmatpush1.msra.mxu0 %v8967
  %9353 = vmatprep.subr.mxu0 0.0
  %9354 = vmatpush1.msra.mxu0 %v8968
  %9355 = vmatprep.subr.mxu0 0.0
  %9356 = vmatpush1.msra.mxu0 %v8969
  %9357 = vmatprep.subr.mxu0 0.0
  %9358 = vmatpush1.msra.mxu0 %v8970
  %9359 = vmatprep.subr.mxu0 0.0
  %9360 = vmatpush1.msra.mxu0 %v8971
  %9361 = vmatprep.subr.mxu0 0.0
  %9362 = vmatpush1.msra.mxu0 %v8972
  %9363 = vmatprep.subr.mxu0 0.0
  %9364 = vmatpush1.msra.mxu0 %v8973
  %9365 = vmatprep.subr.mxu0 0.0
  %9366 = vmatpush1.msra.mxu0 %v8974
  %9367 = vmatprep.subr.mxu0 0.0
  %9368 = vmatpush1.msra.mxu0 %v8975
  %9369 = vmatprep.mubr.f32.mxu0 %v8755
  %9370 = vmatmul.mubr.f32.gmra.mrb[0].mxu0 %v8754
  %v9371 = vpop.f32.mrb[0].mxu0
  %v9372 = vadd.f32 %v9147, %v9371
  %v9373 = vpop.f32.mrb[0].mxu0
  %9374 = vmatprep.mubr.f32.mxu0 %v8760
  %9375 = vmatmul.mubr.f32.gmra.mrb[0].mxu0 %v8759
  %v9376 = vpop.f32.mrb[0].mxu0
  %v9377 = vadd.f32 %v9152, %v9376
  %v9378 = vpop.f32.mrb[0].mxu0
  %9379 = vmatprep.mubr.f32.mxu0 %v8765
  %9380 = vmatmul.mubr.f32.gmra.mrb[0].mxu0 %v8764
  %v9381 = vpop.f32.mrb[0].mxu0
  %v9382 = vadd.f32 %v9157, %v9381
  %v9383 = vpop.f32.mrb[0].mxu0
  %9384 = vmatprep.mubr.f32.mxu0 %v8770
  %9385 = vmatmul.mubr.f32.gmra.mrb[0].mxu0 %v8769
  %v9386 = vpop.f32.mrb[0].mxu0
  %v9387 = vadd.f32 %v9162, %v9386
  %v9388 = vpop.f32.mrb[0].mxu0
  %9389 = vmatprep.mubr.f32.mxu0 %v8775
  %9390 = vmatmul.mubr.f32.gmra.mrb[0].mxu0 %v8774
  %v9391 = vpop.f32.mrb[0].mxu0
  %v9392 = vadd.f32 %v9167, %v9391
  %v9393 = vpop.f32.mrb[0].mxu0
  %9394 = vmatprep.mubr.f32.mxu0 %v8780
  %9395 = vmatmul.mubr.f32.gmra.mrb[0].mxu0 %v8779
  %v9396 = vpop.f32.mrb[0].mxu0
  %v9397 = vadd.f32 %v9172, %v9396
  %v9398 = vpop.f32.mrb[0].mxu0
  %9399 = vmatprep.mubr.f32.mxu0 %v8785
  %9400 = vmatmul.mubr.f32.gmra.mrb[0].mxu0 %v8784
  %v9401 = vpop.f32.mrb[0].mxu0
  %v9402 = vadd.f32 %v9177, %v9401
  %v9403 = vpop.f32.mrb[0].mxu0
  %9404 = vmatprep.mubr.f32.mxu0 %v8790
  %9405 = vmatmul.mubr.f32.gmra.mrb[0].mxu0 %v8789
  %v9406 = vpop.f32.mrb[0].mxu0
  %v9407 = vadd.f32 %v9182, %v9406
  %v9408 = vpop.f32.mrb[0].mxu0
  %9409 = vmatprep.mubr.f32.mxu0 %v8795
  %9410 = vmatmul.mubr.f32.gmra.mrb[0].mxu0 %v8794
  %v9411 = vpop.f32.mrb[0].mxu0
  %v9412 = vadd.f32 %v9187, %v9411
  %v9413 = vpop.f32.mrb[0].mxu0
  %9414 = vmatprep.mubr.f32.mxu0 %v8800
  %9415 = vmatmul.mubr.f32.gmra.mrb[0].mxu0 %v8799
  %v9416 = vpop.f32.mrb[0].mxu0
  %v9417 = vadd.f32 %v9192, %v9416
  %v9418 = vpop.f32.mrb[0].mxu0
  %9419 = vmatprep.mubr.f32.mxu0 %v8805
  %9420 = vmatmul.mubr.f32.gmra.mrb[0].mxu0 %v8804
  %v9421 = vpop.f32.mrb[0].mxu0
  %v9422 = vadd.f32 %v9197, %v9421
  %v9423 = vpop.f32.mrb[0].mxu0
  %9424 = vmatprep.mubr.f32.mxu0 %v8810
  %9425 = vmatmul.mubr.f32.gmra.mrb[0].mxu0 %v8809
  %v9426 = vpop.f32.mrb[0].mxu0
  %v9427 = vadd.f32 %v9202, %v9426
  %v9428 = vpop.f32.mrb[0].mxu0
  %9429 = vmatprep.mubr.f32.mxu0 %v8815
  %9430 = vmatmul.mubr.f32.gmra.mrb[0].mxu0 %v8814
  %v9431 = vpop.f32.mrb[0].mxu0
  %v9432 = vadd.f32 %v9207, %v9431
  %v9433 = vpop.f32.mrb[0].mxu0
  %9434 = vmatprep.mubr.f32.mxu0 %v8820
  %9435 = vmatmul.mubr.f32.gmra.mrb[0].mxu0 %v8819
  %v9436 = vpop.f32.mrb[0].mxu0
  %v9437 = vadd.f32 %v9212, %v9436
  %v9438 = vpop.f32.mrb[0].mxu0
  %9439 = vmatprep.mubr.f32.mxu0 %v8825
  %9440 = vmatmul.mubr.f32.gmra.mrb[0].mxu0 %v8824
  %v9441 = vpop.f32.mrb[0].mxu0
  %v9442 = vadd.f32 %v9217, %v9441
  %v9443 = vpop.f32.mrb[0].mxu0
  %9444 = vmatprep.mubr.f32.mxu0 %v8830
  %9445 = vmatmul.mubr.f32.gmra.mrb[0].mxu0 %v8829
  %v9446 = vpop.f32.mrb[0].mxu0
  %v9447 = vadd.f32 %v9222, %v9446
  %v9448 = vpop.f32.mrb[0].mxu0
  %9449 = vmatprep.mubr.f32.mxu0 %v8835
  %9450 = vmatmul.mubr.f32.gmra.mrb[0].mxu0 %v8834
  %v9451 = vpop.f32.mrb[0].mxu0
  %v9452 = vadd.f32 %v9227, %v9451
  %v9453 = vpop.f32.mrb[0].mxu0
  %9454 = vmatprep.mubr.f32.mxu0 %v8840
  %9455 = vmatmul.mubr.f32.gmra.mrb[0].mxu0 %v8839
  %v9456 = vpop.f32.mrb[0].mxu0
  %v9457 = vadd.f32 %v9232, %v9456
  %v9458 = vpop.f32.mrb[0].mxu0
  %9459 = vmatprep.mubr.f32.mxu0 %v8845
  %9460 = vmatmul.mubr.f32.gmra.mrb[0].mxu0 %v8844
  %v9461 = vpop.f32.mrb[0].mxu0
  %v9462 = vadd.f32 %v9237, %v9461
  %v9463 = vpop.f32.mrb[0].mxu0
  %9464 = vmatprep.mubr.f32.mxu0 %v8850
  %9465 = vmatmul.mubr.f32.gmra.mrb[0].mxu0 %v8849
  %v9466 = vpop.f32.mrb[0].mxu0
  %v9467 = vadd.f32 %v9242, %v9466
  %v9468 = vpop.f32.mrb[0].mxu0
  %9469 = vmatprep.mubr.f32.mxu0 %v8855
  %9470 = vmatmul.mubr.f32.gmra.mrb[0].mxu0 %v8854
  %v9471 = vpop.f32.mrb[0].mxu0
  %v9472 = vadd.f32 %v9247, %v9471
  %v9473 = vpop.f32.mrb[0].mxu0
  %9474 = vmatprep.mubr.f32.mxu0 %v8860
  %9475 = vmatmul.mubr.f32.gmra.mrb[0].mxu0 %v8859
  %v9476 = vpop.f32.mrb[0].mxu0
  %v9477 = vadd.f32 %v9252, %v9476
  %v9478 = vpop.f32.mrb[0].mxu0
  %9479 = vmatprep.mubr.f32.mxu0 %v8865
  %9480 = vmatmul.mubr.f32.gmra.mrb[0].mxu0 %v8864
  %v9481 = vpop.f32.mrb[0].mxu0
  %v9482 = vadd.f32 %v9257, %v9481
  %v9483 = vpop.f32.mrb[0].mxu0
  %9484 = vmatprep.mubr.f32.mxu0 %v8870
  %9485 = vmatmul.mubr.f32.gmra.mrb[0].mxu0 %v8869
  %v9486 = vpop.f32.mrb[0].mxu0
  %v9487 = vadd.f32 %v9262, %v9486
  %v9488 = vpop.f32.mrb[0].mxu0
  %9489 = vmatprep.mubr.f32.mxu0 %v8875
  %9490 = vmatmul.mubr.f32.gmra.mrb[0].mxu0 %v8874
  %v9491 = vpop.f32.mrb[0].mxu0
  %v9492 = vadd.f32 %v9267, %v9491
  %v9493 = vpop.f32.mrb[0].mxu0
  %9494 = vmatprep.mubr.f32.mxu0 %v8880
  %9495 = vmatmul.mubr.f32.gmra.mrb[0].mxu0 %v8879
  %v9496 = vpop.f32.mrb[0].mxu0
  %v9497 = vadd.f32 %v9272, %v9496
  %v9498 = vpop.f32.mrb[0].mxu0
  %9499 = vmatprep.mubr.f32.mxu0 %v8885
  %9500 = vmatmul.mubr.f32.gmra.mrb[0].mxu0 %v8884
  %v9501 = vpop.f32.mrb[0].mxu0
  %v9502 = vadd.f32 %v9277, %v9501
  %v9503 = vpop.f32.mrb[0].mxu0
  %9504 = vmatprep.mubr.f32.mxu0 %v8890
  %9505 = vmatmul.mubr.f32.gmra.mrb[0].mxu0 %v8889
  %v9506 = vpop.f32.mrb[0].mxu0
  %v9507 = vadd.f32 %v9282, %v9506
  %v9508 = vpop.f32.mrb[0].mxu0
  %9509 = vmatprep.mubr.f32.mxu0 %v8895
  %9510 = vmatmul.mubr.f32.gmra.mrb[0].mxu0 %v8894
  %v9511 = vpop.f32.mrb[0].mxu0
  %v9512 = vadd.f32 %v9287, %v9511
  %v9513 = vpop.f32.mrb[0].mxu0
  %9514 = vmatprep.mubr.f32.mxu0 %v8900
  %9515 = vmatmul.mubr.f32.gmra.mrb[0].mxu0 %v8899
  %v9516 = vpop.f32.mrb[0].mxu0
  %v9517 = vadd.f32 %v9292, %v9516
  %v9518 = vpop.f32.mrb[0].mxu0
  %9519 = vmatprep.mubr.f32.mxu0 %v8905
  %9520 = vmatmul.mubr.f32.gmra.mrb[0].mxu0 %v8904
  %v9521 = vpop.f32.mrb[0].mxu0
  %v9522 = vadd.f32 %v9297, %v9521
  %v9523 = vpop.f32.mrb[0].mxu0
  %9524 = vmatprep.mubr.f32.mxu0 %v8910
  %9525 = vmatmul.mubr.f32.gmra.mrb[0].mxu0 %v8909
  %v9526 = vpop.f32.mrb[0].mxu0
  %v9527 = vadd.f32 %v9302, %v9526
  %v9528 = vpop.f32.mrb[0].mxu0
  %9529 = vdwg.mxu0
  %9530 = vmatprep.subr.mxu0 0.0
  %9531 = vmatpush1.msra.mxu0 %v8976
  %9532 = vmatprep.subr.mxu0 0.0
  %9533 = vmatpush1.msra.mxu0 %v8977
  %9534 = vmatprep.subr.mxu0 0.0
  %9535 = vmatpush1.msra.mxu0 %v8978
  %9536 = vmatprep.subr.mxu0 0.0
  %9537 = vmatpush1.msra.mxu0 %v8979
  %9538 = vmatprep.subr.mxu0 0.0
  %9539 = vmatpush1.msra.mxu0 %v8980
  %9540 = vmatprep.subr.mxu0 0.0
  %9541 = vmatpush1.msra.mxu0 %v8981
  %9542 = vmatprep.subr.mxu0 0.0
  %9543 = vmatpush1.msra.mxu0 %v8982
  %9544 = vmatprep.subr.mxu0 0.0
  %9545 = vmatpush1.msra.mxu0 %v8983
  %9546 = vmatprep.subr.mxu0 0.0
  %9547 = vmatpush1.msra.mxu0 0.0
  %9548 = vmatprep.subr.mxu0 0.0
  %9549 = vmatpush1.msra.mxu0 0.0
  %9550 = vmatprep.subr.mxu0 0.0
  %9551 = vmatpush1.msra.mxu0 0.0
  %9552 = vmatprep.subr.mxu0 0.0
  %9553 = vmatpush1.msra.mxu0 0.0
  %9554 = vmatprep.subr.mxu0 0.0
  %9555 = vmatpush1.msra.mxu0 0.0
  %9556 = vmatprep.subr.mxu0 0.0
  %9557 = vmatpush1.msra.mxu0 0.0
  %9558 = vmatprep.subr.mxu0 0.0
  %9559 = vmatpush1.msra.mxu0 0.0
  %9560 = vmatprep.subr.mxu0 0.0
  %9561 = vmatpush1.msra.mxu0 0.0
  %9562 = vmatprep.subr.mxu0 0.0
  %9563 = vmatpush1.msra.mxu0 0.0
  %9564 = vmatprep.subr.mxu0 0.0
  %9565 = vmatpush1.msra.mxu0 0.0
  %9566 = vmatprep.subr.mxu0 0.0
  %9567 = vmatpush1.msra.mxu0 0.0
  %9568 = vmatprep.subr.mxu0 0.0
  %9569 = vmatpush1.msra.mxu0 0.0
  %9570 = vmatprep.subr.mxu0 0.0
  %9571 = vmatpush1.msra.mxu0 0.0
  %9572 = vmatprep.subr.mxu0 0.0
  %9573 = vmatpush1.msra.mxu0 0.0
  %9574 = vmatprep.subr.mxu0 0.0
  %9575 = vmatpush1.msra.mxu0 0.0
  %9576 = vmatprep.subr.mxu0 0.0
  %9577 = vmatpush1.msra.mxu0 0.0
  %9578 = vmatprep.subr.mxu0 0.0
  %9579 = vmatpush1.msra.mxu0 0.0
  %9580 = vmatprep.subr.mxu0 0.0
  %9581 = vmatpush1.msra.mxu0 0.0
  %9582 = vmatprep.subr.mxu0 0.0
  %9583 = vmatpush1.msra.mxu0 0.0
  %9584 = vmatprep.subr.mxu0 0.0
  %9585 = vmatpush1.msra.mxu0 0.0
  %9586 = vmatprep.subr.mxu0 0.0
  %9587 = vmatpush1.msra.mxu0 0.0
  %9588 = vmatprep.subr.mxu0 0.0
  %9589 = vmatpush1.msra.mxu0 0.0
  %9590 = vmatprep.subr.mxu0 0.0
  %9591 = vmatpush1.msra.mxu0 0.0
  %9592 = vmatprep.subr.mxu0 0.0
  %9593 = vmatpush1.msra.mxu0 0.0
  %9594 = vmatprep.mubr.f32.mxu0 0.0
  %9595 = vmatmul.mubr.f32.gmra.mrb[0].mxu0 %v8985
  %v9596 = vpop.f32.mrb[0].mxu0
  %v9597 = vadd.f32 %v9372, %v9596
  %v9598 = vpop.f32.mrb[0].mxu0
  %9599 = vmatprep.mubr.f32.mxu0 0.0
  %9600 = vmatmul.mubr.f32.gmra.mrb[0].mxu0 %v8988
  %v9601 = vpop.f32.mrb[0].mxu0
  %v9602 = vadd.f32 %v9377, %v9601
  %v9603 = vpop.f32.mrb[0].mxu0
  %9604 = vmatprep.mubr.f32.mxu0 0.0
  %9605 = vmatmul.mubr.f32.gmra.mrb[0].mxu0 %v8991
  %v9606 = vpop.f32.mrb[0].mxu0
  %v9607 = vadd.f32 %v9382, %v9606
  %v9608 = vpop.f32.mrb[0].mxu0
  %9609 = vmatprep.mubr.f32.mxu0 0.0
  %9610 = vmatmul.mubr.f32.gmra.mrb[0].mxu0 %v8994
  %v9611 = vpop.f32.mrb[0].mxu0
  %v9612 = vadd.f32 %v9387, %v9611
  %v9613 = vpop.f32.mrb[0].mxu0
  %9614 = vmatprep.mubr.f32.mxu0 0.0
  %9615 = vmatmul.mubr.f32.gmra.mrb[0].mxu0 %v8997
  %v9616 = vpop.f32.mrb[0].mxu0
  %v9617 = vadd.f32 %v9392, %v9616
  %v9618 = vpop.f32.mrb[0].mxu0
  %9619 = vmatprep.mubr.f32.mxu0 0.0
  %9620 = vmatmul.mubr.f32.gmra.mrb[0].mxu0 %v9000
  %v9621 = vpop.f32.mrb[0].mxu0
  %v9622 = vadd.f32 %v9397, %v9621
  %v9623 = vpop.f32.mrb[0].mxu0
  %9624 = vmatprep.mubr.f32.mxu0 0.0
  %9625 = vmatmul.mubr.f32.gmra.mrb[0].mxu0 %v9003
  %v9626 = vpop.f32.mrb[0].mxu0
  %v9627 = vadd.f32 %v9402, %v9626
  %v9628 = vpop.f32.mrb[0].mxu0
  %9629 = vmatprep.mubr.f32.mxu0 0.0
  %9630 = vmatmul.mubr.f32.gmra.mrb[0].mxu0 %v9006
  %v9631 = vpop.f32.mrb[0].mxu0
  %v9632 = vadd.f32 %v9407, %v9631
  %v9633 = vpop.f32.mrb[0].mxu0
  %9634 = vmatprep.mubr.f32.mxu0 0.0
  %9635 = vmatmul.mubr.f32.gmra.mrb[0].mxu0 %v9009
  %v9636 = vpop.f32.mrb[0].mxu0
  %v9637 = vadd.f32 %v9412, %v9636
  %v9638 = vpop.f32.mrb[0].mxu0
  %9639 = vmatprep.mubr.f32.mxu0 0.0
  %9640 = vmatmul.mubr.f32.gmra.mrb[0].mxu0 %v9012
  %v9641 = vpop.f32.mrb[0].mxu0
  %v9642 = vadd.f32 %v9417, %v9641
  %v9643 = vpop.f32.mrb[0].mxu0
  %9644 = vmatprep.mubr.f32.mxu0 0.0
  %9645 = vmatmul.mubr.f32.gmra.mrb[0].mxu0 %v9015
  %v9646 = vpop.f32.mrb[0].mxu0
  %v9647 = vadd.f32 %v9422, %v9646
  %v9648 = vpop.f32.mrb[0].mxu0
  %9649 = vmatprep.mubr.f32.mxu0 0.0
  %9650 = vmatmul.mubr.f32.gmra.mrb[0].mxu0 %v9018
  %v9651 = vpop.f32.mrb[0].mxu0
  %v9652 = vadd.f32 %v9427, %v9651
  %v9653 = vpop.f32.mrb[0].mxu0
  %9654 = vmatprep.mubr.f32.mxu0 0.0
  %9655 = vmatmul.mubr.f32.gmra.mrb[0].mxu0 %v9021
  %v9656 = vpop.f32.mrb[0].mxu0
  %v9657 = vadd.f32 %v9432, %v9656
  %v9658 = vpop.f32.mrb[0].mxu0
  %9659 = vmatprep.mubr.f32.mxu0 0.0
  %9660 = vmatmul.mubr.f32.gmra.mrb[0].mxu0 %v9024
  %v9661 = vpop.f32.mrb[0].mxu0
  %v9662 = vadd.f32 %v9437, %v9661
  %v9663 = vpop.f32.mrb[0].mxu0
  %9664 = vmatprep.mubr.f32.mxu0 0.0
  %9665 = vmatmul.mubr.f32.gmra.mrb[0].mxu0 %v9027
  %v9666 = vpop.f32.mrb[0].mxu0
  %v9667 = vadd.f32 %v9442, %v9666
  %v9668 = vpop.f32.mrb[0].mxu0
  %9669 = vmatprep.mubr.f32.mxu0 0.0
  %9670 = vmatmul.mubr.f32.gmra.mrb[0].mxu0 %v9030
  %v9671 = vpop.f32.mrb[0].mxu0
  %v9672 = vadd.f32 %v9447, %v9671
  %v9673 = vpop.f32.mrb[0].mxu0
  %9674 = vmatprep.mubr.f32.mxu0 0.0
  %9675 = vmatmul.mubr.f32.gmra.mrb[0].mxu0 %v9033
  %v9676 = vpop.f32.mrb[0].mxu0
  %v9677 = vadd.f32 %v9452, %v9676
  %v9678 = vpop.f32.mrb[0].mxu0
  %9679 = vmatprep.mubr.f32.mxu0 0.0
  %9680 = vmatmul.mubr.f32.gmra.mrb[0].mxu0 %v9036
  %v9681 = vpop.f32.mrb[0].mxu0
  %v9682 = vadd.f32 %v9457, %v9681
  %v9683 = vpop.f32.mrb[0].mxu0
  %9684 = vmatprep.mubr.f32.mxu0 0.0
  %9685 = vmatmul.mubr.f32.gmra.mrb[0].mxu0 %v9039
  %v9686 = vpop.f32.mrb[0].mxu0
  %v9687 = vadd.f32 %v9462, %v9686
  %v9688 = vpop.f32.mrb[0].mxu0
  %9689 = vmatprep.mubr.f32.mxu0 0.0
  %9690 = vmatmul.mubr.f32.gmra.mrb[0].mxu0 %v9042
  %v9691 = vpop.f32.mrb[0].mxu0
  %v9692 = vadd.f32 %v9467, %v9691
  %v9693 = vpop.f32.mrb[0].mxu0
  %9694 = vmatprep.mubr.f32.mxu0 0.0
  %9695 = vmatmul.mubr.f32.gmra.mrb[0].mxu0 %v9045
  %v9696 = vpop.f32.mrb[0].mxu0
  %v9697 = vadd.f32 %v9472, %v9696
  %v9698 = vpop.f32.mrb[0].mxu0
  %9699 = vmatprep.mubr.f32.mxu0 0.0
  %9700 = vmatmul.mubr.f32.gmra.mrb[0].mxu0 %v9048
  %v9701 = vpop.f32.mrb[0].mxu0
  %v9702 = vadd.f32 %v9477, %v9701
  %v9703 = vpop.f32.mrb[0].mxu0
  %9704 = vmatprep.mubr.f32.mxu0 0.0
  %9705 = vmatmul.mubr.f32.gmra.mrb[0].mxu0 %v9051
  %v9706 = vpop.f32.mrb[0].mxu0
  %v9707 = vadd.f32 %v9482, %v9706
  %v9708 = vpop.f32.mrb[0].mxu0
  %9709 = vmatprep.mubr.f32.mxu0 0.0
  %9710 = vmatmul.mubr.f32.gmra.mrb[0].mxu0 %v9054
  %v9711 = vpop.f32.mrb[0].mxu0
  %v9712 = vadd.f32 %v9487, %v9711
  %v9713 = vpop.f32.mrb[0].mxu0
  %9714 = vmatprep.mubr.f32.mxu0 0.0
  %9715 = vmatmul.mubr.f32.gmra.mrb[0].mxu0 %v9057
  %v9716 = vpop.f32.mrb[0].mxu0
  %v9717 = vadd.f32 %v9492, %v9716
  %v9718 = vpop.f32.mrb[0].mxu0
  %9719 = vmatprep.mubr.f32.mxu0 0.0
  %9720 = vmatmul.mubr.f32.gmra.mrb[0].mxu0 %v9060
  %v9721 = vpop.f32.mrb[0].mxu0
  %v9722 = vadd.f32 %v9497, %v9721
  %v9723 = vpop.f32.mrb[0].mxu0
  %9724 = vmatprep.mubr.f32.mxu0 0.0
  %9725 = vmatmul.mubr.f32.gmra.mrb[0].mxu0 %v9063
  %v9726 = vpop.f32.mrb[0].mxu0
  %v9727 = vadd.f32 %v9502, %v9726
  %v9728 = vpop.f32.mrb[0].mxu0
  %9729 = vmatprep.mubr.f32.mxu0 0.0
  %9730 = vmatmul.mubr.f32.gmra.mrb[0].mxu0 %v9066
  %v9731 = vpop.f32.mrb[0].mxu0
  %v9732 = vadd.f32 %v9507, %v9731
  %v9733 = vpop.f32.mrb[0].mxu0
  %9734 = vmatprep.mubr.f32.mxu0 0.0
  %9735 = vmatmul.mubr.f32.gmra.mrb[0].mxu0 %v9069
  %v9736 = vpop.f32.mrb[0].mxu0
  %v9737 = vadd.f32 %v9512, %v9736
  %v9738 = vpop.f32.mrb[0].mxu0
  %9739 = vmatprep.mubr.f32.mxu0 0.0
  %9740 = vmatmul.mubr.f32.gmra.mrb[0].mxu0 %v9072
  %v9741 = vpop.f32.mrb[0].mxu0
  %v9742 = vadd.f32 %v9517, %v9741
  %v9743 = vpop.f32.mrb[0].mxu0
  %9744 = vmatprep.mubr.f32.mxu0 0.0
  %9745 = vmatmul.mubr.f32.gmra.mrb[0].mxu0 %v9075
  %v9746 = vpop.f32.mrb[0].mxu0
  %v9747 = vadd.f32 %v9522, %v9746
  %v9748 = vpop.f32.mrb[0].mxu0
  %9749 = vmatprep.mubr.f32.mxu0 0.0
  %9750 = vmatmul.mubr.f32.gmra.mrb[0].mxu0 %v9078
  %v9751 = vpop.f32.mrb[0].mxu0
  %v9752 = vadd.f32 %v9527, %v9751
  %v9753 = vpop.f32.mrb[0].mxu0
  %9754 = vdwg.mxu0
  %v9755 = vsel %vm26, %v9597, 0.0
  %v9756 = vsel %vm26, %v9602, 0.0
  %v9757 = vadd.f32 %v9755, %v9756
  %v9758 = vsel %vm26, %v9607, 0.0
  %v9759 = vadd.f32 %v9757, %v9758
  %v9760 = vsel %vm26, %v9612, 0.0
  %v9761 = vadd.f32 %v9759, %v9760
  %v9762 = vsel %vm26, %v9617, 0.0
  %v9763 = vadd.f32 %v9761, %v9762
  %v9764 = vsel %vm26, %v9622, 0.0
  %v9765 = vadd.f32 %v9763, %v9764
  %v9766 = vsel %vm26, %v9627, 0.0
  %v9767 = vadd.f32 %v9765, %v9766
  %v9768 = vsel %vm26, %v9632, 0.0
  %v9769 = vadd.f32 %v9767, %v9768
  %v9770 = vsel %vm26, %v9637, 0.0
  %v9771 = vadd.f32 %v9769, %v9770
  %v9772 = vsel %vm26, %v9642, 0.0
  %v9773 = vadd.f32 %v9771, %v9772
  %v9774 = vsel %vm26, %v9647, 0.0
  %v9775 = vadd.f32 %v9773, %v9774
  %v9776 = vsel %vm26, %v9652, 0.0
  %v9777 = vadd.f32 %v9775, %v9776
  %v9778 = vsel %vm26, %v9657, 0.0
  %v9779 = vadd.f32 %v9777, %v9778
  %v9780 = vsel %vm26, %v9662, 0.0
  %v9781 = vadd.f32 %v9779, %v9780
  %v9782 = vsel %vm26, %v9667, 0.0
  %v9783 = vadd.f32 %v9781, %v9782
  %v9784 = vsel %vm26, %v9672, 0.0
  %v9785 = vadd.f32 %v9783, %v9784
  %v9786 = vsel %vm26, %v9677, 0.0
  %v9787 = vadd.f32 %v9785, %v9786
  %v9788 = vsel %vm26, %v9682, 0.0
  %v9789 = vadd.f32 %v9787, %v9788
  %v9790 = vsel %vm26, %v9687, 0.0
  %v9791 = vadd.f32 %v9789, %v9790
  %v9792 = vsel %vm26, %v9692, 0.0
  %v9793 = vadd.f32 %v9791, %v9792
  %v9794 = vsel %vm26, %v9697, 0.0
  %v9795 = vadd.f32 %v9793, %v9794
  %v9796 = vsel %vm26, %v9702, 0.0
  %v9797 = vadd.f32 %v9795, %v9796
  %v9798 = vsel %vm26, %v9707, 0.0
  %v9799 = vadd.f32 %v9797, %v9798
  %v9800 = vsel %vm26, %v9712, 0.0
  %v9801 = vadd.f32 %v9799, %v9800
  %v9802 = vsel %vm26, %v9717, 0.0
  %v9803 = vadd.f32 %v9801, %v9802
  %v9804 = vsel %vm26, %v9722, 0.0
  %v9805 = vadd.f32 %v9803, %v9804
  %v9806 = vsel %vm26, %v9727, 0.0
  %v9807 = vadd.f32 %v9805, %v9806
  %v9808 = vsel %vm26, %v9732, 0.0
  %v9809 = vadd.f32 %v9807, %v9808
  %v9810 = vsel %vm26, %v9737, 0.0
  %v9811 = vadd.f32 %v9809, %v9810
  %v9812 = vsel %vm26, %v9742, 0.0
  %v9813 = vadd.f32 %v9811, %v9812
  %v9814 = vsel %vm26, %v9747, 0.0
  %v9815 = vadd.f32 %v9813, %v9814
  %v9816 = vsel %vm26, %v9752, 0.0
  %v9817 = vadd.f32 %v9815, %v9816
  %v9818 = vrot.slane %v9817, 4
  %v9819 = vadd.f32 %v9817, %v9818
  %v9820 = vrot.slane %v9819, 2
  %v9821 = vadd.f32 %v9819, %v9820
  %v9822 = vrot.slane %v9821, 1
  %v9823 = vadd.f32 %v9821, %v9822
  %v9824 = vmul.f32 %v9597, %v9597
  %v9825 = vmul.f32 %v9602, %v9602
  %v9826 = vmul.f32 %v9607, %v9607
  %v9827 = vmul.f32 %v9612, %v9612
  %v9828 = vmul.f32 %v9617, %v9617
  %v9829 = vmul.f32 %v9622, %v9622
  %v9830 = vmul.f32 %v9627, %v9627
  %v9831 = vmul.f32 %v9632, %v9632
  %v9832 = vmul.f32 %v9637, %v9637
  %v9833 = vmul.f32 %v9642, %v9642
  %v9834 = vmul.f32 %v9647, %v9647
  %v9835 = vmul.f32 %v9652, %v9652
  %v9836 = vmul.f32 %v9657, %v9657
  %v9837 = vmul.f32 %v9662, %v9662
  %v9838 = vmul.f32 %v9667, %v9667
  %v9839 = vmul.f32 %v9672, %v9672
  %v9840 = vmul.f32 %v9677, %v9677
  %v9841 = vmul.f32 %v9682, %v9682
  %v9842 = vmul.f32 %v9687, %v9687
  %v9843 = vmul.f32 %v9692, %v9692
  %v9844 = vmul.f32 %v9697, %v9697
  %v9845 = vmul.f32 %v9702, %v9702
  %v9846 = vmul.f32 %v9707, %v9707
  %v9847 = vmul.f32 %v9712, %v9712
  %v9848 = vmul.f32 %v9717, %v9717
  %v9849 = vmul.f32 %v9722, %v9722
  %v9850 = vmul.f32 %v9727, %v9727
  %v9851 = vmul.f32 %v9732, %v9732
  %v9852 = vmul.f32 %v9737, %v9737
  %v9853 = vmul.f32 %v9742, %v9742
  %v9854 = vmul.f32 %v9747, %v9747
  %v9855 = vmul.f32 %v9752, %v9752
  %v9856 = vsel %vm26, %v9824, 0.0
  %v9857 = vsel %vm26, %v9825, 0.0
  %v9858 = vadd.f32 %v9856, %v9857
  %v9859 = vsel %vm26, %v9826, 0.0
  %v9860 = vadd.f32 %v9858, %v9859
  %v9861 = vsel %vm26, %v9827, 0.0
  %v9862 = vadd.f32 %v9860, %v9861
  %v9863 = vsel %vm26, %v9828, 0.0
  %v9864 = vadd.f32 %v9862, %v9863
  %v9865 = vsel %vm26, %v9829, 0.0
  %v9866 = vadd.f32 %v9864, %v9865
  %v9867 = vsel %vm26, %v9830, 0.0
  %v9868 = vadd.f32 %v9866, %v9867
  %v9869 = vsel %vm26, %v9831, 0.0
  %v9870 = vadd.f32 %v9868, %v9869
  %v9871 = vsel %vm26, %v9832, 0.0
  %v9872 = vadd.f32 %v9870, %v9871
  %v9873 = vsel %vm26, %v9833, 0.0
  %v9874 = vadd.f32 %v9872, %v9873
  %v9875 = vsel %vm26, %v9834, 0.0
  %v9876 = vadd.f32 %v9874, %v9875
  %v9877 = vsel %vm26, %v9835, 0.0
  %v9878 = vadd.f32 %v9876, %v9877
  %v9879 = vsel %vm26, %v9836, 0.0
  %v9880 = vadd.f32 %v9878, %v9879
  %v9881 = vsel %vm26, %v9837, 0.0
  %v9882 = vadd.f32 %v9880, %v9881
  %v9883 = vsel %vm26, %v9838, 0.0
  %v9884 = vadd.f32 %v9882, %v9883
  %v9885 = vsel %vm26, %v9839, 0.0
  %v9886 = vadd.f32 %v9884, %v9885
  %v9887 = vsel %vm26, %v9840, 0.0
  %v9888 = vadd.f32 %v9886, %v9887
  %v9889 = vsel %vm26, %v9841, 0.0
  %v9890 = vadd.f32 %v9888, %v9889
  %v9891 = vsel %vm26, %v9842, 0.0
  %v9892 = vadd.f32 %v9890, %v9891
  %v9893 = vsel %vm26, %v9843, 0.0
  %v9894 = vadd.f32 %v9892, %v9893
  %v9895 = vsel %vm26, %v9844, 0.0
  %v9896 = vadd.f32 %v9894, %v9895
  %v9897 = vsel %vm26, %v9845, 0.0
  %v9898 = vadd.f32 %v9896, %v9897
  %v9899 = vsel %vm26, %v9846, 0.0
  %v9900 = vadd.f32 %v9898, %v9899
  %v9901 = vsel %vm26, %v9847, 0.0
  %v9902 = vadd.f32 %v9900, %v9901
  %v9903 = vsel %vm26, %v9848, 0.0
  %v9904 = vadd.f32 %v9902, %v9903
  %v9905 = vsel %vm26, %v9849, 0.0
  %v9906 = vadd.f32 %v9904, %v9905
  %v9907 = vsel %vm26, %v9850, 0.0
  %v9908 = vadd.f32 %v9906, %v9907
  %v9909 = vsel %vm26, %v9851, 0.0
  %v9910 = vadd.f32 %v9908, %v9909
  %v9911 = vsel %vm26, %v9852, 0.0
  %v9912 = vadd.f32 %v9910, %v9911
  %v9913 = vsel %vm26, %v9853, 0.0
  %v9914 = vadd.f32 %v9912, %v9913
  %v9915 = vsel %vm26, %v9854, 0.0
  %v9916 = vadd.f32 %v9914, %v9915
  %v9917 = vsel %vm26, %v9855, 0.0
  %v9918 = vadd.f32 %v9916, %v9917
  %v9919 = vrot.slane %v9918, 4
  %v9920 = vadd.f32 %v9918, %v9919
  %v9921 = vrot.slane %v9920, 2
  %v9922 = vadd.f32 %v9920, %v9921
  %v9923 = vrot.slane %v9922, 1
  %v9924 = vadd.f32 %v9922, %v9923
  %v9925 = vmul.f32 %v9823, 0.00390625
  %v9926 = vmul.f32 %v9924, 0.00390625
  %v9927 = vmul.f32 %v9925, %v9925
  %v9928 = vsub.f32 %v9926, %v9927
  %v9929 = vadd.f32 %v9928, 1e-05
  %v9930 = vrsqrt.pop %v9929
  %v9931 = vmul.f32 %v115, %v9930
  %v9932 = vmul.f32 %v9925, %v9931
  %v9934 = vrot.slane %v9932, 4
  %v9936 = vsub.f32 %v115, %v9934
  %v9937 = vlaneseq
  %v9938 = vshrl.u32 %v9937, 7
  %v9939 = vsub.s32 3, %v9938
  %v9940 = vrot.slane %v9931, %v9939
  %v9941 = vmul.f32 %v9597, %v9940
  %v9942 = vmul.f32 %v9602, %v9940
  %v9943 = vmul.f32 %v9607, %v9940
  %v9944 = vmul.f32 %v9612, %v9940
  %v9945 = vmul.f32 %v9617, %v9940
  %v9946 = vmul.f32 %v9622, %v9940
  %v9947 = vmul.f32 %v9627, %v9940
  %v9948 = vmul.f32 %v9632, %v9940
  %v9949 = vmul.f32 %v9637, %v9940
  %v9950 = vmul.f32 %v9642, %v9940
  %v9951 = vmul.f32 %v9647, %v9940
  %v9952 = vmul.f32 %v9652, %v9940
  %v9953 = vmul.f32 %v9657, %v9940
  %v9954 = vmul.f32 %v9662, %v9940
  %v9955 = vmul.f32 %v9667, %v9940
  %v9956 = vmul.f32 %v9672, %v9940
  %v9957 = vmul.f32 %v9677, %v9940
  %v9958 = vmul.f32 %v9682, %v9940
  %v9959 = vmul.f32 %v9687, %v9940
  %v9960 = vmul.f32 %v9692, %v9940
  %v9961 = vmul.f32 %v9697, %v9940
  %v9962 = vmul.f32 %v9702, %v9940
  %v9963 = vmul.f32 %v9707, %v9940
  %v9964 = vmul.f32 %v9712, %v9940
  %v9965 = vmul.f32 %v9717, %v9940
  %v9966 = vmul.f32 %v9722, %v9940
  %v9967 = vmul.f32 %v9727, %v9940
  %v9968 = vmul.f32 %v9732, %v9940
  %v9969 = vmul.f32 %v9737, %v9940
  %v9970 = vmul.f32 %v9742, %v9940
  %v9971 = vmul.f32 %v9747, %v9940
  %v9972 = vmul.f32 %v9752, %v9940
  %v9973 = vlaneseq
  %v9974 = vshrl.u32 %v9973, 7
  %v9975 = vsub.s32 7, %v9974
  %v9976 = vrot.slane %v9936, %v9975
  %v9977 = vadd.f32 %v9941, %v9976
  %v9978 = vadd.f32 %v9942, %v9976
  %v9979 = vadd.f32 %v9943, %v9976
  %v9980 = vadd.f32 %v9944, %v9976
  %v9981 = vadd.f32 %v9945, %v9976
  %v9982 = vadd.f32 %v9946, %v9976
  %v9983 = vadd.f32 %v9947, %v9976
  %v9984 = vadd.f32 %v9948, %v9976
  %v9985 = vadd.f32 %v9949, %v9976
  %v9986 = vadd.f32 %v9950, %v9976
  %v9987 = vadd.f32 %v9951, %v9976
  %v9988 = vadd.f32 %v9952, %v9976
  %v9989 = vadd.f32 %v9953, %v9976
  %v9990 = vadd.f32 %v9954, %v9976
  %v9991 = vadd.f32 %v9955, %v9976
  %v9992 = vadd.f32 %v9956, %v9976
  %v9993 = vadd.f32 %v9957, %v9976
  %v9994 = vadd.f32 %v9958, %v9976
  %v9995 = vadd.f32 %v9959, %v9976
  %v9996 = vadd.f32 %v9960, %v9976
  %v9997 = vadd.f32 %v9961, %v9976
  %v9998 = vadd.f32 %v9962, %v9976
  %v9999 = vadd.f32 %v9963, %v9976
  %v10000 = vadd.f32 %v9964, %v9976
  %v10001 = vadd.f32 %v9965, %v9976
  %v10002 = vadd.f32 %v9966, %v9976
  %v10003 = vadd.f32 %v9967, %v9976
  %v10004 = vadd.f32 %v9968, %v9976
  %v10005 = vadd.f32 %v9969, %v9976
  %v10006 = vadd.f32 %v9970, %v9976
  %v10007 = vadd.f32 %v9971, %v9976
  %v10008 = vadd.f32 %v9972, %v9976
  %v10009 = vmax.f32 %v9977, 0.0
  %v10010 = vmax.f32 %v9978, 0.0
  %v10011 = vmax.f32 %v9979, 0.0
  %v10012 = vmax.f32 %v9980, 0.0
  %v10013 = vmax.f32 %v9981, 0.0
  %v10014 = vmax.f32 %v9982, 0.0
  %v10015 = vmax.f32 %v9983, 0.0
  %v10016 = vmax.f32 %v9984, 0.0
  %v10017 = vmax.f32 %v9985, 0.0
  %v10018 = vmax.f32 %v9986, 0.0
  %v10019 = vmax.f32 %v9987, 0.0
  %v10020 = vmax.f32 %v9988, 0.0
  %v10021 = vmax.f32 %v9989, 0.0
  %v10022 = vmax.f32 %v9990, 0.0
  %v10023 = vmax.f32 %v9991, 0.0
  %v10024 = vmax.f32 %v9992, 0.0
  %v10025 = vmax.f32 %v9993, 0.0
  %v10026 = vmax.f32 %v9994, 0.0
  %v10027 = vmax.f32 %v9995, 0.0
  %v10028 = vmax.f32 %v9996, 0.0
  %v10029 = vmax.f32 %v9997, 0.0
  %v10030 = vmax.f32 %v9998, 0.0
  %v10031 = vmax.f32 %v9999, 0.0
  %v10032 = vmax.f32 %v10000, 0.0
  %v10033 = vmax.f32 %v10001, 0.0
  %v10034 = vmax.f32 %v10002, 0.0
  %v10035 = vmax.f32 %v10003, 0.0
  %v10036 = vmax.f32 %v10004, 0.0
  %v10037 = vmax.f32 %v10005, 0.0
  %v10038 = vmax.f32 %v10006, 0.0
  %v10039 = vmax.f32 %v10007, 0.0
  %v10040 = vmax.f32 %v10008, 0.0
  %10041 = vst.msk [vmem:[%s148 + $0x1] sm:$0xff] %vm26, %v10009
  %10042 = vst.msk [vmem:[%s148 + $0x9] sm:$0xff] %vm26, %v10010
  %10043 = vst.msk [vmem:[%s148 + $0x19] sm:$0xff] %vm26, %v10011
  %10044 = vst.msk [vmem:[%s148 + $0x21] sm:$0xff] %vm26, %v10012
  %10045 = vst.msk [vmem:[%s148 + $0x31] sm:$0xff] %vm26, %v10013
  %10046 = vst.msk [vmem:[%s148 + $0x39] sm:$0xff] %vm26, %v10014
  %10047 = vst.msk [vmem:[%s148 + $0x49] sm:$0xff] %vm26, %v10015
  %10048 = vst.msk [vmem:[%s148 + $0x51] sm:$0xff] %vm26, %v10016
  %10049 = vst.msk [vmem:[%s148 + $0x61] sm:$0xff] %vm26, %v10017
  %10050 = vst.msk [vmem:[%s148 + $0x69] sm:$0xff] %vm26, %v10018
  %10051 = vst.msk [vmem:[%s148 + $0x79] sm:$0xff] %vm26, %v10019
  %10052 = vst.msk [vmem:[%s148 + $0x81] sm:$0xff] %vm26, %v10020
  %10053 = vst.msk [vmem:[%s148 + $0x91] sm:$0xff] %vm26, %v10021
  %10054 = vst.msk [vmem:[%s148 + $0x99] sm:$0xff] %vm26, %v10022
  %10055 = vst.msk [vmem:[%s148 + $0xa9] sm:$0xff] %vm26, %v10023
  %10056 = vst.msk [vmem:[%s148 + $0xb1] sm:$0xff] %vm26, %v10024
  %10057 = vst.msk [vmem:[%s148 + $0xc1] sm:$0xff] %vm26, %v10025
  %10058 = vst.msk [vmem:[%s148 + $0xc9] sm:$0xff] %vm26, %v10026
  %10059 = vst.msk [vmem:[%s148 + $0xd9] sm:$0xff] %vm26, %v10027
  %10060 = vst.msk [vmem:[%s148 + $0xe1] sm:$0xff] %vm26, %v10028
  %10061 = vst.msk [vmem:[%s148 + $0xf1] sm:$0xff] %vm26, %v10029
  %10062 = vst.msk [vmem:[%s148 + $0xf9] sm:$0xff] %vm26, %v10030
  %10063 = vst.msk [vmem:[%s148 + $0x109] sm:$0xff] %vm26, %v10031
  %10064 = vst.msk [vmem:[%s148 + $0x111] sm:$0xff] %vm26, %v10032
  %10065 = vst.msk [vmem:[%s148 + $0x121] sm:$0xff] %vm26, %v10033
  %10066 = vst.msk [vmem:[%s148 + $0x129] sm:$0xff] %vm26, %v10034
  %10067 = vst.msk [vmem:[%s148 + $0x139] sm:$0xff] %vm26, %v10035
  %10068 = vst.msk [vmem:[%s148 + $0x141] sm:$0xff] %vm26, %v10036
  %10069 = vst.msk [vmem:[%s148 + $0x151] sm:$0xff] %vm26, %v10037
  %10070 = vst.msk [vmem:[%s148 + $0x159] sm:$0xff] %vm26, %v10038
  %10071 = vst.msk [vmem:[%s148 + $0x169] sm:$0xff] %vm26, %v10039
  %10072 = vst.msk [vmem:[%s148 + $0x171] sm:$0xff] %vm26, %v10040
  %v10073 = vld [vmem:[%s5] sm:$0xff]
  %v10074 = vld [vmem:[%s5 + $0x8] sm:$0x1]
  %v10075 = vld [vmem:[#allocation2] sm:$0xff]
  %v10076 = vld [vmem:[#allocation2 + $0x8] sm:$0xff]
  %v10077 = vld [vmem:[#allocation2 + $0x18] sm:$0xff]
  %v10078 = vld [vmem:[#allocation2 + $0x20] sm:$0xff]
  %v10079 = vld [vmem:[#allocation2 + $0x30] sm:$0xff]
  %v10080 = vld [vmem:[#allocation2 + $0x38] sm:$0xff]
  %v10081 = vld [vmem:[#allocation2 + $0x48] sm:$0xff]
  %v10082 = vld [vmem:[#allocation2 + $0x50] sm:$0xff]
  %v10083 = vld [vmem:[#allocation2 + $0x60] sm:$0xff]
  %v10084 = vld [vmem:[#allocation2 + $0x68] sm:$0xff]
  %v10085 = vld [vmem:[#allocation2 + $0x78] sm:$0xff]
  %v10086 = vld [vmem:[#allocation2 + $0x80] sm:$0xff]
  %v10087 = vld [vmem:[#allocation2 + $0x90] sm:$0xff]
  %v10088 = vld [vmem:[#allocation2 + $0x98] sm:$0xff]
  %v10089 = vld [vmem:[#allocation2 + $0xa8] sm:$0xff]
  %v10090 = vld [vmem:[#allocation2 + $0xb0] sm:$0xff]
  %v10091 = vld [vmem:[#allocation2 + $0xc0] sm:$0xff]
  %v10092 = vld [vmem:[#allocation2 + $0xc8] sm:$0xff]
  %v10093 = vld [vmem:[#allocation2 + $0xd8] sm:$0xff]
  %v10094 = vld [vmem:[#allocation2 + $0xe0] sm:$0xff]
  %v10095 = vld [vmem:[#allocation2 + $0xf0] sm:$0xff]
  %v10096 = vld [vmem:[#allocation2 + $0xf8] sm:$0xff]
  %v10097 = vld [vmem:[#allocation2 + $0x108] sm:$0xff]
  %v10098 = vld [vmem:[#allocation2 + $0x110] sm:$0xff]
  %v10099 = vld [vmem:[#allocation2 + $0x120] sm:$0xff]
  %v10100 = vld [vmem:[#allocation2 + $0x128] sm:$0xff]
  %v10101 = vld [vmem:[#allocation2 + $0x138] sm:$0xff]
  %v10102 = vld [vmem:[#allocation2 + $0x140] sm:$0xff]
  %v10103 = vld [vmem:[#allocation2 + $0x150] sm:$0xff]
  %v10104 = vld [vmem:[#allocation2 + $0x158] sm:$0xff]
  %v10105 = vld [vmem:[#allocation2 + $0x168] sm:$0xff]
  %v10106 = vld [vmem:[#allocation2 + $0x170] sm:$0xff]
  %v10107 = vlaneseq
  %v10108 = vshrl.u32 %v10107, 7
  %v10109 = vsub.s32 0, %v10108
  %v10110 = vrot.slane %v10073, %v10109
  %v10111 = vmul.f32 %v10075, %v10110
  %v10112 = vmul.f32 %v10076, %v10110
  %v10113 = vmul.f32 %v10077, %v10110
  %v10114 = vmul.f32 %v10078, %v10110
  %v10115 = vmul.f32 %v10079, %v10110
  %v10116 = vmul.f32 %v10080, %v10110
  %v10117 = vmul.f32 %v10081, %v10110
  %v10118 = vmul.f32 %v10082, %v10110
  %v10119 = vmul.f32 %v10083, %v10110
  %v10120 = vmul.f32 %v10084, %v10110
  %v10121 = vmul.f32 %v10085, %v10110
  %v10122 = vmul.f32 %v10086, %v10110
  %v10123 = vmul.f32 %v10087, %v10110
  %v10124 = vmul.f32 %v10088, %v10110
  %v10125 = vmul.f32 %v10089, %v10110
  %v10126 = vmul.f32 %v10090, %v10110
  %v10127 = vmul.f32 %v10091, %v10110
  %v10128 = vmul.f32 %v10092, %v10110
  %v10129 = vmul.f32 %v10093, %v10110
  %v10130 = vmul.f32 %v10094, %v10110
  %v10131 = vmul.f32 %v10095, %v10110
  %v10132 = vmul.f32 %v10096, %v10110
  %v10133 = vmul.f32 %v10097, %v10110
  %v10134 = vmul.f32 %v10098, %v10110
  %v10135 = vmul.f32 %v10099, %v10110
  %v10136 = vmul.f32 %v10100, %v10110
  %v10137 = vmul.f32 %v10101, %v10110
  %v10138 = vmul.f32 %v10102, %v10110
  %v10139 = vmul.f32 %v10103, %v10110
  %v10140 = vmul.f32 %v10104, %v10110
  %v10141 = vmul.f32 %v10105, %v10110
  %v10142 = vmul.f32 %v10106, %v10110
  %v10143 = vadd.f32 %v10111, 0.0
  %v10144 = vadd.f32 %v10112, 0.0
  %v10145 = vadd.f32 %v10113, 0.0
  %v10146 = vadd.f32 %v10114, 0.0
  %v10147 = vadd.f32 %v10115, 0.0
  %v10148 = vadd.f32 %v10116, 0.0
  %v10149 = vadd.f32 %v10117, 0.0
  %v10150 = vadd.f32 %v10118, 0.0
  %v10151 = vadd.f32 %v10119, 0.0
  %v10152 = vadd.f32 %v10120, 0.0
  %v10153 = vadd.f32 %v10121, 0.0
  %v10154 = vadd.f32 %v10122, 0.0
  %v10155 = vadd.f32 %v10123, 0.0
  %v10156 = vadd.f32 %v10124, 0.0
  %v10157 = vadd.f32 %v10125, 0.0
  %v10158 = vadd.f32 %v10126, 0.0
  %v10159 = vadd.f32 %v10127, 0.0
  %v10160 = vadd.f32 %v10128, 0.0
  %v10161 = vadd.f32 %v10129, 0.0
  %v10162 = vadd.f32 %v10130, 0.0
  %v10163 = vadd.f32 %v10131, 0.0
  %v10164 = vadd.f32 %v10132, 0.0
  %v10165 = vadd.f32 %v10133, 0.0
  %v10166 = vadd.f32 %v10134, 0.0
  %v10167 = vadd.f32 %v10135, 0.0
  %v10168 = vadd.f32 %v10136, 0.0
  %v10169 = vadd.f32 %v10137, 0.0
  %v10170 = vadd.f32 %v10138, 0.0
  %v10171 = vadd.f32 %v10139, 0.0
  %v10172 = vadd.f32 %v10140, 0.0
  %v10173 = vadd.f32 %v10141, 0.0
  %v10174 = vadd.f32 %v10142, 0.0
  %v10175 = vld [vmem:[#allocation2 + $0x1] sm:$0xff]
  %v10176 = vld [vmem:[#allocation2 + $0x9] sm:$0xff]
  %v10177 = vld [vmem:[#allocation2 + $0x19] sm:$0xff]
  %v10178 = vld [vmem:[#allocation2 + $0x21] sm:$0xff]
  %v10179 = vld [vmem:[#allocation2 + $0x31] sm:$0xff]
  %v10180 = vld [vmem:[#allocation2 + $0x39] sm:$0xff]
  %v10181 = vld [vmem:[#allocation2 + $0x49] sm:$0xff]
  %v10182 = vld [vmem:[#allocation2 + $0x51] sm:$0xff]
  %v10183 = vld [vmem:[#allocation2 + $0x61] sm:$0xff]
  %v10184 = vld [vmem:[#allocation2 + $0x69] sm:$0xff]
  %v10185 = vld [vmem:[#allocation2 + $0x79] sm:$0xff]
  %v10186 = vld [vmem:[#allocation2 + $0x81] sm:$0xff]
  %v10187 = vld [vmem:[#allocation2 + $0x91] sm:$0xff]
  %v10188 = vld [vmem:[#allocation2 + $0x99] sm:$0xff]
  %v10189 = vld [vmem:[#allocation2 + $0xa9] sm:$0xff]
  %v10190 = vld [vmem:[#allocation2 + $0xb1] sm:$0xff]
  %v10191 = vld [vmem:[#allocation2 + $0xc1] sm:$0xff]
  %v10192 = vld [vmem:[#allocation2 + $0xc9] sm:$0xff]
  %v10193 = vld [vmem:[#allocation2 + $0xd9] sm:$0xff]
  %v10194 = vld [vmem:[#allocation2 + $0xe1] sm:$0xff]
  %v10195 = vld [vmem:[#allocation2 + $0xf1] sm:$0xff]
  %v10196 = vld [vmem:[#allocation2 + $0xf9] sm:$0xff]
  %v10197 = vld [vmem:[#allocation2 + $0x109] sm:$0xff]
  %v10198 = vld [vmem:[#allocation2 + $0x111] sm:$0xff]
  %v10199 = vld [vmem:[#allocation2 + $0x121] sm:$0xff]
  %v10200 = vld [vmem:[#allocation2 + $0x129] sm:$0xff]
  %v10201 = vld [vmem:[#allocation2 + $0x139] sm:$0xff]
  %v10202 = vld [vmem:[#allocation2 + $0x141] sm:$0xff]
  %v10203 = vld [vmem:[#allocation2 + $0x151] sm:$0xff]
  %v10204 = vld [vmem:[#allocation2 + $0x159] sm:$0xff]
  %v10205 = vld [vmem:[#allocation2 + $0x169] sm:$0xff]
  %v10206 = vld [vmem:[#allocation2 + $0x171] sm:$0xff]
  %v10207 = vlaneseq
  %v10208 = vshrl.u32 %v10207, 7
  %v10209 = vsub.s32 1, %v10208
  %v10210 = vrot.slane %v10073, %v10209
  %v10211 = vmul.f32 %v10175, %v10210
  %v10212 = vmul.f32 %v10176, %v10210
  %v10213 = vmul.f32 %v10177, %v10210
  %v10214 = vmul.f32 %v10178, %v10210
  %v10215 = vmul.f32 %v10179, %v10210
  %v10216 = vmul.f32 %v10180, %v10210
  %v10217 = vmul.f32 %v10181, %v10210
  %v10218 = vmul.f32 %v10182, %v10210
  %v10219 = vmul.f32 %v10183, %v10210
  %v10220 = vmul.f32 %v10184, %v10210
  %v10221 = vmul.f32 %v10185, %v10210
  %v10222 = vmul.f32 %v10186, %v10210
  %v10223 = vmul.f32 %v10187, %v10210
  %v10224 = vmul.f32 %v10188, %v10210
  %v10225 = vmul.f32 %v10189, %v10210
  %v10226 = vmul.f32 %v10190, %v10210
  %v10227 = vmul.f32 %v10191, %v10210
  %v10228 = vmul.f32 %v10192, %v10210
  %v10229 = vmul.f32 %v10193, %v10210
  %v10230 = vmul.f32 %v10194, %v10210
  %v10231 = vmul.f32 %v10195, %v10210
  %v10232 = vmul.f32 %v10196, %v10210
  %v10233 = vmul.f32 %v10197, %v10210
  %v10234 = vmul.f32 %v10198, %v10210
  %v10235 = vmul.f32 %v10199, %v10210
  %v10236 = vmul.f32 %v10200, %v10210
  %v10237 = vmul.f32 %v10201, %v10210
  %v10238 = vmul.f32 %v10202, %v10210
  %v10239 = vmul.f32 %v10203, %v10210
  %v10240 = vmul.f32 %v10204, %v10210
  %v10241 = vmul.f32 %v10205, %v10210
  %v10242 = vmul.f32 %v10206, %v10210
  %v10243 = vadd.f32 %v10143, %v10211
  %v10244 = vadd.f32 %v10144, %v10212
  %v10245 = vadd.f32 %v10145, %v10213
  %v10246 = vadd.f32 %v10146, %v10214
  %v10247 = vadd.f32 %v10147, %v10215
  %v10248 = vadd.f32 %v10148, %v10216
  %v10249 = vadd.f32 %v10149, %v10217
  %v10250 = vadd.f32 %v10150, %v10218
  %v10251 = vadd.f32 %v10151, %v10219
  %v10252 = vadd.f32 %v10152, %v10220
  %v10253 = vadd.f32 %v10153, %v10221
  %v10254 = vadd.f32 %v10154, %v10222
  %v10255 = vadd.f32 %v10155, %v10223
  %v10256 = vadd.f32 %v10156, %v10224
  %v10257 = vadd.f32 %v10157, %v10225
  %v10258 = vadd.f32 %v10158, %v10226
  %v10259 = vadd.f32 %v10159, %v10227
  %v10260 = vadd.f32 %v10160, %v10228
  %v10261 = vadd.f32 %v10161, %v10229
  %v10262 = vadd.f32 %v10162, %v10230
  %v10263 = vadd.f32 %v10163, %v10231
  %v10264 = vadd.f32 %v10164, %v10232
  %v10265 = vadd.f32 %v10165, %v10233
  %v10266 = vadd.f32 %v10166, %v10234
  %v10267 = vadd.f32 %v10167, %v10235
  %v10268 = vadd.f32 %v10168, %v10236
  %v10269 = vadd.f32 %v10169, %v10237
  %v10270 = vadd.f32 %v10170, %v10238
  %v10271 = vadd.f32 %v10171, %v10239
  %v10272 = vadd.f32 %v10172, %v10240
  %v10273 = vadd.f32 %v10173, %v10241
  %v10274 = vadd.f32 %v10174, %v10242
  %v10275 = vld [vmem:[#allocation2 + $0x2] sm:$0xff]
  %v10276 = vld [vmem:[#allocation2 + $0xa] sm:$0xff]
  %v10277 = vld [vmem:[#allocation2 + $0x1a] sm:$0xff]
  %v10278 = vld [vmem:[#allocation2 + $0x22] sm:$0xff]
  %v10279 = vld [vmem:[#allocation2 + $0x32] sm:$0xff]
  %v10280 = vld [vmem:[#allocation2 + $0x3a] sm:$0xff]
  %v10281 = vld [vmem:[#allocation2 + $0x4a] sm:$0xff]
  %v10282 = vld [vmem:[#allocation2 + $0x52] sm:$0xff]
  %v10283 = vld [vmem:[#allocation2 + $0x62] sm:$0xff]
  %v10284 = vld [vmem:[#allocation2 + $0x6a] sm:$0xff]
  %v10285 = vld [vmem:[#allocation2 + $0x7a] sm:$0xff]
  %v10286 = vld [vmem:[#allocation2 + $0x82] sm:$0xff]
  %v10287 = vld [vmem:[#allocation2 + $0x92] sm:$0xff]
  %v10288 = vld [vmem:[#allocation2 + $0x9a] sm:$0xff]
  %v10289 = vld [vmem:[#allocation2 + $0xaa] sm:$0xff]
  %v10290 = vld [vmem:[#allocation2 + $0xb2] sm:$0xff]
  %v10291 = vld [vmem:[#allocation2 + $0xc2] sm:$0xff]
  %v10292 = vld [vmem:[#allocation2 + $0xca] sm:$0xff]
  %v10293 = vld [vmem:[#allocation2 + $0xda] sm:$0xff]
  %v10294 = vld [vmem:[#allocation2 + $0xe2] sm:$0xff]
  %v10295 = vld [vmem:[#allocation2 + $0xf2] sm:$0xff]
  %v10296 = vld [vmem:[#allocation2 + $0xfa] sm:$0xff]
  %v10297 = vld [vmem:[#allocation2 + $0x10a] sm:$0xff]
  %v10298 = vld [vmem:[#allocation2 + $0x112] sm:$0xff]
  %v10299 = vld [vmem:[#allocation2 + $0x122] sm:$0xff]
  %v10300 = vld [vmem:[#allocation2 + $0x12a] sm:$0xff]
  %v10301 = vld [vmem:[#allocation2 + $0x13a] sm:$0xff]
  %v10302 = vld [vmem:[#allocation2 + $0x142] sm:$0xff]
  %v10303 = vld [vmem:[#allocation2 + $0x152] sm:$0xff]
  %v10304 = vld [vmem:[#allocation2 + $0x15a] sm:$0xff]
  %v10305 = vld [vmem:[#allocation2 + $0x16a] sm:$0xff]
  %v10306 = vld [vmem:[#allocation2 + $0x172] sm:$0xff]
  %v10307 = vlaneseq
  %v10308 = vshrl.u32 %v10307, 7
  %v10309 = vsub.s32 2, %v10308
  %v10310 = vrot.slane %v10073, %v10309
  %v10311 = vmul.f32 %v10275, %v10310
  %v10312 = vmul.f32 %v10276, %v10310
  %v10313 = vmul.f32 %v10277, %v10310
  %v10314 = vmul.f32 %v10278, %v10310
  %v10315 = vmul.f32 %v10279, %v10310
  %v10316 = vmul.f32 %v10280, %v10310
  %v10317 = vmul.f32 %v10281, %v10310
  %v10318 = vmul.f32 %v10282, %v10310
  %v10319 = vmul.f32 %v10283, %v10310
  %v10320 = vmul.f32 %v10284, %v10310
  %v10321 = vmul.f32 %v10285, %v10310
  %v10322 = vmul.f32 %v10286, %v10310
  %v10323 = vmul.f32 %v10287, %v10310
  %v10324 = vmul.f32 %v10288, %v10310
  %v10325 = vmul.f32 %v10289, %v10310
  %v10326 = vmul.f32 %v10290, %v10310
  %v10327 = vmul.f32 %v10291, %v10310
  %v10328 = vmul.f32 %v10292, %v10310
  %v10329 = vmul.f32 %v10293, %v10310
  %v10330 = vmul.f32 %v10294, %v10310
  %v10331 = vmul.f32 %v10295, %v10310
  %v10332 = vmul.f32 %v10296, %v10310
  %v10333 = vmul.f32 %v10297, %v10310
  %v10334 = vmul.f32 %v10298, %v10310
  %v10335 = vmul.f32 %v10299, %v10310
  %v10336 = vmul.f32 %v10300, %v10310
  %v10337 = vmul.f32 %v10301, %v10310
  %v10338 = vmul.f32 %v10302, %v10310
  %v10339 = vmul.f32 %v10303, %v10310
  %v10340 = vmul.f32 %v10304, %v10310
  %v10341 = vmul.f32 %v10305, %v10310
  %v10342 = vmul.f32 %v10306, %v10310
  %v10343 = vadd.f32 %v10243, %v10311
  %v10344 = vadd.f32 %v10244, %v10312
  %v10345 = vadd.f32 %v10245, %v10313
  %v10346 = vadd.f32 %v10246, %v10314
  %v10347 = vadd.f32 %v10247, %v10315
  %v10348 = vadd.f32 %v10248, %v10316
  %v10349 = vadd.f32 %v10249, %v10317
  %v10350 = vadd.f32 %v10250, %v10318
  %v10351 = vadd.f32 %v10251, %v10319
  %v10352 = vadd.f32 %v10252, %v10320
  %v10353 = vadd.f32 %v10253, %v10321
  %v10354 = vadd.f32 %v10254, %v10322
  %v10355 = vadd.f32 %v10255, %v10323
  %v10356 = vadd.f32 %v10256, %v10324
  %v10357 = vadd.f32 %v10257, %v10325
  %v10358 = vadd.f32 %v10258, %v10326
  %v10359 = vadd.f32 %v10259, %v10327
  %v10360 = vadd.f32 %v10260, %v10328
  %v10361 = vadd.f32 %v10261, %v10329
  %v10362 = vadd.f32 %v10262, %v10330
  %v10363 = vadd.f32 %v10263, %v10331
  %v10364 = vadd.f32 %v10264, %v10332
  %v10365 = vadd.f32 %v10265, %v10333
  %v10366 = vadd.f32 %v10266, %v10334
  %v10367 = vadd.f32 %v10267, %v10335
  %v10368 = vadd.f32 %v10268, %v10336
  %v10369 = vadd.f32 %v10269, %v10337
  %v10370 = vadd.f32 %v10270, %v10338
  %v10371 = vadd.f32 %v10271, %v10339
  %v10372 = vadd.f32 %v10272, %v10340
  %v10373 = vadd.f32 %v10273, %v10341
  %v10374 = vadd.f32 %v10274, %v10342
  %v10375 = vld [vmem:[%s148] sm:$0xff]
  %v10376 = vld [vmem:[%s148 + $0x8] sm:$0xff]
  %v10377 = vld [vmem:[%s148 + $0x18] sm:$0xff]
  %v10378 = vld [vmem:[%s148 + $0x20] sm:$0xff]
  %v10379 = vld [vmem:[%s148 + $0x30] sm:$0xff]
  %v10380 = vld [vmem:[%s148 + $0x38] sm:$0xff]
  %v10381 = vld [vmem:[%s148 + $0x48] sm:$0xff]
  %v10382 = vld [vmem:[%s148 + $0x50] sm:$0xff]
  %v10383 = vld [vmem:[%s148 + $0x60] sm:$0xff]
  %v10384 = vld [vmem:[%s148 + $0x68] sm:$0xff]
  %v10385 = vld [vmem:[%s148 + $0x78] sm:$0xff]
  %v10386 = vld [vmem:[%s148 + $0x80] sm:$0xff]
  %v10387 = vld [vmem:[%s148 + $0x90] sm:$0xff]
  %v10388 = vld [vmem:[%s148 + $0x98] sm:$0xff]
  %v10389 = vld [vmem:[%s148 + $0xa8] sm:$0xff]
  %v10390 = vld [vmem:[%s148 + $0xb0] sm:$0xff]
  %v10391 = vld [vmem:[%s148 + $0xc0] sm:$0xff]
  %v10392 = vld [vmem:[%s148 + $0xc8] sm:$0xff]
  %v10393 = vld [vmem:[%s148 + $0xd8] sm:$0xff]
  %v10394 = vld [vmem:[%s148 + $0xe0] sm:$0xff]
  %v10395 = vld [vmem:[%s148 + $0xf0] sm:$0xff]
  %v10396 = vld [vmem:[%s148 + $0xf8] sm:$0xff]
  %v10397 = vld [vmem:[%s148 + $0x108] sm:$0xff]
  %v10398 = vld [vmem:[%s148 + $0x110] sm:$0xff]
  %v10399 = vld [vmem:[%s148 + $0x120] sm:$0xff]
  %v10400 = vld [vmem:[%s148 + $0x128] sm:$0xff]
  %v10401 = vld [vmem:[%s148 + $0x138] sm:$0xff]
  %v10402 = vld [vmem:[%s148 + $0x140] sm:$0xff]
  %v10403 = vld [vmem:[%s148 + $0x150] sm:$0xff]
  %v10404 = vld [vmem:[%s148 + $0x158] sm:$0xff]
  %v10405 = vld [vmem:[%s148 + $0x168] sm:$0xff]
  %v10406 = vld [vmem:[%s148 + $0x170] sm:$0xff]
  %v10407 = vlaneseq
  %v10408 = vshrl.u32 %v10407, 7
  %v10409 = vsub.s32 3, %v10408
  %v10410 = vrot.slane %v10073, %v10409
  %v10411 = vmul.f32 %v10375, %v10410
  %v10412 = vmul.f32 %v10376, %v10410
  %v10413 = vmul.f32 %v10377, %v10410
  %v10414 = vmul.f32 %v10378, %v10410
  %v10415 = vmul.f32 %v10379, %v10410
  %v10416 = vmul.f32 %v10380, %v10410
  %v10417 = vmul.f32 %v10381, %v10410
  %v10418 = vmul.f32 %v10382, %v10410
  %v10419 = vmul.f32 %v10383, %v10410
  %v10420 = vmul.f32 %v10384, %v10410
  %v10421 = vmul.f32 %v10385, %v10410
  %v10422 = vmul.f32 %v10386, %v10410
  %v10423 = vmul.f32 %v10387, %v10410
  %v10424 = vmul.f32 %v10388, %v10410
  %v10425 = vmul.f32 %v10389, %v10410
  %v10426 = vmul.f32 %v10390, %v10410
  %v10427 = vmul.f32 %v10391, %v10410
  %v10428 = vmul.f32 %v10392, %v10410
  %v10429 = vmul.f32 %v10393, %v10410
  %v10430 = vmul.f32 %v10394, %v10410
  %v10431 = vmul.f32 %v10395, %v10410
  %v10432 = vmul.f32 %v10396, %v10410
  %v10433 = vmul.f32 %v10397, %v10410
  %v10434 = vmul.f32 %v10398, %v10410
  %v10435 = vmul.f32 %v10399, %v10410
  %v10436 = vmul.f32 %v10400, %v10410
  %v10437 = vmul.f32 %v10401, %v10410
  %v10438 = vmul.f32 %v10402, %v10410
  %v10439 = vmul.f32 %v10403, %v10410
  %v10440 = vmul.f32 %v10404, %v10410
  %v10441 = vmul.f32 %v10405, %v10410
  %v10442 = vmul.f32 %v10406, %v10410
  %v10443 = vadd.f32 %v10343, %v10411
  %v10444 = vadd.f32 %v10344, %v10412
  %v10445 = vadd.f32 %v10345, %v10413
  %v10446 = vadd.f32 %v10346, %v10414
  %v10447 = vadd.f32 %v10347, %v10415
  %v10448 = vadd.f32 %v10348, %v10416
  %v10449 = vadd.f32 %v10349, %v10417
  %v10450 = vadd.f32 %v10350, %v10418
  %v10451 = vadd.f32 %v10351, %v10419
  %v10452 = vadd.f32 %v10352, %v10420
  %v10453 = vadd.f32 %v10353, %v10421
  %v10454 = vadd.f32 %v10354, %v10422
  %v10455 = vadd.f32 %v10355, %v10423
  %v10456 = vadd.f32 %v10356, %v10424
  %v10457 = vadd.f32 %v10357, %v10425
  %v10458 = vadd.f32 %v10358, %v10426
  %v10459 = vadd.f32 %v10359, %v10427
  %v10460 = vadd.f32 %v10360, %v10428
  %v10461 = vadd.f32 %v10361, %v10429
  %v10462 = vadd.f32 %v10362, %v10430
  %v10463 = vadd.f32 %v10363, %v10431
  %v10464 = vadd.f32 %v10364, %v10432
  %v10465 = vadd.f32 %v10365, %v10433
  %v10466 = vadd.f32 %v10366, %v10434
  %v10467 = vadd.f32 %v10367, %v10435
  %v10468 = vadd.f32 %v10368, %v10436
  %v10469 = vadd.f32 %v10369, %v10437
  %v10470 = vadd.f32 %v10370, %v10438
  %v10471 = vadd.f32 %v10371, %v10439
  %v10472 = vadd.f32 %v10372, %v10440
  %v10473 = vadd.f32 %v10373, %v10441
  %v10474 = vadd.f32 %v10374, %v10442
  %v10475 = vld [vmem:[%s148 + $0x1] sm:$0xff]
  %v10476 = vld [vmem:[%s148 + $0x9] sm:$0xff]
  %v10477 = vld [vmem:[%s148 + $0x19] sm:$0xff]
  %v10478 = vld [vmem:[%s148 + $0x21] sm:$0xff]
  %v10479 = vld [vmem:[%s148 + $0x31] sm:$0xff]
  %v10480 = vld [vmem:[%s148 + $0x39] sm:$0xff]
  %v10481 = vld [vmem:[%s148 + $0x49] sm:$0xff]
  %v10482 = vld [vmem:[%s148 + $0x51] sm:$0xff]
  %v10483 = vld [vmem:[%s148 + $0x61] sm:$0xff]
  %v10484 = vld [vmem:[%s148 + $0x69] sm:$0xff]
  %v10485 = vld [vmem:[%s148 + $0x79] sm:$0xff]
  %v10486 = vld [vmem:[%s148 + $0x81] sm:$0xff]
  %v10487 = vld [vmem:[%s148 + $0x91] sm:$0xff]
  %v10488 = vld [vmem:[%s148 + $0x99] sm:$0xff]
  %v10489 = vld [vmem:[%s148 + $0xa9] sm:$0xff]
  %v10490 = vld [vmem:[%s148 + $0xb1] sm:$0xff]
  %v10491 = vld [vmem:[%s148 + $0xc1] sm:$0xff]
  %v10492 = vld [vmem:[%s148 + $0xc9] sm:$0xff]
  %v10493 = vld [vmem:[%s148 + $0xd9] sm:$0xff]
  %v10494 = vld [vmem:[%s148 + $0xe1] sm:$0xff]
  %v10495 = vld [vmem:[%s148 + $0xf1] sm:$0xff]
  %v10496 = vld [vmem:[%s148 + $0xf9] sm:$0xff]
  %v10497 = vld [vmem:[%s148 + $0x109] sm:$0xff]
  %v10498 = vld [vmem:[%s148 + $0x111] sm:$0xff]
  %v10499 = vld [vmem:[%s148 + $0x121] sm:$0xff]
  %v10500 = vld [vmem:[%s148 + $0x129] sm:$0xff]
  %v10501 = vld [vmem:[%s148 + $0x139] sm:$0xff]
  %v10502 = vld [vmem:[%s148 + $0x141] sm:$0xff]
  %v10503 = vld [vmem:[%s148 + $0x151] sm:$0xff]
  %v10504 = vld [vmem:[%s148 + $0x159] sm:$0xff]
  %v10505 = vld [vmem:[%s148 + $0x169] sm:$0xff]
  %v10506 = vld [vmem:[%s148 + $0x171] sm:$0xff]
  %v10507 = vlaneseq
  %v10508 = vshrl.u32 %v10507, 7
  %v10509 = vsub.s32 4, %v10508
  %v10510 = vrot.slane %v10073, %v10509
  %v10511 = vmul.f32 %v10475, %v10510
  %v10512 = vmul.f32 %v10476, %v10510
  %v10513 = vmul.f32 %v10477, %v10510
  %v10514 = vmul.f32 %v10478, %v10510
  %v10515 = vmul.f32 %v10479, %v10510
  %v10516 = vmul.f32 %v10480, %v10510
  %v10517 = vmul.f32 %v10481, %v10510
  %v10518 = vmul.f32 %v10482, %v10510
  %v10519 = vmul.f32 %v10483, %v10510
  %v10520 = vmul.f32 %v10484, %v10510
  %v10521 = vmul.f32 %v10485, %v10510
  %v10522 = vmul.f32 %v10486, %v10510
  %v10523 = vmul.f32 %v10487, %v10510
  %v10524 = vmul.f32 %v10488, %v10510
  %v10525 = vmul.f32 %v10489, %v10510
  %v10526 = vmul.f32 %v10490, %v10510
  %v10527 = vmul.f32 %v10491, %v10510
  %v10528 = vmul.f32 %v10492, %v10510
  %v10529 = vmul.f32 %v10493, %v10510
  %v10530 = vmul.f32 %v10494, %v10510
  %v10531 = vmul.f32 %v10495, %v10510
  %v10532 = vmul.f32 %v10496, %v10510
  %v10533 = vmul.f32 %v10497, %v10510
  %v10534 = vmul.f32 %v10498, %v10510
  %v10535 = vmul.f32 %v10499, %v10510
  %v10536 = vmul.f32 %v10500, %v10510
  %v10537 = vmul.f32 %v10501, %v10510
  %v10538 = vmul.f32 %v10502, %v10510
  %v10539 = vmul.f32 %v10503, %v10510
  %v10540 = vmul.f32 %v10504, %v10510
  %v10541 = vmul.f32 %v10505, %v10510
  %v10542 = vmul.f32 %v10506, %v10510
  %v10543 = vadd.f32 %v10443, %v10511
  %v10544 = vadd.f32 %v10444, %v10512
  %v10545 = vadd.f32 %v10445, %v10513
  %v10546 = vadd.f32 %v10446, %v10514
  %v10547 = vadd.f32 %v10447, %v10515
  %v10548 = vadd.f32 %v10448, %v10516
  %v10549 = vadd.f32 %v10449, %v10517
  %v10550 = vadd.f32 %v10450, %v10518
  %v10551 = vadd.f32 %v10451, %v10519
  %v10552 = vadd.f32 %v10452, %v10520
  %v10553 = vadd.f32 %v10453, %v10521
  %v10554 = vadd.f32 %v10454, %v10522
  %v10555 = vadd.f32 %v10455, %v10523
  %v10556 = vadd.f32 %v10456, %v10524
  %v10557 = vadd.f32 %v10457, %v10525
  %v10558 = vadd.f32 %v10458, %v10526
  %v10559 = vadd.f32 %v10459, %v10527
  %v10560 = vadd.f32 %v10460, %v10528
  %v10561 = vadd.f32 %v10461, %v10529
  %v10562 = vadd.f32 %v10462, %v10530
  %v10563 = vadd.f32 %v10463, %v10531
  %v10564 = vadd.f32 %v10464, %v10532
  %v10565 = vadd.f32 %v10465, %v10533
  %v10566 = vadd.f32 %v10466, %v10534
  %v10567 = vadd.f32 %v10467, %v10535
  %v10568 = vadd.f32 %v10468, %v10536
  %v10569 = vadd.f32 %v10469, %v10537
  %v10570 = vadd.f32 %v10470, %v10538
  %v10571 = vadd.f32 %v10471, %v10539
  %v10572 = vadd.f32 %v10472, %v10540
  %v10573 = vadd.f32 %v10473, %v10541
  %v10574 = vadd.f32 %v10474, %v10542
  %v10575 = vld [vmem:[%s148 + $0x2] sm:$0xff]
  %v10576 = vld [vmem:[%s148 + $0xa] sm:$0xff]
  %v10577 = vld [vmem:[%s148 + $0x1a] sm:$0xff]
  %v10578 = vld [vmem:[%s148 + $0x22] sm:$0xff]
  %v10579 = vld [vmem:[%s148 + $0x32] sm:$0xff]
  %v10580 = vld [vmem:[%s148 + $0x3a] sm:$0xff]
  %v10581 = vld [vmem:[%s148 + $0x4a] sm:$0xff]
  %v10582 = vld [vmem:[%s148 + $0x52] sm:$0xff]
  %v10583 = vld [vmem:[%s148 + $0x62] sm:$0xff]
  %v10584 = vld [vmem:[%s148 + $0x6a] sm:$0xff]
  %v10585 = vld [vmem:[%s148 + $0x7a] sm:$0xff]
  %v10586 = vld [vmem:[%s148 + $0x82] sm:$0xff]
  %v10587 = vld [vmem:[%s148 + $0x92] sm:$0xff]
  %v10588 = vld [vmem:[%s148 + $0x9a] sm:$0xff]
  %v10589 = vld [vmem:[%s148 + $0xaa] sm:$0xff]
  %v10590 = vld [vmem:[%s148 + $0xb2] sm:$0xff]
  %v10591 = vld [vmem:[%s148 + $0xc2] sm:$0xff]
  %v10592 = vld [vmem:[%s148 + $0xca] sm:$0xff]
  %v10593 = vld [vmem:[%s148 + $0xda] sm:$0xff]
  %v10594 = vld [vmem:[%s148 + $0xe2] sm:$0xff]
  %v10595 = vld [vmem:[%s148 + $0xf2] sm:$0xff]
  %v10596 = vld [vmem:[%s148 + $0xfa] sm:$0xff]
  %v10597 = vld [vmem:[%s148 + $0x10a] sm:$0xff]
  %v10598 = vld [vmem:[%s148 + $0x112] sm:$0xff]
  %v10599 = vld [vmem:[%s148 + $0x122] sm:$0xff]
  %v10600 = vld [vmem:[%s148 + $0x12a] sm:$0xff]
  %v10601 = vld [vmem:[%s148 + $0x13a] sm:$0xff]
  %v10602 = vld [vmem:[%s148 + $0x142] sm:$0xff]
  %v10603 = vld [vmem:[%s148 + $0x152] sm:$0xff]
  %v10604 = vld [vmem:[%s148 + $0x15a] sm:$0xff]
  %v10605 = vld [vmem:[%s148 + $0x16a] sm:$0xff]
  %v10606 = vld [vmem:[%s148 + $0x172] sm:$0xff]
  %v10607 = vlaneseq
  %v10608 = vshrl.u32 %v10607, 7
  %v10609 = vsub.s32 5, %v10608
  %v10610 = vrot.slane %v10073, %v10609
  %v10611 = vmul.f32 %v10575, %v10610
  %v10612 = vmul.f32 %v10576, %v10610
  %v10613 = vmul.f32 %v10577, %v10610
  %v10614 = vmul.f32 %v10578, %v10610
  %v10615 = vmul.f32 %v10579, %v10610
  %v10616 = vmul.f32 %v10580, %v10610
  %v10617 = vmul.f32 %v10581, %v10610
  %v10618 = vmul.f32 %v10582, %v10610
  %v10619 = vmul.f32 %v10583, %v10610
  %v10620 = vmul.f32 %v10584, %v10610
  %v10621 = vmul.f32 %v10585, %v10610
  %v10622 = vmul.f32 %v10586, %v10610
  %v10623 = vmul.f32 %v10587, %v10610
  %v10624 = vmul.f32 %v10588, %v10610
  %v10625 = vmul.f32 %v10589, %v10610
  %v10626 = vmul.f32 %v10590, %v10610
  %v10627 = vmul.f32 %v10591, %v10610
  %v10628 = vmul.f32 %v10592, %v10610
  %v10629 = vmul.f32 %v10593, %v10610
  %v10630 = vmul.f32 %v10594, %v10610
  %v10631 = vmul.f32 %v10595, %v10610
  %v10632 = vmul.f32 %v10596, %v10610
  %v10633 = vmul.f32 %v10597, %v10610
  %v10634 = vmul.f32 %v10598, %v10610
  %v10635 = vmul.f32 %v10599, %v10610
  %v10636 = vmul.f32 %v10600, %v10610
  %v10637 = vmul.f32 %v10601, %v10610
  %v10638 = vmul.f32 %v10602, %v10610
  %v10639 = vmul.f32 %v10603, %v10610
  %v10640 = vmul.f32 %v10604, %v10610
  %v10641 = vmul.f32 %v10605, %v10610
  %v10642 = vmul.f32 %v10606, %v10610
  %v10643 = vadd.f32 %v10543, %v10611
  %v10644 = vadd.f32 %v10544, %v10612
  %v10645 = vadd.f32 %v10545, %v10613
  %v10646 = vadd.f32 %v10546, %v10614
  %v10647 = vadd.f32 %v10547, %v10615
  %v10648 = vadd.f32 %v10548, %v10616
  %v10649 = vadd.f32 %v10549, %v10617
  %v10650 = vadd.f32 %v10550, %v10618
  %v10651 = vadd.f32 %v10551, %v10619
  %v10652 = vadd.f32 %v10552, %v10620
  %v10653 = vadd.f32 %v10553, %v10621
  %v10654 = vadd.f32 %v10554, %v10622
  %v10655 = vadd.f32 %v10555, %v10623
  %v10656 = vadd.f32 %v10556, %v10624
  %v10657 = vadd.f32 %v10557, %v10625
  %v10658 = vadd.f32 %v10558, %v10626
  %v10659 = vadd.f32 %v10559, %v10627
  %v10660 = vadd.f32 %v10560, %v10628
  %v10661 = vadd.f32 %v10561, %v10629
  %v10662 = vadd.f32 %v10562, %v10630
  %v10663 = vadd.f32 %v10563, %v10631
  %v10664 = vadd.f32 %v10564, %v10632
  %v10665 = vadd.f32 %v10565, %v10633
  %v10666 = vadd.f32 %v10566, %v10634
  %v10667 = vadd.f32 %v10567, %v10635
  %v10668 = vadd.f32 %v10568, %v10636
  %v10669 = vadd.f32 %v10569, %v10637
  %v10670 = vadd.f32 %v10570, %v10638
  %v10671 = vadd.f32 %v10571, %v10639
  %v10672 = vadd.f32 %v10572, %v10640
  %v10673 = vadd.f32 %v10573, %v10641
  %v10674 = vadd.f32 %v10574, %v10642
  %v10675 = vld [vmem:[%s1744] sm:$0xff]
  %v10676 = vld [vmem:[%s1744 + $0x8] sm:$0xff]
  %v10677 = vld [vmem:[%s1744 + $0x18] sm:$0xff]
  %v10678 = vld [vmem:[%s1744 + $0x20] sm:$0xff]
  %v10679 = vld [vmem:[%s1744 + $0x30] sm:$0xff]
  %v10680 = vld [vmem:[%s1744 + $0x38] sm:$0xff]
  %v10681 = vld [vmem:[%s1744 + $0x48] sm:$0xff]
  %v10682 = vld [vmem:[%s1744 + $0x50] sm:$0xff]
  %v10683 = vld [vmem:[%s1744 + $0x60] sm:$0xff]
  %v10684 = vld [vmem:[%s1744 + $0x68] sm:$0xff]
  %v10685 = vld [vmem:[%s1744 + $0x78] sm:$0xff]
  %v10686 = vld [vmem:[%s1744 + $0x80] sm:$0xff]
  %v10687 = vld [vmem:[%s1744 + $0x90] sm:$0xff]
  %v10688 = vld [vmem:[%s1744 + $0x98] sm:$0xff]
  %v10689 = vld [vmem:[%s1744 + $0xa8] sm:$0xff]
  %v10690 = vld [vmem:[%s1744 + $0xb0] sm:$0xff]
  %v10691 = vld [vmem:[%s1744 + $0xc0] sm:$0xff]
  %v10692 = vld [vmem:[%s1744 + $0xc8] sm:$0xff]
  %v10693 = vld [vmem:[%s1744 + $0xd8] sm:$0xff]
  %v10694 = vld [vmem:[%s1744 + $0xe0] sm:$0xff]
  %v10695 = vld [vmem:[%s1744 + $0xf0] sm:$0xff]
  %v10696 = vld [vmem:[%s1744 + $0xf8] sm:$0xff]
  %v10697 = vld [vmem:[%s1744 + $0x108] sm:$0xff]
  %v10698 = vld [vmem:[%s1744 + $0x110] sm:$0xff]
  %v10699 = vld [vmem:[%s1744 + $0x120] sm:$0xff]
  %v10700 = vld [vmem:[%s1744 + $0x128] sm:$0xff]
  %v10701 = vld [vmem:[%s1744 + $0x138] sm:$0xff]
  %v10702 = vld [vmem:[%s1744 + $0x140] sm:$0xff]
  %v10703 = vld [vmem:[%s1744 + $0x150] sm:$0xff]
  %v10704 = vld [vmem:[%s1744 + $0x158] sm:$0xff]
  %v10705 = vld [vmem:[%s1744 + $0x168] sm:$0xff]
  %v10706 = vld [vmem:[%s1744 + $0x170] sm:$0xff]
  %v10707 = vlaneseq
  %v10708 = vshrl.u32 %v10707, 7
  %v10709 = vsub.s32 6, %v10708
  %v10710 = vrot.slane %v10073, %v10709
  %v10711 = vmul.f32 %v10675, %v10710
  %v10712 = vmul.f32 %v10676, %v10710
  %v10713 = vmul.f32 %v10677, %v10710
  %v10714 = vmul.f32 %v10678, %v10710
  %v10715 = vmul.f32 %v10679, %v10710
  %v10716 = vmul.f32 %v10680, %v10710
  %v10717 = vmul.f32 %v10681, %v10710
  %v10718 = vmul.f32 %v10682, %v10710
  %v10719 = vmul.f32 %v10683, %v10710
  %v10720 = vmul.f32 %v10684, %v10710
  %v10721 = vmul.f32 %v10685, %v10710
  %v10722 = vmul.f32 %v10686, %v10710
  %v10723 = vmul.f32 %v10687, %v10710
  %v10724 = vmul.f32 %v10688, %v10710
  %v10725 = vmul.f32 %v10689, %v10710
  %v10726 = vmul.f32 %v10690, %v10710
  %v10727 = vmul.f32 %v10691, %v10710
  %v10728 = vmul.f32 %v10692, %v10710
  %v10729 = vmul.f32 %v10693, %v10710
  %v10730 = vmul.f32 %v10694, %v10710
  %v10731 = vmul.f32 %v10695, %v10710
  %v10732 = vmul.f32 %v10696, %v10710
  %v10733 = vmul.f32 %v10697, %v10710
  %v10734 = vmul.f32 %v10698, %v10710
  %v10735 = vmul.f32 %v10699, %v10710
  %v10736 = vmul.f32 %v10700, %v10710
  %v10737 = vmul.f32 %v10701, %v10710
  %v10738 = vmul.f32 %v10702, %v10710
  %v10739 = vmul.f32 %v10703, %v10710
  %v10740 = vmul.f32 %v10704, %v10710
  %v10741 = vmul.f32 %v10705, %v10710
  %v10742 = vmul.f32 %v10706, %v10710
  %v10743 = vadd.f32 %v10643, %v10711
  %v10744 = vadd.f32 %v10644, %v10712
  %v10745 = vadd.f32 %v10645, %v10713
  %v10746 = vadd.f32 %v10646, %v10714
  %v10747 = vadd.f32 %v10647, %v10715
  %v10748 = vadd.f32 %v10648, %v10716
  %v10749 = vadd.f32 %v10649, %v10717
  %v10750 = vadd.f32 %v10650, %v10718
  %v10751 = vadd.f32 %v10651, %v10719
  %v10752 = vadd.f32 %v10652, %v10720
  %v10753 = vadd.f32 %v10653, %v10721
  %v10754 = vadd.f32 %v10654, %v10722
  %v10755 = vadd.f32 %v10655, %v10723
  %v10756 = vadd.f32 %v10656, %v10724
  %v10757 = vadd.f32 %v10657, %v10725
  %v10758 = vadd.f32 %v10658, %v10726
  %v10759 = vadd.f32 %v10659, %v10727
  %v10760 = vadd.f32 %v10660, %v10728
  %v10761 = vadd.f32 %v10661, %v10729
  %v10762 = vadd.f32 %v10662, %v10730
  %v10763 = vadd.f32 %v10663, %v10731
  %v10764 = vadd.f32 %v10664, %v10732
  %v10765 = vadd.f32 %v10665, %v10733
  %v10766 = vadd.f32 %v10666, %v10734
  %v10767 = vadd.f32 %v10667, %v10735
  %v10768 = vadd.f32 %v10668, %v10736
  %v10769 = vadd.f32 %v10669, %v10737
  %v10770 = vadd.f32 %v10670, %v10738
  %v10771 = vadd.f32 %v10671, %v10739
  %v10772 = vadd.f32 %v10672, %v10740
  %v10773 = vadd.f32 %v10673, %v10741
  %v10774 = vadd.f32 %v10674, %v10742
  %v10775 = vld [vmem:[%s1744 + $0x1] sm:$0xff]
  %v10776 = vld [vmem:[%s1744 + $0x9] sm:$0xff]
  %v10777 = vld [vmem:[%s1744 + $0x19] sm:$0xff]
  %v10778 = vld [vmem:[%s1744 + $0x21] sm:$0xff]
  %v10779 = vld [vmem:[%s1744 + $0x31] sm:$0xff]
  %v10780 = vld [vmem:[%s1744 + $0x39] sm:$0xff]
  %v10781 = vld [vmem:[%s1744 + $0x49] sm:$0xff]
  %v10782 = vld [vmem:[%s1744 + $0x51] sm:$0xff]
  %v10783 = vld [vmem:[%s1744 + $0x61] sm:$0xff]
  %v10784 = vld [vmem:[%s1744 + $0x69] sm:$0xff]
  %v10785 = vld [vmem:[%s1744 + $0x79] sm:$0xff]
  %v10786 = vld [vmem:[%s1744 + $0x81] sm:$0xff]
  %v10787 = vld [vmem:[%s1744 + $0x91] sm:$0xff]
  %v10788 = vld [vmem:[%s1744 + $0x99] sm:$0xff]
  %v10789 = vld [vmem:[%s1744 + $0xa9] sm:$0xff]
  %v10790 = vld [vmem:[%s1744 + $0xb1] sm:$0xff]
  %v10791 = vld [vmem:[%s1744 + $0xc1] sm:$0xff]
  %v10792 = vld [vmem:[%s1744 + $0xc9] sm:$0xff]
  %v10793 = vld [vmem:[%s1744 + $0xd9] sm:$0xff]
  %v10794 = vld [vmem:[%s1744 + $0xe1] sm:$0xff]
  %v10795 = vld [vmem:[%s1744 + $0xf1] sm:$0xff]
  %v10796 = vld [vmem:[%s1744 + $0xf9] sm:$0xff]
  %v10797 = vld [vmem:[%s1744 + $0x109] sm:$0xff]
  %v10798 = vld [vmem:[%s1744 + $0x111] sm:$0xff]
  %v10799 = vld [vmem:[%s1744 + $0x121] sm:$0xff]
  %v10800 = vld [vmem:[%s1744 + $0x129] sm:$0xff]
  %v10801 = vld [vmem:[%s1744 + $0x139] sm:$0xff]
  %v10802 = vld [vmem:[%s1744 + $0x141] sm:$0xff]
  %v10803 = vld [vmem:[%s1744 + $0x151] sm:$0xff]
  %v10804 = vld [vmem:[%s1744 + $0x159] sm:$0xff]
  %v10805 = vld [vmem:[%s1744 + $0x169] sm:$0xff]
  %v10806 = vld [vmem:[%s1744 + $0x171] sm:$0xff]
  %v10807 = vlaneseq
  %v10808 = vshrl.u32 %v10807, 7
  %v10809 = vsub.s32 7, %v10808
  %v10810 = vrot.slane %v10073, %v10809
  %v10811 = vmul.f32 %v10775, %v10810
  %v10812 = vmul.f32 %v10776, %v10810
  %v10813 = vmul.f32 %v10777, %v10810
  %v10814 = vmul.f32 %v10778, %v10810
  %v10815 = vmul.f32 %v10779, %v10810
  %v10816 = vmul.f32 %v10780, %v10810
  %v10817 = vmul.f32 %v10781, %v10810
  %v10818 = vmul.f32 %v10782, %v10810
  %v10819 = vmul.f32 %v10783, %v10810
  %v10820 = vmul.f32 %v10784, %v10810
  %v10821 = vmul.f32 %v10785, %v10810
  %v10822 = vmul.f32 %v10786, %v10810
  %v10823 = vmul.f32 %v10787, %v10810
  %v10824 = vmul.f32 %v10788, %v10810
  %v10825 = vmul.f32 %v10789, %v10810
  %v10826 = vmul.f32 %v10790, %v10810
  %v10827 = vmul.f32 %v10791, %v10810
  %v10828 = vmul.f32 %v10792, %v10810
  %v10829 = vmul.f32 %v10793, %v10810
  %v10830 = vmul.f32 %v10794, %v10810
  %v10831 = vmul.f32 %v10795, %v10810
  %v10832 = vmul.f32 %v10796, %v10810
  %v10833 = vmul.f32 %v10797, %v10810
  %v10834 = vmul.f32 %v10798, %v10810
  %v10835 = vmul.f32 %v10799, %v10810
  %v10836 = vmul.f32 %v10800, %v10810
  %v10837 = vmul.f32 %v10801, %v10810
  %v10838 = vmul.f32 %v10802, %v10810
  %v10839 = vmul.f32 %v10803, %v10810
  %v10840 = vmul.f32 %v10804, %v10810
  %v10841 = vmul.f32 %v10805, %v10810
  %v10842 = vmul.f32 %v10806, %v10810
  %v10843 = vadd.f32 %v10743, %v10811
  %v10844 = vadd.f32 %v10744, %v10812
  %v10845 = vadd.f32 %v10745, %v10813
  %v10846 = vadd.f32 %v10746, %v10814
  %v10847 = vadd.f32 %v10747, %v10815
  %v10848 = vadd.f32 %v10748, %v10816
  %v10849 = vadd.f32 %v10749, %v10817
  %v10850 = vadd.f32 %v10750, %v10818
  %v10851 = vadd.f32 %v10751, %v10819
  %v10852 = vadd.f32 %v10752, %v10820
  %v10853 = vadd.f32 %v10753, %v10821
  %v10854 = vadd.f32 %v10754, %v10822
  %v10855 = vadd.f32 %v10755, %v10823
  %v10856 = vadd.f32 %v10756, %v10824
  %v10857 = vadd.f32 %v10757, %v10825
  %v10858 = vadd.f32 %v10758, %v10826
  %v10859 = vadd.f32 %v10759, %v10827
  %v10860 = vadd.f32 %v10760, %v10828
  %v10861 = vadd.f32 %v10761, %v10829
  %v10862 = vadd.f32 %v10762, %v10830
  %v10863 = vadd.f32 %v10763, %v10831
  %v10864 = vadd.f32 %v10764, %v10832
  %v10865 = vadd.f32 %v10765, %v10833
  %v10866 = vadd.f32 %v10766, %v10834
  %v10867 = vadd.f32 %v10767, %v10835
  %v10868 = vadd.f32 %v10768, %v10836
  %v10869 = vadd.f32 %v10769, %v10837
  %v10870 = vadd.f32 %v10770, %v10838
  %v10871 = vadd.f32 %v10771, %v10839
  %v10872 = vadd.f32 %v10772, %v10840
  %v10873 = vadd.f32 %v10773, %v10841
  %v10874 = vadd.f32 %v10774, %v10842
  %v10875 = vld [vmem:[%s1744 + $0x2] sm:$0xff]
  %v10876 = vld [vmem:[%s1744 + $0xa] sm:$0xff]
  %v10877 = vld [vmem:[%s1744 + $0x1a] sm:$0xff]
  %v10878 = vld [vmem:[%s1744 + $0x22] sm:$0xff]
  %v10879 = vld [vmem:[%s1744 + $0x32] sm:$0xff]
  %v10880 = vld [vmem:[%s1744 + $0x3a] sm:$0xff]
  %v10881 = vld [vmem:[%s1744 + $0x4a] sm:$0xff]
  %v10882 = vld [vmem:[%s1744 + $0x52] sm:$0xff]
  %v10883 = vld [vmem:[%s1744 + $0x62] sm:$0xff]
  %v10884 = vld [vmem:[%s1744 + $0x6a] sm:$0xff]
  %v10885 = vld [vmem:[%s1744 + $0x7a] sm:$0xff]
  %v10886 = vld [vmem:[%s1744 + $0x82] sm:$0xff]
  %v10887 = vld [vmem:[%s1744 + $0x92] sm:$0xff]
  %v10888 = vld [vmem:[%s1744 + $0x9a] sm:$0xff]
  %v10889 = vld [vmem:[%s1744 + $0xaa] sm:$0xff]
  %v10890 = vld [vmem:[%s1744 + $0xb2] sm:$0xff]
  %v10891 = vld [vmem:[%s1744 + $0xc2] sm:$0xff]
  %v10892 = vld [vmem:[%s1744 + $0xca] sm:$0xff]
  %v10893 = vld [vmem:[%s1744 + $0xda] sm:$0xff]
  %v10894 = vld [vmem:[%s1744 + $0xe2] sm:$0xff]
  %v10895 = vld [vmem:[%s1744 + $0xf2] sm:$0xff]
  %v10896 = vld [vmem:[%s1744 + $0xfa] sm:$0xff]
  %v10897 = vld [vmem:[%s1744 + $0x10a] sm:$0xff]
  %v10898 = vld [vmem:[%s1744 + $0x112] sm:$0xff]
  %v10899 = vld [vmem:[%s1744 + $0x122] sm:$0xff]
  %v10900 = vld [vmem:[%s1744 + $0x12a] sm:$0xff]
  %v10901 = vld [vmem:[%s1744 + $0x13a] sm:$0xff]
  %v10902 = vld [vmem:[%s1744 + $0x142] sm:$0xff]
  %v10903 = vld [vmem:[%s1744 + $0x152] sm:$0xff]
  %v10904 = vld [vmem:[%s1744 + $0x15a] sm:$0xff]
  %v10905 = vld [vmem:[%s1744 + $0x16a] sm:$0xff]
  %v10906 = vld [vmem:[%s1744 + $0x172] sm:$0xff]
  %v10907 = vlaneseq
  %v10908 = vshrl.u32 %v10907, 7
  %v10909 = vsub.s32 0, %v10908
  %v10910 = vrot.slane %v10074, %v10909
  %v10911 = vmul.f32 %v10875, %v10910
  %v10912 = vmul.f32 %v10876, %v10910
  %v10913 = vmul.f32 %v10877, %v10910
  %v10914 = vmul.f32 %v10878, %v10910
  %v10915 = vmul.f32 %v10879, %v10910
  %v10916 = vmul.f32 %v10880, %v10910
  %v10917 = vmul.f32 %v10881, %v10910
  %v10918 = vmul.f32 %v10882, %v10910
  %v10919 = vmul.f32 %v10883, %v10910
  %v10920 = vmul.f32 %v10884, %v10910
  %v10921 = vmul.f32 %v10885, %v10910
  %v10922 = vmul.f32 %v10886, %v10910
  %v10923 = vmul.f32 %v10887, %v10910
  %v10924 = vmul.f32 %v10888, %v10910
  %v10925 = vmul.f32 %v10889, %v10910
  %v10926 = vmul.f32 %v10890, %v10910
  %v10927 = vmul.f32 %v10891, %v10910
  %v10928 = vmul.f32 %v10892, %v10910
  %v10929 = vmul.f32 %v10893, %v10910
  %v10930 = vmul.f32 %v10894, %v10910
  %v10931 = vmul.f32 %v10895, %v10910
  %v10932 = vmul.f32 %v10896, %v10910
  %v10933 = vmul.f32 %v10897, %v10910
  %v10934 = vmul.f32 %v10898, %v10910
  %v10935 = vmul.f32 %v10899, %v10910
  %v10936 = vmul.f32 %v10900, %v10910
  %v10937 = vmul.f32 %v10901, %v10910
  %v10938 = vmul.f32 %v10902, %v10910
  %v10939 = vmul.f32 %v10903, %v10910
  %v10940 = vmul.f32 %v10904, %v10910
  %v10941 = vmul.f32 %v10905, %v10910
  %v10942 = vmul.f32 %v10906, %v10910
  %v10943 = vadd.f32 %v10843, %v10911
  %v10944 = vadd.f32 %v10844, %v10912
  %v10945 = vadd.f32 %v10845, %v10913
  %v10946 = vadd.f32 %v10846, %v10914
  %v10947 = vadd.f32 %v10847, %v10915
  %v10948 = vadd.f32 %v10848, %v10916
  %v10949 = vadd.f32 %v10849, %v10917
  %v10950 = vadd.f32 %v10850, %v10918
  %v10951 = vadd.f32 %v10851, %v10919
  %v10952 = vadd.f32 %v10852, %v10920
  %v10953 = vadd.f32 %v10853, %v10921
  %v10954 = vadd.f32 %v10854, %v10922
  %v10955 = vadd.f32 %v10855, %v10923
  %v10956 = vadd.f32 %v10856, %v10924
  %v10957 = vadd.f32 %v10857, %v10925
  %v10958 = vadd.f32 %v10858, %v10926
  %v10959 = vadd.f32 %v10859, %v10927
  %v10960 = vadd.f32 %v10860, %v10928
  %v10961 = vadd.f32 %v10861, %v10929
  %v10962 = vadd.f32 %v10862, %v10930
  %v10963 = vadd.f32 %v10863, %v10931
  %v10964 = vadd.f32 %v10864, %v10932
  %v10965 = vadd.f32 %v10865, %v10933
  %v10966 = vadd.f32 %v10866, %v10934
  %v10967 = vadd.f32 %v10867, %v10935
  %v10968 = vadd.f32 %v10868, %v10936
  %v10969 = vadd.f32 %v10869, %v10937
  %v10970 = vadd.f32 %v10870, %v10938
  %v10971 = vadd.f32 %v10871, %v10939
  %v10972 = vadd.f32 %v10872, %v10940
  %v10973 = vadd.f32 %v10873, %v10941
  %v10974 = vadd.f32 %v10874, %v10942
  %v10975 = vsel %vm26, %v10943, 0.0
  %10976 = vadd.xlane.f32.xlu0 %v10975
  %v10977 = vpop.xlane.xlu0 %10976
  %v10978 = vsel %vm26, %v10944, 0.0
  %10979 = vadd.xlane.f32.xlu0 %v10978
  %v10980 = vpop.xlane.xlu0 %10979
  %v10981 = vsel %vm26, %v10945, 0.0
  %10982 = vadd.xlane.f32.xlu0 %v10981
  %v10983 = vpop.xlane.xlu0 %10982
  %v10984 = vsel %vm26, %v10946, 0.0
  %10985 = vadd.xlane.f32.xlu0 %v10984
  %v10986 = vpop.xlane.xlu0 %10985
  %v10987 = vsel %vm26, %v10947, 0.0
  %10988 = vadd.xlane.f32.xlu0 %v10987
  %v10989 = vpop.xlane.xlu0 %10988
  %v10990 = vsel %vm26, %v10948, 0.0
  %10991 = vadd.xlane.f32.xlu0 %v10990
  %v10992 = vpop.xlane.xlu0 %10991
  %v10993 = vsel %vm26, %v10949, 0.0
  %10994 = vadd.xlane.f32.xlu0 %v10993
  %v10995 = vpop.xlane.xlu0 %10994
  %v10996 = vsel %vm26, %v10950, 0.0
  %10997 = vadd.xlane.f32.xlu0 %v10996
  %v10998 = vpop.xlane.xlu0 %10997
  %v10999 = vsel %vm26, %v10951, 0.0
  %11000 = vadd.xlane.f32.xlu0 %v10999
  %v11001 = vpop.xlane.xlu0 %11000
  %v11002 = vsel %vm26, %v10952, 0.0
  %11003 = vadd.xlane.f32.xlu0 %v11002
  %v11004 = vpop.xlane.xlu0 %11003
  %v11005 = vsel %vm26, %v10953, 0.0
  %11006 = vadd.xlane.f32.xlu0 %v11005
  %v11007 = vpop.xlane.xlu0 %11006
  %v11008 = vsel %vm26, %v10954, 0.0
  %11009 = vadd.xlane.f32.xlu0 %v11008
  %v11010 = vpop.xlane.xlu0 %11009
  %v11011 = vsel %vm26, %v10955, 0.0
  %11012 = vadd.xlane.f32.xlu0 %v11011
  %v11013 = vpop.xlane.xlu0 %11012
  %v11014 = vsel %vm26, %v10956, 0.0
  %11015 = vadd.xlane.f32.xlu0 %v11014
  %v11016 = vpop.xlane.xlu0 %11015
  %v11017 = vsel %vm26, %v10957, 0.0
  %11018 = vadd.xlane.f32.xlu0 %v11017
  %v11019 = vpop.xlane.xlu0 %11018
  %v11020 = vsel %vm26, %v10958, 0.0
  %11021 = vadd.xlane.f32.xlu0 %v11020
  %v11022 = vpop.xlane.xlu0 %11021
  %v11023 = vsel %vm26, %v10959, 0.0
  %11024 = vadd.xlane.f32.xlu0 %v11023
  %v11025 = vpop.xlane.xlu0 %11024
  %v11026 = vsel %vm26, %v10960, 0.0
  %11027 = vadd.xlane.f32.xlu0 %v11026
  %v11028 = vpop.xlane.xlu0 %11027
  %v11029 = vsel %vm26, %v10961, 0.0
  %11030 = vadd.xlane.f32.xlu0 %v11029
  %v11031 = vpop.xlane.xlu0 %11030
  %v11032 = vsel %vm26, %v10962, 0.0
  %11033 = vadd.xlane.f32.xlu0 %v11032
  %v11034 = vpop.xlane.xlu0 %11033
  %v11035 = vsel %vm26, %v10963, 0.0
  %11036 = vadd.xlane.f32.xlu0 %v11035
  %v11037 = vpop.xlane.xlu0 %11036
  %v11038 = vsel %vm26, %v10964, 0.0
  %11039 = vadd.xlane.f32.xlu0 %v11038
  %v11040 = vpop.xlane.xlu0 %11039
  %v11041 = vsel %vm26, %v10965, 0.0
  %11042 = vadd.xlane.f32.xlu0 %v11041
  %v11043 = vpop.xlane.xlu0 %11042
  %v11044 = vsel %vm26, %v10966, 0.0
  %11045 = vadd.xlane.f32.xlu0 %v11044
  %v11046 = vpop.xlane.xlu0 %11045
  %v11047 = vsel %vm26, %v10967, 0.0
  %11048 = vadd.xlane.f32.xlu0 %v11047
  %v11049 = vpop.xlane.xlu0 %11048
  %v11050 = vsel %vm26, %v10968, 0.0
  %11051 = vadd.xlane.f32.xlu0 %v11050
  %v11052 = vpop.xlane.xlu0 %11051
  %v11053 = vsel %vm26, %v10969, 0.0
  %11054 = vadd.xlane.f32.xlu0 %v11053
  %v11055 = vpop.xlane.xlu0 %11054
  %v11056 = vsel %vm26, %v10970, 0.0
  %11057 = vadd.xlane.f32.xlu0 %v11056
  %v11058 = vpop.xlane.xlu0 %11057
  %v11059 = vsel %vm26, %v10971, 0.0
  %11060 = vadd.xlane.f32.xlu0 %v11059
  %v11061 = vpop.xlane.xlu0 %11060
  %v11062 = vsel %vm26, %v10972, 0.0
  %11063 = vadd.xlane.f32.xlu0 %v11062
  %v11064 = vpop.xlane.xlu0 %11063
  %v11065 = vsel %vm26, %v10973, 0.0
  %11066 = vadd.xlane.f32.xlu0 %v11065
  %v11067 = vpop.xlane.xlu0 %11066
  %v11068 = vsel %vm26, %v10974, 0.0
  %11069 = vadd.xlane.f32.xlu0 %v11068
  %v11070 = vpop.xlane.xlu0 %11069
  %v11071 = vld [vmem:[%s0] sm:$0xff]
  %v11072 = vld [vmem:[%s0 + $0x8] sm:$0xff]
  %v11073 = vld [vmem:[%s0 + $0x10] sm:$0xff]
  %v11074 = vld [vmem:[%s0 + $0x18] sm:$0xff]
  %v11075 = vld [vmem:[%s0 + $0x20] sm:$0xff]
  %v11076 = vld [vmem:[%s0 + $0x28] sm:$0xff]
  %v11077 = vld [vmem:[%s0 + $0x30] sm:$0xff]
  %v11078 = vld [vmem:[%s0 + $0x38] sm:$0xff]
  %v11079 = vld [vmem:[%s0 + $0x40] sm:$0xff]
  %v11080 = vld [vmem:[%s0 + $0x48] sm:$0xff]
  %v11081 = vld [vmem:[%s0 + $0x50] sm:$0xff]
  %v11082 = vld [vmem:[%s0 + $0x58] sm:$0xff]
  %v11083 = vld [vmem:[%s0 + $0x60] sm:$0xff]
  %v11084 = vld [vmem:[%s0 + $0x68] sm:$0xff]
  %v11085 = vld [vmem:[%s0 + $0x70] sm:$0xff]
  %v11086 = vld [vmem:[%s0 + $0x78] sm:$0xff]
  %v11087 = vld [vmem:[%s0 + $0x80] sm:$0xff]
  %v11088 = vld [vmem:[%s0 + $0x88] sm:$0xff]
  %v11089 = vld [vmem:[%s0 + $0x90] sm:$0xff]
  %v11090 = vld [vmem:[%s0 + $0x98] sm:$0xff]
  %v11091 = vld [vmem:[%s0 + $0xa0] sm:$0xff]
  %v11092 = vld [vmem:[%s0 + $0xa8] sm:$0xff]
  %v11093 = vld [vmem:[%s0 + $0xb0] sm:$0xff]
  %v11094 = vld [vmem:[%s0 + $0xb8] sm:$0xff]
  %v11095 = vld [vmem:[%s0 + $0xc0] sm:$0xff]
  %v11096 = vld [vmem:[%s0 + $0xc8] sm:$0xff]
  %v11097 = vld [vmem:[%s0 + $0xd0] sm:$0xff]
  %v11098 = vld [vmem:[%s0 + $0xd8] sm:$0xff]
  %v11099 = vld [vmem:[%s0 + $0xe0] sm:$0xff]
  %v11100 = vld [vmem:[%s0 + $0xe8] sm:$0xff]
  %v11101 = vld [vmem:[%s0 + $0xf0] sm:$0xff]
  %v11102 = vld [vmem:[%s0 + $0xf8] sm:$0xff]
  %v11103 = vadd.f32 %v10977, %v11071
  %v11104 = vadd.f32 %v10980, %v11072
  %v11105 = vadd.f32 %v10983, %v11073
  %v11106 = vadd.f32 %v10986, %v11074
  %v11107 = vadd.f32 %v10989, %v11075
  %v11108 = vadd.f32 %v10992, %v11076
  %v11109 = vadd.f32 %v10995, %v11077
  %v11110 = vadd.f32 %v10998, %v11078
  %v11111 = vadd.f32 %v11001, %v11079
  %v11112 = vadd.f32 %v11004, %v11080
  %v11113 = vadd.f32 %v11007, %v11081
  %v11114 = vadd.f32 %v11010, %v11082
  %v11115 = vadd.f32 %v11013, %v11083
  %v11116 = vadd.f32 %v11016, %v11084
  %v11117 = vadd.f32 %v11019, %v11085
  %v11118 = vadd.f32 %v11022, %v11086
  %v11119 = vadd.f32 %v11025, %v11087
  %v11120 = vadd.f32 %v11028, %v11088
  %v11121 = vadd.f32 %v11031, %v11089
  %v11122 = vadd.f32 %v11034, %v11090
  %v11123 = vadd.f32 %v11037, %v11091
  %v11124 = vadd.f32 %v11040, %v11092
  %v11125 = vadd.f32 %v11043, %v11093
  %v11126 = vadd.f32 %v11046, %v11094
  %v11127 = vadd.f32 %v11049, %v11095
  %v11128 = vadd.f32 %v11052, %v11096
  %v11129 = vadd.f32 %v11055, %v11097
  %v11130 = vadd.f32 %v11058, %v11098
  %v11131 = vadd.f32 %v11061, %v11099
  %v11132 = vadd.f32 %v11064, %v11100
  %v11133 = vadd.f32 %v11067, %v11101
  %v11134 = vadd.f32 %v11070, %v11102
  %11135 = vst.msk [vmem:[%s7] sm:$0xff] %vm149, %v11103
  %11136 = vst.msk [vmem:[%s7 + $0x8] sm:$0xff] %vm149, %v11104
  %11137 = vst.msk [vmem:[%s7 + $0x10] sm:$0xff] %vm149, %v11105
  %11138 = vst.msk [vmem:[%s7 + $0x18] sm:$0xff] %vm149, %v11106
  %11139 = vst.msk [vmem:[%s7 + $0x20] sm:$0xff] %vm149, %v11107
  %11140 = vst.msk [vmem:[%s7 + $0x28] sm:$0xff] %vm149, %v11108
  %11141 = vst.msk [vmem:[%s7 + $0x30] sm:$0xff] %vm149, %v11109
  %11142 = vst.msk [vmem:[%s7 + $0x38] sm:$0xff] %vm149, %v11110
  %11143 = vst.msk [vmem:[%s7 + $0x40] sm:$0xff] %vm149, %v11111
  %11144 = vst.msk [vmem:[%s7 + $0x48] sm:$0xff] %vm149, %v11112
  %11145 = vst.msk [vmem:[%s7 + $0x50] sm:$0xff] %vm149, %v11113
  %11146 = vst.msk [vmem:[%s7 + $0x58] sm:$0xff] %vm149, %v11114
  %11147 = vst.msk [vmem:[%s7 + $0x60] sm:$0xff] %vm149, %v11115
  %11148 = vst.msk [vmem:[%s7 + $0x68] sm:$0xff] %vm149, %v11116
  %11149 = vst.msk [vmem:[%s7 + $0x70] sm:$0xff] %vm149, %v11117
  %11150 = vst.msk [vmem:[%s7 + $0x78] sm:$0xff] %vm149, %v11118
  %11151 = vst.msk [vmem:[%s7 + $0x80] sm:$0xff] %vm149, %v11119
  %11152 = vst.msk [vmem:[%s7 + $0x88] sm:$0xff] %vm149, %v11120
  %11153 = vst.msk [vmem:[%s7 + $0x90] sm:$0xff] %vm149, %v11121
  %11154 = vst.msk [vmem:[%s7 + $0x98] sm:$0xff] %vm149, %v11122
  %11155 = vst.msk [vmem:[%s7 + $0xa0] sm:$0xff] %vm149, %v11123
  %11156 = vst.msk [vmem:[%s7 + $0xa8] sm:$0xff] %vm149, %v11124
  %11157 = vst.msk [vmem:[%s7 + $0xb0] sm:$0xff] %vm149, %v11125
  %11158 = vst.msk [vmem:[%s7 + $0xb8] sm:$0xff] %vm149, %v11126
  %11159 = vst.msk [vmem:[%s7 + $0xc0] sm:$0xff] %vm149, %v11127
  %11160 = vst.msk [vmem:[%s7 + $0xc8] sm:$0xff] %vm149, %v11128
  %11161 = vst.msk [vmem:[%s7 + $0xd0] sm:$0xff] %vm149, %v11129
  %11162 = vst.msk [vmem:[%s7 + $0xd8] sm:$0xff] %vm149, %v11130
  %11163 = vst.msk [vmem:[%s7 + $0xe0] sm:$0xff] %vm149, %v11131
  %11164 = vst.msk [vmem:[%s7 + $0xe8] sm:$0xff] %vm149, %v11132
  %11165 = vst.msk [vmem:[%s7 + $0xf0] sm:$0xff] %vm149, %v11133
  %11166 = vst.msk [vmem:[%s7 + $0xf8] sm:$0xff] %vm149, %v11134
  // Predicated region
  $region30: #{dyproxnet_forward.1} parent=0 // pred_check
    _
  $region31: #{dyproxnet_forward.1} parent=0 // pred_check_branch
    %11168 = sbr.rel (0) target = $region33
  $region32: #{dyproxnet_forward.1} parent=0 // pred_region
    _
  $region33: #{dyproxnet_forward.1} parent=0 // pred_fallthru
    _
  // Predicated region
  $region34: #{dyproxnet_forward.1} parent=0 // pred_check
    _
  $region35: #{dyproxnet_forward.1} parent=0 // pred_check_branch
    %11170 = sbr.rel (0) target = $region37
  $region36: #{dyproxnet_forward.1} parent=0 // pred_region
    _
  $region37: #{dyproxnet_forward.1} parent=0 // pred_fallthru
    _

</llo_original>
